<compile_context>
chip_gen: v7x
topology: tpu7x:2x2x1
jax: 0.10.0
libtpu: 0.0.40
codegen_flags: <defaults>
</compile_context>

<pallas_src>
import numpy as np
import jax
import jax.numpy as jnp
from jax.experimental import pallas as pl
from jax.experimental.pallas import tpu as pltpu


IMG = 16                            # input spatial size (16x16), C_in = 1
H1N = 4 * 14 * 14                   # 784  : conv1 map, lane-flat (oc*196 + y*14 + x)
H2N = 16 * 12 * 12                  # 2304 : conv2 map, lane-flat (oc*144 + y*12 + x)
PW = 15 * 144 + 10 * 12 + 10 + 1    # 2291 : last valid pooled column + 1
NOUT = 2
NOUT_PAD = 128                      # lane-dense final store; wrapper slices [:, :2]
MAX_BLOCK_B = 128


# ----------------------------------------------------------------------------
# Fused kernel: conv1 + conv2 (MXU shift-matrix) + maxpool + fc1 + fc2 + fc3
# ----------------------------------------------------------------------------
def cnn_fused_kernel(x_ref, w1_ref, b1_ref, w2_ref, b2_ref,
                     fc1w_ref, fc1b_ref, fc2w_ref, fc2b_ref,
                     fc3w_ref, fc3b_ref, o_ref):
    x = x_ref[...]                                            # (BB, 256) f32

    # conv1 (1->4, 3x3 valid) as a shift-matrix MXU matmul, bf16 in / f32 acc.
    h1 = jnp.dot(x.astype(jnp.bfloat16), w1_ref[...],
                 preferred_element_type=jnp.float32) + b1_ref[...]
    h1 = jnp.maximum(h1, 0.0)                                 # (BB, 784)

    # conv2 (4->16, 3x3 valid), same trick: (BB,784) x (784,2304), f32 acc.
    h2 = jnp.dot(h1.astype(jnp.bfloat16), w2_ref[...],
                 preferred_element_type=jnp.float32) + b2_ref[...]
    h2 = jnp.maximum(h2, 0.0)                                 # (BB, 2304)

    # 2x2 / stride-2 max-pool, uncompacted: 4 static lane slices + max.
    # Channel stride is 144, so offsets +1/+12/+13 stay inside the channel for
    # every valid pooled column; invalid columns hit zero rows of fc1w.
    g = jnp.maximum(jnp.maximum(h2[:, 0:PW], h2[:, 1:PW + 1]),
                    jnp.maximum(h2[:, 12:12 + PW], h2[:, 13:13 + PW]))

    # FC1: single consolidated MXU matmul against the zero-padded, CHW-reordered
    # weight (replaces 16 tiny K=171 dots of the previous version).
    z1 = jnp.maximum(
        jnp.dot(g, fc1w_ref[...], preferred_element_type=jnp.float32)
        + fc1b_ref[...], 0.0)                                 # (BB, 32)
    # Dropout(p=0.5): identity at inference.
    z2 = jnp.maximum(
        jnp.dot(z1, fc2w_ref[...], preferred_element_type=jnp.float32)
        + fc2b_ref[...], 0.0)                                 # (BB, 32)
    # Dropout(p=0.5): identity at inference.
    o_ref[...] = (jnp.dot(z2, fc3w_ref[...], preferred_element_type=jnp.float32)
                  + fc3b_ref[...])                            # (BB, 128)


# ----------------------------------------------------------------------------
# Wrapper-side weight prep (layout only; traced once per call / jit)
# ----------------------------------------------------------------------------
def _build_conv_mat(w, in_size):
    """(out_ch, in_ch, 3, 3) conv weight -> dense lane-flat shift matrix.

    Maps input index ic*in_size^2 + y*in_size + x to output index
    oc*out_size^2 + y*out_size + x (valid convolution).
    """
    out_ch, in_ch, kh, kw = w.shape
    out_size = in_size - kh + 1
    oc, ic, dy, dx, y, x = np.meshgrid(
        np.arange(out_ch), np.arange(in_ch), np.arange(kh), np.arange(kw),
        np.arange(out_size), np.arange(out_size), indexing="ij")
    rows = (ic * in_size * in_size + (y + dy) * in_size + (x + dx)).reshape(-1)
    cols = (oc * out_size * out_size + y * out_size + x).reshape(-1)
    vals = w.astype(jnp.float32)[oc.reshape(-1), ic.reshape(-1),
                                 dy.reshape(-1), dx.reshape(-1)]
    mat = jnp.zeros((in_ch * in_size * in_size, out_ch * out_size * out_size),
                    jnp.float32)
    return mat.at[rows, cols].set(vals)


def _build_fc1_mat(fc1_w):
    """torch fc1 weight (32, 576), CHW flatten -> zero-padded (PW, 32).

    Row j = oc*144 + (2*py)*12 + 2*px (the uncompacted pooled column) carries
    the fc1 column for flattened input index oc*36 + py*6 + px; all other rows
    are zero.
    """
    oc, py, px = np.meshgrid(np.arange(16), np.arange(6), np.arange(6),
                             indexing="ij")
    rows = (oc * 144 + (2 * py) * 12 + 2 * px).reshape(-1)
    src = (oc * 36 + py * 6 + px).reshape(-1)
    w_t = fc1_w.astype(jnp.float32).T                          # (576, 32)
    return jnp.zeros((PW, 32), jnp.float32).at[rows, :].set(w_t[src, :])


def _round_up(a, m):
    return ((a + m - 1) // m) * m


# ----------------------------------------------------------------------------
# Forward pass (single fused pallas_call)
# ----------------------------------------------------------------------------
def cnn_forward(x_nchw, params):
    B = x_nchw.shape[0]
    # Batch block: up to 128 rows, multiple of 8, and (when the batch allows it)
    # small enough that the grid has >= 2 steps so both v7x TCs get work.
    bb = min(MAX_BLOCK_B, max(8, _round_up(-(-B // 2), 8)))
    Bp = _round_up(B, bb)
    xv = x_nchw.astype(jnp.float32).reshape(B, IMG * IMG)      # C == 1: pure reshape
    if Bp != B:
        xv = jnp.pad(xv, ((0, Bp - B), (0, 0)))

    w1m = _build_conv_mat(params["conv1_w"], IMG).astype(jnp.bfloat16)   # (256, 784)
    b1m = jnp.repeat(params["conv1_b"].astype(jnp.float32), 14 * 14).reshape(1, H1N)
    w2m = _build_conv_mat(params["conv2_w"], 14).astype(jnp.bfloat16)    # (784, 2304)
    b2m = jnp.repeat(params["conv2_b"].astype(jnp.float32), 12 * 12).reshape(1, H2N)
    fc1w = _build_fc1_mat(params["fc1_w"])                               # (2291, 32)
    fc1b = params["fc1_b"].astype(jnp.float32).reshape(1, 32)
    fc2w = params["fc2_w"].astype(jnp.float32).T                         # (32, 32)
    fc2b = params["fc2_b"].astype(jnp.float32).reshape(1, 32)
    fc3w = jnp.zeros((32, NOUT_PAD), jnp.float32).at[:, :NOUT].set(
        params["fc3_w"].astype(jnp.float32).T)                           # (32, 128)
    fc3b = jnp.zeros((1, NOUT_PAD), jnp.float32).at[:, :NOUT].set(
        params["fc3_b"].astype(jnp.float32).reshape(1, NOUT))            # (1, 128)

    def const(*shape):
        return pl.BlockSpec(shape, lambda i: (0,) * len(shape))

    out = pl.pallas_call(
        cnn_fused_kernel,
        out_shape=jax.ShapeDtypeStruct((Bp, NOUT_PAD), jnp.float32),
        grid=(Bp // bb,),
        in_specs=[
            pl.BlockSpec((bb, IMG * IMG), lambda i: (i, 0)),   # x
            const(256, H1N),        # conv1 shift matrix (bf16)
            const(1, H1N),          # conv1 bias (f32)
            const(H1N, H2N),        # conv2 shift matrix (bf16)
            const(1, H2N),          # conv2 bias (f32)
            const(PW, 32),          # fc1 weight (zero-padded, reordered)
            const(1, 32),           # fc1 bias
            const(32, 32),          # fc2 weight
            const(1, 32),           # fc2 bias
            const(32, NOUT_PAD),    # fc3 weight (lane-padded)
            const(1, NOUT_PAD),     # fc3 bias (lane-padded)
        ],
        out_specs=pl.BlockSpec((bb, NOUT_PAD), lambda i: (i, 0)),
        compiler_params=pltpu.CompilerParams(
            dimension_semantics=("parallel",),
            vmem_limit_bytes=48 * 1024 * 1024),
    )(xv, w1m, b1m, w2m, b2m, fc1w, fc1b, fc2w, fc2b, fc3w, fc3b)
    return out[:B, :NOUT]                                       # (B, 2)


# ----------------------------------------------------------------------------
# Deterministic parameter init (synthetic weights, torch-style shapes)
# ----------------------------------------------------------------------------
def init_params(key):
    ks = jax.random.split(key, 10)
    s = 0.1
    return {
        "conv1_w": s * jax.random.normal(ks[0], (4, 1, 3, 3), jnp.float32),
        "conv1_b": s * jax.random.normal(ks[1], (4,), jnp.float32),
        "conv2_w": s * jax.random.normal(ks[2], (16, 4, 3, 3), jnp.float32),
        "conv2_b": s * jax.random.normal(ks[3], (16,), jnp.float32),
        "fc1_w":   s * jax.random.normal(ks[4], (32, 16 * 6 * 6), jnp.float32),
        "fc1_b":   s * jax.random.normal(ks[5], (32,), jnp.float32),
        "fc2_w":   s * jax.random.normal(ks[6], (32, 32), jnp.float32),
        "fc2_b":   s * jax.random.normal(ks[7], (32,), jnp.float32),
        "fc3_w":   s * jax.random.normal(ks[8], (2, 32), jnp.float32),
        "fc3_b":   s * jax.random.normal(ks[9], (2,), jnp.float32),
    }


if __name__ == "__main__":
    key = jax.random.PRNGKey(0)
    kx, kp = jax.random.split(key)
    # Input implied by fc1 in_features = 16*6*6: (B, 1, 16, 16) NCHW.
    x = jax.random.normal(kx, (2, 1, 16, 16), jnp.float32)
    params = init_params(kp)

    out = jax.jit(cnn_forward)(x, params)
    out = jax.block_until_ready(out)
    assert out.shape == (2, 2) and out.dtype == jnp.float32
    print("KERNEL_OK")
</pallas_src>

<mosaic_0001>
module attributes {stable_mosaic.version = 11 : i64} {
  func.func @cnn_fused_kernel(%arg0: i32, %arg1: memref<8x256xf32, #tpu.memory_space<vmem>>, %arg2: memref<256x784xbf16, #tpu.memory_space<vmem>>, %arg3: memref<1x784xf32, #tpu.memory_space<vmem>>, %arg4: memref<784x2304xbf16, #tpu.memory_space<vmem>>, %arg5: memref<1x2304xf32, #tpu.memory_space<vmem>>, %arg6: memref<2291x32xf32, #tpu.memory_space<vmem>>, %arg7: memref<1x32xf32, #tpu.memory_space<vmem>>, %arg8: memref<32x32xf32, #tpu.memory_space<vmem>>, %arg9: memref<1x32xf32, #tpu.memory_space<vmem>>, %arg10: memref<32x128xf32, #tpu.memory_space<vmem>>, %arg11: memref<1x128xf32, #tpu.memory_space<vmem>>, %arg12: memref<8x128xf32, #tpu.memory_space<vmem>>) attributes {dimension_semantics = [#tpu.dimension_semantics<parallel>], iteration_bounds = array<i64: 1>, scalar_prefetch = 0 : i64, scratch_operands = 0 : i64, tpu.core_type = #tpu.core_type<tc>, window_params = [{transform_indices = @transform_0, window_bounds = array<i64: 8, 256>}, {pipeline_mode = #tpu.pipeline_mode<synchronous>, transform_indices = @transform_1, window_bounds = array<i64: 256, 784>}, {pipeline_mode = #tpu.pipeline_mode<synchronous>, transform_indices = @transform_2, window_bounds = array<i64: 1, 784>}, {pipeline_mode = #tpu.pipeline_mode<synchronous>, transform_indices = @transform_3, window_bounds = array<i64: 784, 2304>}, {pipeline_mode = #tpu.pipeline_mode<synchronous>, transform_indices = @transform_4, window_bounds = array<i64: 1, 2304>}, {pipeline_mode = #tpu.pipeline_mode<synchronous>, transform_indices = @transform_5, window_bounds = array<i64: 2291, 32>}, {pipeline_mode = #tpu.pipeline_mode<synchronous>, transform_indices = @transform_6, window_bounds = array<i64: 1, 32>}, {pipeline_mode = #tpu.pipeline_mode<synchronous>, transform_indices = @transform_7, window_bounds = array<i64: 32, 32>}, {pipeline_mode = #tpu.pipeline_mode<synchronous>, transform_indices = @transform_8, window_bounds = array<i64: 1, 32>}, {pipeline_mode = #tpu.pipeline_mode<synchronous>, transform_indices = @transform_9, window_bounds = array<i64: 32, 128>}, {pipeline_mode = #tpu.pipeline_mode<synchronous>, transform_indices = @transform_10, window_bounds = array<i64: 1, 128>}, {transform_indices = @transform_11, window_bounds = array<i64: 8, 128>}]} {
    %c0 = arith.constant 0 : index
    %c0_0 = arith.constant 0 : index
    %0 = vector.load %arg1[%c0, %c0_0] : memref<8x256xf32, #tpu.memory_space<vmem>>, vector<8x256xf32>
    %1 = arith.truncf %0 : vector<8x256xf32> to vector<8x256xbf16>
    %c0_1 = arith.constant 0 : index
    %c0_2 = arith.constant 0 : index
    %2 = vector.load %arg2[%c0_1, %c0_2] : memref<256x784xbf16, #tpu.memory_space<vmem>>, vector<256x784xbf16>
    %cst = arith.constant dense<0.000000e+00> : vector<8x784xf32>
    %3 = tpu.matmul %1, %2, %cst {dimension_numbers = #tpu.dot_dimension_numbers<[1], [0], [0], [1], [0, 0, 1, 1], [], []>} : vector<8x256xbf16>, vector<256x784xbf16>, vector<8x784xf32> -> vector<8x784xf32>
    %c0_3 = arith.constant 0 : index
    %c0_4 = arith.constant 0 : index
    %4 = vector.load %arg3[%c0_3, %c0_4] : memref<1x784xf32, #tpu.memory_space<vmem>>, vector<1x784xf32>
    %5 = vector.broadcast %4 : vector<1x784xf32> to vector<8x784xf32>
    %6 = arith.addf %3, %5 : vector<8x784xf32>
    %cst_5 = arith.constant 0.000000e+00 : f32
    %7 = vector.broadcast %cst_5 : f32 to vector<8x784xf32>
    %8 = arith.maximumf %6, %7 : vector<8x784xf32>
    %9 = arith.truncf %8 : vector<8x784xf32> to vector<8x784xbf16>
    %c0_6 = arith.constant 0 : index
    %c0_7 = arith.constant 0 : index
    %10 = vector.load %arg4[%c0_6, %c0_7] : memref<784x2304xbf16, #tpu.memory_space<vmem>>, vector<784x2304xbf16>
    %cst_8 = arith.constant dense<0.000000e+00> : vector<8x2304xf32>
    %11 = tpu.matmul %9, %10, %cst_8 {dimension_numbers = #tpu.dot_dimension_numbers<[1], [0], [0], [1], [0, 0, 1, 1], [], []>} : vector<8x784xbf16>, vector<784x2304xbf16>, vector<8x2304xf32> -> vector<8x2304xf32>
    %c0_9 = arith.constant 0 : index
    %c0_10 = arith.constant 0 : index
    %12 = vector.load %arg5[%c0_9, %c0_10] : memref<1x2304xf32, #tpu.memory_space<vmem>>, vector<1x2304xf32>
    %13 = vector.broadcast %12 : vector<1x2304xf32> to vector<8x2304xf32>
    %14 = arith.addf %11, %13 : vector<8x2304xf32>
    %cst_11 = arith.constant 0.000000e+00 : f32
    %15 = vector.broadcast %cst_11 : f32 to vector<8x2304xf32>
    %16 = arith.maximumf %14, %15 : vector<8x2304xf32>
    %17 = vector.extract_strided_slice %16 {offsets = [0, 0], sizes = [8, 2291], strides = [1, 1]} : vector<8x2304xf32> to vector<8x2291xf32>
    %18 = vector.extract_strided_slice %16 {offsets = [0, 1], sizes = [8, 2291], strides = [1, 1]} : vector<8x2304xf32> to vector<8x2291xf32>
    %19 = arith.maximumf %17, %18 : vector<8x2291xf32>
    %20 = vector.extract_strided_slice %16 {offsets = [0, 12], sizes = [8, 2291], strides = [1, 1]} : vector<8x2304xf32> to vector<8x2291xf32>
    %21 = vector.extract_strided_slice %16 {offsets = [0, 13], sizes = [8, 2291], strides = [1, 1]} : vector<8x2304xf32> to vector<8x2291xf32>
    %22 = arith.maximumf %20, %21 : vector<8x2291xf32>
    %23 = arith.maximumf %19, %22 : vector<8x2291xf32>
    %c0_12 = arith.constant 0 : index
    %c0_13 = arith.constant 0 : index
    %24 = vector.load %arg6[%c0_12, %c0_13] : memref<2291x32xf32, #tpu.memory_space<vmem>>, vector<2291x32xf32>
    %cst_14 = arith.constant dense<0.000000e+00> : vector<8x32xf32>
    %25 = tpu.matmul %23, %24, %cst_14 {dimension_numbers = #tpu.dot_dimension_numbers<[1], [0], [0], [1], [0, 0, 1, 1], [], []>} : vector<8x2291xf32>, vector<2291x32xf32>, vector<8x32xf32> -> vector<8x32xf32>
    %c0_15 = arith.constant 0 : index
    %c0_16 = arith.constant 0 : index
    %26 = vector.load %arg7[%c0_15, %c0_16] : memref<1x32xf32, #tpu.memory_space<vmem>>, vector<1x32xf32>
    %27 = vector.broadcast %26 : vector<1x32xf32> to vector<8x32xf32>
    %28 = arith.addf %25, %27 : vector<8x32xf32>
    %cst_17 = arith.constant 0.000000e+00 : f32
    %29 = vector.broadcast %cst_17 : f32 to vector<8x32xf32>
    %30 = arith.maximumf %28, %29 : vector<8x32xf32>
    %c0_18 = arith.constant 0 : index
    %c0_19 = arith.constant 0 : index
    %31 = vector.load %arg8[%c0_18, %c0_19] : memref<32x32xf32, #tpu.memory_space<vmem>>, vector<32x32xf32>
    %cst_20 = arith.constant dense<0.000000e+00> : vector<8x32xf32>
    %32 = tpu.matmul %30, %31, %cst_20 {dimension_numbers = #tpu.dot_dimension_numbers<[1], [0], [0], [1], [0, 0, 1, 1], [], []>} : vector<8x32xf32>, vector<32x32xf32>, vector<8x32xf32> -> vector<8x32xf32>
    %c0_21 = arith.constant 0 : index
    %c0_22 = arith.constant 0 : index
    %33 = vector.load %arg9[%c0_21, %c0_22] : memref<1x32xf32, #tpu.memory_space<vmem>>, vector<1x32xf32>
    %34 = vector.broadcast %33 : vector<1x32xf32> to vector<8x32xf32>
    %35 = arith.addf %32, %34 : vector<8x32xf32>
    %cst_23 = arith.constant 0.000000e+00 : f32
    %36 = vector.broadcast %cst_23 : f32 to vector<8x32xf32>
    %37 = arith.maximumf %35, %36 : vector<8x32xf32>
    %c0_24 = arith.constant 0 : index
    %c0_25 = arith.constant 0 : index
    %38 = vector.load %arg10[%c0_24, %c0_25] : memref<32x128xf32, #tpu.memory_space<vmem>>, vector<32x128xf32>
    %cst_26 = arith.constant dense<0.000000e+00> : vector<8x128xf32>
    %39 = tpu.matmul %37, %38, %cst_26 {dimension_numbers = #tpu.dot_dimension_numbers<[1], [0], [0], [1], [0, 0, 1, 1], [], []>} : vector<8x32xf32>, vector<32x128xf32>, vector<8x128xf32> -> vector<8x128xf32>
    %c0_27 = arith.constant 0 : index
    %c0_28 = arith.constant 0 : index
    %40 = vector.load %arg11[%c0_27, %c0_28] : memref<1x128xf32, #tpu.memory_space<vmem>>, vector<1x128xf32>
    %41 = vector.broadcast %40 : vector<1x128xf32> to vector<8x128xf32>
    %42 = arith.addf %39, %41 : vector<8x128xf32>
    %c0_29 = arith.constant 0 : index
    %c0_30 = arith.constant 0 : index
    %43 = vector.load %arg12[%c0_29, %c0_30] : memref<8x128xf32, #tpu.memory_space<vmem>>, vector<8x128xf32>
    tpu.vector_store %arg12[%c0_29, %c0_30], %42 {strides = array<i32>} : memref<8x128xf32, #tpu.memory_space<vmem>>, vector<8x128xf32>,
    return
  }
  func.func @transform_0(%arg0: i32) -> (i32, i32) {
    %c0_i32 = arith.constant 0 : i32
    %c0_i32_0 = arith.constant 0 : i32
    return %arg0, %c0_i32 : i32, i32
  }
  func.func @transform_1(%arg0: i32) -> (i32, i32) {
    %c0_i32 = arith.constant 0 : i32
    %c0_i32_0 = arith.constant 0 : i32
    %c0_i32_1 = arith.constant 0 : i32
    return %c0_i32, %c0_i32_0 : i32, i32
  }
  func.func @transform_2(%arg0: i32) -> (i32, i32) {
    %c0_i32 = arith.constant 0 : i32
    %c0_i32_0 = arith.constant 0 : i32
    %c0_i32_1 = arith.constant 0 : i32
    return %c0_i32, %c0_i32_0 : i32, i32
  }
  func.func @transform_3(%arg0: i32) -> (i32, i32) {
    %c0_i32 = arith.constant 0 : i32
    %c0_i32_0 = arith.constant 0 : i32
    %c0_i32_1 = arith.constant 0 : i32
    return %c0_i32, %c0_i32_0 : i32, i32
  }
  func.func @transform_4(%arg0: i32) -> (i32, i32) {
    %c0_i32 = arith.constant 0 : i32
    %c0_i32_0 = arith.constant 0 : i32
    %c0_i32_1 = arith.constant 0 : i32
    return %c0_i32, %c0_i32_0 : i32, i32
  }
  func.func @transform_5(%arg0: i32) -> (i32, i32) {
    %c0_i32 = arith.constant 0 : i32
    %c0_i32_0 = arith.constant 0 : i32
    %c0_i32_1 = arith.constant 0 : i32
    return %c0_i32, %c0_i32_0 : i32, i32
  }
  func.func @transform_6(%arg0: i32) -> (i32, i32) {
    %c0_i32 = arith.constant 0 : i32
    %c0_i32_0 = arith.constant 0 : i32
    %c0_i32_1 = arith.constant 0 : i32
    return %c0_i32, %c0_i32_0 : i32, i32
  }
  func.func @transform_7(%arg0: i32) -> (i32, i32) {
    %c0_i32 = arith.constant 0 : i32
    %c0_i32_0 = arith.constant 0 : i32
    %c0_i32_1 = arith.constant 0 : i32
    return %c0_i32, %c0_i32_0 : i32, i32
  }
  func.func @transform_8(%arg0: i32) -> (i32, i32) {
    %c0_i32 = arith.constant 0 : i32
    %c0_i32_0 = arith.constant 0 : i32
    %c0_i32_1 = arith.constant 0 : i32
    return %c0_i32, %c0_i32_0 : i32, i32
  }
  func.func @transform_9(%arg0: i32) -> (i32, i32) {
    %c0_i32 = arith.constant 0 : i32
    %c0_i32_0 = arith.constant 0 : i32
    %c0_i32_1 = arith.constant 0 : i32
    return %c0_i32, %c0_i32_0 : i32, i32
  }
  func.func @transform_10(%arg0: i32) -> (i32, i32) {
    %c0_i32 = arith.constant 0 : i32
    %c0_i32_0 = arith.constant 0 : i32
    %c0_i32_1 = arith.constant 0 : i32
    return %c0_i32, %c0_i32_0 : i32, i32
  }
  func.func @transform_11(%arg0: i32) -> (i32, i32) {
    %c0_i32 = arith.constant 0 : i32
    %c0_i32_0 = arith.constant 0 : i32
    return %arg0, %c0_i32 : i32, i32
  }
}

</mosaic_0001>

<llo_original>
// kernel: cnn_forward.1
$region0: #{cnn_forward.1}
  #allocation0 [shape = 'u32[]', space=smem, size = 0x4, offset = 0x4, fixed_abs, tag = 'smem constant byte address 0x4 - core index']
  #allocation1 [shape = 'u32[144,128]{1,0:T(1,128)}', space=vmem, size = 0x12000, scoped, tag = 'internal scratch']
  %s0 = inlined_call_operand.vmem [shape: f32[8,256], index: 0, kind: input, shape index: {}]
  %s1 = inlined_call_operand.vmem [shape: bf16[256,784], index: 1, kind: input, shape index: {}]
  %s2 = inlined_call_operand.vmem [shape: f32[1,784], index: 2, kind: input, shape index: {}]
  %s3 = inlined_call_operand.vmem [shape: bf16[784,2304], index: 3, kind: input, shape index: {}]
  %s4 = inlined_call_operand.vmem [shape: f32[1,2304], index: 4, kind: input, shape index: {}]
  %s5 = inlined_call_operand.vmem [shape: f32[2291,32], index: 5, kind: input, shape index: {}]
  %s6 = inlined_call_operand.vmem [shape: f32[1,32], index: 6, kind: input, shape index: {}]
  %s7 = inlined_call_operand.vmem [shape: f32[32,32], index: 7, kind: input, shape index: {}]
  %s8 = inlined_call_operand.vmem [shape: f32[1,32], index: 8, kind: input, shape index: {}]
  %s9 = inlined_call_operand.vmem [shape: f32[32,128], index: 9, kind: input, shape index: {}]
  %s10 = inlined_call_operand.vmem [shape: f32[1,128], index: 10, kind: input, shape index: {}]
  %s11 = inlined_call_operand.vmem [shape: f32[8,128], index: 11, kind: output, shape index: {}]
  %s12 = sld [smem:[#allocation0]]
  $region54: #{cnn_forward.1} parent=0
    _
  %s14 = ssub.s32 1, %s12
  %s15 = scalar_select 0, %s14, %s12
  // Predicated region
  $region2: #{cnn_forward.1} parent=0 // pred_check
    _
  $region3: #{cnn_forward.1} parent=0 // pred_check_branch
    %17 = sbr.rel (0) target = $region5
  $region4: #{cnn_forward.1} parent=0 // pred_region
    _
  $region5: #{cnn_forward.1} parent=0 // pred_fallthru
    _
  // Predicated region
  $region6: #{cnn_forward.1} parent=0 // pred_check
    _
  $region7: #{cnn_forward.1} parent=0 // pred_check_branch
    %19 = sbr.rel (0) target = $region9
  $region8: #{cnn_forward.1} parent=0 // pred_region
    _
  $region9: #{cnn_forward.1} parent=0 // pred_fallthru
    _
  // Predicated region
  $region10: #{cnn_forward.1} parent=0 // pred_check
    _
  $region11: #{cnn_forward.1} parent=0 // pred_check_branch
    %21 = sbr.rel (0) target = $region13
  $region12: #{cnn_forward.1} parent=0 // pred_region
    _
  $region13: #{cnn_forward.1} parent=0 // pred_fallthru
    _
  // Predicated region
  $region14: #{cnn_forward.1} parent=0 // pred_check
    _
  $region15: #{cnn_forward.1} parent=0 // pred_check_branch
    %23 = sbr.rel (0) target = $region17
  $region16: #{cnn_forward.1} parent=0 // pred_region
    _
  $region17: #{cnn_forward.1} parent=0 // pred_fallthru
    _
  // Predicated region
  $region18: #{cnn_forward.1} parent=0 // pred_check
    _
  $region19: #{cnn_forward.1} parent=0 // pred_check_branch
    %25 = sbr.rel (0) target = $region21
  $region20: #{cnn_forward.1} parent=0 // pred_region
    _
  $region21: #{cnn_forward.1} parent=0 // pred_fallthru
    _
  // Predicated region
  $region22: #{cnn_forward.1} parent=0 // pred_check
    _
  $region23: #{cnn_forward.1} parent=0 // pred_check_branch
    %27 = sbr.rel (0) target = $region25
  $region24: #{cnn_forward.1} parent=0 // pred_region
    _
  $region25: #{cnn_forward.1} parent=0 // pred_fallthru
    _
  // Predicated region
  $region26: #{cnn_forward.1} parent=0 // pred_check
    _
  $region27: #{cnn_forward.1} parent=0 // pred_check_branch
    %29 = sbr.rel (0) target = $region29
  $region28: #{cnn_forward.1} parent=0 // pred_region
    _
  $region29: #{cnn_forward.1} parent=0 // pred_fallthru
    _
  // Predicated region
  $region30: #{cnn_forward.1} parent=0 // pred_check
    _
  $region31: #{cnn_forward.1} parent=0 // pred_check_branch
    %31 = sbr.rel (0) target = $region33
  $region32: #{cnn_forward.1} parent=0 // pred_region
    _
  $region33: #{cnn_forward.1} parent=0 // pred_fallthru
    _
  // Predicated region
  $region34: #{cnn_forward.1} parent=0 // pred_check
    _
  $region35: #{cnn_forward.1} parent=0 // pred_check_branch
    %33 = sbr.rel (0) target = $region37
  $region36: #{cnn_forward.1} parent=0 // pred_region
    _
  $region37: #{cnn_forward.1} parent=0 // pred_fallthru
    _
  // Predicated region
  $region38: #{cnn_forward.1} parent=0 // pred_check
    _
  $region39: #{cnn_forward.1} parent=0 // pred_check_branch
    %35 = sbr.rel (0) target = $region41
  $region40: #{cnn_forward.1} parent=0 // pred_region
    _
  $region41: #{cnn_forward.1} parent=0 // pred_fallthru
    _
  // Predicated region
  $region42: #{cnn_forward.1} parent=0 // pred_check
    _
  $region43: #{cnn_forward.1} parent=0 // pred_check_branch
    %37 = sbr.rel (0) target = $region45
  $region44: #{cnn_forward.1} parent=0 // pred_region
    _
  $region45: #{cnn_forward.1} parent=0 // pred_fallthru
    _
  %v39 = vld [vmem:[%s0] sm:$0xff]
  %v40 = vld [vmem:[%s0 + $0x8] sm:$0xff]
  %v41 = vpack.c.bf16 %v39, %v39
  %v42 = vpack.c.bf16 %v40, %v40
  %v43 = vld [vmem:[%s1] sm:$0xff]
  %v44 = vld [vmem:[%s1 + $0x8] sm:$0xff]
  %v45 = vld [vmem:[%s1 + $0x10] sm:$0xff]
  %v46 = vld [vmem:[%s1 + $0x18] sm:$0xf]
  %v47 = vld [vmem:[%s1 + $0x1c] sm:$0xff]
  %v48 = vld [vmem:[%s1 + $0x24] sm:$0xff]
  %v49 = vld [vmem:[%s1 + $0x2c] sm:$0xff]
  %v50 = vld [vmem:[%s1 + $0x34] sm:$0xf]
  %v51 = vld [vmem:[%s1 + $0x38] sm:$0xff]
  %v52 = vld [vmem:[%s1 + $0x40] sm:$0xff]
  %v53 = vld [vmem:[%s1 + $0x48] sm:$0xff]
  %v54 = vld [vmem:[%s1 + $0x50] sm:$0xf]
  %v55 = vld [vmem:[%s1 + $0x54] sm:$0xff]
  %v56 = vld [vmem:[%s1 + $0x5c] sm:$0xff]
  %v57 = vld [vmem:[%s1 + $0x64] sm:$0xff]
  %v58 = vld [vmem:[%s1 + $0x6c] sm:$0xf]
  %v59 = vld [vmem:[%s1 + $0x70] sm:$0xff]
  %v60 = vld [vmem:[%s1 + $0x78] sm:$0xff]
  %v61 = vld [vmem:[%s1 + $0x80] sm:$0xff]
  %v62 = vld [vmem:[%s1 + $0x88] sm:$0xf]
  %v63 = vld [vmem:[%s1 + $0x8c] sm:$0xff]
  %v64 = vld [vmem:[%s1 + $0x94] sm:$0xff]
  %v65 = vld [vmem:[%s1 + $0x9c] sm:$0xff]
  %v66 = vld [vmem:[%s1 + $0xa4] sm:$0xf]
  %v67 = vld [vmem:[%s1 + $0xa8] sm:$0xff]
  %v68 = vld [vmem:[%s1 + $0xb0] sm:$0xff]
  %v69 = vld [vmem:[%s1 + $0xb8] sm:$0xff]
  %v70 = vld [vmem:[%s1 + $0xc0] sm:$0xf]
  %v71 = vld [vmem:[%s1 + $0xc4] sm:$0xff]
  %v72 = vld [vmem:[%s1 + $0xcc] sm:$0xff]
  %v73 = vld [vmem:[%s1 + $0xd4] sm:$0xff]
  %v74 = vld [vmem:[%s1 + $0xdc] sm:$0xf]
  %v75 = vld [vmem:[%s1 + $0xe0] sm:$0xff]
  %v76 = vld [vmem:[%s1 + $0xe8] sm:$0xff]
  %v77 = vld [vmem:[%s1 + $0xf0] sm:$0xff]
  %v78 = vld [vmem:[%s1 + $0xf8] sm:$0xf]
  %v79 = vld [vmem:[%s1 + $0xfc] sm:$0xff]
  %v80 = vld [vmem:[%s1 + $0x104] sm:$0xff]
  %v81 = vld [vmem:[%s1 + $0x10c] sm:$0xff]
  %v82 = vld [vmem:[%s1 + $0x114] sm:$0xf]
  %v83 = vld [vmem:[%s1 + $0x118] sm:$0xff]
  %v84 = vld [vmem:[%s1 + $0x120] sm:$0xff]
  %v85 = vld [vmem:[%s1 + $0x128] sm:$0xff]
  %v86 = vld [vmem:[%s1 + $0x130] sm:$0xf]
  %v87 = vld [vmem:[%s1 + $0x134] sm:$0xff]
  %v88 = vld [vmem:[%s1 + $0x13c] sm:$0xff]
  %v89 = vld [vmem:[%s1 + $0x144] sm:$0xff]
  %v90 = vld [vmem:[%s1 + $0x14c] sm:$0xf]
  %v91 = vld [vmem:[%s1 + $0x150] sm:$0xff]
  %v92 = vld [vmem:[%s1 + $0x158] sm:$0xff]
  %v93 = vld [vmem:[%s1 + $0x160] sm:$0xff]
  %v94 = vld [vmem:[%s1 + $0x168] sm:$0xf]
  %v95 = vld [vmem:[%s1 + $0x16c] sm:$0xff]
  %v96 = vld [vmem:[%s1 + $0x174] sm:$0xff]
  %v97 = vld [vmem:[%s1 + $0x17c] sm:$0xff]
  %v98 = vld [vmem:[%s1 + $0x184] sm:$0xf]
  %v99 = vld [vmem:[%s1 + $0x188] sm:$0xff]
  %v100 = vld [vmem:[%s1 + $0x190] sm:$0xff]
  %v101 = vld [vmem:[%s1 + $0x198] sm:$0xff]
  %v102 = vld [vmem:[%s1 + $0x1a0] sm:$0xf]
  %v103 = vld [vmem:[%s1 + $0x1a4] sm:$0xff]
  %v104 = vld [vmem:[%s1 + $0x1ac] sm:$0xff]
  %v105 = vld [vmem:[%s1 + $0x1b4] sm:$0xff]
  %v106 = vld [vmem:[%s1 + $0x1bc] sm:$0xf]
  %v107 = vld [vmem:[%s1 + $0x1c0] sm:$0xff]
  %v108 = vld [vmem:[%s1 + $0x1c8] sm:$0xff]
  %v109 = vld [vmem:[%s1 + $0x1d0] sm:$0xff]
  %v110 = vld [vmem:[%s1 + $0x1d8] sm:$0xf]
  %v111 = vld [vmem:[%s1 + $0x1dc] sm:$0xff]
  %v112 = vld [vmem:[%s1 + $0x1e4] sm:$0xff]
  %v113 = vld [vmem:[%s1 + $0x1ec] sm:$0xff]
  %v114 = vld [vmem:[%s1 + $0x1f4] sm:$0xf]
  %v115 = vld [vmem:[%s1 + $0x1f8] sm:$0xff]
  %v116 = vld [vmem:[%s1 + $0x200] sm:$0xff]
  %v117 = vld [vmem:[%s1 + $0x208] sm:$0xff]
  %v118 = vld [vmem:[%s1 + $0x210] sm:$0xf]
  %v119 = vld [vmem:[%s1 + $0x214] sm:$0xff]
  %v120 = vld [vmem:[%s1 + $0x21c] sm:$0xff]
  %v121 = vld [vmem:[%s1 + $0x224] sm:$0xff]
  %v122 = vld [vmem:[%s1 + $0x22c] sm:$0xf]
  %v123 = vld [vmem:[%s1 + $0x230] sm:$0xff]
  %v124 = vld [vmem:[%s1 + $0x238] sm:$0xff]
  %v125 = vld [vmem:[%s1 + $0x240] sm:$0xff]
  %v126 = vld [vmem:[%s1 + $0x248] sm:$0xf]
  %v127 = vld [vmem:[%s1 + $0x24c] sm:$0xff]
  %v128 = vld [vmem:[%s1 + $0x254] sm:$0xff]
  %v129 = vld [vmem:[%s1 + $0x25c] sm:$0xff]
  %v130 = vld [vmem:[%s1 + $0x264] sm:$0xf]
  %v131 = vld [vmem:[%s1 + $0x268] sm:$0xff]
  %v132 = vld [vmem:[%s1 + $0x270] sm:$0xff]
  %v133 = vld [vmem:[%s1 + $0x278] sm:$0xff]
  %v134 = vld [vmem:[%s1 + $0x280] sm:$0xf]
  %v135 = vld [vmem:[%s1 + $0x284] sm:$0xff]
  %v136 = vld [vmem:[%s1 + $0x28c] sm:$0xff]
  %v137 = vld [vmem:[%s1 + $0x294] sm:$0xff]
  %v138 = vld [vmem:[%s1 + $0x29c] sm:$0xf]
  %v139 = vld [vmem:[%s1 + $0x2a0] sm:$0xff]
  %v140 = vld [vmem:[%s1 + $0x2a8] sm:$0xff]
  %v141 = vld [vmem:[%s1 + $0x2b0] sm:$0xff]
  %v142 = vld [vmem:[%s1 + $0x2b8] sm:$0xf]
  %v143 = vld [vmem:[%s1 + $0x2bc] sm:$0xff]
  %v144 = vld [vmem:[%s1 + $0x2c4] sm:$0xff]
  %v145 = vld [vmem:[%s1 + $0x2cc] sm:$0xff]
  %v146 = vld [vmem:[%s1 + $0x2d4] sm:$0xf]
  %v147 = vld [vmem:[%s1 + $0x2d8] sm:$0xff]
  %v148 = vld [vmem:[%s1 + $0x2e0] sm:$0xff]
  %v149 = vld [vmem:[%s1 + $0x2e8] sm:$0xff]
  %v150 = vld [vmem:[%s1 + $0x2f0] sm:$0xf]
  %v151 = vld [vmem:[%s1 + $0x2f4] sm:$0xff]
  %v152 = vld [vmem:[%s1 + $0x2fc] sm:$0xff]
  %v153 = vld [vmem:[%s1 + $0x304] sm:$0xff]
  %v154 = vld [vmem:[%s1 + $0x30c] sm:$0xf]
  %v155 = vld [vmem:[%s1 + $0x310] sm:$0xff]
  %v156 = vld [vmem:[%s1 + $0x318] sm:$0xff]
  %v157 = vld [vmem:[%s1 + $0x320] sm:$0xff]
  %v158 = vld [vmem:[%s1 + $0x328] sm:$0xf]
  %v159 = vld [vmem:[%s1 + $0x32c] sm:$0xff]
  %v160 = vld [vmem:[%s1 + $0x334] sm:$0xff]
  %v161 = vld [vmem:[%s1 + $0x33c] sm:$0xff]
  %v162 = vld [vmem:[%s1 + $0x344] sm:$0xf]
  %v163 = vld [vmem:[%s1 + $0x348] sm:$0xff]
  %v164 = vld [vmem:[%s1 + $0x350] sm:$0xff]
  %v165 = vld [vmem:[%s1 + $0x358] sm:$0xff]
  %v166 = vld [vmem:[%s1 + $0x360] sm:$0xf]
  %v167 = vld [vmem:[%s1 + $0x364] sm:$0xff]
  %v168 = vld [vmem:[%s1 + $0x36c] sm:$0xff]
  %v169 = vld [vmem:[%s1 + $0x374] sm:$0xff]
  %v170 = vld [vmem:[%s1 + $0x37c] sm:$0xf]
  %v171 = vld [vmem:[%s2] sm:$0x7f]
  %v173 = vlaneseq
  %v174 = vshrl.u32 %v173, 7
  %v175 = vsub.s32 0, %v174
  %v176 = vrot.slane %v171, %v175
  %v177 = vlaneseq
  %v178 = vshrl.u32 %v177, 7
  %v179 = vsub.s32 1, %v178
  %v180 = vrot.slane %v171, %v179
  %v181 = vlaneseq
  %v182 = vshrl.u32 %v181, 7
  %v183 = vsub.s32 2, %v182
  %v184 = vrot.slane %v171, %v183
  %v185 = vlaneseq
  %v186 = vshrl.u32 %v185, 7
  %v187 = vsub.s32 3, %v186
  %v188 = vrot.slane %v171, %v187
  %v189 = vlaneseq
  %v190 = vshrl.u32 %v189, 7
  %v191 = vsub.s32 4, %v190
  %v192 = vrot.slane %v171, %v191
  %v193 = vlaneseq
  %v194 = vshrl.u32 %v193, 7
  %v195 = vsub.s32 5, %v194
  %v196 = vrot.slane %v171, %v195
  %v197 = vlaneseq
  %v198 = vshrl.u32 %v197, 7
  %v199 = vsub.s32 6, %v198
  %v200 = vrot.slane %v171, %v199
  %v336 = vunpack.c.l.b16 %v43
  %v337 = vunpack.c.h.b16 %v43
  %v338 = vunpack.c.l.b16 %v44
  %v339 = vunpack.c.h.b16 %v44
  %v340 = vunpack.c.l.b16 %v45
  %v341 = vunpack.c.h.b16 %v45
  %v342 = vunpack.c.l.b16 %v46
  %v343 = vunpack.c.l.b16 %v47
  %v344 = vunpack.c.h.b16 %v47
  %v345 = vunpack.c.l.b16 %v48
  %v346 = vunpack.c.h.b16 %v48
  %v347 = vunpack.c.l.b16 %v49
  %v348 = vunpack.c.h.b16 %v49
  %v349 = vunpack.c.l.b16 %v50
  %v350 = vunpack.c.l.b16 %v51
  %v351 = vunpack.c.h.b16 %v51
  %v352 = vunpack.c.l.b16 %v52
  %v353 = vunpack.c.h.b16 %v52
  %v354 = vunpack.c.l.b16 %v53
  %v355 = vunpack.c.h.b16 %v53
  %v356 = vunpack.c.l.b16 %v54
  %v357 = vunpack.c.l.b16 %v55
  %v358 = vunpack.c.h.b16 %v55
  %v359 = vunpack.c.l.b16 %v56
  %v360 = vunpack.c.h.b16 %v56
  %v361 = vunpack.c.l.b16 %v57
  %v362 = vunpack.c.h.b16 %v57
  %v363 = vunpack.c.l.b16 %v58
  %v364 = vunpack.c.l.b16 %v59
  %v365 = vunpack.c.h.b16 %v59
  %v366 = vunpack.c.l.b16 %v60
  %v367 = vunpack.c.h.b16 %v60
  %v368 = vunpack.c.l.b16 %v61
  %v369 = vunpack.c.h.b16 %v61
  %v370 = vunpack.c.l.b16 %v62
  %v371 = vunpack.c.l.b16 %v63
  %v372 = vunpack.c.h.b16 %v63
  %v373 = vunpack.c.l.b16 %v64
  %v374 = vunpack.c.h.b16 %v64
  %v375 = vunpack.c.l.b16 %v65
  %v376 = vunpack.c.h.b16 %v65
  %v377 = vunpack.c.l.b16 %v66
  %v378 = vunpack.c.l.b16 %v67
  %v379 = vunpack.c.h.b16 %v67
  %v380 = vunpack.c.l.b16 %v68
  %v381 = vunpack.c.h.b16 %v68
  %v382 = vunpack.c.l.b16 %v69
  %v383 = vunpack.c.h.b16 %v69
  %v384 = vunpack.c.l.b16 %v70
  %v385 = vunpack.c.l.b16 %v71
  %v386 = vunpack.c.h.b16 %v71
  %v387 = vunpack.c.l.b16 %v72
  %v388 = vunpack.c.h.b16 %v72
  %v389 = vunpack.c.l.b16 %v73
  %v390 = vunpack.c.h.b16 %v73
  %v391 = vunpack.c.l.b16 %v74
  %v392 = vunpack.c.l.b16 %v75
  %v393 = vunpack.c.h.b16 %v75
  %v394 = vunpack.c.l.b16 %v76
  %v395 = vunpack.c.h.b16 %v76
  %v396 = vunpack.c.l.b16 %v77
  %v397 = vunpack.c.h.b16 %v77
  %v398 = vunpack.c.l.b16 %v78
  %v399 = vunpack.c.l.b16 %v79
  %v400 = vunpack.c.h.b16 %v79
  %v401 = vunpack.c.l.b16 %v80
  %v402 = vunpack.c.h.b16 %v80
  %v403 = vunpack.c.l.b16 %v81
  %v404 = vunpack.c.h.b16 %v81
  %v405 = vunpack.c.l.b16 %v82
  %v406 = vunpack.c.l.b16 %v83
  %v407 = vunpack.c.h.b16 %v83
  %v408 = vunpack.c.l.b16 %v84
  %v409 = vunpack.c.h.b16 %v84
  %v410 = vunpack.c.l.b16 %v85
  %v411 = vunpack.c.h.b16 %v85
  %v412 = vunpack.c.l.b16 %v86
  %v413 = vunpack.c.l.b16 %v87
  %v414 = vunpack.c.h.b16 %v87
  %v415 = vunpack.c.l.b16 %v88
  %v416 = vunpack.c.h.b16 %v88
  %v417 = vunpack.c.l.b16 %v89
  %v418 = vunpack.c.h.b16 %v89
  %v419 = vunpack.c.l.b16 %v90
  %v420 = vunpack.c.l.b16 %v91
  %v421 = vunpack.c.h.b16 %v91
  %v422 = vunpack.c.l.b16 %v92
  %v423 = vunpack.c.h.b16 %v92
  %v424 = vunpack.c.l.b16 %v93
  %v425 = vunpack.c.h.b16 %v93
  %v426 = vunpack.c.l.b16 %v94
  %v427 = vunpack.c.l.b16 %v95
  %v428 = vunpack.c.h.b16 %v95
  %v429 = vunpack.c.l.b16 %v96
  %v430 = vunpack.c.h.b16 %v96
  %v431 = vunpack.c.l.b16 %v97
  %v432 = vunpack.c.h.b16 %v97
  %v433 = vunpack.c.l.b16 %v98
  %v434 = vunpack.c.l.b16 %v99
  %v435 = vunpack.c.h.b16 %v99
  %v436 = vunpack.c.l.b16 %v100
  %v437 = vunpack.c.h.b16 %v100
  %v438 = vunpack.c.l.b16 %v101
  %v439 = vunpack.c.h.b16 %v101
  %v440 = vunpack.c.l.b16 %v102
  %v441 = vunpack.c.l.b16 %v103
  %v442 = vunpack.c.h.b16 %v103
  %v443 = vunpack.c.l.b16 %v104
  %v444 = vunpack.c.h.b16 %v104
  %v445 = vunpack.c.l.b16 %v105
  %v446 = vunpack.c.h.b16 %v105
  %v447 = vunpack.c.l.b16 %v106
  %v448 = vunpack.c.l.b16 %v107
  %v449 = vunpack.c.h.b16 %v107
  %v450 = vunpack.c.l.b16 %v108
  %v451 = vunpack.c.h.b16 %v108
  %v452 = vunpack.c.l.b16 %v109
  %v453 = vunpack.c.h.b16 %v109
  %v454 = vunpack.c.l.b16 %v110
  %v455 = vunpack.c.l.b16 %v111
  %v456 = vunpack.c.h.b16 %v111
  %v457 = vunpack.c.l.b16 %v112
  %v458 = vunpack.c.h.b16 %v112
  %v459 = vunpack.c.l.b16 %v113
  %v460 = vunpack.c.h.b16 %v113
  %v461 = vunpack.c.l.b16 %v114
  %v462 = vunpack.c.l.b16 %v115
  %v463 = vunpack.c.h.b16 %v115
  %v464 = vunpack.c.l.b16 %v116
  %v465 = vunpack.c.h.b16 %v116
  %v466 = vunpack.c.l.b16 %v117
  %v467 = vunpack.c.h.b16 %v117
  %v468 = vunpack.c.l.b16 %v118
  %v469 = vunpack.c.l.b16 %v119
  %v470 = vunpack.c.h.b16 %v119
  %v471 = vunpack.c.l.b16 %v120
  %v472 = vunpack.c.h.b16 %v120
  %v473 = vunpack.c.l.b16 %v121
  %v474 = vunpack.c.h.b16 %v121
  %v475 = vunpack.c.l.b16 %v122
  %v476 = vunpack.c.l.b16 %v123
  %v477 = vunpack.c.h.b16 %v123
  %v478 = vunpack.c.l.b16 %v124
  %v479 = vunpack.c.h.b16 %v124
  %v480 = vunpack.c.l.b16 %v125
  %v481 = vunpack.c.h.b16 %v125
  %v482 = vunpack.c.l.b16 %v126
  %v483 = vunpack.c.l.b16 %v127
  %v484 = vunpack.c.h.b16 %v127
  %v485 = vunpack.c.l.b16 %v128
  %v486 = vunpack.c.h.b16 %v128
  %v487 = vunpack.c.l.b16 %v129
  %v488 = vunpack.c.h.b16 %v129
  %v489 = vunpack.c.l.b16 %v130
  %v490 = vunpack.c.l.b16 %v131
  %v491 = vunpack.c.h.b16 %v131
  %v492 = vunpack.c.l.b16 %v132
  %v493 = vunpack.c.h.b16 %v132
  %v494 = vunpack.c.l.b16 %v133
  %v495 = vunpack.c.h.b16 %v133
  %v496 = vunpack.c.l.b16 %v134
  %v497 = vunpack.c.l.b16 %v135
  %v498 = vunpack.c.h.b16 %v135
  %v499 = vunpack.c.l.b16 %v136
  %v500 = vunpack.c.h.b16 %v136
  %v501 = vunpack.c.l.b16 %v137
  %v502 = vunpack.c.h.b16 %v137
  %v503 = vunpack.c.l.b16 %v138
  %v504 = vunpack.c.l.b16 %v139
  %v505 = vunpack.c.h.b16 %v139
  %v506 = vunpack.c.l.b16 %v140
  %v507 = vunpack.c.h.b16 %v140
  %v508 = vunpack.c.l.b16 %v141
  %v509 = vunpack.c.h.b16 %v141
  %v510 = vunpack.c.l.b16 %v142
  %v511 = vunpack.c.l.b16 %v143
  %v512 = vunpack.c.h.b16 %v143
  %v513 = vunpack.c.l.b16 %v144
  %v514 = vunpack.c.h.b16 %v144
  %v515 = vunpack.c.l.b16 %v145
  %v516 = vunpack.c.h.b16 %v145
  %v517 = vunpack.c.l.b16 %v146
  %v518 = vunpack.c.l.b16 %v147
  %v519 = vunpack.c.h.b16 %v147
  %v520 = vunpack.c.l.b16 %v148
  %v521 = vunpack.c.h.b16 %v148
  %v522 = vunpack.c.l.b16 %v149
  %v523 = vunpack.c.h.b16 %v149
  %v524 = vunpack.c.l.b16 %v150
  %v525 = vunpack.c.l.b16 %v151
  %v526 = vunpack.c.h.b16 %v151
  %v527 = vunpack.c.l.b16 %v152
  %v528 = vunpack.c.h.b16 %v152
  %v529 = vunpack.c.l.b16 %v153
  %v530 = vunpack.c.h.b16 %v153
  %v531 = vunpack.c.l.b16 %v154
  %v532 = vunpack.c.l.b16 %v155
  %v533 = vunpack.c.h.b16 %v155
  %v534 = vunpack.c.l.b16 %v156
  %v535 = vunpack.c.h.b16 %v156
  %v536 = vunpack.c.l.b16 %v157
  %v537 = vunpack.c.h.b16 %v157
  %v538 = vunpack.c.l.b16 %v158
  %v539 = vunpack.c.l.b16 %v159
  %v540 = vunpack.c.h.b16 %v159
  %v541 = vunpack.c.l.b16 %v160
  %v542 = vunpack.c.h.b16 %v160
  %v543 = vunpack.c.l.b16 %v161
  %v544 = vunpack.c.h.b16 %v161
  %v545 = vunpack.c.l.b16 %v162
  %v546 = vunpack.c.l.b16 %v163
  %v547 = vunpack.c.h.b16 %v163
  %v548 = vunpack.c.l.b16 %v164
  %v549 = vunpack.c.h.b16 %v164
  %v550 = vunpack.c.l.b16 %v165
  %v551 = vunpack.c.h.b16 %v165
  %v552 = vunpack.c.l.b16 %v166
  %v553 = vunpack.c.l.b16 %v167
  %v554 = vunpack.c.h.b16 %v167
  %v555 = vunpack.c.l.b16 %v168
  %v556 = vunpack.c.h.b16 %v168
  %v557 = vunpack.c.l.b16 %v169
  %v558 = vunpack.c.h.b16 %v169
  %v559 = vunpack.c.l.b16 %v170
  %v560 = vpack.c.b16 %v343, %v336
  %v561 = vpack.c.b16 %v344, %v337
  %v562 = vpack.c.b16 %v345, %v338
  %v563 = vpack.c.b16 %v346, %v339
  %v564 = vpack.c.b16 %v347, %v340
  %v565 = vpack.c.b16 %v348, %v341
  %v566 = vpack.c.b16 %v349, %v342
  %v567 = vpack.c.b16 %v357, %v350
  %v568 = vpack.c.b16 %v358, %v351
  %v569 = vpack.c.b16 %v359, %v352
  %v570 = vpack.c.b16 %v360, %v353
  %v571 = vpack.c.b16 %v361, %v354
  %v572 = vpack.c.b16 %v362, %v355
  %v573 = vpack.c.b16 %v363, %v356
  %v574 = vpack.c.b16 %v371, %v364
  %v575 = vpack.c.b16 %v372, %v365
  %v576 = vpack.c.b16 %v373, %v366
  %v577 = vpack.c.b16 %v374, %v367
  %v578 = vpack.c.b16 %v375, %v368
  %v579 = vpack.c.b16 %v376, %v369
  %v580 = vpack.c.b16 %v377, %v370
  %v581 = vpack.c.b16 %v385, %v378
  %v582 = vpack.c.b16 %v386, %v379
  %v583 = vpack.c.b16 %v387, %v380
  %v584 = vpack.c.b16 %v388, %v381
  %v585 = vpack.c.b16 %v389, %v382
  %v586 = vpack.c.b16 %v390, %v383
  %v587 = vpack.c.b16 %v391, %v384
  %v588 = vpack.c.b16 %v399, %v392
  %v589 = vpack.c.b16 %v400, %v393
  %v590 = vpack.c.b16 %v401, %v394
  %v591 = vpack.c.b16 %v402, %v395
  %v592 = vpack.c.b16 %v403, %v396
  %v593 = vpack.c.b16 %v404, %v397
  %v594 = vpack.c.b16 %v405, %v398
  %v595 = vpack.c.b16 %v413, %v406
  %v596 = vpack.c.b16 %v414, %v407
  %v597 = vpack.c.b16 %v415, %v408
  %v598 = vpack.c.b16 %v416, %v409
  %v599 = vpack.c.b16 %v417, %v410
  %v600 = vpack.c.b16 %v418, %v411
  %v601 = vpack.c.b16 %v419, %v412
  %v602 = vpack.c.b16 %v427, %v420
  %v603 = vpack.c.b16 %v428, %v421
  %v604 = vpack.c.b16 %v429, %v422
  %v605 = vpack.c.b16 %v430, %v423
  %v606 = vpack.c.b16 %v431, %v424
  %v607 = vpack.c.b16 %v432, %v425
  %v608 = vpack.c.b16 %v433, %v426
  %v609 = vpack.c.b16 %v441, %v434
  %v610 = vpack.c.b16 %v442, %v435
  %v611 = vpack.c.b16 %v443, %v436
  %v612 = vpack.c.b16 %v444, %v437
  %v613 = vpack.c.b16 %v445, %v438
  %v614 = vpack.c.b16 %v446, %v439
  %v615 = vpack.c.b16 %v447, %v440
  %v616 = vpack.c.b16 %v455, %v448
  %v617 = vpack.c.b16 %v456, %v449
  %v618 = vpack.c.b16 %v457, %v450
  %v619 = vpack.c.b16 %v458, %v451
  %v620 = vpack.c.b16 %v459, %v452
  %v621 = vpack.c.b16 %v460, %v453
  %v622 = vpack.c.b16 %v461, %v454
  %v623 = vpack.c.b16 %v469, %v462
  %v624 = vpack.c.b16 %v470, %v463
  %v625 = vpack.c.b16 %v471, %v464
  %v626 = vpack.c.b16 %v472, %v465
  %v627 = vpack.c.b16 %v473, %v466
  %v628 = vpack.c.b16 %v474, %v467
  %v629 = vpack.c.b16 %v475, %v468
  %v630 = vpack.c.b16 %v483, %v476
  %v631 = vpack.c.b16 %v484, %v477
  %v632 = vpack.c.b16 %v485, %v478
  %v633 = vpack.c.b16 %v486, %v479
  %v634 = vpack.c.b16 %v487, %v480
  %v635 = vpack.c.b16 %v488, %v481
  %v636 = vpack.c.b16 %v489, %v482
  %v637 = vpack.c.b16 %v497, %v490
  %v638 = vpack.c.b16 %v498, %v491
  %v639 = vpack.c.b16 %v499, %v492
  %v640 = vpack.c.b16 %v500, %v493
  %v641 = vpack.c.b16 %v501, %v494
  %v642 = vpack.c.b16 %v502, %v495
  %v643 = vpack.c.b16 %v503, %v496
  %v644 = vpack.c.b16 %v511, %v504
  %v645 = vpack.c.b16 %v512, %v505
  %v646 = vpack.c.b16 %v513, %v506
  %v647 = vpack.c.b16 %v514, %v507
  %v648 = vpack.c.b16 %v515, %v508
  %v649 = vpack.c.b16 %v516, %v509
  %v650 = vpack.c.b16 %v517, %v510
  %v651 = vpack.c.b16 %v525, %v518
  %v652 = vpack.c.b16 %v526, %v519
  %v653 = vpack.c.b16 %v527, %v520
  %v654 = vpack.c.b16 %v528, %v521
  %v655 = vpack.c.b16 %v529, %v522
  %v656 = vpack.c.b16 %v530, %v523
  %v657 = vpack.c.b16 %v531, %v524
  %v658 = vpack.c.b16 %v539, %v532
  %v659 = vpack.c.b16 %v540, %v533
  %v660 = vpack.c.b16 %v541, %v534
  %v661 = vpack.c.b16 %v542, %v535
  %v662 = vpack.c.b16 %v543, %v536
  %v663 = vpack.c.b16 %v544, %v537
  %v664 = vpack.c.b16 %v545, %v538
  %v665 = vpack.c.b16 %v553, %v546
  %v666 = vpack.c.b16 %v554, %v547
  %v667 = vpack.c.b16 %v555, %v548
  %v668 = vpack.c.b16 %v556, %v549
  %v669 = vpack.c.b16 %v557, %v550
  %v670 = vpack.c.b16 %v558, %v551
  %v671 = vpack.c.b16 %v559, %v552
  %784 = vmatprep.subr.bf16.mxu0 %v561
  %785 = vmatpush1.bf16.msra.mxu0 %v560
  %786 = vmatprep.subr.bf16.mxu0 %v568
  %787 = vmatpush1.bf16.msra.mxu0 %v567
  %788 = vmatprep.subr.bf16.mxu0 %v575
  %789 = vmatpush1.bf16.msra.mxu0 %v574
  %790 = vmatprep.subr.bf16.mxu0 %v582
  %791 = vmatpush1.bf16.msra.mxu0 %v581
  %792 = vmatprep.subr.bf16.mxu0 %v589
  %793 = vmatpush1.bf16.msra.mxu0 %v588
  %794 = vmatprep.subr.bf16.mxu0 %v596
  %795 = vmatpush1.bf16.msra.mxu0 %v595
  %796 = vmatprep.subr.bf16.mxu0 %v603
  %797 = vmatpush1.bf16.msra.mxu0 %v602
  %798 = vmatprep.subr.bf16.mxu0 %v610
  %799 = vmatpush1.bf16.msra.mxu0 %v609
  %800 = vmatprep.subr.bf16.mxu0 %v617
  %801 = vmatpush1.bf16.msra.mxu0 %v616
  %802 = vmatprep.subr.bf16.mxu0 %v624
  %803 = vmatpush1.bf16.msra.mxu0 %v623
  %804 = vmatprep.subr.bf16.mxu0 %v631
  %805 = vmatpush1.bf16.msra.mxu0 %v630
  %806 = vmatprep.subr.bf16.mxu0 %v638
  %807 = vmatpush1.bf16.msra.mxu0 %v637
  %808 = vmatprep.subr.bf16.mxu0 %v645
  %809 = vmatpush1.bf16.msra.mxu0 %v644
  %810 = vmatprep.subr.bf16.mxu0 %v652
  %811 = vmatpush1.bf16.msra.mxu0 %v651
  %812 = vmatprep.subr.bf16.mxu0 %v659
  %813 = vmatpush1.bf16.msra.mxu0 %v658
  %814 = vmatprep.subr.bf16.mxu0 %v666
  %815 = vmatpush1.bf16.msra.mxu0 %v665
  %816 = vmatprep.mubr.bf16.mxu0 %v42
  %817 = vmatmul.mubr.bf16.gmra.mrb[0].mxu0 %v41
  %v818 = vpop.f32.mrb[0].mxu0
  %v819 = vadd.f32 %v176, %v818
  %v820 = vpop.f32.mrb[0].mxu0
  %v821 = vadd.f32 %v180, %v820
  %v822 = vpop.f32.mrb[0].mxu0
  %v823 = vpop.f32.mrb[0].mxu0
  %824 = vdwg.mxu0
  %825 = vmatprep.subr.bf16.mxu0 %v563
  %826 = vmatpush1.bf16.msra.mxu0 %v562
  %827 = vmatprep.subr.bf16.mxu0 %v570
  %828 = vmatpush1.bf16.msra.mxu0 %v569
  %829 = vmatprep.subr.bf16.mxu0 %v577
  %830 = vmatpush1.bf16.msra.mxu0 %v576
  %831 = vmatprep.subr.bf16.mxu0 %v584
  %832 = vmatpush1.bf16.msra.mxu0 %v583
  %833 = vmatprep.subr.bf16.mxu0 %v591
  %834 = vmatpush1.bf16.msra.mxu0 %v590
  %835 = vmatprep.subr.bf16.mxu0 %v598
  %836 = vmatpush1.bf16.msra.mxu0 %v597
  %837 = vmatprep.subr.bf16.mxu0 %v605
  %838 = vmatpush1.bf16.msra.mxu0 %v604
  %839 = vmatprep.subr.bf16.mxu0 %v612
  %840 = vmatpush1.bf16.msra.mxu0 %v611
  %841 = vmatprep.subr.bf16.mxu0 %v619
  %842 = vmatpush1.bf16.msra.mxu0 %v618
  %843 = vmatprep.subr.bf16.mxu0 %v626
  %844 = vmatpush1.bf16.msra.mxu0 %v625
  %845 = vmatprep.subr.bf16.mxu0 %v633
  %846 = vmatpush1.bf16.msra.mxu0 %v632
  %847 = vmatprep.subr.bf16.mxu0 %v640
  %848 = vmatpush1.bf16.msra.mxu0 %v639
  %849 = vmatprep.subr.bf16.mxu0 %v647
  %850 = vmatpush1.bf16.msra.mxu0 %v646
  %851 = vmatprep.subr.bf16.mxu0 %v654
  %852 = vmatpush1.bf16.msra.mxu0 %v653
  %853 = vmatprep.subr.bf16.mxu0 %v661
  %854 = vmatpush1.bf16.msra.mxu0 %v660
  %855 = vmatprep.subr.bf16.mxu0 %v668
  %856 = vmatpush1.bf16.msra.mxu0 %v667
  %857 = vmatprep.mubr.bf16.mxu0 %v42
  %858 = vmatmul.mubr.bf16.gmra.mrb[0].mxu0 %v41
  %v859 = vpop.f32.mrb[0].mxu0
  %v860 = vadd.f32 %v184, %v859
  %v861 = vpop.f32.mrb[0].mxu0
  %v862 = vadd.f32 %v188, %v861
  %v863 = vpop.f32.mrb[0].mxu0
  %v864 = vpop.f32.mrb[0].mxu0
  %865 = vdwg.mxu0
  %866 = vmatprep.subr.bf16.mxu0 %v565
  %867 = vmatpush1.bf16.msra.mxu0 %v564
  %868 = vmatprep.subr.bf16.mxu0 %v572
  %869 = vmatpush1.bf16.msra.mxu0 %v571
  %870 = vmatprep.subr.bf16.mxu0 %v579
  %871 = vmatpush1.bf16.msra.mxu0 %v578
  %872 = vmatprep.subr.bf16.mxu0 %v586
  %873 = vmatpush1.bf16.msra.mxu0 %v585
  %874 = vmatprep.subr.bf16.mxu0 %v593
  %875 = vmatpush1.bf16.msra.mxu0 %v592
  %876 = vmatprep.subr.bf16.mxu0 %v600
  %877 = vmatpush1.bf16.msra.mxu0 %v599
  %878 = vmatprep.subr.bf16.mxu0 %v607
  %879 = vmatpush1.bf16.msra.mxu0 %v606
  %880 = vmatprep.subr.bf16.mxu0 %v614
  %881 = vmatpush1.bf16.msra.mxu0 %v613
  %882 = vmatprep.subr.bf16.mxu0 %v621
  %883 = vmatpush1.bf16.msra.mxu0 %v620
  %884 = vmatprep.subr.bf16.mxu0 %v628
  %885 = vmatpush1.bf16.msra.mxu0 %v627
  %886 = vmatprep.subr.bf16.mxu0 %v635
  %887 = vmatpush1.bf16.msra.mxu0 %v634
  %888 = vmatprep.subr.bf16.mxu0 %v642
  %889 = vmatpush1.bf16.msra.mxu0 %v641
  %890 = vmatprep.subr.bf16.mxu0 %v649
  %891 = vmatpush1.bf16.msra.mxu0 %v648
  %892 = vmatprep.subr.bf16.mxu0 %v656
  %893 = vmatpush1.bf16.msra.mxu0 %v655
  %894 = vmatprep.subr.bf16.mxu0 %v663
  %895 = vmatpush1.bf16.msra.mxu0 %v662
  %896 = vmatprep.subr.bf16.mxu0 %v670
  %897 = vmatpush1.bf16.msra.mxu0 %v669
  %898 = vmatprep.mubr.bf16.mxu0 %v42
  %899 = vmatmul.mubr.bf16.gmra.mrb[0].mxu0 %v41
  %v900 = vpop.f32.mrb[0].mxu0
  %v901 = vadd.f32 %v192, %v900
  %v902 = vpop.f32.mrb[0].mxu0
  %v903 = vadd.f32 %v196, %v902
  %v904 = vpop.f32.mrb[0].mxu0
  %v905 = vpop.f32.mrb[0].mxu0
  %906 = vdwg.mxu0
  %907 = vmatprep.subr.bf16.mxu0 0
  %908 = vmatpush1.bf16.msra.mxu0 %v566
  %909 = vmatprep.subr.bf16.mxu0 0
  %910 = vmatpush1.bf16.msra.mxu0 %v573
  %911 = vmatprep.subr.bf16.mxu0 0
  %912 = vmatpush1.bf16.msra.mxu0 %v580
  %913 = vmatprep.subr.bf16.mxu0 0
  %914 = vmatpush1.bf16.msra.mxu0 %v587
  %915 = vmatprep.subr.bf16.mxu0 0
  %916 = vmatpush1.bf16.msra.mxu0 %v594
  %917 = vmatprep.subr.bf16.mxu0 0
  %918 = vmatpush1.bf16.msra.mxu0 %v601
  %919 = vmatprep.subr.bf16.mxu0 0
  %920 = vmatpush1.bf16.msra.mxu0 %v608
  %921 = vmatprep.subr.bf16.mxu0 0
  %922 = vmatpush1.bf16.msra.mxu0 %v615
  %923 = vmatprep.subr.bf16.mxu0 0
  %924 = vmatpush1.bf16.msra.mxu0 %v622
  %925 = vmatprep.subr.bf16.mxu0 0
  %926 = vmatpush1.bf16.msra.mxu0 %v629
  %927 = vmatprep.subr.bf16.mxu0 0
  %928 = vmatpush1.bf16.msra.mxu0 %v636
  %929 = vmatprep.subr.bf16.mxu0 0
  %930 = vmatpush1.bf16.msra.mxu0 %v643
  %931 = vmatprep.subr.bf16.mxu0 0
  %932 = vmatpush1.bf16.msra.mxu0 %v650
  %933 = vmatprep.subr.bf16.mxu0 0
  %934 = vmatpush1.bf16.msra.mxu0 %v657
  %935 = vmatprep.subr.bf16.mxu0 0
  %936 = vmatpush1.bf16.msra.mxu0 %v664
  %937 = vmatprep.subr.bf16.mxu0 0
  %938 = vmatpush1.bf16.msra.mxu0 %v671
  %939 = vmatprep.mubr.bf16.mxu0 %v42
  %940 = vmatmul.mubr.bf16.gmra.mrb[0].mxu0 %v41
  %v941 = vpop.f32.mrb[0].mxu0
  %v942 = vadd.f32 %v200, %v941
  %v943 = vpop.f32.mrb[0].mxu0
  %v944 = vpop.f32.mrb[0].mxu0
  %v945 = vpop.f32.mrb[0].mxu0
  %946 = vdwg.mxu0
  %v947 = vmax.f32 %v819, 0.0
  %v948 = vmax.f32 %v821, 0.0
  %v949 = vmax.f32 %v860, 0.0
  %v950 = vmax.f32 %v862, 0.0
  %v951 = vmax.f32 %v901, 0.0
  %v952 = vmax.f32 %v903, 0.0
  %v953 = vmax.f32 %v942, 0.0
  %v954 = vpack.c.bf16 %v947, %v947
  %v955 = vpack.c.bf16 %v948, %v948
  %v956 = vpack.c.bf16 %v949, %v949
  %v957 = vpack.c.bf16 %v950, %v950
  %v958 = vpack.c.bf16 %v951, %v951
  %v959 = vpack.c.bf16 %v952, %v952
  %v960 = vpack.c.bf16 %v953, %v953
  %v961 = vld [vmem:[%s3] sm:$0xff]
  %v962 = vld [vmem:[%s3 + $0x8] sm:$0xff]
  %v963 = vld [vmem:[%s3 + $0x10] sm:$0xff]
  %v964 = vld [vmem:[%s3 + $0x18] sm:$0xff]
  %v965 = vld [vmem:[%s3 + $0x20] sm:$0xff]
  %v966 = vld [vmem:[%s3 + $0x28] sm:$0xff]
  %v967 = vld [vmem:[%s3 + $0x30] sm:$0xff]
  %v968 = vld [vmem:[%s3 + $0x38] sm:$0xff]
  %v969 = vld [vmem:[%s3 + $0x40] sm:$0xff]
  %v970 = vld [vmem:[%s3 + $0x48] sm:$0xff]
  %v971 = vld [vmem:[%s3 + $0x50] sm:$0xff]
  %v972 = vld [vmem:[%s3 + $0x58] sm:$0xff]
  %v973 = vld [vmem:[%s3 + $0x60] sm:$0xff]
  %v974 = vld [vmem:[%s3 + $0x68] sm:$0xff]
  %v975 = vld [vmem:[%s3 + $0x70] sm:$0xff]
  %v976 = vld [vmem:[%s3 + $0x78] sm:$0xff]
  %v977 = vld [vmem:[%s3 + $0x80] sm:$0xff]
  %v978 = vld [vmem:[%s3 + $0x88] sm:$0xff]
  %v979 = vld [vmem:[%s3 + $0x90] sm:$0xff]
  %v980 = vld [vmem:[%s3 + $0x98] sm:$0xff]
  %v981 = vld [vmem:[%s3 + $0xa0] sm:$0xff]
  %v982 = vld [vmem:[%s3 + $0xa8] sm:$0xff]
  %v983 = vld [vmem:[%s3 + $0xb0] sm:$0xff]
  %v984 = vld [vmem:[%s3 + $0xb8] sm:$0xff]
  %v985 = vld [vmem:[%s3 + $0xc0] sm:$0xff]
  %v986 = vld [vmem:[%s3 + $0xc8] sm:$0xff]
  %v987 = vld [vmem:[%s3 + $0xd0] sm:$0xff]
  %v988 = vld [vmem:[%s3 + $0xd8] sm:$0xff]
  %v989 = vld [vmem:[%s3 + $0xe0] sm:$0xff]
  %v990 = vld [vmem:[%s3 + $0xe8] sm:$0xff]
  %v991 = vld [vmem:[%s3 + $0xf0] sm:$0xff]
  %v992 = vld [vmem:[%s3 + $0xf8] sm:$0xff]
  %v993 = vld [vmem:[%s3 + $0x100] sm:$0xff]
  %v994 = vld [vmem:[%s3 + $0x108] sm:$0xff]
  %v995 = vld [vmem:[%s3 + $0x110] sm:$0xff]
  %v996 = vld [vmem:[%s3 + $0x118] sm:$0xff]
  %v997 = vld [vmem:[%s3 + $0x120] sm:$0xff]
  %v998 = vld [vmem:[%s3 + $0x128] sm:$0xff]
  %v999 = vld [vmem:[%s3 + $0x130] sm:$0xff]
  %v1000 = vld [vmem:[%s3 + $0x138] sm:$0xff]
  %v1001 = vld [vmem:[%s3 + $0x140] sm:$0xff]
  %v1002 = vld [vmem:[%s3 + $0x148] sm:$0xff]
  %v1003 = vld [vmem:[%s3 + $0x150] sm:$0xff]
  %v1004 = vld [vmem:[%s3 + $0x158] sm:$0xff]
  %v1005 = vld [vmem:[%s3 + $0x160] sm:$0xff]
  %v1006 = vld [vmem:[%s3 + $0x168] sm:$0xff]
  %v1007 = vld [vmem:[%s3 + $0x170] sm:$0xff]
  %v1008 = vld [vmem:[%s3 + $0x178] sm:$0xff]
  %v1009 = vld [vmem:[%s3 + $0x180] sm:$0xff]
  %v1010 = vld [vmem:[%s3 + $0x188] sm:$0xff]
  %v1011 = vld [vmem:[%s3 + $0x190] sm:$0xff]
  %v1012 = vld [vmem:[%s3 + $0x198] sm:$0xff]
  %v1013 = vld [vmem:[%s3 + $0x1a0] sm:$0xff]
  %v1014 = vld [vmem:[%s3 + $0x1a8] sm:$0xff]
  %v1015 = vld [vmem:[%s3 + $0x1b0] sm:$0xff]
  %v1016 = vld [vmem:[%s3 + $0x1b8] sm:$0xff]
  %v1017 = vld [vmem:[%s3 + $0x1c0] sm:$0xff]
  %v1018 = vld [vmem:[%s3 + $0x1c8] sm:$0xff]
  %v1019 = vld [vmem:[%s3 + $0x1d0] sm:$0xff]
  %v1020 = vld [vmem:[%s3 + $0x1d8] sm:$0xff]
  %v1021 = vld [vmem:[%s3 + $0x1e0] sm:$0xff]
  %v1022 = vld [vmem:[%s3 + $0x1e8] sm:$0xff]
  %v1023 = vld [vmem:[%s3 + $0x1f0] sm:$0xff]
  %v1024 = vld [vmem:[%s3 + $0x1f8] sm:$0xff]
  %v1025 = vld [vmem:[%s3 + $0x200] sm:$0xff]
  %v1026 = vld [vmem:[%s3 + $0x208] sm:$0xff]
  %v1027 = vld [vmem:[%s3 + $0x210] sm:$0xff]
  %v1028 = vld [vmem:[%s3 + $0x218] sm:$0xff]
  %v1029 = vld [vmem:[%s3 + $0x220] sm:$0xff]
  %v1030 = vld [vmem:[%s3 + $0x228] sm:$0xff]
  %v1031 = vld [vmem:[%s3 + $0x230] sm:$0xff]
  %v1032 = vld [vmem:[%s3 + $0x238] sm:$0xff]
  %v1033 = vld [vmem:[%s3 + $0x240] sm:$0xff]
  %v1034 = vld [vmem:[%s3 + $0x248] sm:$0xff]
  %v1035 = vld [vmem:[%s3 + $0x250] sm:$0xff]
  %v1036 = vld [vmem:[%s3 + $0x258] sm:$0xff]
  %v1037 = vld [vmem:[%s3 + $0x260] sm:$0xff]
  %v1038 = vld [vmem:[%s3 + $0x268] sm:$0xff]
  %v1039 = vld [vmem:[%s3 + $0x270] sm:$0xff]
  %v1040 = vld [vmem:[%s3 + $0x278] sm:$0xff]
  %v1041 = vld [vmem:[%s3 + $0x280] sm:$0xff]
  %v1042 = vld [vmem:[%s3 + $0x288] sm:$0xff]
  %v1043 = vld [vmem:[%s3 + $0x290] sm:$0xff]
  %v1044 = vld [vmem:[%s3 + $0x298] sm:$0xff]
  %v1045 = vld [vmem:[%s3 + $0x2a0] sm:$0xff]
  %v1046 = vld [vmem:[%s3 + $0x2a8] sm:$0xff]
  %v1047 = vld [vmem:[%s3 + $0x2b0] sm:$0xff]
  %v1048 = vld [vmem:[%s3 + $0x2b8] sm:$0xff]
  %v1049 = vld [vmem:[%s3 + $0x2c0] sm:$0xff]
  %v1050 = vld [vmem:[%s3 + $0x2c8] sm:$0xff]
  %v1051 = vld [vmem:[%s3 + $0x2d0] sm:$0xff]
  %v1052 = vld [vmem:[%s3 + $0x2d8] sm:$0xff]
  %v1053 = vld [vmem:[%s3 + $0x2e0] sm:$0xff]
  %v1054 = vld [vmem:[%s3 + $0x2e8] sm:$0xff]
  %v1055 = vld [vmem:[%s3 + $0x2f0] sm:$0xff]
  %v1056 = vld [vmem:[%s3 + $0x2f8] sm:$0xff]
  %v1057 = vld [vmem:[%s3 + $0x300] sm:$0xff]
  %v1058 = vld [vmem:[%s3 + $0x308] sm:$0xff]
  %v1059 = vld [vmem:[%s3 + $0x310] sm:$0xff]
  %v1060 = vld [vmem:[%s3 + $0x318] sm:$0xff]
  %v1061 = vld [vmem:[%s3 + $0x320] sm:$0xff]
  %v1062 = vld [vmem:[%s3 + $0x328] sm:$0xff]
  %v1063 = vld [vmem:[%s3 + $0x330] sm:$0xff]
  %v1064 = vld [vmem:[%s3 + $0x338] sm:$0xff]
  %v1065 = vld [vmem:[%s3 + $0x340] sm:$0xff]
  %v1066 = vld [vmem:[%s3 + $0x348] sm:$0xff]
  %v1067 = vld [vmem:[%s3 + $0x350] sm:$0xff]
  %v1068 = vld [vmem:[%s3 + $0x358] sm:$0xff]
  %v1069 = vld [vmem:[%s3 + $0x360] sm:$0xff]
  %v1070 = vld [vmem:[%s3 + $0x368] sm:$0xff]
  %v1071 = vld [vmem:[%s3 + $0x370] sm:$0xff]
  %v1072 = vld [vmem:[%s3 + $0x378] sm:$0xff]
  %v1073 = vld [vmem:[%s3 + $0x380] sm:$0xff]
  %v1074 = vld [vmem:[%s3 + $0x388] sm:$0xff]
  %v1075 = vld [vmem:[%s3 + $0x390] sm:$0xff]
  %v1076 = vld [vmem:[%s3 + $0x398] sm:$0xff]
  %v1077 = vld [vmem:[%s3 + $0x3a0] sm:$0xff]
  %v1078 = vld [vmem:[%s3 + $0x3a8] sm:$0xff]
  %v1079 = vld [vmem:[%s3 + $0x3b0] sm:$0xff]
  %v1080 = vld [vmem:[%s3 + $0x3b8] sm:$0xff]
  %v1081 = vld [vmem:[%s3 + $0x3c0] sm:$0xff]
  %v1082 = vld [vmem:[%s3 + $0x3c8] sm:$0xff]
  %v1083 = vld [vmem:[%s3 + $0x3d0] sm:$0xff]
  %v1084 = vld [vmem:[%s3 + $0x3d8] sm:$0xff]
  %v1085 = vld [vmem:[%s3 + $0x3e0] sm:$0xff]
  %v1086 = vld [vmem:[%s3 + $0x3e8] sm:$0xff]
  %v1087 = vld [vmem:[%s3 + $0x3f0] sm:$0xff]
  %v1088 = vld [vmem:[%s3 + $0x3f8] sm:$0xff]
  %v1089 = vld [vmem:[%s3 + $0x400] sm:$0xff]
  %v1090 = vld [vmem:[%s3 + $0x408] sm:$0xff]
  %v1091 = vld [vmem:[%s3 + $0x410] sm:$0xff]
  %v1092 = vld [vmem:[%s3 + $0x418] sm:$0xff]
  %v1093 = vld [vmem:[%s3 + $0x420] sm:$0xff]
  %v1094 = vld [vmem:[%s3 + $0x428] sm:$0xff]
  %v1095 = vld [vmem:[%s3 + $0x430] sm:$0xff]
  %v1096 = vld [vmem:[%s3 + $0x438] sm:$0xff]
  %v1097 = vld [vmem:[%s3 + $0x440] sm:$0xff]
  %v1098 = vld [vmem:[%s3 + $0x448] sm:$0xff]
  %v1099 = vld [vmem:[%s3 + $0x450] sm:$0xff]
  %v1100 = vld [vmem:[%s3 + $0x458] sm:$0xff]
  %v1101 = vld [vmem:[%s3 + $0x460] sm:$0xff]
  %v1102 = vld [vmem:[%s3 + $0x468] sm:$0xff]
  %v1103 = vld [vmem:[%s3 + $0x470] sm:$0xff]
  %v1104 = vld [vmem:[%s3 + $0x478] sm:$0xff]
  %v1105 = vld [vmem:[%s3 + $0x480] sm:$0xff]
  %v1106 = vld [vmem:[%s3 + $0x488] sm:$0xff]
  %v1107 = vld [vmem:[%s3 + $0x490] sm:$0xff]
  %v1108 = vld [vmem:[%s3 + $0x498] sm:$0xff]
  %v1109 = vld [vmem:[%s3 + $0x4a0] sm:$0xff]
  %v1110 = vld [vmem:[%s3 + $0x4a8] sm:$0xff]
  %v1111 = vld [vmem:[%s3 + $0x4b0] sm:$0xff]
  %v1112 = vld [vmem:[%s3 + $0x4b8] sm:$0xff]
  %v1113 = vld [vmem:[%s3 + $0x4c0] sm:$0xff]
  %v1114 = vld [vmem:[%s3 + $0x4c8] sm:$0xff]
  %v1115 = vld [vmem:[%s3 + $0x4d0] sm:$0xff]
  %v1116 = vld [vmem:[%s3 + $0x4d8] sm:$0xff]
  %v1117 = vld [vmem:[%s3 + $0x4e0] sm:$0xff]
  %v1118 = vld [vmem:[%s3 + $0x4e8] sm:$0xff]
  %v1119 = vld [vmem:[%s3 + $0x4f0] sm:$0xff]
  %v1120 = vld [vmem:[%s3 + $0x4f8] sm:$0xff]
  %v1121 = vld [vmem:[%s3 + $0x500] sm:$0xff]
  %v1122 = vld [vmem:[%s3 + $0x508] sm:$0xff]
  %v1123 = vld [vmem:[%s3 + $0x510] sm:$0xff]
  %v1124 = vld [vmem:[%s3 + $0x518] sm:$0xff]
  %v1125 = vld [vmem:[%s3 + $0x520] sm:$0xff]
  %v1126 = vld [vmem:[%s3 + $0x528] sm:$0xff]
  %v1127 = vld [vmem:[%s3 + $0x530] sm:$0xff]
  %v1128 = vld [vmem:[%s3 + $0x538] sm:$0xff]
  %v1129 = vld [vmem:[%s3 + $0x540] sm:$0xff]
  %v1130 = vld [vmem:[%s3 + $0x548] sm:$0xff]
  %v1131 = vld [vmem:[%s3 + $0x550] sm:$0xff]
  %v1132 = vld [vmem:[%s3 + $0x558] sm:$0xff]
  %v1133 = vld [vmem:[%s3 + $0x560] sm:$0xff]
  %v1134 = vld [vmem:[%s3 + $0x568] sm:$0xff]
  %v1135 = vld [vmem:[%s3 + $0x570] sm:$0xff]
  %v1136 = vld [vmem:[%s3 + $0x578] sm:$0xff]
  %v1137 = vld [vmem:[%s3 + $0x580] sm:$0xff]
  %v1138 = vld [vmem:[%s3 + $0x588] sm:$0xff]
  %v1139 = vld [vmem:[%s3 + $0x590] sm:$0xff]
  %v1140 = vld [vmem:[%s3 + $0x598] sm:$0xff]
  %v1141 = vld [vmem:[%s3 + $0x5a0] sm:$0xff]
  %v1142 = vld [vmem:[%s3 + $0x5a8] sm:$0xff]
  %v1143 = vld [vmem:[%s3 + $0x5b0] sm:$0xff]
  %v1144 = vld [vmem:[%s3 + $0x5b8] sm:$0xff]
  %v1145 = vld [vmem:[%s3 + $0x5c0] sm:$0xff]
  %v1146 = vld [vmem:[%s3 + $0x5c8] sm:$0xff]
  %v1147 = vld [vmem:[%s3 + $0x5d0] sm:$0xff]
  %v1148 = vld [vmem:[%s3 + $0x5d8] sm:$0xff]
  %v1149 = vld [vmem:[%s3 + $0x5e0] sm:$0xff]
  %v1150 = vld [vmem:[%s3 + $0x5e8] sm:$0xff]
  %v1151 = vld [vmem:[%s3 + $0x5f0] sm:$0xff]
  %v1152 = vld [vmem:[%s3 + $0x5f8] sm:$0xff]
  %v1153 = vld [vmem:[%s3 + $0x600] sm:$0xff]
  %v1154 = vld [vmem:[%s3 + $0x608] sm:$0xff]
  %v1155 = vld [vmem:[%s3 + $0x610] sm:$0xff]
  %v1156 = vld [vmem:[%s3 + $0x618] sm:$0xff]
  %v1157 = vld [vmem:[%s3 + $0x620] sm:$0xff]
  %v1158 = vld [vmem:[%s3 + $0x628] sm:$0xff]
  %v1159 = vld [vmem:[%s3 + $0x630] sm:$0xff]
  %v1160 = vld [vmem:[%s3 + $0x638] sm:$0xff]
  %v1161 = vld [vmem:[%s3 + $0x640] sm:$0xff]
  %v1162 = vld [vmem:[%s3 + $0x648] sm:$0xff]
  %v1163 = vld [vmem:[%s3 + $0x650] sm:$0xff]
  %v1164 = vld [vmem:[%s3 + $0x658] sm:$0xff]
  %v1165 = vld [vmem:[%s3 + $0x660] sm:$0xff]
  %v1166 = vld [vmem:[%s3 + $0x668] sm:$0xff]
  %v1167 = vld [vmem:[%s3 + $0x670] sm:$0xff]
  %v1168 = vld [vmem:[%s3 + $0x678] sm:$0xff]
  %v1169 = vld [vmem:[%s3 + $0x680] sm:$0xff]
  %v1170 = vld [vmem:[%s3 + $0x688] sm:$0xff]
  %v1171 = vld [vmem:[%s3 + $0x690] sm:$0xff]
  %v1172 = vld [vmem:[%s3 + $0x698] sm:$0xff]
  %v1173 = vld [vmem:[%s3 + $0x6a0] sm:$0xff]
  %v1174 = vld [vmem:[%s3 + $0x6a8] sm:$0xff]
  %v1175 = vld [vmem:[%s3 + $0x6b0] sm:$0xff]
  %v1176 = vld [vmem:[%s3 + $0x6b8] sm:$0xff]
  %v1177 = vld [vmem:[%s3 + $0x6c0] sm:$0xff]
  %v1178 = vld [vmem:[%s3 + $0x6c8] sm:$0xff]
  %v1179 = vld [vmem:[%s3 + $0x6d0] sm:$0xff]
  %v1180 = vld [vmem:[%s3 + $0x6d8] sm:$0xff]
  %v1181 = vld [vmem:[%s3 + $0x6e0] sm:$0xff]
  %v1182 = vld [vmem:[%s3 + $0x6e8] sm:$0xff]
  %v1183 = vld [vmem:[%s3 + $0x6f0] sm:$0xff]
  %v1184 = vld [vmem:[%s3 + $0x6f8] sm:$0xff]
  %v1185 = vld [vmem:[%s3 + $0x700] sm:$0xff]
  %v1186 = vld [vmem:[%s3 + $0x708] sm:$0xff]
  %v1187 = vld [vmem:[%s3 + $0x710] sm:$0xff]
  %v1188 = vld [vmem:[%s3 + $0x718] sm:$0xff]
  %v1189 = vld [vmem:[%s3 + $0x720] sm:$0xff]
  %v1190 = vld [vmem:[%s3 + $0x728] sm:$0xff]
  %v1191 = vld [vmem:[%s3 + $0x730] sm:$0xff]
  %v1192 = vld [vmem:[%s3 + $0x738] sm:$0xff]
  %v1193 = vld [vmem:[%s3 + $0x740] sm:$0xff]
  %v1194 = vld [vmem:[%s3 + $0x748] sm:$0xff]
  %v1195 = vld [vmem:[%s3 + $0x750] sm:$0xff]
  %v1196 = vld [vmem:[%s3 + $0x758] sm:$0xff]
  %v1197 = vld [vmem:[%s3 + $0x760] sm:$0xff]
  %v1198 = vld [vmem:[%s3 + $0x768] sm:$0xff]
  %v1199 = vld [vmem:[%s3 + $0x770] sm:$0xff]
  %v1200 = vld [vmem:[%s3 + $0x778] sm:$0xff]
  %v1201 = vld [vmem:[%s3 + $0x780] sm:$0xff]
  %v1202 = vld [vmem:[%s3 + $0x788] sm:$0xff]
  %v1203 = vld [vmem:[%s3 + $0x790] sm:$0xff]
  %v1204 = vld [vmem:[%s3 + $0x798] sm:$0xff]
  %v1205 = vld [vmem:[%s3 + $0x7a0] sm:$0xff]
  %v1206 = vld [vmem:[%s3 + $0x7a8] sm:$0xff]
  %v1207 = vld [vmem:[%s3 + $0x7b0] sm:$0xff]
  %v1208 = vld [vmem:[%s3 + $0x7b8] sm:$0xff]
  %v1209 = vld [vmem:[%s3 + $0x7c0] sm:$0xff]
  %v1210 = vld [vmem:[%s3 + $0x7c8] sm:$0xff]
  %v1211 = vld [vmem:[%s3 + $0x7d0] sm:$0xff]
  %v1212 = vld [vmem:[%s3 + $0x7d8] sm:$0xff]
  %v1213 = vld [vmem:[%s3 + $0x7e0] sm:$0xff]
  %v1214 = vld [vmem:[%s3 + $0x7e8] sm:$0xff]
  %v1215 = vld [vmem:[%s3 + $0x7f0] sm:$0xff]
  %v1216 = vld [vmem:[%s3 + $0x7f8] sm:$0xff]
  %v1217 = vld [vmem:[%s3 + $0x800] sm:$0xff]
  %v1218 = vld [vmem:[%s3 + $0x808] sm:$0xff]
  %v1219 = vld [vmem:[%s3 + $0x810] sm:$0xff]
  %v1220 = vld [vmem:[%s3 + $0x818] sm:$0xff]
  %v1221 = vld [vmem:[%s3 + $0x820] sm:$0xff]
  %v1222 = vld [vmem:[%s3 + $0x828] sm:$0xff]
  %v1223 = vld [vmem:[%s3 + $0x830] sm:$0xff]
  %v1224 = vld [vmem:[%s3 + $0x838] sm:$0xff]
  %v1225 = vld [vmem:[%s3 + $0x840] sm:$0xff]
  %v1226 = vld [vmem:[%s3 + $0x848] sm:$0xff]
  %v1227 = vld [vmem:[%s3 + $0x850] sm:$0xff]
  %v1228 = vld [vmem:[%s3 + $0x858] sm:$0xff]
  %v1229 = vld [vmem:[%s3 + $0x860] sm:$0xff]
  %v1230 = vld [vmem:[%s3 + $0x868] sm:$0xff]
  %v1231 = vld [vmem:[%s3 + $0x870] sm:$0xff]
  %v1232 = vld [vmem:[%s3 + $0x878] sm:$0xff]
  %v1233 = vld [vmem:[%s3 + $0x880] sm:$0xff]
  %v1234 = vld [vmem:[%s3 + $0x888] sm:$0xff]
  %v1235 = vld [vmem:[%s3 + $0x890] sm:$0xff]
  %v1236 = vld [vmem:[%s3 + $0x898] sm:$0xff]
  %v1237 = vld [vmem:[%s3 + $0x8a0] sm:$0xff]
  %v1238 = vld [vmem:[%s3 + $0x8a8] sm:$0xff]
  %v1239 = vld [vmem:[%s3 + $0x8b0] sm:$0xff]
  %v1240 = vld [vmem:[%s3 + $0x8b8] sm:$0xff]
  %v1241 = vld [vmem:[%s3 + $0x8c0] sm:$0xff]
  %v1242 = vld [vmem:[%s3 + $0x8c8] sm:$0xff]
  %v1243 = vld [vmem:[%s3 + $0x8d0] sm:$0xff]
  %v1244 = vld [vmem:[%s3 + $0x8d8] sm:$0xff]
  %v1245 = vld [vmem:[%s3 + $0x8e0] sm:$0xff]
  %v1246 = vld [vmem:[%s3 + $0x8e8] sm:$0xff]
  %v1247 = vld [vmem:[%s3 + $0x8f0] sm:$0xff]
  %v1248 = vld [vmem:[%s3 + $0x8f8] sm:$0xff]
  %v1249 = vld [vmem:[%s3 + $0x900] sm:$0xff]
  %v1250 = vld [vmem:[%s3 + $0x908] sm:$0xff]
  %v1251 = vld [vmem:[%s3 + $0x910] sm:$0xff]
  %v1252 = vld [vmem:[%s3 + $0x918] sm:$0xff]
  %v1253 = vld [vmem:[%s3 + $0x920] sm:$0xff]
  %v1254 = vld [vmem:[%s3 + $0x928] sm:$0xff]
  %v1255 = vld [vmem:[%s3 + $0x930] sm:$0xff]
  %v1256 = vld [vmem:[%s3 + $0x938] sm:$0xff]
  %v1257 = vld [vmem:[%s3 + $0x940] sm:$0xff]
  %v1258 = vld [vmem:[%s3 + $0x948] sm:$0xff]
  %v1259 = vld [vmem:[%s3 + $0x950] sm:$0xff]
  %v1260 = vld [vmem:[%s3 + $0x958] sm:$0xff]
  %v1261 = vld [vmem:[%s3 + $0x960] sm:$0xff]
  %v1262 = vld [vmem:[%s3 + $0x968] sm:$0xff]
  %v1263 = vld [vmem:[%s3 + $0x970] sm:$0xff]
  %v1264 = vld [vmem:[%s3 + $0x978] sm:$0xff]
  %v1265 = vld [vmem:[%s3 + $0x980] sm:$0xff]
  %v1266 = vld [vmem:[%s3 + $0x988] sm:$0xff]
  %v1267 = vld [vmem:[%s3 + $0x990] sm:$0xff]
  %v1268 = vld [vmem:[%s3 + $0x998] sm:$0xff]
  %v1269 = vld [vmem:[%s3 + $0x9a0] sm:$0xff]
  %v1270 = vld [vmem:[%s3 + $0x9a8] sm:$0xff]
  %v1271 = vld [vmem:[%s3 + $0x9b0] sm:$0xff]
  %v1272 = vld [vmem:[%s3 + $0x9b8] sm:$0xff]
  %v1273 = vld [vmem:[%s3 + $0x9c0] sm:$0xff]
  %v1274 = vld [vmem:[%s3 + $0x9c8] sm:$0xff]
  %v1275 = vld [vmem:[%s3 + $0x9d0] sm:$0xff]
  %v1276 = vld [vmem:[%s3 + $0x9d8] sm:$0xff]
  %v1277 = vld [vmem:[%s3 + $0x9e0] sm:$0xff]
  %v1278 = vld [vmem:[%s3 + $0x9e8] sm:$0xff]
  %v1279 = vld [vmem:[%s3 + $0x9f0] sm:$0xff]
  %v1280 = vld [vmem:[%s3 + $0x9f8] sm:$0xff]
  %v1281 = vld [vmem:[%s3 + $0xa00] sm:$0xff]
  %v1282 = vld [vmem:[%s3 + $0xa08] sm:$0xff]
  %v1283 = vld [vmem:[%s3 + $0xa10] sm:$0xff]
  %v1284 = vld [vmem:[%s3 + $0xa18] sm:$0xff]
  %v1285 = vld [vmem:[%s3 + $0xa20] sm:$0xff]
  %v1286 = vld [vmem:[%s3 + $0xa28] sm:$0xff]
  %v1287 = vld [vmem:[%s3 + $0xa30] sm:$0xff]
  %v1288 = vld [vmem:[%s3 + $0xa38] sm:$0xff]
  %v1289 = vld [vmem:[%s3 + $0xa40] sm:$0xff]
  %v1290 = vld [vmem:[%s3 + $0xa48] sm:$0xff]
  %v1291 = vld [vmem:[%s3 + $0xa50] sm:$0xff]
  %v1292 = vld [vmem:[%s3 + $0xa58] sm:$0xff]
  %v1293 = vld [vmem:[%s3 + $0xa60] sm:$0xff]
  %v1294 = vld [vmem:[%s3 + $0xa68] sm:$0xff]
  %v1295 = vld [vmem:[%s3 + $0xa70] sm:$0xff]
  %v1296 = vld [vmem:[%s3 + $0xa78] sm:$0xff]
  %v1297 = vld [vmem:[%s3 + $0xa80] sm:$0xff]
  %v1298 = vld [vmem:[%s3 + $0xa88] sm:$0xff]
  %v1299 = vld [vmem:[%s3 + $0xa90] sm:$0xff]
  %v1300 = vld [vmem:[%s3 + $0xa98] sm:$0xff]
  %v1301 = vld [vmem:[%s3 + $0xaa0] sm:$0xff]
  %v1302 = vld [vmem:[%s3 + $0xaa8] sm:$0xff]
  %v1303 = vld [vmem:[%s3 + $0xab0] sm:$0xff]
  %v1304 = vld [vmem:[%s3 + $0xab8] sm:$0xff]
  %v1305 = vld [vmem:[%s3 + $0xac0] sm:$0xff]
  %v1306 = vld [vmem:[%s3 + $0xac8] sm:$0xff]
  %v1307 = vld [vmem:[%s3 + $0xad0] sm:$0xff]
  %v1308 = vld [vmem:[%s3 + $0xad8] sm:$0xff]
  %v1309 = vld [vmem:[%s3 + $0xae0] sm:$0xff]
  %v1310 = vld [vmem:[%s3 + $0xae8] sm:$0xff]
  %v1311 = vld [vmem:[%s3 + $0xaf0] sm:$0xff]
  %v1312 = vld [vmem:[%s3 + $0xaf8] sm:$0xff]
  %v1313 = vld [vmem:[%s3 + $0xb00] sm:$0xff]
  %v1314 = vld [vmem:[%s3 + $0xb08] sm:$0xff]
  %v1315 = vld [vmem:[%s3 + $0xb10] sm:$0xff]
  %v1316 = vld [vmem:[%s3 + $0xb18] sm:$0xff]
  %v1317 = vld [vmem:[%s3 + $0xb20] sm:$0xff]
  %v1318 = vld [vmem:[%s3 + $0xb28] sm:$0xff]
  %v1319 = vld [vmem:[%s3 + $0xb30] sm:$0xff]
  %v1320 = vld [vmem:[%s3 + $0xb38] sm:$0xff]
  %v1321 = vld [vmem:[%s3 + $0xb40] sm:$0xff]
  %v1322 = vld [vmem:[%s3 + $0xb48] sm:$0xff]
  %v1323 = vld [vmem:[%s3 + $0xb50] sm:$0xff]
  %v1324 = vld [vmem:[%s3 + $0xb58] sm:$0xff]
  %v1325 = vld [vmem:[%s3 + $0xb60] sm:$0xff]
  %v1326 = vld [vmem:[%s3 + $0xb68] sm:$0xff]
  %v1327 = vld [vmem:[%s3 + $0xb70] sm:$0xff]
  %v1328 = vld [vmem:[%s3 + $0xb78] sm:$0xff]
  %v1329 = vld [vmem:[%s3 + $0xb80] sm:$0xff]
  %v1330 = vld [vmem:[%s3 + $0xb88] sm:$0xff]
  %v1331 = vld [vmem:[%s3 + $0xb90] sm:$0xff]
  %v1332 = vld [vmem:[%s3 + $0xb98] sm:$0xff]
  %v1333 = vld [vmem:[%s3 + $0xba0] sm:$0xff]
  %v1334 = vld [vmem:[%s3 + $0xba8] sm:$0xff]
  %v1335 = vld [vmem:[%s3 + $0xbb0] sm:$0xff]
  %v1336 = vld [vmem:[%s3 + $0xbb8] sm:$0xff]
  %v1337 = vld [vmem:[%s3 + $0xbc0] sm:$0xff]
  %v1338 = vld [vmem:[%s3 + $0xbc8] sm:$0xff]
  %v1339 = vld [vmem:[%s3 + $0xbd0] sm:$0xff]
  %v1340 = vld [vmem:[%s3 + $0xbd8] sm:$0xff]
  %v1341 = vld [vmem:[%s3 + $0xbe0] sm:$0xff]
  %v1342 = vld [vmem:[%s3 + $0xbe8] sm:$0xff]
  %v1343 = vld [vmem:[%s3 + $0xbf0] sm:$0xff]
  %v1344 = vld [vmem:[%s3 + $0xbf8] sm:$0xff]
  %v1345 = vld [vmem:[%s3 + $0xc00] sm:$0xff]
  %v1346 = vld [vmem:[%s3 + $0xc08] sm:$0xff]
  %v1347 = vld [vmem:[%s3 + $0xc10] sm:$0xff]
  %v1348 = vld [vmem:[%s3 + $0xc18] sm:$0xff]
  %v1349 = vld [vmem:[%s3 + $0xc20] sm:$0xff]
  %v1350 = vld [vmem:[%s3 + $0xc28] sm:$0xff]
  %v1351 = vld [vmem:[%s3 + $0xc30] sm:$0xff]
  %v1352 = vld [vmem:[%s3 + $0xc38] sm:$0xff]
  %v1353 = vld [vmem:[%s3 + $0xc40] sm:$0xff]
  %v1354 = vld [vmem:[%s3 + $0xc48] sm:$0xff]
  %v1355 = vld [vmem:[%s3 + $0xc50] sm:$0xff]
  %v1356 = vld [vmem:[%s3 + $0xc58] sm:$0xff]
  %v1357 = vld [vmem:[%s3 + $0xc60] sm:$0xff]
  %v1358 = vld [vmem:[%s3 + $0xc68] sm:$0xff]
  %v1359 = vld [vmem:[%s3 + $0xc70] sm:$0xff]
  %v1360 = vld [vmem:[%s3 + $0xc78] sm:$0xff]
  %v1361 = vld [vmem:[%s3 + $0xc80] sm:$0xff]
  %v1362 = vld [vmem:[%s3 + $0xc88] sm:$0xff]
  %v1363 = vld [vmem:[%s3 + $0xc90] sm:$0xff]
  %v1364 = vld [vmem:[%s3 + $0xc98] sm:$0xff]
  %v1365 = vld [vmem:[%s3 + $0xca0] sm:$0xff]
  %v1366 = vld [vmem:[%s3 + $0xca8] sm:$0xff]
  %v1367 = vld [vmem:[%s3 + $0xcb0] sm:$0xff]
  %v1368 = vld [vmem:[%s3 + $0xcb8] sm:$0xff]
  %v1369 = vld [vmem:[%s3 + $0xcc0] sm:$0xff]
  %v1370 = vld [vmem:[%s3 + $0xcc8] sm:$0xff]
  %v1371 = vld [vmem:[%s3 + $0xcd0] sm:$0xff]
  %v1372 = vld [vmem:[%s3 + $0xcd8] sm:$0xff]
  %v1373 = vld [vmem:[%s3 + $0xce0] sm:$0xff]
  %v1374 = vld [vmem:[%s3 + $0xce8] sm:$0xff]
  %v1375 = vld [vmem:[%s3 + $0xcf0] sm:$0xff]
  %v1376 = vld [vmem:[%s3 + $0xcf8] sm:$0xff]
  %v1377 = vld [vmem:[%s3 + $0xd00] sm:$0xff]
  %v1378 = vld [vmem:[%s3 + $0xd08] sm:$0xff]
  %v1379 = vld [vmem:[%s3 + $0xd10] sm:$0xff]
  %v1380 = vld [vmem:[%s3 + $0xd18] sm:$0xff]
  %v1381 = vld [vmem:[%s3 + $0xd20] sm:$0xff]
  %v1382 = vld [vmem:[%s3 + $0xd28] sm:$0xff]
  %v1383 = vld [vmem:[%s3 + $0xd30] sm:$0xff]
  %v1384 = vld [vmem:[%s3 + $0xd38] sm:$0xff]
  %v1385 = vld [vmem:[%s3 + $0xd40] sm:$0xff]
  %v1386 = vld [vmem:[%s3 + $0xd48] sm:$0xff]
  %v1387 = vld [vmem:[%s3 + $0xd50] sm:$0xff]
  %v1388 = vld [vmem:[%s3 + $0xd58] sm:$0xff]
  %v1389 = vld [vmem:[%s3 + $0xd60] sm:$0xff]
  %v1390 = vld [vmem:[%s3 + $0xd68] sm:$0xff]
  %v1391 = vld [vmem:[%s3 + $0xd70] sm:$0xff]
  %v1392 = vld [vmem:[%s3 + $0xd78] sm:$0xff]
  %v1393 = vld [vmem:[%s3 + $0xd80] sm:$0xff]
  %v1394 = vld [vmem:[%s3 + $0xd88] sm:$0xff]
  %v1395 = vld [vmem:[%s3 + $0xd90] sm:$0xff]
  %v1396 = vld [vmem:[%s3 + $0xd98] sm:$0xff]
  %v1397 = vld [vmem:[%s3 + $0xda0] sm:$0xff]
  %v1398 = vld [vmem:[%s3 + $0xda8] sm:$0xff]
  %v1399 = vld [vmem:[%s3 + $0xdb0] sm:$0xff]
  %v1400 = vld [vmem:[%s3 + $0xdb8] sm:$0xff]
  %v1401 = vld [vmem:[%s3 + $0xdc0] sm:$0xff]
  %v1402 = vld [vmem:[%s3 + $0xdc8] sm:$0xff]
  %v1403 = vld [vmem:[%s3 + $0xdd0] sm:$0xff]
  %v1404 = vld [vmem:[%s3 + $0xdd8] sm:$0xff]
  %v1405 = vld [vmem:[%s3 + $0xde0] sm:$0xff]
  %v1406 = vld [vmem:[%s3 + $0xde8] sm:$0xff]
  %v1407 = vld [vmem:[%s3 + $0xdf0] sm:$0xff]
  %v1408 = vld [vmem:[%s3 + $0xdf8] sm:$0xff]
  %v1409 = vld [vmem:[%s3 + $0xe00] sm:$0xff]
  %v1410 = vld [vmem:[%s3 + $0xe08] sm:$0xff]
  %v1411 = vld [vmem:[%s3 + $0xe10] sm:$0xff]
  %v1412 = vld [vmem:[%s3 + $0xe18] sm:$0xff]
  %v1413 = vld [vmem:[%s3 + $0xe20] sm:$0xff]
  %v1414 = vld [vmem:[%s3 + $0xe28] sm:$0xff]
  %v1415 = vld [vmem:[%s3 + $0xe30] sm:$0xff]
  %v1416 = vld [vmem:[%s3 + $0xe38] sm:$0xff]
  %v1417 = vld [vmem:[%s3 + $0xe40] sm:$0xff]
  %v1418 = vld [vmem:[%s3 + $0xe48] sm:$0xff]
  %v1419 = vld [vmem:[%s3 + $0xe50] sm:$0xff]
  %v1420 = vld [vmem:[%s3 + $0xe58] sm:$0xff]
  %v1421 = vld [vmem:[%s3 + $0xe60] sm:$0xff]
  %v1422 = vld [vmem:[%s3 + $0xe68] sm:$0xff]
  %v1423 = vld [vmem:[%s3 + $0xe70] sm:$0xff]
  %v1424 = vld [vmem:[%s3 + $0xe78] sm:$0xff]
  %v1425 = vld [vmem:[%s3 + $0xe80] sm:$0xff]
  %v1426 = vld [vmem:[%s3 + $0xe88] sm:$0xff]
  %v1427 = vld [vmem:[%s3 + $0xe90] sm:$0xff]
  %v1428 = vld [vmem:[%s3 + $0xe98] sm:$0xff]
  %v1429 = vld [vmem:[%s3 + $0xea0] sm:$0xff]
  %v1430 = vld [vmem:[%s3 + $0xea8] sm:$0xff]
  %v1431 = vld [vmem:[%s3 + $0xeb0] sm:$0xff]
  %v1432 = vld [vmem:[%s3 + $0xeb8] sm:$0xff]
  %v1433 = vld [vmem:[%s3 + $0xec0] sm:$0xff]
  %v1434 = vld [vmem:[%s3 + $0xec8] sm:$0xff]
  %v1435 = vld [vmem:[%s3 + $0xed0] sm:$0xff]
  %v1436 = vld [vmem:[%s3 + $0xed8] sm:$0xff]
  %v1437 = vld [vmem:[%s3 + $0xee0] sm:$0xff]
  %v1438 = vld [vmem:[%s3 + $0xee8] sm:$0xff]
  %v1439 = vld [vmem:[%s3 + $0xef0] sm:$0xff]
  %v1440 = vld [vmem:[%s3 + $0xef8] sm:$0xff]
  %v1441 = vld [vmem:[%s3 + $0xf00] sm:$0xff]
  %v1442 = vld [vmem:[%s3 + $0xf08] sm:$0xff]
  %v1443 = vld [vmem:[%s3 + $0xf10] sm:$0xff]
  %v1444 = vld [vmem:[%s3 + $0xf18] sm:$0xff]
  %v1445 = vld [vmem:[%s3 + $0xf20] sm:$0xff]
  %v1446 = vld [vmem:[%s3 + $0xf28] sm:$0xff]
  %v1447 = vld [vmem:[%s3 + $0xf30] sm:$0xff]
  %v1448 = vld [vmem:[%s3 + $0xf38] sm:$0xff]
  %v1449 = vld [vmem:[%s3 + $0xf40] sm:$0xff]
  %v1450 = vld [vmem:[%s3 + $0xf48] sm:$0xff]
  %v1451 = vld [vmem:[%s3 + $0xf50] sm:$0xff]
  %v1452 = vld [vmem:[%s3 + $0xf58] sm:$0xff]
  %v1453 = vld [vmem:[%s3 + $0xf60] sm:$0xff]
  %v1454 = vld [vmem:[%s3 + $0xf68] sm:$0xff]
  %v1455 = vld [vmem:[%s3 + $0xf70] sm:$0xff]
  %v1456 = vld [vmem:[%s3 + $0xf78] sm:$0xff]
  %v1457 = vld [vmem:[%s3 + $0xf80] sm:$0xff]
  %v1458 = vld [vmem:[%s3 + $0xf88] sm:$0xff]
  %v1459 = vld [vmem:[%s3 + $0xf90] sm:$0xff]
  %v1460 = vld [vmem:[%s3 + $0xf98] sm:$0xff]
  %v1461 = vld [vmem:[%s3 + $0xfa0] sm:$0xff]
  %v1462 = vld [vmem:[%s3 + $0xfa8] sm:$0xff]
  %v1463 = vld [vmem:[%s3 + $0xfb0] sm:$0xff]
  %v1464 = vld [vmem:[%s3 + $0xfb8] sm:$0xff]
  %v1465 = vld [vmem:[%s3 + $0xfc0] sm:$0xff]
  %v1466 = vld [vmem:[%s3 + $0xfc8] sm:$0xff]
  %v1467 = vld [vmem:[%s3 + $0xfd0] sm:$0xff]
  %v1468 = vld [vmem:[%s3 + $0xfd8] sm:$0xff]
  %v1469 = vld [vmem:[%s3 + $0xfe0] sm:$0xff]
  %v1470 = vld [vmem:[%s3 + $0xfe8] sm:$0xff]
  %v1471 = vld [vmem:[%s3 + $0xff0] sm:$0xff]
  %v1472 = vld [vmem:[%s3 + $0xff8] sm:$0xff]
  %v1473 = vld [vmem:[%s3 + $0x1000] sm:$0xff]
  %v1474 = vld [vmem:[%s3 + $0x1008] sm:$0xff]
  %v1475 = vld [vmem:[%s3 + $0x1010] sm:$0xff]
  %v1476 = vld [vmem:[%s3 + $0x1018] sm:$0xff]
  %v1477 = vld [vmem:[%s3 + $0x1020] sm:$0xff]
  %v1478 = vld [vmem:[%s3 + $0x1028] sm:$0xff]
  %v1479 = vld [vmem:[%s3 + $0x1030] sm:$0xff]
  %v1480 = vld [vmem:[%s3 + $0x1038] sm:$0xff]
  %v1481 = vld [vmem:[%s3 + $0x1040] sm:$0xff]
  %v1482 = vld [vmem:[%s3 + $0x1048] sm:$0xff]
  %v1483 = vld [vmem:[%s3 + $0x1050] sm:$0xff]
  %v1484 = vld [vmem:[%s3 + $0x1058] sm:$0xff]
  %v1485 = vld [vmem:[%s3 + $0x1060] sm:$0xff]
  %v1486 = vld [vmem:[%s3 + $0x1068] sm:$0xff]
  %v1487 = vld [vmem:[%s3 + $0x1070] sm:$0xff]
  %v1488 = vld [vmem:[%s3 + $0x1078] sm:$0xff]
  %v1489 = vld [vmem:[%s3 + $0x1080] sm:$0xff]
  %v1490 = vld [vmem:[%s3 + $0x1088] sm:$0xff]
  %v1491 = vld [vmem:[%s3 + $0x1090] sm:$0xff]
  %v1492 = vld [vmem:[%s3 + $0x1098] sm:$0xff]
  %v1493 = vld [vmem:[%s3 + $0x10a0] sm:$0xff]
  %v1494 = vld [vmem:[%s3 + $0x10a8] sm:$0xff]
  %v1495 = vld [vmem:[%s3 + $0x10b0] sm:$0xff]
  %v1496 = vld [vmem:[%s3 + $0x10b8] sm:$0xff]
  %v1497 = vld [vmem:[%s3 + $0x10c0] sm:$0xff]
  %v1498 = vld [vmem:[%s3 + $0x10c8] sm:$0xff]
  %v1499 = vld [vmem:[%s3 + $0x10d0] sm:$0xff]
  %v1500 = vld [vmem:[%s3 + $0x10d8] sm:$0xff]
  %v1501 = vld [vmem:[%s3 + $0x10e0] sm:$0xff]
  %v1502 = vld [vmem:[%s3 + $0x10e8] sm:$0xff]
  %v1503 = vld [vmem:[%s3 + $0x10f0] sm:$0xff]
  %v1504 = vld [vmem:[%s3 + $0x10f8] sm:$0xff]
  %v1505 = vld [vmem:[%s3 + $0x1100] sm:$0xff]
  %v1506 = vld [vmem:[%s3 + $0x1108] sm:$0xff]
  %v1507 = vld [vmem:[%s3 + $0x1110] sm:$0xff]
  %v1508 = vld [vmem:[%s3 + $0x1118] sm:$0xff]
  %v1509 = vld [vmem:[%s3 + $0x1120] sm:$0xff]
  %v1510 = vld [vmem:[%s3 + $0x1128] sm:$0xff]
  %v1511 = vld [vmem:[%s3 + $0x1130] sm:$0xff]
  %v1512 = vld [vmem:[%s3 + $0x1138] sm:$0xff]
  %v1513 = vld [vmem:[%s3 + $0x1140] sm:$0xff]
  %v1514 = vld [vmem:[%s3 + $0x1148] sm:$0xff]
  %v1515 = vld [vmem:[%s3 + $0x1150] sm:$0xff]
  %v1516 = vld [vmem:[%s3 + $0x1158] sm:$0xff]
  %v1517 = vld [vmem:[%s3 + $0x1160] sm:$0xff]
  %v1518 = vld [vmem:[%s3 + $0x1168] sm:$0xff]
  %v1519 = vld [vmem:[%s3 + $0x1170] sm:$0xff]
  %v1520 = vld [vmem:[%s3 + $0x1178] sm:$0xff]
  %v1521 = vld [vmem:[%s3 + $0x1180] sm:$0xff]
  %v1522 = vld [vmem:[%s3 + $0x1188] sm:$0xff]
  %v1523 = vld [vmem:[%s3 + $0x1190] sm:$0xff]
  %v1524 = vld [vmem:[%s3 + $0x1198] sm:$0xff]
  %v1525 = vld [vmem:[%s3 + $0x11a0] sm:$0xff]
  %v1526 = vld [vmem:[%s3 + $0x11a8] sm:$0xff]
  %v1527 = vld [vmem:[%s3 + $0x11b0] sm:$0xff]
  %v1528 = vld [vmem:[%s3 + $0x11b8] sm:$0xff]
  %v1529 = vld [vmem:[%s3 + $0x11c0] sm:$0xff]
  %v1530 = vld [vmem:[%s3 + $0x11c8] sm:$0xff]
  %v1531 = vld [vmem:[%s3 + $0x11d0] sm:$0xff]
  %v1532 = vld [vmem:[%s3 + $0x11d8] sm:$0xff]
  %v1533 = vld [vmem:[%s3 + $0x11e0] sm:$0xff]
  %v1534 = vld [vmem:[%s3 + $0x11e8] sm:$0xff]
  %v1535 = vld [vmem:[%s3 + $0x11f0] sm:$0xff]
  %v1536 = vld [vmem:[%s3 + $0x11f8] sm:$0xff]
  %v1537 = vld [vmem:[%s3 + $0x1200] sm:$0xff]
  %v1538 = vld [vmem:[%s3 + $0x1208] sm:$0xff]
  %v1539 = vld [vmem:[%s3 + $0x1210] sm:$0xff]
  %v1540 = vld [vmem:[%s3 + $0x1218] sm:$0xff]
  %v1541 = vld [vmem:[%s3 + $0x1220] sm:$0xff]
  %v1542 = vld [vmem:[%s3 + $0x1228] sm:$0xff]
  %v1543 = vld [vmem:[%s3 + $0x1230] sm:$0xff]
  %v1544 = vld [vmem:[%s3 + $0x1238] sm:$0xff]
  %v1545 = vld [vmem:[%s3 + $0x1240] sm:$0xff]
  %v1546 = vld [vmem:[%s3 + $0x1248] sm:$0xff]
  %v1547 = vld [vmem:[%s3 + $0x1250] sm:$0xff]
  %v1548 = vld [vmem:[%s3 + $0x1258] sm:$0xff]
  %v1549 = vld [vmem:[%s3 + $0x1260] sm:$0xff]
  %v1550 = vld [vmem:[%s3 + $0x1268] sm:$0xff]
  %v1551 = vld [vmem:[%s3 + $0x1270] sm:$0xff]
  %v1552 = vld [vmem:[%s3 + $0x1278] sm:$0xff]
  %v1553 = vld [vmem:[%s3 + $0x1280] sm:$0xff]
  %v1554 = vld [vmem:[%s3 + $0x1288] sm:$0xff]
  %v1555 = vld [vmem:[%s3 + $0x1290] sm:$0xff]
  %v1556 = vld [vmem:[%s3 + $0x1298] sm:$0xff]
  %v1557 = vld [vmem:[%s3 + $0x12a0] sm:$0xff]
  %v1558 = vld [vmem:[%s3 + $0x12a8] sm:$0xff]
  %v1559 = vld [vmem:[%s3 + $0x12b0] sm:$0xff]
  %v1560 = vld [vmem:[%s3 + $0x12b8] sm:$0xff]
  %v1561 = vld [vmem:[%s3 + $0x12c0] sm:$0xff]
  %v1562 = vld [vmem:[%s3 + $0x12c8] sm:$0xff]
  %v1563 = vld [vmem:[%s3 + $0x12d0] sm:$0xff]
  %v1564 = vld [vmem:[%s3 + $0x12d8] sm:$0xff]
  %v1565 = vld [vmem:[%s3 + $0x12e0] sm:$0xff]
  %v1566 = vld [vmem:[%s3 + $0x12e8] sm:$0xff]
  %v1567 = vld [vmem:[%s3 + $0x12f0] sm:$0xff]
  %v1568 = vld [vmem:[%s3 + $0x12f8] sm:$0xff]
  %v1569 = vld [vmem:[%s3 + $0x1300] sm:$0xff]
  %v1570 = vld [vmem:[%s3 + $0x1308] sm:$0xff]
  %v1571 = vld [vmem:[%s3 + $0x1310] sm:$0xff]
  %v1572 = vld [vmem:[%s3 + $0x1318] sm:$0xff]
  %v1573 = vld [vmem:[%s3 + $0x1320] sm:$0xff]
  %v1574 = vld [vmem:[%s3 + $0x1328] sm:$0xff]
  %v1575 = vld [vmem:[%s3 + $0x1330] sm:$0xff]
  %v1576 = vld [vmem:[%s3 + $0x1338] sm:$0xff]
  %v1577 = vld [vmem:[%s3 + $0x1340] sm:$0xff]
  %v1578 = vld [vmem:[%s3 + $0x1348] sm:$0xff]
  %v1579 = vld [vmem:[%s3 + $0x1350] sm:$0xff]
  %v1580 = vld [vmem:[%s3 + $0x1358] sm:$0xff]
  %v1581 = vld [vmem:[%s3 + $0x1360] sm:$0xff]
  %v1582 = vld [vmem:[%s3 + $0x1368] sm:$0xff]
  %v1583 = vld [vmem:[%s3 + $0x1370] sm:$0xff]
  %v1584 = vld [vmem:[%s3 + $0x1378] sm:$0xff]
  %v1585 = vld [vmem:[%s3 + $0x1380] sm:$0xff]
  %v1586 = vld [vmem:[%s3 + $0x1388] sm:$0xff]
  %v1587 = vld [vmem:[%s3 + $0x1390] sm:$0xff]
  %v1588 = vld [vmem:[%s3 + $0x1398] sm:$0xff]
  %v1589 = vld [vmem:[%s3 + $0x13a0] sm:$0xff]
  %v1590 = vld [vmem:[%s3 + $0x13a8] sm:$0xff]
  %v1591 = vld [vmem:[%s3 + $0x13b0] sm:$0xff]
  %v1592 = vld [vmem:[%s3 + $0x13b8] sm:$0xff]
  %v1593 = vld [vmem:[%s3 + $0x13c0] sm:$0xff]
  %v1594 = vld [vmem:[%s3 + $0x13c8] sm:$0xff]
  %v1595 = vld [vmem:[%s3 + $0x13d0] sm:$0xff]
  %v1596 = vld [vmem:[%s3 + $0x13d8] sm:$0xff]
  %v1597 = vld [vmem:[%s3 + $0x13e0] sm:$0xff]
  %v1598 = vld [vmem:[%s3 + $0x13e8] sm:$0xff]
  %v1599 = vld [vmem:[%s3 + $0x13f0] sm:$0xff]
  %v1600 = vld [vmem:[%s3 + $0x13f8] sm:$0xff]
  %v1601 = vld [vmem:[%s3 + $0x1400] sm:$0xff]
  %v1602 = vld [vmem:[%s3 + $0x1408] sm:$0xff]
  %v1603 = vld [vmem:[%s3 + $0x1410] sm:$0xff]
  %v1604 = vld [vmem:[%s3 + $0x1418] sm:$0xff]
  %v1605 = vld [vmem:[%s3 + $0x1420] sm:$0xff]
  %v1606 = vld [vmem:[%s3 + $0x1428] sm:$0xff]
  %v1607 = vld [vmem:[%s3 + $0x1430] sm:$0xff]
  %v1608 = vld [vmem:[%s3 + $0x1438] sm:$0xff]
  %v1609 = vld [vmem:[%s3 + $0x1440] sm:$0xff]
  %v1610 = vld [vmem:[%s3 + $0x1448] sm:$0xff]
  %v1611 = vld [vmem:[%s3 + $0x1450] sm:$0xff]
  %v1612 = vld [vmem:[%s3 + $0x1458] sm:$0xff]
  %v1613 = vld [vmem:[%s3 + $0x1460] sm:$0xff]
  %v1614 = vld [vmem:[%s3 + $0x1468] sm:$0xff]
  %v1615 = vld [vmem:[%s3 + $0x1470] sm:$0xff]
  %v1616 = vld [vmem:[%s3 + $0x1478] sm:$0xff]
  %v1617 = vld [vmem:[%s3 + $0x1480] sm:$0xff]
  %v1618 = vld [vmem:[%s3 + $0x1488] sm:$0xff]
  %v1619 = vld [vmem:[%s3 + $0x1490] sm:$0xff]
  %v1620 = vld [vmem:[%s3 + $0x1498] sm:$0xff]
  %v1621 = vld [vmem:[%s3 + $0x14a0] sm:$0xff]
  %v1622 = vld [vmem:[%s3 + $0x14a8] sm:$0xff]
  %v1623 = vld [vmem:[%s3 + $0x14b0] sm:$0xff]
  %v1624 = vld [vmem:[%s3 + $0x14b8] sm:$0xff]
  %v1625 = vld [vmem:[%s3 + $0x14c0] sm:$0xff]
  %v1626 = vld [vmem:[%s3 + $0x14c8] sm:$0xff]
  %v1627 = vld [vmem:[%s3 + $0x14d0] sm:$0xff]
  %v1628 = vld [vmem:[%s3 + $0x14d8] sm:$0xff]
  %v1629 = vld [vmem:[%s3 + $0x14e0] sm:$0xff]
  %v1630 = vld [vmem:[%s3 + $0x14e8] sm:$0xff]
  %v1631 = vld [vmem:[%s3 + $0x14f0] sm:$0xff]
  %v1632 = vld [vmem:[%s3 + $0x14f8] sm:$0xff]
  %v1633 = vld [vmem:[%s3 + $0x1500] sm:$0xff]
  %v1634 = vld [vmem:[%s3 + $0x1508] sm:$0xff]
  %v1635 = vld [vmem:[%s3 + $0x1510] sm:$0xff]
  %v1636 = vld [vmem:[%s3 + $0x1518] sm:$0xff]
  %v1637 = vld [vmem:[%s3 + $0x1520] sm:$0xff]
  %v1638 = vld [vmem:[%s3 + $0x1528] sm:$0xff]
  %v1639 = vld [vmem:[%s3 + $0x1530] sm:$0xff]
  %v1640 = vld [vmem:[%s3 + $0x1538] sm:$0xff]
  %v1641 = vld [vmem:[%s3 + $0x1540] sm:$0xff]
  %v1642 = vld [vmem:[%s3 + $0x1548] sm:$0xff]
  %v1643 = vld [vmem:[%s3 + $0x1550] sm:$0xff]
  %v1644 = vld [vmem:[%s3 + $0x1558] sm:$0xff]
  %v1645 = vld [vmem:[%s3 + $0x1560] sm:$0xff]
  %v1646 = vld [vmem:[%s3 + $0x1568] sm:$0xff]
  %v1647 = vld [vmem:[%s3 + $0x1570] sm:$0xff]
  %v1648 = vld [vmem:[%s3 + $0x1578] sm:$0xff]
  %v1649 = vld [vmem:[%s3 + $0x1580] sm:$0xff]
  %v1650 = vld [vmem:[%s3 + $0x1588] sm:$0xff]
  %v1651 = vld [vmem:[%s3 + $0x1590] sm:$0xff]
  %v1652 = vld [vmem:[%s3 + $0x1598] sm:$0xff]
  %v1653 = vld [vmem:[%s3 + $0x15a0] sm:$0xff]
  %v1654 = vld [vmem:[%s3 + $0x15a8] sm:$0xff]
  %v1655 = vld [vmem:[%s3 + $0x15b0] sm:$0xff]
  %v1656 = vld [vmem:[%s3 + $0x15b8] sm:$0xff]
  %v1657 = vld [vmem:[%s3 + $0x15c0] sm:$0xff]
  %v1658 = vld [vmem:[%s3 + $0x15c8] sm:$0xff]
  %v1659 = vld [vmem:[%s3 + $0x15d0] sm:$0xff]
  %v1660 = vld [vmem:[%s3 + $0x15d8] sm:$0xff]
  %v1661 = vld [vmem:[%s3 + $0x15e0] sm:$0xff]
  %v1662 = vld [vmem:[%s3 + $0x15e8] sm:$0xff]
  %v1663 = vld [vmem:[%s3 + $0x15f0] sm:$0xff]
  %v1664 = vld [vmem:[%s3 + $0x15f8] sm:$0xff]
  %v1665 = vld [vmem:[%s3 + $0x1600] sm:$0xff]
  %v1666 = vld [vmem:[%s3 + $0x1608] sm:$0xff]
  %v1667 = vld [vmem:[%s3 + $0x1610] sm:$0xff]
  %v1668 = vld [vmem:[%s3 + $0x1618] sm:$0xff]
  %v1669 = vld [vmem:[%s3 + $0x1620] sm:$0xff]
  %v1670 = vld [vmem:[%s3 + $0x1628] sm:$0xff]
  %v1671 = vld [vmem:[%s3 + $0x1630] sm:$0xff]
  %v1672 = vld [vmem:[%s3 + $0x1638] sm:$0xff]
  %v1673 = vld [vmem:[%s3 + $0x1640] sm:$0xff]
  %v1674 = vld [vmem:[%s3 + $0x1648] sm:$0xff]
  %v1675 = vld [vmem:[%s3 + $0x1650] sm:$0xff]
  %v1676 = vld [vmem:[%s3 + $0x1658] sm:$0xff]
  %v1677 = vld [vmem:[%s3 + $0x1660] sm:$0xff]
  %v1678 = vld [vmem:[%s3 + $0x1668] sm:$0xff]
  %v1679 = vld [vmem:[%s3 + $0x1670] sm:$0xff]
  %v1680 = vld [vmem:[%s3 + $0x1678] sm:$0xff]
  %v1681 = vld [vmem:[%s3 + $0x1680] sm:$0xff]
  %v1682 = vld [vmem:[%s3 + $0x1688] sm:$0xff]
  %v1683 = vld [vmem:[%s3 + $0x1690] sm:$0xff]
  %v1684 = vld [vmem:[%s3 + $0x1698] sm:$0xff]
  %v1685 = vld [vmem:[%s3 + $0x16a0] sm:$0xff]
  %v1686 = vld [vmem:[%s3 + $0x16a8] sm:$0xff]
  %v1687 = vld [vmem:[%s3 + $0x16b0] sm:$0xff]
  %v1688 = vld [vmem:[%s3 + $0x16b8] sm:$0xff]
  %v1689 = vld [vmem:[%s3 + $0x16c0] sm:$0xff]
  %v1690 = vld [vmem:[%s3 + $0x16c8] sm:$0xff]
  %v1691 = vld [vmem:[%s3 + $0x16d0] sm:$0xff]
  %v1692 = vld [vmem:[%s3 + $0x16d8] sm:$0xff]
  %v1693 = vld [vmem:[%s3 + $0x16e0] sm:$0xff]
  %v1694 = vld [vmem:[%s3 + $0x16e8] sm:$0xff]
  %v1695 = vld [vmem:[%s3 + $0x16f0] sm:$0xff]
  %v1696 = vld [vmem:[%s3 + $0x16f8] sm:$0xff]
  %v1697 = vld [vmem:[%s3 + $0x1700] sm:$0xff]
  %v1698 = vld [vmem:[%s3 + $0x1708] sm:$0xff]
  %v1699 = vld [vmem:[%s3 + $0x1710] sm:$0xff]
  %v1700 = vld [vmem:[%s3 + $0x1718] sm:$0xff]
  %v1701 = vld [vmem:[%s3 + $0x1720] sm:$0xff]
  %v1702 = vld [vmem:[%s3 + $0x1728] sm:$0xff]
  %v1703 = vld [vmem:[%s3 + $0x1730] sm:$0xff]
  %v1704 = vld [vmem:[%s3 + $0x1738] sm:$0xff]
  %v1705 = vld [vmem:[%s3 + $0x1740] sm:$0xff]
  %v1706 = vld [vmem:[%s3 + $0x1748] sm:$0xff]
  %v1707 = vld [vmem:[%s3 + $0x1750] sm:$0xff]
  %v1708 = vld [vmem:[%s3 + $0x1758] sm:$0xff]
  %v1709 = vld [vmem:[%s3 + $0x1760] sm:$0xff]
  %v1710 = vld [vmem:[%s3 + $0x1768] sm:$0xff]
  %v1711 = vld [vmem:[%s3 + $0x1770] sm:$0xff]
  %v1712 = vld [vmem:[%s3 + $0x1778] sm:$0xff]
  %v1713 = vld [vmem:[%s3 + $0x1780] sm:$0xff]
  %v1714 = vld [vmem:[%s3 + $0x1788] sm:$0xff]
  %v1715 = vld [vmem:[%s3 + $0x1790] sm:$0xff]
  %v1716 = vld [vmem:[%s3 + $0x1798] sm:$0xff]
  %v1717 = vld [vmem:[%s3 + $0x17a0] sm:$0xff]
  %v1718 = vld [vmem:[%s3 + $0x17a8] sm:$0xff]
  %v1719 = vld [vmem:[%s3 + $0x17b0] sm:$0xff]
  %v1720 = vld [vmem:[%s3 + $0x17b8] sm:$0xff]
  %v1721 = vld [vmem:[%s3 + $0x17c0] sm:$0xff]
  %v1722 = vld [vmem:[%s3 + $0x17c8] sm:$0xff]
  %v1723 = vld [vmem:[%s3 + $0x17d0] sm:$0xff]
  %v1724 = vld [vmem:[%s3 + $0x17d8] sm:$0xff]
  %v1725 = vld [vmem:[%s3 + $0x17e0] sm:$0xff]
  %v1726 = vld [vmem:[%s3 + $0x17e8] sm:$0xff]
  %v1727 = vld [vmem:[%s3 + $0x17f0] sm:$0xff]
  %v1728 = vld [vmem:[%s3 + $0x17f8] sm:$0xff]
  %v1729 = vld [vmem:[%s3 + $0x1800] sm:$0xff]
  %v1730 = vld [vmem:[%s3 + $0x1808] sm:$0xff]
  %v1731 = vld [vmem:[%s3 + $0x1810] sm:$0xff]
  %v1732 = vld [vmem:[%s3 + $0x1818] sm:$0xff]
  %v1733 = vld [vmem:[%s3 + $0x1820] sm:$0xff]
  %v1734 = vld [vmem:[%s3 + $0x1828] sm:$0xff]
  %v1735 = vld [vmem:[%s3 + $0x1830] sm:$0xff]
  %v1736 = vld [vmem:[%s3 + $0x1838] sm:$0xff]
  %v1737 = vld [vmem:[%s3 + $0x1840] sm:$0xff]
  %v1738 = vld [vmem:[%s3 + $0x1848] sm:$0xff]
  %v1739 = vld [vmem:[%s3 + $0x1850] sm:$0xff]
  %v1740 = vld [vmem:[%s3 + $0x1858] sm:$0xff]
  %v1741 = vld [vmem:[%s3 + $0x1860] sm:$0xff]
  %v1742 = vld [vmem:[%s3 + $0x1868] sm:$0xff]
  %v1743 = vld [vmem:[%s3 + $0x1870] sm:$0xff]
  %v1744 = vld [vmem:[%s3 + $0x1878] sm:$0xff]
  %v1745 = vld [vmem:[%s3 + $0x1880] sm:$0xff]
  %v1746 = vld [vmem:[%s3 + $0x1888] sm:$0xff]
  %v1747 = vld [vmem:[%s3 + $0x1890] sm:$0xff]
  %v1748 = vld [vmem:[%s3 + $0x1898] sm:$0xff]
  %v1749 = vld [vmem:[%s3 + $0x18a0] sm:$0xff]
  %v1750 = vld [vmem:[%s3 + $0x18a8] sm:$0xff]
  %v1751 = vld [vmem:[%s3 + $0x18b0] sm:$0xff]
  %v1752 = vld [vmem:[%s3 + $0x18b8] sm:$0xff]
  %v1753 = vld [vmem:[%s3 + $0x18c0] sm:$0xff]
  %v1754 = vld [vmem:[%s3 + $0x18c8] sm:$0xff]
  %v1755 = vld [vmem:[%s3 + $0x18d0] sm:$0xff]
  %v1756 = vld [vmem:[%s3 + $0x18d8] sm:$0xff]
  %v1757 = vld [vmem:[%s3 + $0x18e0] sm:$0xff]
  %v1758 = vld [vmem:[%s3 + $0x18e8] sm:$0xff]
  %v1759 = vld [vmem:[%s3 + $0x18f0] sm:$0xff]
  %v1760 = vld [vmem:[%s3 + $0x18f8] sm:$0xff]
  %v1761 = vld [vmem:[%s3 + $0x1900] sm:$0xff]
  %v1762 = vld [vmem:[%s3 + $0x1908] sm:$0xff]
  %v1763 = vld [vmem:[%s3 + $0x1910] sm:$0xff]
  %v1764 = vld [vmem:[%s3 + $0x1918] sm:$0xff]
  %v1765 = vld [vmem:[%s3 + $0x1920] sm:$0xff]
  %v1766 = vld [vmem:[%s3 + $0x1928] sm:$0xff]
  %v1767 = vld [vmem:[%s3 + $0x1930] sm:$0xff]
  %v1768 = vld [vmem:[%s3 + $0x1938] sm:$0xff]
  %v1769 = vld [vmem:[%s3 + $0x1940] sm:$0xff]
  %v1770 = vld [vmem:[%s3 + $0x1948] sm:$0xff]
  %v1771 = vld [vmem:[%s3 + $0x1950] sm:$0xff]
  %v1772 = vld [vmem:[%s3 + $0x1958] sm:$0xff]
  %v1773 = vld [vmem:[%s3 + $0x1960] sm:$0xff]
  %v1774 = vld [vmem:[%s3 + $0x1968] sm:$0xff]
  %v1775 = vld [vmem:[%s3 + $0x1970] sm:$0xff]
  %v1776 = vld [vmem:[%s3 + $0x1978] sm:$0xff]
  %v1777 = vld [vmem:[%s3 + $0x1980] sm:$0xff]
  %v1778 = vld [vmem:[%s3 + $0x1988] sm:$0xff]
  %v1779 = vld [vmem:[%s3 + $0x1990] sm:$0xff]
  %v1780 = vld [vmem:[%s3 + $0x1998] sm:$0xff]
  %v1781 = vld [vmem:[%s3 + $0x19a0] sm:$0xff]
  %v1782 = vld [vmem:[%s3 + $0x19a8] sm:$0xff]
  %v1783 = vld [vmem:[%s3 + $0x19b0] sm:$0xff]
  %v1784 = vld [vmem:[%s3 + $0x19b8] sm:$0xff]
  %v1785 = vld [vmem:[%s3 + $0x19c0] sm:$0xff]
  %v1786 = vld [vmem:[%s3 + $0x19c8] sm:$0xff]
  %v1787 = vld [vmem:[%s3 + $0x19d0] sm:$0xff]
  %v1788 = vld [vmem:[%s3 + $0x19d8] sm:$0xff]
  %v1789 = vld [vmem:[%s3 + $0x19e0] sm:$0xff]
  %v1790 = vld [vmem:[%s3 + $0x19e8] sm:$0xff]
  %v1791 = vld [vmem:[%s3 + $0x19f0] sm:$0xff]
  %v1792 = vld [vmem:[%s3 + $0x19f8] sm:$0xff]
  %v1793 = vld [vmem:[%s3 + $0x1a00] sm:$0xff]
  %v1794 = vld [vmem:[%s3 + $0x1a08] sm:$0xff]
  %v1795 = vld [vmem:[%s3 + $0x1a10] sm:$0xff]
  %v1796 = vld [vmem:[%s3 + $0x1a18] sm:$0xff]
  %v1797 = vld [vmem:[%s3 + $0x1a20] sm:$0xff]
  %v1798 = vld [vmem:[%s3 + $0x1a28] sm:$0xff]
  %v1799 = vld [vmem:[%s3 + $0x1a30] sm:$0xff]
  %v1800 = vld [vmem:[%s3 + $0x1a38] sm:$0xff]
  %v1801 = vld [vmem:[%s3 + $0x1a40] sm:$0xff]
  %v1802 = vld [vmem:[%s3 + $0x1a48] sm:$0xff]
  %v1803 = vld [vmem:[%s3 + $0x1a50] sm:$0xff]
  %v1804 = vld [vmem:[%s3 + $0x1a58] sm:$0xff]
  %v1805 = vld [vmem:[%s3 + $0x1a60] sm:$0xff]
  %v1806 = vld [vmem:[%s3 + $0x1a68] sm:$0xff]
  %v1807 = vld [vmem:[%s3 + $0x1a70] sm:$0xff]
  %v1808 = vld [vmem:[%s3 + $0x1a78] sm:$0xff]
  %v1809 = vld [vmem:[%s3 + $0x1a80] sm:$0xff]
  %v1810 = vld [vmem:[%s3 + $0x1a88] sm:$0xff]
  %v1811 = vld [vmem:[%s3 + $0x1a90] sm:$0xff]
  %v1812 = vld [vmem:[%s3 + $0x1a98] sm:$0xff]
  %v1813 = vld [vmem:[%s3 + $0x1aa0] sm:$0xff]
  %v1814 = vld [vmem:[%s3 + $0x1aa8] sm:$0xff]
  %v1815 = vld [vmem:[%s3 + $0x1ab0] sm:$0xff]
  %v1816 = vld [vmem:[%s3 + $0x1ab8] sm:$0xff]
  %v1817 = vld [vmem:[%s3 + $0x1ac0] sm:$0xff]
  %v1818 = vld [vmem:[%s3 + $0x1ac8] sm:$0xff]
  %v1819 = vld [vmem:[%s3 + $0x1ad0] sm:$0xff]
  %v1820 = vld [vmem:[%s3 + $0x1ad8] sm:$0xff]
  %v1821 = vld [vmem:[%s3 + $0x1ae0] sm:$0xff]
  %v1822 = vld [vmem:[%s3 + $0x1ae8] sm:$0xff]
  %v1823 = vld [vmem:[%s3 + $0x1af0] sm:$0xff]
  %v1824 = vld [vmem:[%s3 + $0x1af8] sm:$0xff]
  %v1825 = vld [vmem:[%s3 + $0x1b00] sm:$0xff]
  %v1826 = vld [vmem:[%s3 + $0x1b08] sm:$0xff]
  %v1827 = vld [vmem:[%s3 + $0x1b10] sm:$0xff]
  %v1828 = vld [vmem:[%s3 + $0x1b18] sm:$0xff]
  %v1829 = vld [vmem:[%s3 + $0x1b20] sm:$0xff]
  %v1830 = vld [vmem:[%s3 + $0x1b28] sm:$0xff]
  %v1831 = vld [vmem:[%s3 + $0x1b30] sm:$0xff]
  %v1832 = vld [vmem:[%s3 + $0x1b38] sm:$0xff]
  %v1833 = vld [vmem:[%s3 + $0x1b40] sm:$0xff]
  %v1834 = vld [vmem:[%s3 + $0x1b48] sm:$0xff]
  %v1835 = vld [vmem:[%s3 + $0x1b50] sm:$0xff]
  %v1836 = vld [vmem:[%s3 + $0x1b58] sm:$0xff]
  %v1837 = vld [vmem:[%s3 + $0x1b60] sm:$0xff]
  %v1838 = vld [vmem:[%s3 + $0x1b68] sm:$0xff]
  %v1839 = vld [vmem:[%s3 + $0x1b70] sm:$0xff]
  %v1840 = vld [vmem:[%s3 + $0x1b78] sm:$0xff]
  %v1841 = vld [vmem:[%s3 + $0x1b80] sm:$0xff]
  %v1842 = vld [vmem:[%s3 + $0x1b88] sm:$0xff]
  %v1843 = vld [vmem:[%s4] sm:$0xff]
  %v1844 = vld [vmem:[%s4 + $0x8] sm:$0xff]
  %v1845 = vld [vmem:[%s4 + $0x10] sm:$0x3]
  %v1849 = vlaneseq
  %v1850 = vshrl.u32 %v1849, 7
  %v1851 = vsub.s32 0, %v1850
  %v1852 = vrot.slane %v1843, %v1851
  %v1853 = vlaneseq
  %v1854 = vshrl.u32 %v1853, 7
  %v1855 = vsub.s32 1, %v1854
  %v1856 = vrot.slane %v1843, %v1855
  %v1857 = vlaneseq
  %v1858 = vshrl.u32 %v1857, 7
  %v1859 = vsub.s32 2, %v1858
  %v1860 = vrot.slane %v1843, %v1859
  %v1861 = vlaneseq
  %v1862 = vshrl.u32 %v1861, 7
  %v1863 = vsub.s32 3, %v1862
  %v1864 = vrot.slane %v1843, %v1863
  %v1865 = vlaneseq
  %v1866 = vshrl.u32 %v1865, 7
  %v1867 = vsub.s32 4, %v1866
  %v1868 = vrot.slane %v1843, %v1867
  %v1869 = vlaneseq
  %v1870 = vshrl.u32 %v1869, 7
  %v1871 = vsub.s32 5, %v1870
  %v1872 = vrot.slane %v1843, %v1871
  %v1873 = vlaneseq
  %v1874 = vshrl.u32 %v1873, 7
  %v1875 = vsub.s32 6, %v1874
  %v1876 = vrot.slane %v1843, %v1875
  %v1877 = vlaneseq
  %v1878 = vshrl.u32 %v1877, 7
  %v1879 = vsub.s32 7, %v1878
  %v1880 = vrot.slane %v1843, %v1879
  %v1881 = vlaneseq
  %v1882 = vshrl.u32 %v1881, 7
  %v1883 = vsub.s32 0, %v1882
  %v1884 = vrot.slane %v1844, %v1883
  %v1885 = vlaneseq
  %v1886 = vshrl.u32 %v1885, 7
  %v1887 = vsub.s32 1, %v1886
  %v1888 = vrot.slane %v1844, %v1887
  %v1889 = vlaneseq
  %v1890 = vshrl.u32 %v1889, 7
  %v1891 = vsub.s32 2, %v1890
  %v1892 = vrot.slane %v1844, %v1891
  %v1893 = vlaneseq
  %v1894 = vshrl.u32 %v1893, 7
  %v1895 = vsub.s32 3, %v1894
  %v1896 = vrot.slane %v1844, %v1895
  %v1897 = vlaneseq
  %v1898 = vshrl.u32 %v1897, 7
  %v1899 = vsub.s32 4, %v1898
  %v1900 = vrot.slane %v1844, %v1899
  %v1901 = vlaneseq
  %v1902 = vshrl.u32 %v1901, 7
  %v1903 = vsub.s32 5, %v1902
  %v1904 = vrot.slane %v1844, %v1903
  %v1905 = vlaneseq
  %v1906 = vshrl.u32 %v1905, 7
  %v1907 = vsub.s32 6, %v1906
  %v1908 = vrot.slane %v1844, %v1907
  %v1909 = vlaneseq
  %v1910 = vshrl.u32 %v1909, 7
  %v1911 = vsub.s32 7, %v1910
  %v1912 = vrot.slane %v1844, %v1911
  %v1913 = vlaneseq
  %v1914 = vshrl.u32 %v1913, 7
  %v1915 = vsub.s32 0, %v1914
  %v1916 = vrot.slane %v1845, %v1915
  %v1917 = vlaneseq
  %v1918 = vshrl.u32 %v1917, 7
  %v1919 = vsub.s32 1, %v1918
  %v1920 = vrot.slane %v1845, %v1919
  %v2821 = vunpack.c.l.b16 %v961
  %v2822 = vunpack.c.h.b16 %v961
  %v2823 = vunpack.c.l.b16 %v962
  %v2824 = vunpack.c.h.b16 %v962
  %v2825 = vunpack.c.l.b16 %v963
  %v2826 = vunpack.c.h.b16 %v963
  %v2827 = vunpack.c.l.b16 %v964
  %v2828 = vunpack.c.h.b16 %v964
  %v2829 = vunpack.c.l.b16 %v965
  %v2830 = vunpack.c.h.b16 %v965
  %v2831 = vunpack.c.l.b16 %v966
  %v2832 = vunpack.c.h.b16 %v966
  %v2833 = vunpack.c.l.b16 %v967
  %v2834 = vunpack.c.h.b16 %v967
  %v2835 = vunpack.c.l.b16 %v968
  %v2836 = vunpack.c.h.b16 %v968
  %v2837 = vunpack.c.l.b16 %v969
  %v2838 = vunpack.c.h.b16 %v969
  %v2839 = vunpack.c.l.b16 %v970
  %v2840 = vunpack.c.h.b16 %v970
  %v2841 = vunpack.c.l.b16 %v971
  %v2842 = vunpack.c.h.b16 %v971
  %v2843 = vunpack.c.l.b16 %v972
  %v2844 = vunpack.c.h.b16 %v972
  %v2845 = vunpack.c.l.b16 %v973
  %v2846 = vunpack.c.h.b16 %v973
  %v2847 = vunpack.c.l.b16 %v974
  %v2848 = vunpack.c.h.b16 %v974
  %v2849 = vunpack.c.l.b16 %v975
  %v2850 = vunpack.c.h.b16 %v975
  %v2851 = vunpack.c.l.b16 %v976
  %v2852 = vunpack.c.h.b16 %v976
  %v2853 = vunpack.c.l.b16 %v977
  %v2854 = vunpack.c.h.b16 %v977
  %v2855 = vunpack.c.l.b16 %v978
  %v2856 = vunpack.c.h.b16 %v978
  %v2857 = vunpack.c.l.b16 %v979
  %v2858 = vunpack.c.h.b16 %v979
  %v2859 = vunpack.c.l.b16 %v980
  %v2860 = vunpack.c.h.b16 %v980
  %v2861 = vunpack.c.l.b16 %v981
  %v2862 = vunpack.c.h.b16 %v981
  %v2863 = vunpack.c.l.b16 %v982
  %v2864 = vunpack.c.h.b16 %v982
  %v2865 = vunpack.c.l.b16 %v983
  %v2866 = vunpack.c.h.b16 %v983
  %v2867 = vunpack.c.l.b16 %v984
  %v2868 = vunpack.c.h.b16 %v984
  %v2869 = vunpack.c.l.b16 %v985
  %v2870 = vunpack.c.h.b16 %v985
  %v2871 = vunpack.c.l.b16 %v986
  %v2872 = vunpack.c.h.b16 %v986
  %v2873 = vunpack.c.l.b16 %v987
  %v2874 = vunpack.c.h.b16 %v987
  %v2875 = vunpack.c.l.b16 %v988
  %v2876 = vunpack.c.h.b16 %v988
  %v2877 = vunpack.c.l.b16 %v989
  %v2878 = vunpack.c.h.b16 %v989
  %v2879 = vunpack.c.l.b16 %v990
  %v2880 = vunpack.c.h.b16 %v990
  %v2881 = vunpack.c.l.b16 %v991
  %v2882 = vunpack.c.h.b16 %v991
  %v2883 = vunpack.c.l.b16 %v992
  %v2884 = vunpack.c.h.b16 %v992
  %v2885 = vunpack.c.l.b16 %v993
  %v2886 = vunpack.c.h.b16 %v993
  %v2887 = vunpack.c.l.b16 %v994
  %v2888 = vunpack.c.h.b16 %v994
  %v2889 = vunpack.c.l.b16 %v995
  %v2890 = vunpack.c.h.b16 %v995
  %v2891 = vunpack.c.l.b16 %v996
  %v2892 = vunpack.c.h.b16 %v996
  %v2893 = vunpack.c.l.b16 %v997
  %v2894 = vunpack.c.h.b16 %v997
  %v2895 = vunpack.c.l.b16 %v998
  %v2896 = vunpack.c.h.b16 %v998
  %v2897 = vunpack.c.l.b16 %v999
  %v2898 = vunpack.c.h.b16 %v999
  %v2899 = vunpack.c.l.b16 %v1000
  %v2900 = vunpack.c.h.b16 %v1000
  %v2901 = vunpack.c.l.b16 %v1001
  %v2902 = vunpack.c.h.b16 %v1001
  %v2903 = vunpack.c.l.b16 %v1002
  %v2904 = vunpack.c.h.b16 %v1002
  %v2905 = vunpack.c.l.b16 %v1003
  %v2906 = vunpack.c.h.b16 %v1003
  %v2907 = vunpack.c.l.b16 %v1004
  %v2908 = vunpack.c.h.b16 %v1004
  %v2909 = vunpack.c.l.b16 %v1005
  %v2910 = vunpack.c.h.b16 %v1005
  %v2911 = vunpack.c.l.b16 %v1006
  %v2912 = vunpack.c.h.b16 %v1006
  %v2913 = vunpack.c.l.b16 %v1007
  %v2914 = vunpack.c.h.b16 %v1007
  %v2915 = vunpack.c.l.b16 %v1008
  %v2916 = vunpack.c.h.b16 %v1008
  %v2917 = vunpack.c.l.b16 %v1009
  %v2918 = vunpack.c.h.b16 %v1009
  %v2919 = vunpack.c.l.b16 %v1010
  %v2920 = vunpack.c.h.b16 %v1010
  %v2921 = vunpack.c.l.b16 %v1011
  %v2922 = vunpack.c.h.b16 %v1011
  %v2923 = vunpack.c.l.b16 %v1012
  %v2924 = vunpack.c.h.b16 %v1012
  %v2925 = vunpack.c.l.b16 %v1013
  %v2926 = vunpack.c.h.b16 %v1013
  %v2927 = vunpack.c.l.b16 %v1014
  %v2928 = vunpack.c.h.b16 %v1014
  %v2929 = vunpack.c.l.b16 %v1015
  %v2930 = vunpack.c.h.b16 %v1015
  %v2931 = vunpack.c.l.b16 %v1016
  %v2932 = vunpack.c.h.b16 %v1016
  %v2933 = vunpack.c.l.b16 %v1017
  %v2934 = vunpack.c.h.b16 %v1017
  %v2935 = vunpack.c.l.b16 %v1018
  %v2936 = vunpack.c.h.b16 %v1018
  %v2937 = vunpack.c.l.b16 %v1019
  %v2938 = vunpack.c.h.b16 %v1019
  %v2939 = vunpack.c.l.b16 %v1020
  %v2940 = vunpack.c.h.b16 %v1020
  %v2941 = vunpack.c.l.b16 %v1021
  %v2942 = vunpack.c.h.b16 %v1021
  %v2943 = vunpack.c.l.b16 %v1022
  %v2944 = vunpack.c.h.b16 %v1022
  %v2945 = vunpack.c.l.b16 %v1023
  %v2946 = vunpack.c.h.b16 %v1023
  %v2947 = vunpack.c.l.b16 %v1024
  %v2948 = vunpack.c.h.b16 %v1024
  %v2949 = vunpack.c.l.b16 %v1025
  %v2950 = vunpack.c.h.b16 %v1025
  %v2951 = vunpack.c.l.b16 %v1026
  %v2952 = vunpack.c.h.b16 %v1026
  %v2953 = vunpack.c.l.b16 %v1027
  %v2954 = vunpack.c.h.b16 %v1027
  %v2955 = vunpack.c.l.b16 %v1028
  %v2956 = vunpack.c.h.b16 %v1028
  %v2957 = vunpack.c.l.b16 %v1029
  %v2958 = vunpack.c.h.b16 %v1029
  %v2959 = vunpack.c.l.b16 %v1030
  %v2960 = vunpack.c.h.b16 %v1030
  %v2961 = vunpack.c.l.b16 %v1031
  %v2962 = vunpack.c.h.b16 %v1031
  %v2963 = vunpack.c.l.b16 %v1032
  %v2964 = vunpack.c.h.b16 %v1032
  %v2965 = vunpack.c.l.b16 %v1033
  %v2966 = vunpack.c.h.b16 %v1033
  %v2967 = vunpack.c.l.b16 %v1034
  %v2968 = vunpack.c.h.b16 %v1034
  %v2969 = vunpack.c.l.b16 %v1035
  %v2970 = vunpack.c.h.b16 %v1035
  %v2971 = vunpack.c.l.b16 %v1036
  %v2972 = vunpack.c.h.b16 %v1036
  %v2973 = vunpack.c.l.b16 %v1037
  %v2974 = vunpack.c.h.b16 %v1037
  %v2975 = vunpack.c.l.b16 %v1038
  %v2976 = vunpack.c.h.b16 %v1038
  %v2977 = vunpack.c.l.b16 %v1039
  %v2978 = vunpack.c.h.b16 %v1039
  %v2979 = vunpack.c.l.b16 %v1040
  %v2980 = vunpack.c.h.b16 %v1040
  %v2981 = vunpack.c.l.b16 %v1041
  %v2982 = vunpack.c.h.b16 %v1041
  %v2983 = vunpack.c.l.b16 %v1042
  %v2984 = vunpack.c.h.b16 %v1042
  %v2985 = vunpack.c.l.b16 %v1043
  %v2986 = vunpack.c.h.b16 %v1043
  %v2987 = vunpack.c.l.b16 %v1044
  %v2988 = vunpack.c.h.b16 %v1044
  %v2989 = vunpack.c.l.b16 %v1045
  %v2990 = vunpack.c.h.b16 %v1045
  %v2991 = vunpack.c.l.b16 %v1046
  %v2992 = vunpack.c.h.b16 %v1046
  %v2993 = vunpack.c.l.b16 %v1047
  %v2994 = vunpack.c.h.b16 %v1047
  %v2995 = vunpack.c.l.b16 %v1048
  %v2996 = vunpack.c.h.b16 %v1048
  %v2997 = vunpack.c.l.b16 %v1049
  %v2998 = vunpack.c.h.b16 %v1049
  %v2999 = vunpack.c.l.b16 %v1050
  %v3000 = vunpack.c.h.b16 %v1050
  %v3001 = vunpack.c.l.b16 %v1051
  %v3002 = vunpack.c.h.b16 %v1051
  %v3003 = vunpack.c.l.b16 %v1052
  %v3004 = vunpack.c.h.b16 %v1052
  %v3005 = vunpack.c.l.b16 %v1053
  %v3006 = vunpack.c.h.b16 %v1053
  %v3007 = vunpack.c.l.b16 %v1054
  %v3008 = vunpack.c.h.b16 %v1054
  %v3009 = vunpack.c.l.b16 %v1055
  %v3010 = vunpack.c.h.b16 %v1055
  %v3011 = vunpack.c.l.b16 %v1056
  %v3012 = vunpack.c.h.b16 %v1056
  %v3013 = vunpack.c.l.b16 %v1057
  %v3014 = vunpack.c.h.b16 %v1057
  %v3015 = vunpack.c.l.b16 %v1058
  %v3016 = vunpack.c.h.b16 %v1058
  %v3017 = vunpack.c.l.b16 %v1059
  %v3018 = vunpack.c.h.b16 %v1059
  %v3019 = vunpack.c.l.b16 %v1060
  %v3020 = vunpack.c.h.b16 %v1060
  %v3021 = vunpack.c.l.b16 %v1061
  %v3022 = vunpack.c.h.b16 %v1061
  %v3023 = vunpack.c.l.b16 %v1062
  %v3024 = vunpack.c.h.b16 %v1062
  %v3025 = vunpack.c.l.b16 %v1063
  %v3026 = vunpack.c.h.b16 %v1063
  %v3027 = vunpack.c.l.b16 %v1064
  %v3028 = vunpack.c.h.b16 %v1064
  %v3029 = vunpack.c.l.b16 %v1065
  %v3030 = vunpack.c.h.b16 %v1065
  %v3031 = vunpack.c.l.b16 %v1066
  %v3032 = vunpack.c.h.b16 %v1066
  %v3033 = vunpack.c.l.b16 %v1067
  %v3034 = vunpack.c.h.b16 %v1067
  %v3035 = vunpack.c.l.b16 %v1068
  %v3036 = vunpack.c.h.b16 %v1068
  %v3037 = vunpack.c.l.b16 %v1069
  %v3038 = vunpack.c.h.b16 %v1069
  %v3039 = vunpack.c.l.b16 %v1070
  %v3040 = vunpack.c.h.b16 %v1070
  %v3041 = vunpack.c.l.b16 %v1071
  %v3042 = vunpack.c.h.b16 %v1071
  %v3043 = vunpack.c.l.b16 %v1072
  %v3044 = vunpack.c.h.b16 %v1072
  %v3045 = vunpack.c.l.b16 %v1073
  %v3046 = vunpack.c.h.b16 %v1073
  %v3047 = vunpack.c.l.b16 %v1074
  %v3048 = vunpack.c.h.b16 %v1074
  %v3049 = vunpack.c.l.b16 %v1075
  %v3050 = vunpack.c.h.b16 %v1075
  %v3051 = vunpack.c.l.b16 %v1076
  %v3052 = vunpack.c.h.b16 %v1076
  %v3053 = vunpack.c.l.b16 %v1077
  %v3054 = vunpack.c.h.b16 %v1077
  %v3055 = vunpack.c.l.b16 %v1078
  %v3056 = vunpack.c.h.b16 %v1078
  %v3057 = vunpack.c.l.b16 %v1079
  %v3058 = vunpack.c.h.b16 %v1079
  %v3059 = vunpack.c.l.b16 %v1080
  %v3060 = vunpack.c.h.b16 %v1080
  %v3061 = vunpack.c.l.b16 %v1081
  %v3062 = vunpack.c.h.b16 %v1081
  %v3063 = vunpack.c.l.b16 %v1082
  %v3064 = vunpack.c.h.b16 %v1082
  %v3065 = vunpack.c.l.b16 %v1083
  %v3066 = vunpack.c.h.b16 %v1083
  %v3067 = vunpack.c.l.b16 %v1084
  %v3068 = vunpack.c.h.b16 %v1084
  %v3069 = vunpack.c.l.b16 %v1085
  %v3070 = vunpack.c.h.b16 %v1085
  %v3071 = vunpack.c.l.b16 %v1086
  %v3072 = vunpack.c.h.b16 %v1086
  %v3073 = vunpack.c.l.b16 %v1087
  %v3074 = vunpack.c.h.b16 %v1087
  %v3075 = vunpack.c.l.b16 %v1088
  %v3076 = vunpack.c.h.b16 %v1088
  %v3077 = vunpack.c.l.b16 %v1089
  %v3078 = vunpack.c.h.b16 %v1089
  %v3079 = vunpack.c.l.b16 %v1090
  %v3080 = vunpack.c.h.b16 %v1090
  %v3081 = vunpack.c.l.b16 %v1091
  %v3082 = vunpack.c.h.b16 %v1091
  %v3083 = vunpack.c.l.b16 %v1092
  %v3084 = vunpack.c.h.b16 %v1092
  %v3085 = vunpack.c.l.b16 %v1093
  %v3086 = vunpack.c.h.b16 %v1093
  %v3087 = vunpack.c.l.b16 %v1094
  %v3088 = vunpack.c.h.b16 %v1094
  %v3089 = vunpack.c.l.b16 %v1095
  %v3090 = vunpack.c.h.b16 %v1095
  %v3091 = vunpack.c.l.b16 %v1096
  %v3092 = vunpack.c.h.b16 %v1096
  %v3093 = vunpack.c.l.b16 %v1097
  %v3094 = vunpack.c.h.b16 %v1097
  %v3095 = vunpack.c.l.b16 %v1098
  %v3096 = vunpack.c.h.b16 %v1098
  %v3097 = vunpack.c.l.b16 %v1099
  %v3098 = vunpack.c.h.b16 %v1099
  %v3099 = vunpack.c.l.b16 %v1100
  %v3100 = vunpack.c.h.b16 %v1100
  %v3101 = vunpack.c.l.b16 %v1101
  %v3102 = vunpack.c.h.b16 %v1101
  %v3103 = vunpack.c.l.b16 %v1102
  %v3104 = vunpack.c.h.b16 %v1102
  %v3105 = vunpack.c.l.b16 %v1103
  %v3106 = vunpack.c.h.b16 %v1103
  %v3107 = vunpack.c.l.b16 %v1104
  %v3108 = vunpack.c.h.b16 %v1104
  %v3109 = vunpack.c.l.b16 %v1105
  %v3110 = vunpack.c.h.b16 %v1105
  %v3111 = vunpack.c.l.b16 %v1106
  %v3112 = vunpack.c.h.b16 %v1106
  %v3113 = vunpack.c.l.b16 %v1107
  %v3114 = vunpack.c.h.b16 %v1107
  %v3115 = vunpack.c.l.b16 %v1108
  %v3116 = vunpack.c.h.b16 %v1108
  %v3117 = vunpack.c.l.b16 %v1109
  %v3118 = vunpack.c.h.b16 %v1109
  %v3119 = vunpack.c.l.b16 %v1110
  %v3120 = vunpack.c.h.b16 %v1110
  %v3121 = vunpack.c.l.b16 %v1111
  %v3122 = vunpack.c.h.b16 %v1111
  %v3123 = vunpack.c.l.b16 %v1112
  %v3124 = vunpack.c.h.b16 %v1112
  %v3125 = vunpack.c.l.b16 %v1113
  %v3126 = vunpack.c.h.b16 %v1113
  %v3127 = vunpack.c.l.b16 %v1114
  %v3128 = vunpack.c.h.b16 %v1114
  %v3129 = vunpack.c.l.b16 %v1115
  %v3130 = vunpack.c.h.b16 %v1115
  %v3131 = vunpack.c.l.b16 %v1116
  %v3132 = vunpack.c.h.b16 %v1116
  %v3133 = vunpack.c.l.b16 %v1117
  %v3134 = vunpack.c.h.b16 %v1117
  %v3135 = vunpack.c.l.b16 %v1118
  %v3136 = vunpack.c.h.b16 %v1118
  %v3137 = vunpack.c.l.b16 %v1119
  %v3138 = vunpack.c.h.b16 %v1119
  %v3139 = vunpack.c.l.b16 %v1120
  %v3140 = vunpack.c.h.b16 %v1120
  %v3141 = vunpack.c.l.b16 %v1121
  %v3142 = vunpack.c.h.b16 %v1121
  %v3143 = vunpack.c.l.b16 %v1122
  %v3144 = vunpack.c.h.b16 %v1122
  %v3145 = vunpack.c.l.b16 %v1123
  %v3146 = vunpack.c.h.b16 %v1123
  %v3147 = vunpack.c.l.b16 %v1124
  %v3148 = vunpack.c.h.b16 %v1124
  %v3149 = vunpack.c.l.b16 %v1125
  %v3150 = vunpack.c.h.b16 %v1125
  %v3151 = vunpack.c.l.b16 %v1126
  %v3152 = vunpack.c.h.b16 %v1126
  %v3153 = vunpack.c.l.b16 %v1127
  %v3154 = vunpack.c.h.b16 %v1127
  %v3155 = vunpack.c.l.b16 %v1128
  %v3156 = vunpack.c.h.b16 %v1128
  %v3157 = vunpack.c.l.b16 %v1129
  %v3158 = vunpack.c.h.b16 %v1129
  %v3159 = vunpack.c.l.b16 %v1130
  %v3160 = vunpack.c.h.b16 %v1130
  %v3161 = vunpack.c.l.b16 %v1131
  %v3162 = vunpack.c.h.b16 %v1131
  %v3163 = vunpack.c.l.b16 %v1132
  %v3164 = vunpack.c.h.b16 %v1132
  %v3165 = vunpack.c.l.b16 %v1133
  %v3166 = vunpack.c.h.b16 %v1133
  %v3167 = vunpack.c.l.b16 %v1134
  %v3168 = vunpack.c.h.b16 %v1134
  %v3169 = vunpack.c.l.b16 %v1135
  %v3170 = vunpack.c.h.b16 %v1135
  %v3171 = vunpack.c.l.b16 %v1136
  %v3172 = vunpack.c.h.b16 %v1136
  %v3173 = vunpack.c.l.b16 %v1137
  %v3174 = vunpack.c.h.b16 %v1137
  %v3175 = vunpack.c.l.b16 %v1138
  %v3176 = vunpack.c.h.b16 %v1138
  %v3177 = vunpack.c.l.b16 %v1139
  %v3178 = vunpack.c.h.b16 %v1139
  %v3179 = vunpack.c.l.b16 %v1140
  %v3180 = vunpack.c.h.b16 %v1140
  %v3181 = vunpack.c.l.b16 %v1141
  %v3182 = vunpack.c.h.b16 %v1141
  %v3183 = vunpack.c.l.b16 %v1142
  %v3184 = vunpack.c.h.b16 %v1142
  %v3185 = vunpack.c.l.b16 %v1143
  %v3186 = vunpack.c.h.b16 %v1143
  %v3187 = vunpack.c.l.b16 %v1144
  %v3188 = vunpack.c.h.b16 %v1144
  %v3189 = vunpack.c.l.b16 %v1145
  %v3190 = vunpack.c.h.b16 %v1145
  %v3191 = vunpack.c.l.b16 %v1146
  %v3192 = vunpack.c.h.b16 %v1146
  %v3193 = vunpack.c.l.b16 %v1147
  %v3194 = vunpack.c.h.b16 %v1147
  %v3195 = vunpack.c.l.b16 %v1148
  %v3196 = vunpack.c.h.b16 %v1148
  %v3197 = vunpack.c.l.b16 %v1149
  %v3198 = vunpack.c.h.b16 %v1149
  %v3199 = vunpack.c.l.b16 %v1150
  %v3200 = vunpack.c.h.b16 %v1150
  %v3201 = vunpack.c.l.b16 %v1151
  %v3202 = vunpack.c.h.b16 %v1151
  %v3203 = vunpack.c.l.b16 %v1152
  %v3204 = vunpack.c.h.b16 %v1152
  %v3205 = vunpack.c.l.b16 %v1153
  %v3206 = vunpack.c.h.b16 %v1153
  %v3207 = vunpack.c.l.b16 %v1154
  %v3208 = vunpack.c.h.b16 %v1154
  %v3209 = vunpack.c.l.b16 %v1155
  %v3210 = vunpack.c.h.b16 %v1155
  %v3211 = vunpack.c.l.b16 %v1156
  %v3212 = vunpack.c.h.b16 %v1156
  %v3213 = vunpack.c.l.b16 %v1157
  %v3214 = vunpack.c.h.b16 %v1157
  %v3215 = vunpack.c.l.b16 %v1158
  %v3216 = vunpack.c.h.b16 %v1158
  %v3217 = vunpack.c.l.b16 %v1159
  %v3218 = vunpack.c.h.b16 %v1159
  %v3219 = vunpack.c.l.b16 %v1160
  %v3220 = vunpack.c.h.b16 %v1160
  %v3221 = vunpack.c.l.b16 %v1161
  %v3222 = vunpack.c.h.b16 %v1161
  %v3223 = vunpack.c.l.b16 %v1162
  %v3224 = vunpack.c.h.b16 %v1162
  %v3225 = vunpack.c.l.b16 %v1163
  %v3226 = vunpack.c.h.b16 %v1163
  %v3227 = vunpack.c.l.b16 %v1164
  %v3228 = vunpack.c.h.b16 %v1164
  %v3229 = vunpack.c.l.b16 %v1165
  %v3230 = vunpack.c.h.b16 %v1165
  %v3231 = vunpack.c.l.b16 %v1166
  %v3232 = vunpack.c.h.b16 %v1166
  %v3233 = vunpack.c.l.b16 %v1167
  %v3234 = vunpack.c.h.b16 %v1167
  %v3235 = vunpack.c.l.b16 %v1168
  %v3236 = vunpack.c.h.b16 %v1168
  %v3237 = vunpack.c.l.b16 %v1169
  %v3238 = vunpack.c.h.b16 %v1169
  %v3239 = vunpack.c.l.b16 %v1170
  %v3240 = vunpack.c.h.b16 %v1170
  %v3241 = vunpack.c.l.b16 %v1171
  %v3242 = vunpack.c.h.b16 %v1171
  %v3243 = vunpack.c.l.b16 %v1172
  %v3244 = vunpack.c.h.b16 %v1172
  %v3245 = vunpack.c.l.b16 %v1173
  %v3246 = vunpack.c.h.b16 %v1173
  %v3247 = vunpack.c.l.b16 %v1174
  %v3248 = vunpack.c.h.b16 %v1174
  %v3249 = vunpack.c.l.b16 %v1175
  %v3250 = vunpack.c.h.b16 %v1175
  %v3251 = vunpack.c.l.b16 %v1176
  %v3252 = vunpack.c.h.b16 %v1176
  %v3253 = vunpack.c.l.b16 %v1177
  %v3254 = vunpack.c.h.b16 %v1177
  %v3255 = vunpack.c.l.b16 %v1178
  %v3256 = vunpack.c.h.b16 %v1178
  %v3257 = vunpack.c.l.b16 %v1179
  %v3258 = vunpack.c.h.b16 %v1179
  %v3259 = vunpack.c.l.b16 %v1180
  %v3260 = vunpack.c.h.b16 %v1180
  %v3261 = vunpack.c.l.b16 %v1181
  %v3262 = vunpack.c.h.b16 %v1181
  %v3263 = vunpack.c.l.b16 %v1182
  %v3264 = vunpack.c.h.b16 %v1182
  %v3265 = vunpack.c.l.b16 %v1183
  %v3266 = vunpack.c.h.b16 %v1183
  %v3267 = vunpack.c.l.b16 %v1184
  %v3268 = vunpack.c.h.b16 %v1184
  %v3269 = vunpack.c.l.b16 %v1185
  %v3270 = vunpack.c.h.b16 %v1185
  %v3271 = vunpack.c.l.b16 %v1186
  %v3272 = vunpack.c.h.b16 %v1186
  %v3273 = vunpack.c.l.b16 %v1187
  %v3274 = vunpack.c.h.b16 %v1187
  %v3275 = vunpack.c.l.b16 %v1188
  %v3276 = vunpack.c.h.b16 %v1188
  %v3277 = vunpack.c.l.b16 %v1189
  %v3278 = vunpack.c.h.b16 %v1189
  %v3279 = vunpack.c.l.b16 %v1190
  %v3280 = vunpack.c.h.b16 %v1190
  %v3281 = vunpack.c.l.b16 %v1191
  %v3282 = vunpack.c.h.b16 %v1191
  %v3283 = vunpack.c.l.b16 %v1192
  %v3284 = vunpack.c.h.b16 %v1192
  %v3285 = vunpack.c.l.b16 %v1193
  %v3286 = vunpack.c.h.b16 %v1193
  %v3287 = vunpack.c.l.b16 %v1194
  %v3288 = vunpack.c.h.b16 %v1194
  %v3289 = vunpack.c.l.b16 %v1195
  %v3290 = vunpack.c.h.b16 %v1195
  %v3291 = vunpack.c.l.b16 %v1196
  %v3292 = vunpack.c.h.b16 %v1196
  %v3293 = vunpack.c.l.b16 %v1197
  %v3294 = vunpack.c.h.b16 %v1197
  %v3295 = vunpack.c.l.b16 %v1198
  %v3296 = vunpack.c.h.b16 %v1198
  %v3297 = vunpack.c.l.b16 %v1199
  %v3298 = vunpack.c.h.b16 %v1199
  %v3299 = vunpack.c.l.b16 %v1200
  %v3300 = vunpack.c.h.b16 %v1200
  %v3301 = vunpack.c.l.b16 %v1201
  %v3302 = vunpack.c.h.b16 %v1201
  %v3303 = vunpack.c.l.b16 %v1202
  %v3304 = vunpack.c.h.b16 %v1202
  %v3305 = vunpack.c.l.b16 %v1203
  %v3306 = vunpack.c.h.b16 %v1203
  %v3307 = vunpack.c.l.b16 %v1204
  %v3308 = vunpack.c.h.b16 %v1204
  %v3309 = vunpack.c.l.b16 %v1205
  %v3310 = vunpack.c.h.b16 %v1205
  %v3311 = vunpack.c.l.b16 %v1206
  %v3312 = vunpack.c.h.b16 %v1206
  %v3313 = vunpack.c.l.b16 %v1207
  %v3314 = vunpack.c.h.b16 %v1207
  %v3315 = vunpack.c.l.b16 %v1208
  %v3316 = vunpack.c.h.b16 %v1208
  %v3317 = vunpack.c.l.b16 %v1209
  %v3318 = vunpack.c.h.b16 %v1209
  %v3319 = vunpack.c.l.b16 %v1210
  %v3320 = vunpack.c.h.b16 %v1210
  %v3321 = vunpack.c.l.b16 %v1211
  %v3322 = vunpack.c.h.b16 %v1211
  %v3323 = vunpack.c.l.b16 %v1212
  %v3324 = vunpack.c.h.b16 %v1212
  %v3325 = vunpack.c.l.b16 %v1213
  %v3326 = vunpack.c.h.b16 %v1213
  %v3327 = vunpack.c.l.b16 %v1214
  %v3328 = vunpack.c.h.b16 %v1214
  %v3329 = vunpack.c.l.b16 %v1215
  %v3330 = vunpack.c.h.b16 %v1215
  %v3331 = vunpack.c.l.b16 %v1216
  %v3332 = vunpack.c.h.b16 %v1216
  %v3333 = vunpack.c.l.b16 %v1217
  %v3334 = vunpack.c.h.b16 %v1217
  %v3335 = vunpack.c.l.b16 %v1218
  %v3336 = vunpack.c.h.b16 %v1218
  %v3337 = vunpack.c.l.b16 %v1219
  %v3338 = vunpack.c.h.b16 %v1219
  %v3339 = vunpack.c.l.b16 %v1220
  %v3340 = vunpack.c.h.b16 %v1220
  %v3341 = vunpack.c.l.b16 %v1221
  %v3342 = vunpack.c.h.b16 %v1221
  %v3343 = vunpack.c.l.b16 %v1222
  %v3344 = vunpack.c.h.b16 %v1222
  %v3345 = vunpack.c.l.b16 %v1223
  %v3346 = vunpack.c.h.b16 %v1223
  %v3347 = vunpack.c.l.b16 %v1224
  %v3348 = vunpack.c.h.b16 %v1224
  %v3349 = vunpack.c.l.b16 %v1225
  %v3350 = vunpack.c.h.b16 %v1225
  %v3351 = vunpack.c.l.b16 %v1226
  %v3352 = vunpack.c.h.b16 %v1226
  %v3353 = vunpack.c.l.b16 %v1227
  %v3354 = vunpack.c.h.b16 %v1227
  %v3355 = vunpack.c.l.b16 %v1228
  %v3356 = vunpack.c.h.b16 %v1228
  %v3357 = vunpack.c.l.b16 %v1229
  %v3358 = vunpack.c.h.b16 %v1229
  %v3359 = vunpack.c.l.b16 %v1230
  %v3360 = vunpack.c.h.b16 %v1230
  %v3361 = vunpack.c.l.b16 %v1231
  %v3362 = vunpack.c.h.b16 %v1231
  %v3363 = vunpack.c.l.b16 %v1232
  %v3364 = vunpack.c.h.b16 %v1232
  %v3365 = vunpack.c.l.b16 %v1233
  %v3366 = vunpack.c.h.b16 %v1233
  %v3367 = vunpack.c.l.b16 %v1234
  %v3368 = vunpack.c.h.b16 %v1234
  %v3369 = vunpack.c.l.b16 %v1235
  %v3370 = vunpack.c.h.b16 %v1235
  %v3371 = vunpack.c.l.b16 %v1236
  %v3372 = vunpack.c.h.b16 %v1236
  %v3373 = vunpack.c.l.b16 %v1237
  %v3374 = vunpack.c.h.b16 %v1237
  %v3375 = vunpack.c.l.b16 %v1238
  %v3376 = vunpack.c.h.b16 %v1238
  %v3377 = vunpack.c.l.b16 %v1239
  %v3378 = vunpack.c.h.b16 %v1239
  %v3379 = vunpack.c.l.b16 %v1240
  %v3380 = vunpack.c.h.b16 %v1240
  %v3381 = vunpack.c.l.b16 %v1241
  %v3382 = vunpack.c.h.b16 %v1241
  %v3383 = vunpack.c.l.b16 %v1242
  %v3384 = vunpack.c.h.b16 %v1242
  %v3385 = vunpack.c.l.b16 %v1243
  %v3386 = vunpack.c.h.b16 %v1243
  %v3387 = vunpack.c.l.b16 %v1244
  %v3388 = vunpack.c.h.b16 %v1244
  %v3389 = vunpack.c.l.b16 %v1245
  %v3390 = vunpack.c.h.b16 %v1245
  %v3391 = vunpack.c.l.b16 %v1246
  %v3392 = vunpack.c.h.b16 %v1246
  %v3393 = vunpack.c.l.b16 %v1247
  %v3394 = vunpack.c.h.b16 %v1247
  %v3395 = vunpack.c.l.b16 %v1248
  %v3396 = vunpack.c.h.b16 %v1248
  %v3397 = vunpack.c.l.b16 %v1249
  %v3398 = vunpack.c.h.b16 %v1249
  %v3399 = vunpack.c.l.b16 %v1250
  %v3400 = vunpack.c.h.b16 %v1250
  %v3401 = vunpack.c.l.b16 %v1251
  %v3402 = vunpack.c.h.b16 %v1251
  %v3403 = vunpack.c.l.b16 %v1252
  %v3404 = vunpack.c.h.b16 %v1252
  %v3405 = vunpack.c.l.b16 %v1253
  %v3406 = vunpack.c.h.b16 %v1253
  %v3407 = vunpack.c.l.b16 %v1254
  %v3408 = vunpack.c.h.b16 %v1254
  %v3409 = vunpack.c.l.b16 %v1255
  %v3410 = vunpack.c.h.b16 %v1255
  %v3411 = vunpack.c.l.b16 %v1256
  %v3412 = vunpack.c.h.b16 %v1256
  %v3413 = vunpack.c.l.b16 %v1257
  %v3414 = vunpack.c.h.b16 %v1257
  %v3415 = vunpack.c.l.b16 %v1258
  %v3416 = vunpack.c.h.b16 %v1258
  %v3417 = vunpack.c.l.b16 %v1259
  %v3418 = vunpack.c.h.b16 %v1259
  %v3419 = vunpack.c.l.b16 %v1260
  %v3420 = vunpack.c.h.b16 %v1260
  %v3421 = vunpack.c.l.b16 %v1261
  %v3422 = vunpack.c.h.b16 %v1261
  %v3423 = vunpack.c.l.b16 %v1262
  %v3424 = vunpack.c.h.b16 %v1262
  %v3425 = vunpack.c.l.b16 %v1263
  %v3426 = vunpack.c.h.b16 %v1263
  %v3427 = vunpack.c.l.b16 %v1264
  %v3428 = vunpack.c.h.b16 %v1264
  %v3429 = vunpack.c.l.b16 %v1265
  %v3430 = vunpack.c.h.b16 %v1265
  %v3431 = vunpack.c.l.b16 %v1266
  %v3432 = vunpack.c.h.b16 %v1266
  %v3433 = vunpack.c.l.b16 %v1267
  %v3434 = vunpack.c.h.b16 %v1267
  %v3435 = vunpack.c.l.b16 %v1268
  %v3436 = vunpack.c.h.b16 %v1268
  %v3437 = vunpack.c.l.b16 %v1269
  %v3438 = vunpack.c.h.b16 %v1269
  %v3439 = vunpack.c.l.b16 %v1270
  %v3440 = vunpack.c.h.b16 %v1270
  %v3441 = vunpack.c.l.b16 %v1271
  %v3442 = vunpack.c.h.b16 %v1271
  %v3443 = vunpack.c.l.b16 %v1272
  %v3444 = vunpack.c.h.b16 %v1272
  %v3445 = vunpack.c.l.b16 %v1273
  %v3446 = vunpack.c.h.b16 %v1273
  %v3447 = vunpack.c.l.b16 %v1274
  %v3448 = vunpack.c.h.b16 %v1274
  %v3449 = vunpack.c.l.b16 %v1275
  %v3450 = vunpack.c.h.b16 %v1275
  %v3451 = vunpack.c.l.b16 %v1276
  %v3452 = vunpack.c.h.b16 %v1276
  %v3453 = vunpack.c.l.b16 %v1277
  %v3454 = vunpack.c.h.b16 %v1277
  %v3455 = vunpack.c.l.b16 %v1278
  %v3456 = vunpack.c.h.b16 %v1278
  %v3457 = vunpack.c.l.b16 %v1279
  %v3458 = vunpack.c.h.b16 %v1279
  %v3459 = vunpack.c.l.b16 %v1280
  %v3460 = vunpack.c.h.b16 %v1280
  %v3461 = vunpack.c.l.b16 %v1281
  %v3462 = vunpack.c.h.b16 %v1281
  %v3463 = vunpack.c.l.b16 %v1282
  %v3464 = vunpack.c.h.b16 %v1282
  %v3465 = vunpack.c.l.b16 %v1283
  %v3466 = vunpack.c.h.b16 %v1283
  %v3467 = vunpack.c.l.b16 %v1284
  %v3468 = vunpack.c.h.b16 %v1284
  %v3469 = vunpack.c.l.b16 %v1285
  %v3470 = vunpack.c.h.b16 %v1285
  %v3471 = vunpack.c.l.b16 %v1286
  %v3472 = vunpack.c.h.b16 %v1286
  %v3473 = vunpack.c.l.b16 %v1287
  %v3474 = vunpack.c.h.b16 %v1287
  %v3475 = vunpack.c.l.b16 %v1288
  %v3476 = vunpack.c.h.b16 %v1288
  %v3477 = vunpack.c.l.b16 %v1289
  %v3478 = vunpack.c.h.b16 %v1289
  %v3479 = vunpack.c.l.b16 %v1290
  %v3480 = vunpack.c.h.b16 %v1290
  %v3481 = vunpack.c.l.b16 %v1291
  %v3482 = vunpack.c.h.b16 %v1291
  %v3483 = vunpack.c.l.b16 %v1292
  %v3484 = vunpack.c.h.b16 %v1292
  %v3485 = vunpack.c.l.b16 %v1293
  %v3486 = vunpack.c.h.b16 %v1293
  %v3487 = vunpack.c.l.b16 %v1294
  %v3488 = vunpack.c.h.b16 %v1294
  %v3489 = vunpack.c.l.b16 %v1295
  %v3490 = vunpack.c.h.b16 %v1295
  %v3491 = vunpack.c.l.b16 %v1296
  %v3492 = vunpack.c.h.b16 %v1296
  %v3493 = vunpack.c.l.b16 %v1297
  %v3494 = vunpack.c.h.b16 %v1297
  %v3495 = vunpack.c.l.b16 %v1298
  %v3496 = vunpack.c.h.b16 %v1298
  %v3497 = vunpack.c.l.b16 %v1299
  %v3498 = vunpack.c.h.b16 %v1299
  %v3499 = vunpack.c.l.b16 %v1300
  %v3500 = vunpack.c.h.b16 %v1300
  %v3501 = vunpack.c.l.b16 %v1301
  %v3502 = vunpack.c.h.b16 %v1301
  %v3503 = vunpack.c.l.b16 %v1302
  %v3504 = vunpack.c.h.b16 %v1302
  %v3505 = vunpack.c.l.b16 %v1303
  %v3506 = vunpack.c.h.b16 %v1303
  %v3507 = vunpack.c.l.b16 %v1304
  %v3508 = vunpack.c.h.b16 %v1304
  %v3509 = vunpack.c.l.b16 %v1305
  %v3510 = vunpack.c.h.b16 %v1305
  %v3511 = vunpack.c.l.b16 %v1306
  %v3512 = vunpack.c.h.b16 %v1306
  %v3513 = vunpack.c.l.b16 %v1307
  %v3514 = vunpack.c.h.b16 %v1307
  %v3515 = vunpack.c.l.b16 %v1308
  %v3516 = vunpack.c.h.b16 %v1308
  %v3517 = vunpack.c.l.b16 %v1309
  %v3518 = vunpack.c.h.b16 %v1309
  %v3519 = vunpack.c.l.b16 %v1310
  %v3520 = vunpack.c.h.b16 %v1310
  %v3521 = vunpack.c.l.b16 %v1311
  %v3522 = vunpack.c.h.b16 %v1311
  %v3523 = vunpack.c.l.b16 %v1312
  %v3524 = vunpack.c.h.b16 %v1312
  %v3525 = vunpack.c.l.b16 %v1313
  %v3526 = vunpack.c.h.b16 %v1313
  %v3527 = vunpack.c.l.b16 %v1314
  %v3528 = vunpack.c.h.b16 %v1314
  %v3529 = vunpack.c.l.b16 %v1315
  %v3530 = vunpack.c.h.b16 %v1315
  %v3531 = vunpack.c.l.b16 %v1316
  %v3532 = vunpack.c.h.b16 %v1316
  %v3533 = vunpack.c.l.b16 %v1317
  %v3534 = vunpack.c.h.b16 %v1317
  %v3535 = vunpack.c.l.b16 %v1318
  %v3536 = vunpack.c.h.b16 %v1318
  %v3537 = vunpack.c.l.b16 %v1319
  %v3538 = vunpack.c.h.b16 %v1319
  %v3539 = vunpack.c.l.b16 %v1320
  %v3540 = vunpack.c.h.b16 %v1320
  %v3541 = vunpack.c.l.b16 %v1321
  %v3542 = vunpack.c.h.b16 %v1321
  %v3543 = vunpack.c.l.b16 %v1322
  %v3544 = vunpack.c.h.b16 %v1322
  %v3545 = vunpack.c.l.b16 %v1323
  %v3546 = vunpack.c.h.b16 %v1323
  %v3547 = vunpack.c.l.b16 %v1324
  %v3548 = vunpack.c.h.b16 %v1324
  %v3549 = vunpack.c.l.b16 %v1325
  %v3550 = vunpack.c.h.b16 %v1325
  %v3551 = vunpack.c.l.b16 %v1326
  %v3552 = vunpack.c.h.b16 %v1326
  %v3553 = vunpack.c.l.b16 %v1327
  %v3554 = vunpack.c.h.b16 %v1327
  %v3555 = vunpack.c.l.b16 %v1328
  %v3556 = vunpack.c.h.b16 %v1328
  %v3557 = vunpack.c.l.b16 %v1329
  %v3558 = vunpack.c.h.b16 %v1329
  %v3559 = vunpack.c.l.b16 %v1330
  %v3560 = vunpack.c.h.b16 %v1330
  %v3561 = vunpack.c.l.b16 %v1331
  %v3562 = vunpack.c.h.b16 %v1331
  %v3563 = vunpack.c.l.b16 %v1332
  %v3564 = vunpack.c.h.b16 %v1332
  %v3565 = vunpack.c.l.b16 %v1333
  %v3566 = vunpack.c.h.b16 %v1333
  %v3567 = vunpack.c.l.b16 %v1334
  %v3568 = vunpack.c.h.b16 %v1334
  %v3569 = vunpack.c.l.b16 %v1335
  %v3570 = vunpack.c.h.b16 %v1335
  %v3571 = vunpack.c.l.b16 %v1336
  %v3572 = vunpack.c.h.b16 %v1336
  %v3573 = vunpack.c.l.b16 %v1337
  %v3574 = vunpack.c.h.b16 %v1337
  %v3575 = vunpack.c.l.b16 %v1338
  %v3576 = vunpack.c.h.b16 %v1338
  %v3577 = vunpack.c.l.b16 %v1339
  %v3578 = vunpack.c.h.b16 %v1339
  %v3579 = vunpack.c.l.b16 %v1340
  %v3580 = vunpack.c.h.b16 %v1340
  %v3581 = vunpack.c.l.b16 %v1341
  %v3582 = vunpack.c.h.b16 %v1341
  %v3583 = vunpack.c.l.b16 %v1342
  %v3584 = vunpack.c.h.b16 %v1342
  %v3585 = vunpack.c.l.b16 %v1343
  %v3586 = vunpack.c.h.b16 %v1343
  %v3587 = vunpack.c.l.b16 %v1344
  %v3588 = vunpack.c.h.b16 %v1344
  %v3589 = vunpack.c.l.b16 %v1345
  %v3590 = vunpack.c.h.b16 %v1345
  %v3591 = vunpack.c.l.b16 %v1346
  %v3592 = vunpack.c.h.b16 %v1346
  %v3593 = vunpack.c.l.b16 %v1347
  %v3594 = vunpack.c.h.b16 %v1347
  %v3595 = vunpack.c.l.b16 %v1348
  %v3596 = vunpack.c.h.b16 %v1348
  %v3597 = vunpack.c.l.b16 %v1349
  %v3598 = vunpack.c.h.b16 %v1349
  %v3599 = vunpack.c.l.b16 %v1350
  %v3600 = vunpack.c.h.b16 %v1350
  %v3601 = vunpack.c.l.b16 %v1351
  %v3602 = vunpack.c.h.b16 %v1351
  %v3603 = vunpack.c.l.b16 %v1352
  %v3604 = vunpack.c.h.b16 %v1352
  %v3605 = vunpack.c.l.b16 %v1353
  %v3606 = vunpack.c.h.b16 %v1353
  %v3607 = vunpack.c.l.b16 %v1354
  %v3608 = vunpack.c.h.b16 %v1354
  %v3609 = vunpack.c.l.b16 %v1355
  %v3610 = vunpack.c.h.b16 %v1355
  %v3611 = vunpack.c.l.b16 %v1356
  %v3612 = vunpack.c.h.b16 %v1356
  %v3613 = vunpack.c.l.b16 %v1357
  %v3614 = vunpack.c.h.b16 %v1357
  %v3615 = vunpack.c.l.b16 %v1358
  %v3616 = vunpack.c.h.b16 %v1358
  %v3617 = vunpack.c.l.b16 %v1359
  %v3618 = vunpack.c.h.b16 %v1359
  %v3619 = vunpack.c.l.b16 %v1360
  %v3620 = vunpack.c.h.b16 %v1360
  %v3621 = vunpack.c.l.b16 %v1361
  %v3622 = vunpack.c.h.b16 %v1361
  %v3623 = vunpack.c.l.b16 %v1362
  %v3624 = vunpack.c.h.b16 %v1362
  %v3625 = vunpack.c.l.b16 %v1363
  %v3626 = vunpack.c.h.b16 %v1363
  %v3627 = vunpack.c.l.b16 %v1364
  %v3628 = vunpack.c.h.b16 %v1364
  %v3629 = vunpack.c.l.b16 %v1365
  %v3630 = vunpack.c.h.b16 %v1365
  %v3631 = vunpack.c.l.b16 %v1366
  %v3632 = vunpack.c.h.b16 %v1366
  %v3633 = vunpack.c.l.b16 %v1367
  %v3634 = vunpack.c.h.b16 %v1367
  %v3635 = vunpack.c.l.b16 %v1368
  %v3636 = vunpack.c.h.b16 %v1368
  %v3637 = vunpack.c.l.b16 %v1369
  %v3638 = vunpack.c.h.b16 %v1369
  %v3639 = vunpack.c.l.b16 %v1370
  %v3640 = vunpack.c.h.b16 %v1370
  %v3641 = vunpack.c.l.b16 %v1371
  %v3642 = vunpack.c.h.b16 %v1371
  %v3643 = vunpack.c.l.b16 %v1372
  %v3644 = vunpack.c.h.b16 %v1372
  %v3645 = vunpack.c.l.b16 %v1373
  %v3646 = vunpack.c.h.b16 %v1373
  %v3647 = vunpack.c.l.b16 %v1374
  %v3648 = vunpack.c.h.b16 %v1374
  %v3649 = vunpack.c.l.b16 %v1375
  %v3650 = vunpack.c.h.b16 %v1375
  %v3651 = vunpack.c.l.b16 %v1376
  %v3652 = vunpack.c.h.b16 %v1376
  %v3653 = vunpack.c.l.b16 %v1377
  %v3654 = vunpack.c.h.b16 %v1377
  %v3655 = vunpack.c.l.b16 %v1378
  %v3656 = vunpack.c.h.b16 %v1378
  %v3657 = vunpack.c.l.b16 %v1379
  %v3658 = vunpack.c.h.b16 %v1379
  %v3659 = vunpack.c.l.b16 %v1380
  %v3660 = vunpack.c.h.b16 %v1380
  %v3661 = vunpack.c.l.b16 %v1381
  %v3662 = vunpack.c.h.b16 %v1381
  %v3663 = vunpack.c.l.b16 %v1382
  %v3664 = vunpack.c.h.b16 %v1382
  %v3665 = vunpack.c.l.b16 %v1383
  %v3666 = vunpack.c.h.b16 %v1383
  %v3667 = vunpack.c.l.b16 %v1384
  %v3668 = vunpack.c.h.b16 %v1384
  %v3669 = vunpack.c.l.b16 %v1385
  %v3670 = vunpack.c.h.b16 %v1385
  %v3671 = vunpack.c.l.b16 %v1386
  %v3672 = vunpack.c.h.b16 %v1386
  %v3673 = vunpack.c.l.b16 %v1387
  %v3674 = vunpack.c.h.b16 %v1387
  %v3675 = vunpack.c.l.b16 %v1388
  %v3676 = vunpack.c.h.b16 %v1388
  %v3677 = vunpack.c.l.b16 %v1389
  %v3678 = vunpack.c.h.b16 %v1389
  %v3679 = vunpack.c.l.b16 %v1390
  %v3680 = vunpack.c.h.b16 %v1390
  %v3681 = vunpack.c.l.b16 %v1391
  %v3682 = vunpack.c.h.b16 %v1391
  %v3683 = vunpack.c.l.b16 %v1392
  %v3684 = vunpack.c.h.b16 %v1392
  %v3685 = vunpack.c.l.b16 %v1393
  %v3686 = vunpack.c.h.b16 %v1393
  %v3687 = vunpack.c.l.b16 %v1394
  %v3688 = vunpack.c.h.b16 %v1394
  %v3689 = vunpack.c.l.b16 %v1395
  %v3690 = vunpack.c.h.b16 %v1395
  %v3691 = vunpack.c.l.b16 %v1396
  %v3692 = vunpack.c.h.b16 %v1396
  %v3693 = vunpack.c.l.b16 %v1397
  %v3694 = vunpack.c.h.b16 %v1397
  %v3695 = vunpack.c.l.b16 %v1398
  %v3696 = vunpack.c.h.b16 %v1398
  %v3697 = vunpack.c.l.b16 %v1399
  %v3698 = vunpack.c.h.b16 %v1399
  %v3699 = vunpack.c.l.b16 %v1400
  %v3700 = vunpack.c.h.b16 %v1400
  %v3701 = vunpack.c.l.b16 %v1401
  %v3702 = vunpack.c.h.b16 %v1401
  %v3703 = vunpack.c.l.b16 %v1402
  %v3704 = vunpack.c.h.b16 %v1402
  %v3705 = vunpack.c.l.b16 %v1403
  %v3706 = vunpack.c.h.b16 %v1403
  %v3707 = vunpack.c.l.b16 %v1404
  %v3708 = vunpack.c.h.b16 %v1404
  %v3709 = vunpack.c.l.b16 %v1405
  %v3710 = vunpack.c.h.b16 %v1405
  %v3711 = vunpack.c.l.b16 %v1406
  %v3712 = vunpack.c.h.b16 %v1406
  %v3713 = vunpack.c.l.b16 %v1407
  %v3714 = vunpack.c.h.b16 %v1407
  %v3715 = vunpack.c.l.b16 %v1408
  %v3716 = vunpack.c.h.b16 %v1408
  %v3717 = vunpack.c.l.b16 %v1409
  %v3718 = vunpack.c.h.b16 %v1409
  %v3719 = vunpack.c.l.b16 %v1410
  %v3720 = vunpack.c.h.b16 %v1410
  %v3721 = vunpack.c.l.b16 %v1411
  %v3722 = vunpack.c.h.b16 %v1411
  %v3723 = vunpack.c.l.b16 %v1412
  %v3724 = vunpack.c.h.b16 %v1412
  %v3725 = vunpack.c.l.b16 %v1413
  %v3726 = vunpack.c.h.b16 %v1413
  %v3727 = vunpack.c.l.b16 %v1414
  %v3728 = vunpack.c.h.b16 %v1414
  %v3729 = vunpack.c.l.b16 %v1415
  %v3730 = vunpack.c.h.b16 %v1415
  %v3731 = vunpack.c.l.b16 %v1416
  %v3732 = vunpack.c.h.b16 %v1416
  %v3733 = vunpack.c.l.b16 %v1417
  %v3734 = vunpack.c.h.b16 %v1417
  %v3735 = vunpack.c.l.b16 %v1418
  %v3736 = vunpack.c.h.b16 %v1418
  %v3737 = vunpack.c.l.b16 %v1419
  %v3738 = vunpack.c.h.b16 %v1419
  %v3739 = vunpack.c.l.b16 %v1420
  %v3740 = vunpack.c.h.b16 %v1420
  %v3741 = vunpack.c.l.b16 %v1421
  %v3742 = vunpack.c.h.b16 %v1421
  %v3743 = vunpack.c.l.b16 %v1422
  %v3744 = vunpack.c.h.b16 %v1422
  %v3745 = vunpack.c.l.b16 %v1423
  %v3746 = vunpack.c.h.b16 %v1423
  %v3747 = vunpack.c.l.b16 %v1424
  %v3748 = vunpack.c.h.b16 %v1424
  %v3749 = vunpack.c.l.b16 %v1425
  %v3750 = vunpack.c.h.b16 %v1425
  %v3751 = vunpack.c.l.b16 %v1426
  %v3752 = vunpack.c.h.b16 %v1426
  %v3753 = vunpack.c.l.b16 %v1427
  %v3754 = vunpack.c.h.b16 %v1427
  %v3755 = vunpack.c.l.b16 %v1428
  %v3756 = vunpack.c.h.b16 %v1428
  %v3757 = vunpack.c.l.b16 %v1429
  %v3758 = vunpack.c.h.b16 %v1429
  %v3759 = vunpack.c.l.b16 %v1430
  %v3760 = vunpack.c.h.b16 %v1430
  %v3761 = vunpack.c.l.b16 %v1431
  %v3762 = vunpack.c.h.b16 %v1431
  %v3763 = vunpack.c.l.b16 %v1432
  %v3764 = vunpack.c.h.b16 %v1432
  %v3765 = vunpack.c.l.b16 %v1433
  %v3766 = vunpack.c.h.b16 %v1433
  %v3767 = vunpack.c.l.b16 %v1434
  %v3768 = vunpack.c.h.b16 %v1434
  %v3769 = vunpack.c.l.b16 %v1435
  %v3770 = vunpack.c.h.b16 %v1435
  %v3771 = vunpack.c.l.b16 %v1436
  %v3772 = vunpack.c.h.b16 %v1436
  %v3773 = vunpack.c.l.b16 %v1437
  %v3774 = vunpack.c.h.b16 %v1437
  %v3775 = vunpack.c.l.b16 %v1438
  %v3776 = vunpack.c.h.b16 %v1438
  %v3777 = vunpack.c.l.b16 %v1439
  %v3778 = vunpack.c.h.b16 %v1439
  %v3779 = vunpack.c.l.b16 %v1440
  %v3780 = vunpack.c.h.b16 %v1440
  %v3781 = vunpack.c.l.b16 %v1441
  %v3782 = vunpack.c.h.b16 %v1441
  %v3783 = vunpack.c.l.b16 %v1442
  %v3784 = vunpack.c.h.b16 %v1442
  %v3785 = vunpack.c.l.b16 %v1443
  %v3786 = vunpack.c.h.b16 %v1443
  %v3787 = vunpack.c.l.b16 %v1444
  %v3788 = vunpack.c.h.b16 %v1444
  %v3789 = vunpack.c.l.b16 %v1445
  %v3790 = vunpack.c.h.b16 %v1445
  %v3791 = vunpack.c.l.b16 %v1446
  %v3792 = vunpack.c.h.b16 %v1446
  %v3793 = vunpack.c.l.b16 %v1447
  %v3794 = vunpack.c.h.b16 %v1447
  %v3795 = vunpack.c.l.b16 %v1448
  %v3796 = vunpack.c.h.b16 %v1448
  %v3797 = vunpack.c.l.b16 %v1449
  %v3798 = vunpack.c.h.b16 %v1449
  %v3799 = vunpack.c.l.b16 %v1450
  %v3800 = vunpack.c.h.b16 %v1450
  %v3801 = vunpack.c.l.b16 %v1451
  %v3802 = vunpack.c.h.b16 %v1451
  %v3803 = vunpack.c.l.b16 %v1452
  %v3804 = vunpack.c.h.b16 %v1452
  %v3805 = vunpack.c.l.b16 %v1453
  %v3806 = vunpack.c.h.b16 %v1453
  %v3807 = vunpack.c.l.b16 %v1454
  %v3808 = vunpack.c.h.b16 %v1454
  %v3809 = vunpack.c.l.b16 %v1455
  %v3810 = vunpack.c.h.b16 %v1455
  %v3811 = vunpack.c.l.b16 %v1456
  %v3812 = vunpack.c.h.b16 %v1456
  %v3813 = vunpack.c.l.b16 %v1457
  %v3814 = vunpack.c.h.b16 %v1457
  %v3815 = vunpack.c.l.b16 %v1458
  %v3816 = vunpack.c.h.b16 %v1458
  %v3817 = vunpack.c.l.b16 %v1459
  %v3818 = vunpack.c.h.b16 %v1459
  %v3819 = vunpack.c.l.b16 %v1460
  %v3820 = vunpack.c.h.b16 %v1460
  %v3821 = vunpack.c.l.b16 %v1461
  %v3822 = vunpack.c.h.b16 %v1461
  %v3823 = vunpack.c.l.b16 %v1462
  %v3824 = vunpack.c.h.b16 %v1462
  %v3825 = vunpack.c.l.b16 %v1463
  %v3826 = vunpack.c.h.b16 %v1463
  %v3827 = vunpack.c.l.b16 %v1464
  %v3828 = vunpack.c.h.b16 %v1464
  %v3829 = vunpack.c.l.b16 %v1465
  %v3830 = vunpack.c.h.b16 %v1465
  %v3831 = vunpack.c.l.b16 %v1466
  %v3832 = vunpack.c.h.b16 %v1466
  %v3833 = vunpack.c.l.b16 %v1467
  %v3834 = vunpack.c.h.b16 %v1467
  %v3835 = vunpack.c.l.b16 %v1468
  %v3836 = vunpack.c.h.b16 %v1468
  %v3837 = vunpack.c.l.b16 %v1469
  %v3838 = vunpack.c.h.b16 %v1469
  %v3839 = vunpack.c.l.b16 %v1470
  %v3840 = vunpack.c.h.b16 %v1470
  %v3841 = vunpack.c.l.b16 %v1471
  %v3842 = vunpack.c.h.b16 %v1471
  %v3843 = vunpack.c.l.b16 %v1472
  %v3844 = vunpack.c.h.b16 %v1472
  %v3845 = vunpack.c.l.b16 %v1473
  %v3846 = vunpack.c.h.b16 %v1473
  %v3847 = vunpack.c.l.b16 %v1474
  %v3848 = vunpack.c.h.b16 %v1474
  %v3849 = vunpack.c.l.b16 %v1475
  %v3850 = vunpack.c.h.b16 %v1475
  %v3851 = vunpack.c.l.b16 %v1476
  %v3852 = vunpack.c.h.b16 %v1476
  %v3853 = vunpack.c.l.b16 %v1477
  %v3854 = vunpack.c.h.b16 %v1477
  %v3855 = vunpack.c.l.b16 %v1478
  %v3856 = vunpack.c.h.b16 %v1478
  %v3857 = vunpack.c.l.b16 %v1479
  %v3858 = vunpack.c.h.b16 %v1479
  %v3859 = vunpack.c.l.b16 %v1480
  %v3860 = vunpack.c.h.b16 %v1480
  %v3861 = vunpack.c.l.b16 %v1481
  %v3862 = vunpack.c.h.b16 %v1481
  %v3863 = vunpack.c.l.b16 %v1482
  %v3864 = vunpack.c.h.b16 %v1482
  %v3865 = vunpack.c.l.b16 %v1483
  %v3866 = vunpack.c.h.b16 %v1483
  %v3867 = vunpack.c.l.b16 %v1484
  %v3868 = vunpack.c.h.b16 %v1484
  %v3869 = vunpack.c.l.b16 %v1485
  %v3870 = vunpack.c.h.b16 %v1485
  %v3871 = vunpack.c.l.b16 %v1486
  %v3872 = vunpack.c.h.b16 %v1486
  %v3873 = vunpack.c.l.b16 %v1487
  %v3874 = vunpack.c.h.b16 %v1487
  %v3875 = vunpack.c.l.b16 %v1488
  %v3876 = vunpack.c.h.b16 %v1488
  %v3877 = vunpack.c.l.b16 %v1489
  %v3878 = vunpack.c.h.b16 %v1489
  %v3879 = vunpack.c.l.b16 %v1490
  %v3880 = vunpack.c.h.b16 %v1490
  %v3881 = vunpack.c.l.b16 %v1491
  %v3882 = vunpack.c.h.b16 %v1491
  %v3883 = vunpack.c.l.b16 %v1492
  %v3884 = vunpack.c.h.b16 %v1492
  %v3885 = vunpack.c.l.b16 %v1493
  %v3886 = vunpack.c.h.b16 %v1493
  %v3887 = vunpack.c.l.b16 %v1494
  %v3888 = vunpack.c.h.b16 %v1494
  %v3889 = vunpack.c.l.b16 %v1495
  %v3890 = vunpack.c.h.b16 %v1495
  %v3891 = vunpack.c.l.b16 %v1496
  %v3892 = vunpack.c.h.b16 %v1496
  %v3893 = vunpack.c.l.b16 %v1497
  %v3894 = vunpack.c.h.b16 %v1497
  %v3895 = vunpack.c.l.b16 %v1498
  %v3896 = vunpack.c.h.b16 %v1498
  %v3897 = vunpack.c.l.b16 %v1499
  %v3898 = vunpack.c.h.b16 %v1499
  %v3899 = vunpack.c.l.b16 %v1500
  %v3900 = vunpack.c.h.b16 %v1500
  %v3901 = vunpack.c.l.b16 %v1501
  %v3902 = vunpack.c.h.b16 %v1501
  %v3903 = vunpack.c.l.b16 %v1502
  %v3904 = vunpack.c.h.b16 %v1502
  %v3905 = vunpack.c.l.b16 %v1503
  %v3906 = vunpack.c.h.b16 %v1503
  %v3907 = vunpack.c.l.b16 %v1504
  %v3908 = vunpack.c.h.b16 %v1504
  %v3909 = vunpack.c.l.b16 %v1505
  %v3910 = vunpack.c.h.b16 %v1505
  %v3911 = vunpack.c.l.b16 %v1506
  %v3912 = vunpack.c.h.b16 %v1506
  %v3913 = vunpack.c.l.b16 %v1507
  %v3914 = vunpack.c.h.b16 %v1507
  %v3915 = vunpack.c.l.b16 %v1508
  %v3916 = vunpack.c.h.b16 %v1508
  %v3917 = vunpack.c.l.b16 %v1509
  %v3918 = vunpack.c.h.b16 %v1509
  %v3919 = vunpack.c.l.b16 %v1510
  %v3920 = vunpack.c.h.b16 %v1510
  %v3921 = vunpack.c.l.b16 %v1511
  %v3922 = vunpack.c.h.b16 %v1511
  %v3923 = vunpack.c.l.b16 %v1512
  %v3924 = vunpack.c.h.b16 %v1512
  %v3925 = vunpack.c.l.b16 %v1513
  %v3926 = vunpack.c.h.b16 %v1513
  %v3927 = vunpack.c.l.b16 %v1514
  %v3928 = vunpack.c.h.b16 %v1514
  %v3929 = vunpack.c.l.b16 %v1515
  %v3930 = vunpack.c.h.b16 %v1515
  %v3931 = vunpack.c.l.b16 %v1516
  %v3932 = vunpack.c.h.b16 %v1516
  %v3933 = vunpack.c.l.b16 %v1517
  %v3934 = vunpack.c.h.b16 %v1517
  %v3935 = vunpack.c.l.b16 %v1518
  %v3936 = vunpack.c.h.b16 %v1518
  %v3937 = vunpack.c.l.b16 %v1519
  %v3938 = vunpack.c.h.b16 %v1519
  %v3939 = vunpack.c.l.b16 %v1520
  %v3940 = vunpack.c.h.b16 %v1520
  %v3941 = vunpack.c.l.b16 %v1521
  %v3942 = vunpack.c.h.b16 %v1521
  %v3943 = vunpack.c.l.b16 %v1522
  %v3944 = vunpack.c.h.b16 %v1522
  %v3945 = vunpack.c.l.b16 %v1523
  %v3946 = vunpack.c.h.b16 %v1523
  %v3947 = vunpack.c.l.b16 %v1524
  %v3948 = vunpack.c.h.b16 %v1524
  %v3949 = vunpack.c.l.b16 %v1525
  %v3950 = vunpack.c.h.b16 %v1525
  %v3951 = vunpack.c.l.b16 %v1526
  %v3952 = vunpack.c.h.b16 %v1526
  %v3953 = vunpack.c.l.b16 %v1527
  %v3954 = vunpack.c.h.b16 %v1527
  %v3955 = vunpack.c.l.b16 %v1528
  %v3956 = vunpack.c.h.b16 %v1528
  %v3957 = vunpack.c.l.b16 %v1529
  %v3958 = vunpack.c.h.b16 %v1529
  %v3959 = vunpack.c.l.b16 %v1530
  %v3960 = vunpack.c.h.b16 %v1530
  %v3961 = vunpack.c.l.b16 %v1531
  %v3962 = vunpack.c.h.b16 %v1531
  %v3963 = vunpack.c.l.b16 %v1532
  %v3964 = vunpack.c.h.b16 %v1532
  %v3965 = vunpack.c.l.b16 %v1533
  %v3966 = vunpack.c.h.b16 %v1533
  %v3967 = vunpack.c.l.b16 %v1534
  %v3968 = vunpack.c.h.b16 %v1534
  %v3969 = vunpack.c.l.b16 %v1535
  %v3970 = vunpack.c.h.b16 %v1535
  %v3971 = vunpack.c.l.b16 %v1536
  %v3972 = vunpack.c.h.b16 %v1536
  %v3973 = vunpack.c.l.b16 %v1537
  %v3974 = vunpack.c.h.b16 %v1537
  %v3975 = vunpack.c.l.b16 %v1538
  %v3976 = vunpack.c.h.b16 %v1538
  %v3977 = vunpack.c.l.b16 %v1539
  %v3978 = vunpack.c.h.b16 %v1539
  %v3979 = vunpack.c.l.b16 %v1540
  %v3980 = vunpack.c.h.b16 %v1540
  %v3981 = vunpack.c.l.b16 %v1541
  %v3982 = vunpack.c.h.b16 %v1541
  %v3983 = vunpack.c.l.b16 %v1542
  %v3984 = vunpack.c.h.b16 %v1542
  %v3985 = vunpack.c.l.b16 %v1543
  %v3986 = vunpack.c.h.b16 %v1543
  %v3987 = vunpack.c.l.b16 %v1544
  %v3988 = vunpack.c.h.b16 %v1544
  %v3989 = vunpack.c.l.b16 %v1545
  %v3990 = vunpack.c.h.b16 %v1545
  %v3991 = vunpack.c.l.b16 %v1546
  %v3992 = vunpack.c.h.b16 %v1546
  %v3993 = vunpack.c.l.b16 %v1547
  %v3994 = vunpack.c.h.b16 %v1547
  %v3995 = vunpack.c.l.b16 %v1548
  %v3996 = vunpack.c.h.b16 %v1548
  %v3997 = vunpack.c.l.b16 %v1549
  %v3998 = vunpack.c.h.b16 %v1549
  %v3999 = vunpack.c.l.b16 %v1550
  %v4000 = vunpack.c.h.b16 %v1550
  %v4001 = vunpack.c.l.b16 %v1551
  %v4002 = vunpack.c.h.b16 %v1551
  %v4003 = vunpack.c.l.b16 %v1552
  %v4004 = vunpack.c.h.b16 %v1552
  %v4005 = vunpack.c.l.b16 %v1553
  %v4006 = vunpack.c.h.b16 %v1553
  %v4007 = vunpack.c.l.b16 %v1554
  %v4008 = vunpack.c.h.b16 %v1554
  %v4009 = vunpack.c.l.b16 %v1555
  %v4010 = vunpack.c.h.b16 %v1555
  %v4011 = vunpack.c.l.b16 %v1556
  %v4012 = vunpack.c.h.b16 %v1556
  %v4013 = vunpack.c.l.b16 %v1557
  %v4014 = vunpack.c.h.b16 %v1557
  %v4015 = vunpack.c.l.b16 %v1558
  %v4016 = vunpack.c.h.b16 %v1558
  %v4017 = vunpack.c.l.b16 %v1559
  %v4018 = vunpack.c.h.b16 %v1559
  %v4019 = vunpack.c.l.b16 %v1560
  %v4020 = vunpack.c.h.b16 %v1560
  %v4021 = vunpack.c.l.b16 %v1561
  %v4022 = vunpack.c.h.b16 %v1561
  %v4023 = vunpack.c.l.b16 %v1562
  %v4024 = vunpack.c.h.b16 %v1562
  %v4025 = vunpack.c.l.b16 %v1563
  %v4026 = vunpack.c.h.b16 %v1563
  %v4027 = vunpack.c.l.b16 %v1564
  %v4028 = vunpack.c.h.b16 %v1564
  %v4029 = vunpack.c.l.b16 %v1565
  %v4030 = vunpack.c.h.b16 %v1565
  %v4031 = vunpack.c.l.b16 %v1566
  %v4032 = vunpack.c.h.b16 %v1566
  %v4033 = vunpack.c.l.b16 %v1567
  %v4034 = vunpack.c.h.b16 %v1567
  %v4035 = vunpack.c.l.b16 %v1568
  %v4036 = vunpack.c.h.b16 %v1568
  %v4037 = vunpack.c.l.b16 %v1569
  %v4038 = vunpack.c.h.b16 %v1569
  %v4039 = vunpack.c.l.b16 %v1570
  %v4040 = vunpack.c.h.b16 %v1570
  %v4041 = vunpack.c.l.b16 %v1571
  %v4042 = vunpack.c.h.b16 %v1571
  %v4043 = vunpack.c.l.b16 %v1572
  %v4044 = vunpack.c.h.b16 %v1572
  %v4045 = vunpack.c.l.b16 %v1573
  %v4046 = vunpack.c.h.b16 %v1573
  %v4047 = vunpack.c.l.b16 %v1574
  %v4048 = vunpack.c.h.b16 %v1574
  %v4049 = vunpack.c.l.b16 %v1575
  %v4050 = vunpack.c.h.b16 %v1575
  %v4051 = vunpack.c.l.b16 %v1576
  %v4052 = vunpack.c.h.b16 %v1576
  %v4053 = vunpack.c.l.b16 %v1577
  %v4054 = vunpack.c.h.b16 %v1577
  %v4055 = vunpack.c.l.b16 %v1578
  %v4056 = vunpack.c.h.b16 %v1578
  %v4057 = vunpack.c.l.b16 %v1579
  %v4058 = vunpack.c.h.b16 %v1579
  %v4059 = vunpack.c.l.b16 %v1580
  %v4060 = vunpack.c.h.b16 %v1580
  %v4061 = vunpack.c.l.b16 %v1581
  %v4062 = vunpack.c.h.b16 %v1581
  %v4063 = vunpack.c.l.b16 %v1582
  %v4064 = vunpack.c.h.b16 %v1582
  %v4065 = vunpack.c.l.b16 %v1583
  %v4066 = vunpack.c.h.b16 %v1583
  %v4067 = vunpack.c.l.b16 %v1584
  %v4068 = vunpack.c.h.b16 %v1584
  %v4069 = vunpack.c.l.b16 %v1585
  %v4070 = vunpack.c.h.b16 %v1585
  %v4071 = vunpack.c.l.b16 %v1586
  %v4072 = vunpack.c.h.b16 %v1586
  %v4073 = vunpack.c.l.b16 %v1587
  %v4074 = vunpack.c.h.b16 %v1587
  %v4075 = vunpack.c.l.b16 %v1588
  %v4076 = vunpack.c.h.b16 %v1588
  %v4077 = vunpack.c.l.b16 %v1589
  %v4078 = vunpack.c.h.b16 %v1589
  %v4079 = vunpack.c.l.b16 %v1590
  %v4080 = vunpack.c.h.b16 %v1590
  %v4081 = vunpack.c.l.b16 %v1591
  %v4082 = vunpack.c.h.b16 %v1591
  %v4083 = vunpack.c.l.b16 %v1592
  %v4084 = vunpack.c.h.b16 %v1592
  %v4085 = vunpack.c.l.b16 %v1593
  %v4086 = vunpack.c.h.b16 %v1593
  %v4087 = vunpack.c.l.b16 %v1594
  %v4088 = vunpack.c.h.b16 %v1594
  %v4089 = vunpack.c.l.b16 %v1595
  %v4090 = vunpack.c.h.b16 %v1595
  %v4091 = vunpack.c.l.b16 %v1596
  %v4092 = vunpack.c.h.b16 %v1596
  %v4093 = vunpack.c.l.b16 %v1597
  %v4094 = vunpack.c.h.b16 %v1597
  %v4095 = vunpack.c.l.b16 %v1598
  %v4096 = vunpack.c.h.b16 %v1598
  %v4097 = vunpack.c.l.b16 %v1599
  %v4098 = vunpack.c.h.b16 %v1599
  %v4099 = vunpack.c.l.b16 %v1600
  %v4100 = vunpack.c.h.b16 %v1600
  %v4101 = vunpack.c.l.b16 %v1601
  %v4102 = vunpack.c.h.b16 %v1601
  %v4103 = vunpack.c.l.b16 %v1602
  %v4104 = vunpack.c.h.b16 %v1602
  %v4105 = vunpack.c.l.b16 %v1603
  %v4106 = vunpack.c.h.b16 %v1603
  %v4107 = vunpack.c.l.b16 %v1604
  %v4108 = vunpack.c.h.b16 %v1604
  %v4109 = vunpack.c.l.b16 %v1605
  %v4110 = vunpack.c.h.b16 %v1605
  %v4111 = vunpack.c.l.b16 %v1606
  %v4112 = vunpack.c.h.b16 %v1606
  %v4113 = vunpack.c.l.b16 %v1607
  %v4114 = vunpack.c.h.b16 %v1607
  %v4115 = vunpack.c.l.b16 %v1608
  %v4116 = vunpack.c.h.b16 %v1608
  %v4117 = vunpack.c.l.b16 %v1609
  %v4118 = vunpack.c.h.b16 %v1609
  %v4119 = vunpack.c.l.b16 %v1610
  %v4120 = vunpack.c.h.b16 %v1610
  %v4121 = vunpack.c.l.b16 %v1611
  %v4122 = vunpack.c.h.b16 %v1611
  %v4123 = vunpack.c.l.b16 %v1612
  %v4124 = vunpack.c.h.b16 %v1612
  %v4125 = vunpack.c.l.b16 %v1613
  %v4126 = vunpack.c.h.b16 %v1613
  %v4127 = vunpack.c.l.b16 %v1614
  %v4128 = vunpack.c.h.b16 %v1614
  %v4129 = vunpack.c.l.b16 %v1615
  %v4130 = vunpack.c.h.b16 %v1615
  %v4131 = vunpack.c.l.b16 %v1616
  %v4132 = vunpack.c.h.b16 %v1616
  %v4133 = vunpack.c.l.b16 %v1617
  %v4134 = vunpack.c.h.b16 %v1617
  %v4135 = vunpack.c.l.b16 %v1618
  %v4136 = vunpack.c.h.b16 %v1618
  %v4137 = vunpack.c.l.b16 %v1619
  %v4138 = vunpack.c.h.b16 %v1619
  %v4139 = vunpack.c.l.b16 %v1620
  %v4140 = vunpack.c.h.b16 %v1620
  %v4141 = vunpack.c.l.b16 %v1621
  %v4142 = vunpack.c.h.b16 %v1621
  %v4143 = vunpack.c.l.b16 %v1622
  %v4144 = vunpack.c.h.b16 %v1622
  %v4145 = vunpack.c.l.b16 %v1623
  %v4146 = vunpack.c.h.b16 %v1623
  %v4147 = vunpack.c.l.b16 %v1624
  %v4148 = vunpack.c.h.b16 %v1624
  %v4149 = vunpack.c.l.b16 %v1625
  %v4150 = vunpack.c.h.b16 %v1625
  %v4151 = vunpack.c.l.b16 %v1626
  %v4152 = vunpack.c.h.b16 %v1626
  %v4153 = vunpack.c.l.b16 %v1627
  %v4154 = vunpack.c.h.b16 %v1627
  %v4155 = vunpack.c.l.b16 %v1628
  %v4156 = vunpack.c.h.b16 %v1628
  %v4157 = vunpack.c.l.b16 %v1629
  %v4158 = vunpack.c.h.b16 %v1629
  %v4159 = vunpack.c.l.b16 %v1630
  %v4160 = vunpack.c.h.b16 %v1630
  %v4161 = vunpack.c.l.b16 %v1631
  %v4162 = vunpack.c.h.b16 %v1631
  %v4163 = vunpack.c.l.b16 %v1632
  %v4164 = vunpack.c.h.b16 %v1632
  %v4165 = vunpack.c.l.b16 %v1633
  %v4166 = vunpack.c.h.b16 %v1633
  %v4167 = vunpack.c.l.b16 %v1634
  %v4168 = vunpack.c.h.b16 %v1634
  %v4169 = vunpack.c.l.b16 %v1635
  %v4170 = vunpack.c.h.b16 %v1635
  %v4171 = vunpack.c.l.b16 %v1636
  %v4172 = vunpack.c.h.b16 %v1636
  %v4173 = vunpack.c.l.b16 %v1637
  %v4174 = vunpack.c.h.b16 %v1637
  %v4175 = vunpack.c.l.b16 %v1638
  %v4176 = vunpack.c.h.b16 %v1638
  %v4177 = vunpack.c.l.b16 %v1639
  %v4178 = vunpack.c.h.b16 %v1639
  %v4179 = vunpack.c.l.b16 %v1640
  %v4180 = vunpack.c.h.b16 %v1640
  %v4181 = vunpack.c.l.b16 %v1641
  %v4182 = vunpack.c.h.b16 %v1641
  %v4183 = vunpack.c.l.b16 %v1642
  %v4184 = vunpack.c.h.b16 %v1642
  %v4185 = vunpack.c.l.b16 %v1643
  %v4186 = vunpack.c.h.b16 %v1643
  %v4187 = vunpack.c.l.b16 %v1644
  %v4188 = vunpack.c.h.b16 %v1644
  %v4189 = vunpack.c.l.b16 %v1645
  %v4190 = vunpack.c.h.b16 %v1645
  %v4191 = vunpack.c.l.b16 %v1646
  %v4192 = vunpack.c.h.b16 %v1646
  %v4193 = vunpack.c.l.b16 %v1647
  %v4194 = vunpack.c.h.b16 %v1647
  %v4195 = vunpack.c.l.b16 %v1648
  %v4196 = vunpack.c.h.b16 %v1648
  %v4197 = vunpack.c.l.b16 %v1649
  %v4198 = vunpack.c.h.b16 %v1649
  %v4199 = vunpack.c.l.b16 %v1650
  %v4200 = vunpack.c.h.b16 %v1650
  %v4201 = vunpack.c.l.b16 %v1651
  %v4202 = vunpack.c.h.b16 %v1651
  %v4203 = vunpack.c.l.b16 %v1652
  %v4204 = vunpack.c.h.b16 %v1652
  %v4205 = vunpack.c.l.b16 %v1653
  %v4206 = vunpack.c.h.b16 %v1653
  %v4207 = vunpack.c.l.b16 %v1654
  %v4208 = vunpack.c.h.b16 %v1654
  %v4209 = vunpack.c.l.b16 %v1655
  %v4210 = vunpack.c.h.b16 %v1655
  %v4211 = vunpack.c.l.b16 %v1656
  %v4212 = vunpack.c.h.b16 %v1656
  %v4213 = vunpack.c.l.b16 %v1657
  %v4214 = vunpack.c.h.b16 %v1657
  %v4215 = vunpack.c.l.b16 %v1658
  %v4216 = vunpack.c.h.b16 %v1658
  %v4217 = vunpack.c.l.b16 %v1659
  %v4218 = vunpack.c.h.b16 %v1659
  %v4219 = vunpack.c.l.b16 %v1660
  %v4220 = vunpack.c.h.b16 %v1660
  %v4221 = vunpack.c.l.b16 %v1661
  %v4222 = vunpack.c.h.b16 %v1661
  %v4223 = vunpack.c.l.b16 %v1662
  %v4224 = vunpack.c.h.b16 %v1662
  %v4225 = vunpack.c.l.b16 %v1663
  %v4226 = vunpack.c.h.b16 %v1663
  %v4227 = vunpack.c.l.b16 %v1664
  %v4228 = vunpack.c.h.b16 %v1664
  %v4229 = vunpack.c.l.b16 %v1665
  %v4230 = vunpack.c.h.b16 %v1665
  %v4231 = vunpack.c.l.b16 %v1666
  %v4232 = vunpack.c.h.b16 %v1666
  %v4233 = vunpack.c.l.b16 %v1667
  %v4234 = vunpack.c.h.b16 %v1667
  %v4235 = vunpack.c.l.b16 %v1668
  %v4236 = vunpack.c.h.b16 %v1668
  %v4237 = vunpack.c.l.b16 %v1669
  %v4238 = vunpack.c.h.b16 %v1669
  %v4239 = vunpack.c.l.b16 %v1670
  %v4240 = vunpack.c.h.b16 %v1670
  %v4241 = vunpack.c.l.b16 %v1671
  %v4242 = vunpack.c.h.b16 %v1671
  %v4243 = vunpack.c.l.b16 %v1672
  %v4244 = vunpack.c.h.b16 %v1672
  %v4245 = vunpack.c.l.b16 %v1673
  %v4246 = vunpack.c.h.b16 %v1673
  %v4247 = vunpack.c.l.b16 %v1674
  %v4248 = vunpack.c.h.b16 %v1674
  %v4249 = vunpack.c.l.b16 %v1675
  %v4250 = vunpack.c.h.b16 %v1675
  %v4251 = vunpack.c.l.b16 %v1676
  %v4252 = vunpack.c.h.b16 %v1676
  %v4253 = vunpack.c.l.b16 %v1677
  %v4254 = vunpack.c.h.b16 %v1677
  %v4255 = vunpack.c.l.b16 %v1678
  %v4256 = vunpack.c.h.b16 %v1678
  %v4257 = vunpack.c.l.b16 %v1679
  %v4258 = vunpack.c.h.b16 %v1679
  %v4259 = vunpack.c.l.b16 %v1680
  %v4260 = vunpack.c.h.b16 %v1680
  %v4261 = vunpack.c.l.b16 %v1681
  %v4262 = vunpack.c.h.b16 %v1681
  %v4263 = vunpack.c.l.b16 %v1682
  %v4264 = vunpack.c.h.b16 %v1682
  %v4265 = vunpack.c.l.b16 %v1683
  %v4266 = vunpack.c.h.b16 %v1683
  %v4267 = vunpack.c.l.b16 %v1684
  %v4268 = vunpack.c.h.b16 %v1684
  %v4269 = vunpack.c.l.b16 %v1685
  %v4270 = vunpack.c.h.b16 %v1685
  %v4271 = vunpack.c.l.b16 %v1686
  %v4272 = vunpack.c.h.b16 %v1686
  %v4273 = vunpack.c.l.b16 %v1687
  %v4274 = vunpack.c.h.b16 %v1687
  %v4275 = vunpack.c.l.b16 %v1688
  %v4276 = vunpack.c.h.b16 %v1688
  %v4277 = vunpack.c.l.b16 %v1689
  %v4278 = vunpack.c.h.b16 %v1689
  %v4279 = vunpack.c.l.b16 %v1690
  %v4280 = vunpack.c.h.b16 %v1690
  %v4281 = vunpack.c.l.b16 %v1691
  %v4282 = vunpack.c.h.b16 %v1691
  %v4283 = vunpack.c.l.b16 %v1692
  %v4284 = vunpack.c.h.b16 %v1692
  %v4285 = vunpack.c.l.b16 %v1693
  %v4286 = vunpack.c.h.b16 %v1693
  %v4287 = vunpack.c.l.b16 %v1694
  %v4288 = vunpack.c.h.b16 %v1694
  %v4289 = vunpack.c.l.b16 %v1695
  %v4290 = vunpack.c.h.b16 %v1695
  %v4291 = vunpack.c.l.b16 %v1696
  %v4292 = vunpack.c.h.b16 %v1696
  %v4293 = vunpack.c.l.b16 %v1697
  %v4294 = vunpack.c.h.b16 %v1697
  %v4295 = vunpack.c.l.b16 %v1698
  %v4296 = vunpack.c.h.b16 %v1698
  %v4297 = vunpack.c.l.b16 %v1699
  %v4298 = vunpack.c.h.b16 %v1699
  %v4299 = vunpack.c.l.b16 %v1700
  %v4300 = vunpack.c.h.b16 %v1700
  %v4301 = vunpack.c.l.b16 %v1701
  %v4302 = vunpack.c.h.b16 %v1701
  %v4303 = vunpack.c.l.b16 %v1702
  %v4304 = vunpack.c.h.b16 %v1702
  %v4305 = vunpack.c.l.b16 %v1703
  %v4306 = vunpack.c.h.b16 %v1703
  %v4307 = vunpack.c.l.b16 %v1704
  %v4308 = vunpack.c.h.b16 %v1704
  %v4309 = vunpack.c.l.b16 %v1705
  %v4310 = vunpack.c.h.b16 %v1705
  %v4311 = vunpack.c.l.b16 %v1706
  %v4312 = vunpack.c.h.b16 %v1706
  %v4313 = vunpack.c.l.b16 %v1707
  %v4314 = vunpack.c.h.b16 %v1707
  %v4315 = vunpack.c.l.b16 %v1708
  %v4316 = vunpack.c.h.b16 %v1708
  %v4317 = vunpack.c.l.b16 %v1709
  %v4318 = vunpack.c.h.b16 %v1709
  %v4319 = vunpack.c.l.b16 %v1710
  %v4320 = vunpack.c.h.b16 %v1710
  %v4321 = vunpack.c.l.b16 %v1711
  %v4322 = vunpack.c.h.b16 %v1711
  %v4323 = vunpack.c.l.b16 %v1712
  %v4324 = vunpack.c.h.b16 %v1712
  %v4325 = vunpack.c.l.b16 %v1713
  %v4326 = vunpack.c.h.b16 %v1713
  %v4327 = vunpack.c.l.b16 %v1714
  %v4328 = vunpack.c.h.b16 %v1714
  %v4329 = vunpack.c.l.b16 %v1715
  %v4330 = vunpack.c.h.b16 %v1715
  %v4331 = vunpack.c.l.b16 %v1716
  %v4332 = vunpack.c.h.b16 %v1716
  %v4333 = vunpack.c.l.b16 %v1717
  %v4334 = vunpack.c.h.b16 %v1717
  %v4335 = vunpack.c.l.b16 %v1718
  %v4336 = vunpack.c.h.b16 %v1718
  %v4337 = vunpack.c.l.b16 %v1719
  %v4338 = vunpack.c.h.b16 %v1719
  %v4339 = vunpack.c.l.b16 %v1720
  %v4340 = vunpack.c.h.b16 %v1720
  %v4341 = vunpack.c.l.b16 %v1721
  %v4342 = vunpack.c.h.b16 %v1721
  %v4343 = vunpack.c.l.b16 %v1722
  %v4344 = vunpack.c.h.b16 %v1722
  %v4345 = vunpack.c.l.b16 %v1723
  %v4346 = vunpack.c.h.b16 %v1723
  %v4347 = vunpack.c.l.b16 %v1724
  %v4348 = vunpack.c.h.b16 %v1724
  %v4349 = vunpack.c.l.b16 %v1725
  %v4350 = vunpack.c.h.b16 %v1725
  %v4351 = vunpack.c.l.b16 %v1726
  %v4352 = vunpack.c.h.b16 %v1726
  %v4353 = vunpack.c.l.b16 %v1727
  %v4354 = vunpack.c.h.b16 %v1727
  %v4355 = vunpack.c.l.b16 %v1728
  %v4356 = vunpack.c.h.b16 %v1728
  %v4357 = vunpack.c.l.b16 %v1729
  %v4358 = vunpack.c.h.b16 %v1729
  %v4359 = vunpack.c.l.b16 %v1730
  %v4360 = vunpack.c.h.b16 %v1730
  %v4361 = vunpack.c.l.b16 %v1731
  %v4362 = vunpack.c.h.b16 %v1731
  %v4363 = vunpack.c.l.b16 %v1732
  %v4364 = vunpack.c.h.b16 %v1732
  %v4365 = vunpack.c.l.b16 %v1733
  %v4366 = vunpack.c.h.b16 %v1733
  %v4367 = vunpack.c.l.b16 %v1734
  %v4368 = vunpack.c.h.b16 %v1734
  %v4369 = vunpack.c.l.b16 %v1735
  %v4370 = vunpack.c.h.b16 %v1735
  %v4371 = vunpack.c.l.b16 %v1736
  %v4372 = vunpack.c.h.b16 %v1736
  %v4373 = vunpack.c.l.b16 %v1737
  %v4374 = vunpack.c.h.b16 %v1737
  %v4375 = vunpack.c.l.b16 %v1738
  %v4376 = vunpack.c.h.b16 %v1738
  %v4377 = vunpack.c.l.b16 %v1739
  %v4378 = vunpack.c.h.b16 %v1739
  %v4379 = vunpack.c.l.b16 %v1740
  %v4380 = vunpack.c.h.b16 %v1740
  %v4381 = vunpack.c.l.b16 %v1741
  %v4382 = vunpack.c.h.b16 %v1741
  %v4383 = vunpack.c.l.b16 %v1742
  %v4384 = vunpack.c.h.b16 %v1742
  %v4385 = vunpack.c.l.b16 %v1743
  %v4386 = vunpack.c.h.b16 %v1743
  %v4387 = vunpack.c.l.b16 %v1744
  %v4388 = vunpack.c.h.b16 %v1744
  %v4389 = vunpack.c.l.b16 %v1745
  %v4390 = vunpack.c.h.b16 %v1745
  %v4391 = vunpack.c.l.b16 %v1746
  %v4392 = vunpack.c.h.b16 %v1746
  %v4393 = vunpack.c.l.b16 %v1747
  %v4394 = vunpack.c.h.b16 %v1747
  %v4395 = vunpack.c.l.b16 %v1748
  %v4396 = vunpack.c.h.b16 %v1748
  %v4397 = vunpack.c.l.b16 %v1749
  %v4398 = vunpack.c.h.b16 %v1749
  %v4399 = vunpack.c.l.b16 %v1750
  %v4400 = vunpack.c.h.b16 %v1750
  %v4401 = vunpack.c.l.b16 %v1751
  %v4402 = vunpack.c.h.b16 %v1751
  %v4403 = vunpack.c.l.b16 %v1752
  %v4404 = vunpack.c.h.b16 %v1752
  %v4405 = vunpack.c.l.b16 %v1753
  %v4406 = vunpack.c.h.b16 %v1753
  %v4407 = vunpack.c.l.b16 %v1754
  %v4408 = vunpack.c.h.b16 %v1754
  %v4409 = vunpack.c.l.b16 %v1755
  %v4410 = vunpack.c.h.b16 %v1755
  %v4411 = vunpack.c.l.b16 %v1756
  %v4412 = vunpack.c.h.b16 %v1756
  %v4413 = vunpack.c.l.b16 %v1757
  %v4414 = vunpack.c.h.b16 %v1757
  %v4415 = vunpack.c.l.b16 %v1758
  %v4416 = vunpack.c.h.b16 %v1758
  %v4417 = vunpack.c.l.b16 %v1759
  %v4418 = vunpack.c.h.b16 %v1759
  %v4419 = vunpack.c.l.b16 %v1760
  %v4420 = vunpack.c.h.b16 %v1760
  %v4421 = vunpack.c.l.b16 %v1761
  %v4422 = vunpack.c.h.b16 %v1761
  %v4423 = vunpack.c.l.b16 %v1762
  %v4424 = vunpack.c.h.b16 %v1762
  %v4425 = vunpack.c.l.b16 %v1763
  %v4426 = vunpack.c.h.b16 %v1763
  %v4427 = vunpack.c.l.b16 %v1764
  %v4428 = vunpack.c.h.b16 %v1764
  %v4429 = vunpack.c.l.b16 %v1765
  %v4430 = vunpack.c.h.b16 %v1765
  %v4431 = vunpack.c.l.b16 %v1766
  %v4432 = vunpack.c.h.b16 %v1766
  %v4433 = vunpack.c.l.b16 %v1767
  %v4434 = vunpack.c.h.b16 %v1767
  %v4435 = vunpack.c.l.b16 %v1768
  %v4436 = vunpack.c.h.b16 %v1768
  %v4437 = vunpack.c.l.b16 %v1769
  %v4438 = vunpack.c.h.b16 %v1769
  %v4439 = vunpack.c.l.b16 %v1770
  %v4440 = vunpack.c.h.b16 %v1770
  %v4441 = vunpack.c.l.b16 %v1771
  %v4442 = vunpack.c.h.b16 %v1771
  %v4443 = vunpack.c.l.b16 %v1772
  %v4444 = vunpack.c.h.b16 %v1772
  %v4445 = vunpack.c.l.b16 %v1773
  %v4446 = vunpack.c.h.b16 %v1773
  %v4447 = vunpack.c.l.b16 %v1774
  %v4448 = vunpack.c.h.b16 %v1774
  %v4449 = vunpack.c.l.b16 %v1775
  %v4450 = vunpack.c.h.b16 %v1775
  %v4451 = vunpack.c.l.b16 %v1776
  %v4452 = vunpack.c.h.b16 %v1776
  %v4453 = vunpack.c.l.b16 %v1777
  %v4454 = vunpack.c.h.b16 %v1777
  %v4455 = vunpack.c.l.b16 %v1778
  %v4456 = vunpack.c.h.b16 %v1778
  %v4457 = vunpack.c.l.b16 %v1779
  %v4458 = vunpack.c.h.b16 %v1779
  %v4459 = vunpack.c.l.b16 %v1780
  %v4460 = vunpack.c.h.b16 %v1780
  %v4461 = vunpack.c.l.b16 %v1781
  %v4462 = vunpack.c.h.b16 %v1781
  %v4463 = vunpack.c.l.b16 %v1782
  %v4464 = vunpack.c.h.b16 %v1782
  %v4465 = vunpack.c.l.b16 %v1783
  %v4466 = vunpack.c.h.b16 %v1783
  %v4467 = vunpack.c.l.b16 %v1784
  %v4468 = vunpack.c.h.b16 %v1784
  %v4469 = vunpack.c.l.b16 %v1785
  %v4470 = vunpack.c.h.b16 %v1785
  %v4471 = vunpack.c.l.b16 %v1786
  %v4472 = vunpack.c.h.b16 %v1786
  %v4473 = vunpack.c.l.b16 %v1787
  %v4474 = vunpack.c.h.b16 %v1787
  %v4475 = vunpack.c.l.b16 %v1788
  %v4476 = vunpack.c.h.b16 %v1788
  %v4477 = vunpack.c.l.b16 %v1789
  %v4478 = vunpack.c.h.b16 %v1789
  %v4479 = vunpack.c.l.b16 %v1790
  %v4480 = vunpack.c.h.b16 %v1790
  %v4481 = vunpack.c.l.b16 %v1791
  %v4482 = vunpack.c.h.b16 %v1791
  %v4483 = vunpack.c.l.b16 %v1792
  %v4484 = vunpack.c.h.b16 %v1792
  %v4485 = vunpack.c.l.b16 %v1793
  %v4486 = vunpack.c.h.b16 %v1793
  %v4487 = vunpack.c.l.b16 %v1794
  %v4488 = vunpack.c.h.b16 %v1794
  %v4489 = vunpack.c.l.b16 %v1795
  %v4490 = vunpack.c.h.b16 %v1795
  %v4491 = vunpack.c.l.b16 %v1796
  %v4492 = vunpack.c.h.b16 %v1796
  %v4493 = vunpack.c.l.b16 %v1797
  %v4494 = vunpack.c.h.b16 %v1797
  %v4495 = vunpack.c.l.b16 %v1798
  %v4496 = vunpack.c.h.b16 %v1798
  %v4497 = vunpack.c.l.b16 %v1799
  %v4498 = vunpack.c.h.b16 %v1799
  %v4499 = vunpack.c.l.b16 %v1800
  %v4500 = vunpack.c.h.b16 %v1800
  %v4501 = vunpack.c.l.b16 %v1801
  %v4502 = vunpack.c.h.b16 %v1801
  %v4503 = vunpack.c.l.b16 %v1802
  %v4504 = vunpack.c.h.b16 %v1802
  %v4505 = vunpack.c.l.b16 %v1803
  %v4506 = vunpack.c.h.b16 %v1803
  %v4507 = vunpack.c.l.b16 %v1804
  %v4508 = vunpack.c.h.b16 %v1804
  %v4509 = vunpack.c.l.b16 %v1805
  %v4510 = vunpack.c.h.b16 %v1805
  %v4511 = vunpack.c.l.b16 %v1806
  %v4512 = vunpack.c.h.b16 %v1806
  %v4513 = vunpack.c.l.b16 %v1807
  %v4514 = vunpack.c.h.b16 %v1807
  %v4515 = vunpack.c.l.b16 %v1808
  %v4516 = vunpack.c.h.b16 %v1808
  %v4517 = vunpack.c.l.b16 %v1809
  %v4518 = vunpack.c.h.b16 %v1809
  %v4519 = vunpack.c.l.b16 %v1810
  %v4520 = vunpack.c.h.b16 %v1810
  %v4521 = vunpack.c.l.b16 %v1811
  %v4522 = vunpack.c.h.b16 %v1811
  %v4523 = vunpack.c.l.b16 %v1812
  %v4524 = vunpack.c.h.b16 %v1812
  %v4525 = vunpack.c.l.b16 %v1813
  %v4526 = vunpack.c.h.b16 %v1813
  %v4527 = vunpack.c.l.b16 %v1814
  %v4528 = vunpack.c.h.b16 %v1814
  %v4529 = vunpack.c.l.b16 %v1815
  %v4530 = vunpack.c.h.b16 %v1815
  %v4531 = vunpack.c.l.b16 %v1816
  %v4532 = vunpack.c.h.b16 %v1816
  %v4533 = vunpack.c.l.b16 %v1817
  %v4534 = vunpack.c.h.b16 %v1817
  %v4535 = vunpack.c.l.b16 %v1818
  %v4536 = vunpack.c.h.b16 %v1818
  %v4537 = vunpack.c.l.b16 %v1819
  %v4538 = vunpack.c.h.b16 %v1819
  %v4539 = vunpack.c.l.b16 %v1820
  %v4540 = vunpack.c.h.b16 %v1820
  %v4541 = vunpack.c.l.b16 %v1821
  %v4542 = vunpack.c.h.b16 %v1821
  %v4543 = vunpack.c.l.b16 %v1822
  %v4544 = vunpack.c.h.b16 %v1822
  %v4545 = vunpack.c.l.b16 %v1823
  %v4546 = vunpack.c.h.b16 %v1823
  %v4547 = vunpack.c.l.b16 %v1824
  %v4548 = vunpack.c.h.b16 %v1824
  %v4549 = vunpack.c.l.b16 %v1825
  %v4550 = vunpack.c.h.b16 %v1825
  %v4551 = vunpack.c.l.b16 %v1826
  %v4552 = vunpack.c.h.b16 %v1826
  %v4553 = vunpack.c.l.b16 %v1827
  %v4554 = vunpack.c.h.b16 %v1827
  %v4555 = vunpack.c.l.b16 %v1828
  %v4556 = vunpack.c.h.b16 %v1828
  %v4557 = vunpack.c.l.b16 %v1829
  %v4558 = vunpack.c.h.b16 %v1829
  %v4559 = vunpack.c.l.b16 %v1830
  %v4560 = vunpack.c.h.b16 %v1830
  %v4561 = vunpack.c.l.b16 %v1831
  %v4562 = vunpack.c.h.b16 %v1831
  %v4563 = vunpack.c.l.b16 %v1832
  %v4564 = vunpack.c.h.b16 %v1832
  %v4565 = vunpack.c.l.b16 %v1833
  %v4566 = vunpack.c.h.b16 %v1833
  %v4567 = vunpack.c.l.b16 %v1834
  %v4568 = vunpack.c.h.b16 %v1834
  %v4569 = vunpack.c.l.b16 %v1835
  %v4570 = vunpack.c.h.b16 %v1835
  %v4571 = vunpack.c.l.b16 %v1836
  %v4572 = vunpack.c.h.b16 %v1836
  %v4573 = vunpack.c.l.b16 %v1837
  %v4574 = vunpack.c.h.b16 %v1837
  %v4575 = vunpack.c.l.b16 %v1838
  %v4576 = vunpack.c.h.b16 %v1838
  %v4577 = vunpack.c.l.b16 %v1839
  %v4578 = vunpack.c.h.b16 %v1839
  %v4579 = vunpack.c.l.b16 %v1840
  %v4580 = vunpack.c.h.b16 %v1840
  %v4581 = vunpack.c.l.b16 %v1841
  %v4582 = vunpack.c.h.b16 %v1841
  %v4583 = vunpack.c.l.b16 %v1842
  %v4584 = vunpack.c.h.b16 %v1842
  %v4585 = vpack.c.b16 %v2839, %v2821
  %v4586 = vpack.c.b16 %v2840, %v2822
  %v4587 = vpack.c.b16 %v2841, %v2823
  %v4588 = vpack.c.b16 %v2842, %v2824
  %v4589 = vpack.c.b16 %v2843, %v2825
  %v4590 = vpack.c.b16 %v2844, %v2826
  %v4591 = vpack.c.b16 %v2845, %v2827
  %v4592 = vpack.c.b16 %v2846, %v2828
  %v4593 = vpack.c.b16 %v2847, %v2829
  %v4594 = vpack.c.b16 %v2848, %v2830
  %v4595 = vpack.c.b16 %v2849, %v2831
  %v4596 = vpack.c.b16 %v2850, %v2832
  %v4597 = vpack.c.b16 %v2851, %v2833
  %v4598 = vpack.c.b16 %v2852, %v2834
  %v4599 = vpack.c.b16 %v2853, %v2835
  %v4600 = vpack.c.b16 %v2854, %v2836
  %v4601 = vpack.c.b16 %v2855, %v2837
  %v4602 = vpack.c.b16 %v2856, %v2838
  %v4603 = vpack.c.b16 %v2875, %v2857
  %v4604 = vpack.c.b16 %v2876, %v2858
  %v4605 = vpack.c.b16 %v2877, %v2859
  %v4606 = vpack.c.b16 %v2878, %v2860
  %v4607 = vpack.c.b16 %v2879, %v2861
  %v4608 = vpack.c.b16 %v2880, %v2862
  %v4609 = vpack.c.b16 %v2881, %v2863
  %v4610 = vpack.c.b16 %v2882, %v2864
  %v4611 = vpack.c.b16 %v2883, %v2865
  %v4612 = vpack.c.b16 %v2884, %v2866
  %v4613 = vpack.c.b16 %v2885, %v2867
  %v4614 = vpack.c.b16 %v2886, %v2868
  %v4615 = vpack.c.b16 %v2887, %v2869
  %v4616 = vpack.c.b16 %v2888, %v2870
  %v4617 = vpack.c.b16 %v2889, %v2871
  %v4618 = vpack.c.b16 %v2890, %v2872
  %v4619 = vpack.c.b16 %v2891, %v2873
  %v4620 = vpack.c.b16 %v2892, %v2874
  %v4621 = vpack.c.b16 %v2911, %v2893
  %v4622 = vpack.c.b16 %v2912, %v2894
  %v4623 = vpack.c.b16 %v2913, %v2895
  %v4624 = vpack.c.b16 %v2914, %v2896
  %v4625 = vpack.c.b16 %v2915, %v2897
  %v4626 = vpack.c.b16 %v2916, %v2898
  %v4627 = vpack.c.b16 %v2917, %v2899
  %v4628 = vpack.c.b16 %v2918, %v2900
  %v4629 = vpack.c.b16 %v2919, %v2901
  %v4630 = vpack.c.b16 %v2920, %v2902
  %v4631 = vpack.c.b16 %v2921, %v2903
  %v4632 = vpack.c.b16 %v2922, %v2904
  %v4633 = vpack.c.b16 %v2923, %v2905
  %v4634 = vpack.c.b16 %v2924, %v2906
  %v4635 = vpack.c.b16 %v2925, %v2907
  %v4636 = vpack.c.b16 %v2926, %v2908
  %v4637 = vpack.c.b16 %v2927, %v2909
  %v4638 = vpack.c.b16 %v2928, %v2910
  %v4639 = vpack.c.b16 %v2947, %v2929
  %v4640 = vpack.c.b16 %v2948, %v2930
  %v4641 = vpack.c.b16 %v2949, %v2931
  %v4642 = vpack.c.b16 %v2950, %v2932
  %v4643 = vpack.c.b16 %v2951, %v2933
  %v4644 = vpack.c.b16 %v2952, %v2934
  %v4645 = vpack.c.b16 %v2953, %v2935
  %v4646 = vpack.c.b16 %v2954, %v2936
  %v4647 = vpack.c.b16 %v2955, %v2937
  %v4648 = vpack.c.b16 %v2956, %v2938
  %v4649 = vpack.c.b16 %v2957, %v2939
  %v4650 = vpack.c.b16 %v2958, %v2940
  %v4651 = vpack.c.b16 %v2959, %v2941
  %v4652 = vpack.c.b16 %v2960, %v2942
  %v4653 = vpack.c.b16 %v2961, %v2943
  %v4654 = vpack.c.b16 %v2962, %v2944
  %v4655 = vpack.c.b16 %v2963, %v2945
  %v4656 = vpack.c.b16 %v2964, %v2946
  %v4657 = vpack.c.b16 %v2983, %v2965
  %v4658 = vpack.c.b16 %v2984, %v2966
  %v4659 = vpack.c.b16 %v2985, %v2967
  %v4660 = vpack.c.b16 %v2986, %v2968
  %v4661 = vpack.c.b16 %v2987, %v2969
  %v4662 = vpack.c.b16 %v2988, %v2970
  %v4663 = vpack.c.b16 %v2989, %v2971
  %v4664 = vpack.c.b16 %v2990, %v2972
  %v4665 = vpack.c.b16 %v2991, %v2973
  %v4666 = vpack.c.b16 %v2992, %v2974
  %v4667 = vpack.c.b16 %v2993, %v2975
  %v4668 = vpack.c.b16 %v2994, %v2976
  %v4669 = vpack.c.b16 %v2995, %v2977
  %v4670 = vpack.c.b16 %v2996, %v2978
  %v4671 = vpack.c.b16 %v2997, %v2979
  %v4672 = vpack.c.b16 %v2998, %v2980
  %v4673 = vpack.c.b16 %v2999, %v2981
  %v4674 = vpack.c.b16 %v3000, %v2982
  %v4675 = vpack.c.b16 %v3019, %v3001
  %v4676 = vpack.c.b16 %v3020, %v3002
  %v4677 = vpack.c.b16 %v3021, %v3003
  %v4678 = vpack.c.b16 %v3022, %v3004
  %v4679 = vpack.c.b16 %v3023, %v3005
  %v4680 = vpack.c.b16 %v3024, %v3006
  %v4681 = vpack.c.b16 %v3025, %v3007
  %v4682 = vpack.c.b16 %v3026, %v3008
  %v4683 = vpack.c.b16 %v3027, %v3009
  %v4684 = vpack.c.b16 %v3028, %v3010
  %v4685 = vpack.c.b16 %v3029, %v3011
  %v4686 = vpack.c.b16 %v3030, %v3012
  %v4687 = vpack.c.b16 %v3031, %v3013
  %v4688 = vpack.c.b16 %v3032, %v3014
  %v4689 = vpack.c.b16 %v3033, %v3015
  %v4690 = vpack.c.b16 %v3034, %v3016
  %v4691 = vpack.c.b16 %v3035, %v3017
  %v4692 = vpack.c.b16 %v3036, %v3018
  %v4693 = vpack.c.b16 %v3055, %v3037
  %v4694 = vpack.c.b16 %v3056, %v3038
  %v4695 = vpack.c.b16 %v3057, %v3039
  %v4696 = vpack.c.b16 %v3058, %v3040
  %v4697 = vpack.c.b16 %v3059, %v3041
  %v4698 = vpack.c.b16 %v3060, %v3042
  %v4699 = vpack.c.b16 %v3061, %v3043
  %v4700 = vpack.c.b16 %v3062, %v3044
  %v4701 = vpack.c.b16 %v3063, %v3045
  %v4702 = vpack.c.b16 %v3064, %v3046
  %v4703 = vpack.c.b16 %v3065, %v3047
  %v4704 = vpack.c.b16 %v3066, %v3048
  %v4705 = vpack.c.b16 %v3067, %v3049
  %v4706 = vpack.c.b16 %v3068, %v3050
  %v4707 = vpack.c.b16 %v3069, %v3051
  %v4708 = vpack.c.b16 %v3070, %v3052
  %v4709 = vpack.c.b16 %v3071, %v3053
  %v4710 = vpack.c.b16 %v3072, %v3054
  %v4711 = vpack.c.b16 %v3091, %v3073
  %v4712 = vpack.c.b16 %v3092, %v3074
  %v4713 = vpack.c.b16 %v3093, %v3075
  %v4714 = vpack.c.b16 %v3094, %v3076
  %v4715 = vpack.c.b16 %v3095, %v3077
  %v4716 = vpack.c.b16 %v3096, %v3078
  %v4717 = vpack.c.b16 %v3097, %v3079
  %v4718 = vpack.c.b16 %v3098, %v3080
  %v4719 = vpack.c.b16 %v3099, %v3081
  %v4720 = vpack.c.b16 %v3100, %v3082
  %v4721 = vpack.c.b16 %v3101, %v3083
  %v4722 = vpack.c.b16 %v3102, %v3084
  %v4723 = vpack.c.b16 %v3103, %v3085
  %v4724 = vpack.c.b16 %v3104, %v3086
  %v4725 = vpack.c.b16 %v3105, %v3087
  %v4726 = vpack.c.b16 %v3106, %v3088
  %v4727 = vpack.c.b16 %v3107, %v3089
  %v4728 = vpack.c.b16 %v3108, %v3090
  %v4729 = vpack.c.b16 %v3127, %v3109
  %v4730 = vpack.c.b16 %v3128, %v3110
  %v4731 = vpack.c.b16 %v3129, %v3111
  %v4732 = vpack.c.b16 %v3130, %v3112
  %v4733 = vpack.c.b16 %v3131, %v3113
  %v4734 = vpack.c.b16 %v3132, %v3114
  %v4735 = vpack.c.b16 %v3133, %v3115
  %v4736 = vpack.c.b16 %v3134, %v3116
  %v4737 = vpack.c.b16 %v3135, %v3117
  %v4738 = vpack.c.b16 %v3136, %v3118
  %v4739 = vpack.c.b16 %v3137, %v3119
  %v4740 = vpack.c.b16 %v3138, %v3120
  %v4741 = vpack.c.b16 %v3139, %v3121
  %v4742 = vpack.c.b16 %v3140, %v3122
  %v4743 = vpack.c.b16 %v3141, %v3123
  %v4744 = vpack.c.b16 %v3142, %v3124
  %v4745 = vpack.c.b16 %v3143, %v3125
  %v4746 = vpack.c.b16 %v3144, %v3126
  %v4747 = vpack.c.b16 %v3163, %v3145
  %v4748 = vpack.c.b16 %v3164, %v3146
  %v4749 = vpack.c.b16 %v3165, %v3147
  %v4750 = vpack.c.b16 %v3166, %v3148
  %v4751 = vpack.c.b16 %v3167, %v3149
  %v4752 = vpack.c.b16 %v3168, %v3150
  %v4753 = vpack.c.b16 %v3169, %v3151
  %v4754 = vpack.c.b16 %v3170, %v3152
  %v4755 = vpack.c.b16 %v3171, %v3153
  %v4756 = vpack.c.b16 %v3172, %v3154
  %v4757 = vpack.c.b16 %v3173, %v3155
  %v4758 = vpack.c.b16 %v3174, %v3156
  %v4759 = vpack.c.b16 %v3175, %v3157
  %v4760 = vpack.c.b16 %v3176, %v3158
  %v4761 = vpack.c.b16 %v3177, %v3159
  %v4762 = vpack.c.b16 %v3178, %v3160
  %v4763 = vpack.c.b16 %v3179, %v3161
  %v4764 = vpack.c.b16 %v3180, %v3162
  %v4765 = vpack.c.b16 %v3199, %v3181
  %v4766 = vpack.c.b16 %v3200, %v3182
  %v4767 = vpack.c.b16 %v3201, %v3183
  %v4768 = vpack.c.b16 %v3202, %v3184
  %v4769 = vpack.c.b16 %v3203, %v3185
  %v4770 = vpack.c.b16 %v3204, %v3186
  %v4771 = vpack.c.b16 %v3205, %v3187
  %v4772 = vpack.c.b16 %v3206, %v3188
  %v4773 = vpack.c.b16 %v3207, %v3189
  %v4774 = vpack.c.b16 %v3208, %v3190
  %v4775 = vpack.c.b16 %v3209, %v3191
  %v4776 = vpack.c.b16 %v3210, %v3192
  %v4777 = vpack.c.b16 %v3211, %v3193
  %v4778 = vpack.c.b16 %v3212, %v3194
  %v4779 = vpack.c.b16 %v3213, %v3195
  %v4780 = vpack.c.b16 %v3214, %v3196
  %v4781 = vpack.c.b16 %v3215, %v3197
  %v4782 = vpack.c.b16 %v3216, %v3198
  %v4783 = vpack.c.b16 %v3235, %v3217
  %v4784 = vpack.c.b16 %v3236, %v3218
  %v4785 = vpack.c.b16 %v3237, %v3219
  %v4786 = vpack.c.b16 %v3238, %v3220
  %v4787 = vpack.c.b16 %v3239, %v3221
  %v4788 = vpack.c.b16 %v3240, %v3222
  %v4789 = vpack.c.b16 %v3241, %v3223
  %v4790 = vpack.c.b16 %v3242, %v3224
  %v4791 = vpack.c.b16 %v3243, %v3225
  %v4792 = vpack.c.b16 %v3244, %v3226
  %v4793 = vpack.c.b16 %v3245, %v3227
  %v4794 = vpack.c.b16 %v3246, %v3228
  %v4795 = vpack.c.b16 %v3247, %v3229
  %v4796 = vpack.c.b16 %v3248, %v3230
  %v4797 = vpack.c.b16 %v3249, %v3231
  %v4798 = vpack.c.b16 %v3250, %v3232
  %v4799 = vpack.c.b16 %v3251, %v3233
  %v4800 = vpack.c.b16 %v3252, %v3234
  %v4801 = vpack.c.b16 %v3271, %v3253
  %v4802 = vpack.c.b16 %v3272, %v3254
  %v4803 = vpack.c.b16 %v3273, %v3255
  %v4804 = vpack.c.b16 %v3274, %v3256
  %v4805 = vpack.c.b16 %v3275, %v3257
  %v4806 = vpack.c.b16 %v3276, %v3258
  %v4807 = vpack.c.b16 %v3277, %v3259
  %v4808 = vpack.c.b16 %v3278, %v3260
  %v4809 = vpack.c.b16 %v3279, %v3261
  %v4810 = vpack.c.b16 %v3280, %v3262
  %v4811 = vpack.c.b16 %v3281, %v3263
  %v4812 = vpack.c.b16 %v3282, %v3264
  %v4813 = vpack.c.b16 %v3283, %v3265
  %v4814 = vpack.c.b16 %v3284, %v3266
  %v4815 = vpack.c.b16 %v3285, %v3267
  %v4816 = vpack.c.b16 %v3286, %v3268
  %v4817 = vpack.c.b16 %v3287, %v3269
  %v4818 = vpack.c.b16 %v3288, %v3270
  %v4819 = vpack.c.b16 %v3307, %v3289
  %v4820 = vpack.c.b16 %v3308, %v3290
  %v4821 = vpack.c.b16 %v3309, %v3291
  %v4822 = vpack.c.b16 %v3310, %v3292
  %v4823 = vpack.c.b16 %v3311, %v3293
  %v4824 = vpack.c.b16 %v3312, %v3294
  %v4825 = vpack.c.b16 %v3313, %v3295
  %v4826 = vpack.c.b16 %v3314, %v3296
  %v4827 = vpack.c.b16 %v3315, %v3297
  %v4828 = vpack.c.b16 %v3316, %v3298
  %v4829 = vpack.c.b16 %v3317, %v3299
  %v4830 = vpack.c.b16 %v3318, %v3300
  %v4831 = vpack.c.b16 %v3319, %v3301
  %v4832 = vpack.c.b16 %v3320, %v3302
  %v4833 = vpack.c.b16 %v3321, %v3303
  %v4834 = vpack.c.b16 %v3322, %v3304
  %v4835 = vpack.c.b16 %v3323, %v3305
  %v4836 = vpack.c.b16 %v3324, %v3306
  %v4837 = vpack.c.b16 %v3343, %v3325
  %v4838 = vpack.c.b16 %v3344, %v3326
  %v4839 = vpack.c.b16 %v3345, %v3327
  %v4840 = vpack.c.b16 %v3346, %v3328
  %v4841 = vpack.c.b16 %v3347, %v3329
  %v4842 = vpack.c.b16 %v3348, %v3330
  %v4843 = vpack.c.b16 %v3349, %v3331
  %v4844 = vpack.c.b16 %v3350, %v3332
  %v4845 = vpack.c.b16 %v3351, %v3333
  %v4846 = vpack.c.b16 %v3352, %v3334
  %v4847 = vpack.c.b16 %v3353, %v3335
  %v4848 = vpack.c.b16 %v3354, %v3336
  %v4849 = vpack.c.b16 %v3355, %v3337
  %v4850 = vpack.c.b16 %v3356, %v3338
  %v4851 = vpack.c.b16 %v3357, %v3339
  %v4852 = vpack.c.b16 %v3358, %v3340
  %v4853 = vpack.c.b16 %v3359, %v3341
  %v4854 = vpack.c.b16 %v3360, %v3342
  %v4855 = vpack.c.b16 %v3379, %v3361
  %v4856 = vpack.c.b16 %v3380, %v3362
  %v4857 = vpack.c.b16 %v3381, %v3363
  %v4858 = vpack.c.b16 %v3382, %v3364
  %v4859 = vpack.c.b16 %v3383, %v3365
  %v4860 = vpack.c.b16 %v3384, %v3366
  %v4861 = vpack.c.b16 %v3385, %v3367
  %v4862 = vpack.c.b16 %v3386, %v3368
  %v4863 = vpack.c.b16 %v3387, %v3369
  %v4864 = vpack.c.b16 %v3388, %v3370
  %v4865 = vpack.c.b16 %v3389, %v3371
  %v4866 = vpack.c.b16 %v3390, %v3372
  %v4867 = vpack.c.b16 %v3391, %v3373
  %v4868 = vpack.c.b16 %v3392, %v3374
  %v4869 = vpack.c.b16 %v3393, %v3375
  %v4870 = vpack.c.b16 %v3394, %v3376
  %v4871 = vpack.c.b16 %v3395, %v3377
  %v4872 = vpack.c.b16 %v3396, %v3378
  %v4873 = vpack.c.b16 %v3415, %v3397
  %v4874 = vpack.c.b16 %v3416, %v3398
  %v4875 = vpack.c.b16 %v3417, %v3399
  %v4876 = vpack.c.b16 %v3418, %v3400
  %v4877 = vpack.c.b16 %v3419, %v3401
  %v4878 = vpack.c.b16 %v3420, %v3402
  %v4879 = vpack.c.b16 %v3421, %v3403
  %v4880 = vpack.c.b16 %v3422, %v3404
  %v4881 = vpack.c.b16 %v3423, %v3405
  %v4882 = vpack.c.b16 %v3424, %v3406
  %v4883 = vpack.c.b16 %v3425, %v3407
  %v4884 = vpack.c.b16 %v3426, %v3408
  %v4885 = vpack.c.b16 %v3427, %v3409
  %v4886 = vpack.c.b16 %v3428, %v3410
  %v4887 = vpack.c.b16 %v3429, %v3411
  %v4888 = vpack.c.b16 %v3430, %v3412
  %v4889 = vpack.c.b16 %v3431, %v3413
  %v4890 = vpack.c.b16 %v3432, %v3414
  %v4891 = vpack.c.b16 %v3451, %v3433
  %v4892 = vpack.c.b16 %v3452, %v3434
  %v4893 = vpack.c.b16 %v3453, %v3435
  %v4894 = vpack.c.b16 %v3454, %v3436
  %v4895 = vpack.c.b16 %v3455, %v3437
  %v4896 = vpack.c.b16 %v3456, %v3438
  %v4897 = vpack.c.b16 %v3457, %v3439
  %v4898 = vpack.c.b16 %v3458, %v3440
  %v4899 = vpack.c.b16 %v3459, %v3441
  %v4900 = vpack.c.b16 %v3460, %v3442
  %v4901 = vpack.c.b16 %v3461, %v3443
  %v4902 = vpack.c.b16 %v3462, %v3444
  %v4903 = vpack.c.b16 %v3463, %v3445
  %v4904 = vpack.c.b16 %v3464, %v3446
  %v4905 = vpack.c.b16 %v3465, %v3447
  %v4906 = vpack.c.b16 %v3466, %v3448
  %v4907 = vpack.c.b16 %v3467, %v3449
  %v4908 = vpack.c.b16 %v3468, %v3450
  %v4909 = vpack.c.b16 %v3487, %v3469
  %v4910 = vpack.c.b16 %v3488, %v3470
  %v4911 = vpack.c.b16 %v3489, %v3471
  %v4912 = vpack.c.b16 %v3490, %v3472
  %v4913 = vpack.c.b16 %v3491, %v3473
  %v4914 = vpack.c.b16 %v3492, %v3474
  %v4915 = vpack.c.b16 %v3493, %v3475
  %v4916 = vpack.c.b16 %v3494, %v3476
  %v4917 = vpack.c.b16 %v3495, %v3477
  %v4918 = vpack.c.b16 %v3496, %v3478
  %v4919 = vpack.c.b16 %v3497, %v3479
  %v4920 = vpack.c.b16 %v3498, %v3480
  %v4921 = vpack.c.b16 %v3499, %v3481
  %v4922 = vpack.c.b16 %v3500, %v3482
  %v4923 = vpack.c.b16 %v3501, %v3483
  %v4924 = vpack.c.b16 %v3502, %v3484
  %v4925 = vpack.c.b16 %v3503, %v3485
  %v4926 = vpack.c.b16 %v3504, %v3486
  %v4927 = vpack.c.b16 %v3523, %v3505
  %v4928 = vpack.c.b16 %v3524, %v3506
  %v4929 = vpack.c.b16 %v3525, %v3507
  %v4930 = vpack.c.b16 %v3526, %v3508
  %v4931 = vpack.c.b16 %v3527, %v3509
  %v4932 = vpack.c.b16 %v3528, %v3510
  %v4933 = vpack.c.b16 %v3529, %v3511
  %v4934 = vpack.c.b16 %v3530, %v3512
  %v4935 = vpack.c.b16 %v3531, %v3513
  %v4936 = vpack.c.b16 %v3532, %v3514
  %v4937 = vpack.c.b16 %v3533, %v3515
  %v4938 = vpack.c.b16 %v3534, %v3516
  %v4939 = vpack.c.b16 %v3535, %v3517
  %v4940 = vpack.c.b16 %v3536, %v3518
  %v4941 = vpack.c.b16 %v3537, %v3519
  %v4942 = vpack.c.b16 %v3538, %v3520
  %v4943 = vpack.c.b16 %v3539, %v3521
  %v4944 = vpack.c.b16 %v3540, %v3522
  %v4945 = vpack.c.b16 %v3559, %v3541
  %v4946 = vpack.c.b16 %v3560, %v3542
  %v4947 = vpack.c.b16 %v3561, %v3543
  %v4948 = vpack.c.b16 %v3562, %v3544
  %v4949 = vpack.c.b16 %v3563, %v3545
  %v4950 = vpack.c.b16 %v3564, %v3546
  %v4951 = vpack.c.b16 %v3565, %v3547
  %v4952 = vpack.c.b16 %v3566, %v3548
  %v4953 = vpack.c.b16 %v3567, %v3549
  %v4954 = vpack.c.b16 %v3568, %v3550
  %v4955 = vpack.c.b16 %v3569, %v3551
  %v4956 = vpack.c.b16 %v3570, %v3552
  %v4957 = vpack.c.b16 %v3571, %v3553
  %v4958 = vpack.c.b16 %v3572, %v3554
  %v4959 = vpack.c.b16 %v3573, %v3555
  %v4960 = vpack.c.b16 %v3574, %v3556
  %v4961 = vpack.c.b16 %v3575, %v3557
  %v4962 = vpack.c.b16 %v3576, %v3558
  %v4963 = vpack.c.b16 %v3595, %v3577
  %v4964 = vpack.c.b16 %v3596, %v3578
  %v4965 = vpack.c.b16 %v3597, %v3579
  %v4966 = vpack.c.b16 %v3598, %v3580
  %v4967 = vpack.c.b16 %v3599, %v3581
  %v4968 = vpack.c.b16 %v3600, %v3582
  %v4969 = vpack.c.b16 %v3601, %v3583
  %v4970 = vpack.c.b16 %v3602, %v3584
  %v4971 = vpack.c.b16 %v3603, %v3585
  %v4972 = vpack.c.b16 %v3604, %v3586
  %v4973 = vpack.c.b16 %v3605, %v3587
  %v4974 = vpack.c.b16 %v3606, %v3588
  %v4975 = vpack.c.b16 %v3607, %v3589
  %v4976 = vpack.c.b16 %v3608, %v3590
  %v4977 = vpack.c.b16 %v3609, %v3591
  %v4978 = vpack.c.b16 %v3610, %v3592
  %v4979 = vpack.c.b16 %v3611, %v3593
  %v4980 = vpack.c.b16 %v3612, %v3594
  %v4981 = vpack.c.b16 %v3631, %v3613
  %v4982 = vpack.c.b16 %v3632, %v3614
  %v4983 = vpack.c.b16 %v3633, %v3615
  %v4984 = vpack.c.b16 %v3634, %v3616
  %v4985 = vpack.c.b16 %v3635, %v3617
  %v4986 = vpack.c.b16 %v3636, %v3618
  %v4987 = vpack.c.b16 %v3637, %v3619
  %v4988 = vpack.c.b16 %v3638, %v3620
  %v4989 = vpack.c.b16 %v3639, %v3621
  %v4990 = vpack.c.b16 %v3640, %v3622
  %v4991 = vpack.c.b16 %v3641, %v3623
  %v4992 = vpack.c.b16 %v3642, %v3624
  %v4993 = vpack.c.b16 %v3643, %v3625
  %v4994 = vpack.c.b16 %v3644, %v3626
  %v4995 = vpack.c.b16 %v3645, %v3627
  %v4996 = vpack.c.b16 %v3646, %v3628
  %v4997 = vpack.c.b16 %v3647, %v3629
  %v4998 = vpack.c.b16 %v3648, %v3630
  %v4999 = vpack.c.b16 %v3667, %v3649
  %v5000 = vpack.c.b16 %v3668, %v3650
  %v5001 = vpack.c.b16 %v3669, %v3651
  %v5002 = vpack.c.b16 %v3670, %v3652
  %v5003 = vpack.c.b16 %v3671, %v3653
  %v5004 = vpack.c.b16 %v3672, %v3654
  %v5005 = vpack.c.b16 %v3673, %v3655
  %v5006 = vpack.c.b16 %v3674, %v3656
  %v5007 = vpack.c.b16 %v3675, %v3657
  %v5008 = vpack.c.b16 %v3676, %v3658
  %v5009 = vpack.c.b16 %v3677, %v3659
  %v5010 = vpack.c.b16 %v3678, %v3660
  %v5011 = vpack.c.b16 %v3679, %v3661
  %v5012 = vpack.c.b16 %v3680, %v3662
  %v5013 = vpack.c.b16 %v3681, %v3663
  %v5014 = vpack.c.b16 %v3682, %v3664
  %v5015 = vpack.c.b16 %v3683, %v3665
  %v5016 = vpack.c.b16 %v3684, %v3666
  %v5017 = vpack.c.b16 %v3703, %v3685
  %v5018 = vpack.c.b16 %v3704, %v3686
  %v5019 = vpack.c.b16 %v3705, %v3687
  %v5020 = vpack.c.b16 %v3706, %v3688
  %v5021 = vpack.c.b16 %v3707, %v3689
  %v5022 = vpack.c.b16 %v3708, %v3690
  %v5023 = vpack.c.b16 %v3709, %v3691
  %v5024 = vpack.c.b16 %v3710, %v3692
  %v5025 = vpack.c.b16 %v3711, %v3693
  %v5026 = vpack.c.b16 %v3712, %v3694
  %v5027 = vpack.c.b16 %v3713, %v3695
  %v5028 = vpack.c.b16 %v3714, %v3696
  %v5029 = vpack.c.b16 %v3715, %v3697
  %v5030 = vpack.c.b16 %v3716, %v3698
  %v5031 = vpack.c.b16 %v3717, %v3699
  %v5032 = vpack.c.b16 %v3718, %v3700
  %v5033 = vpack.c.b16 %v3719, %v3701
  %v5034 = vpack.c.b16 %v3720, %v3702
  %v5035 = vpack.c.b16 %v3739, %v3721
  %v5036 = vpack.c.b16 %v3740, %v3722
  %v5037 = vpack.c.b16 %v3741, %v3723
  %v5038 = vpack.c.b16 %v3742, %v3724
  %v5039 = vpack.c.b16 %v3743, %v3725
  %v5040 = vpack.c.b16 %v3744, %v3726
  %v5041 = vpack.c.b16 %v3745, %v3727
  %v5042 = vpack.c.b16 %v3746, %v3728
  %v5043 = vpack.c.b16 %v3747, %v3729
  %v5044 = vpack.c.b16 %v3748, %v3730
  %v5045 = vpack.c.b16 %v3749, %v3731
  %v5046 = vpack.c.b16 %v3750, %v3732
  %v5047 = vpack.c.b16 %v3751, %v3733
  %v5048 = vpack.c.b16 %v3752, %v3734
  %v5049 = vpack.c.b16 %v3753, %v3735
  %v5050 = vpack.c.b16 %v3754, %v3736
  %v5051 = vpack.c.b16 %v3755, %v3737
  %v5052 = vpack.c.b16 %v3756, %v3738
  %v5053 = vpack.c.b16 %v3775, %v3757
  %v5054 = vpack.c.b16 %v3776, %v3758
  %v5055 = vpack.c.b16 %v3777, %v3759
  %v5056 = vpack.c.b16 %v3778, %v3760
  %v5057 = vpack.c.b16 %v3779, %v3761
  %v5058 = vpack.c.b16 %v3780, %v3762
  %v5059 = vpack.c.b16 %v3781, %v3763
  %v5060 = vpack.c.b16 %v3782, %v3764
  %v5061 = vpack.c.b16 %v3783, %v3765
  %v5062 = vpack.c.b16 %v3784, %v3766
  %v5063 = vpack.c.b16 %v3785, %v3767
  %v5064 = vpack.c.b16 %v3786, %v3768
  %v5065 = vpack.c.b16 %v3787, %v3769
  %v5066 = vpack.c.b16 %v3788, %v3770
  %v5067 = vpack.c.b16 %v3789, %v3771
  %v5068 = vpack.c.b16 %v3790, %v3772
  %v5069 = vpack.c.b16 %v3791, %v3773
  %v5070 = vpack.c.b16 %v3792, %v3774
  %v5071 = vpack.c.b16 %v3811, %v3793
  %v5072 = vpack.c.b16 %v3812, %v3794
  %v5073 = vpack.c.b16 %v3813, %v3795
  %v5074 = vpack.c.b16 %v3814, %v3796
  %v5075 = vpack.c.b16 %v3815, %v3797
  %v5076 = vpack.c.b16 %v3816, %v3798
  %v5077 = vpack.c.b16 %v3817, %v3799
  %v5078 = vpack.c.b16 %v3818, %v3800
  %v5079 = vpack.c.b16 %v3819, %v3801
  %v5080 = vpack.c.b16 %v3820, %v3802
  %v5081 = vpack.c.b16 %v3821, %v3803
  %v5082 = vpack.c.b16 %v3822, %v3804
  %v5083 = vpack.c.b16 %v3823, %v3805
  %v5084 = vpack.c.b16 %v3824, %v3806
  %v5085 = vpack.c.b16 %v3825, %v3807
  %v5086 = vpack.c.b16 %v3826, %v3808
  %v5087 = vpack.c.b16 %v3827, %v3809
  %v5088 = vpack.c.b16 %v3828, %v3810
  %v5089 = vpack.c.b16 %v3847, %v3829
  %v5090 = vpack.c.b16 %v3848, %v3830
  %v5091 = vpack.c.b16 %v3849, %v3831
  %v5092 = vpack.c.b16 %v3850, %v3832
  %v5093 = vpack.c.b16 %v3851, %v3833
  %v5094 = vpack.c.b16 %v3852, %v3834
  %v5095 = vpack.c.b16 %v3853, %v3835
  %v5096 = vpack.c.b16 %v3854, %v3836
  %v5097 = vpack.c.b16 %v3855, %v3837
  %v5098 = vpack.c.b16 %v3856, %v3838
  %v5099 = vpack.c.b16 %v3857, %v3839
  %v5100 = vpack.c.b16 %v3858, %v3840
  %v5101 = vpack.c.b16 %v3859, %v3841
  %v5102 = vpack.c.b16 %v3860, %v3842
  %v5103 = vpack.c.b16 %v3861, %v3843
  %v5104 = vpack.c.b16 %v3862, %v3844
  %v5105 = vpack.c.b16 %v3863, %v3845
  %v5106 = vpack.c.b16 %v3864, %v3846
  %v5107 = vpack.c.b16 %v3883, %v3865
  %v5108 = vpack.c.b16 %v3884, %v3866
  %v5109 = vpack.c.b16 %v3885, %v3867
  %v5110 = vpack.c.b16 %v3886, %v3868
  %v5111 = vpack.c.b16 %v3887, %v3869
  %v5112 = vpack.c.b16 %v3888, %v3870
  %v5113 = vpack.c.b16 %v3889, %v3871
  %v5114 = vpack.c.b16 %v3890, %v3872
  %v5115 = vpack.c.b16 %v3891, %v3873
  %v5116 = vpack.c.b16 %v3892, %v3874
  %v5117 = vpack.c.b16 %v3893, %v3875
  %v5118 = vpack.c.b16 %v3894, %v3876
  %v5119 = vpack.c.b16 %v3895, %v3877
  %v5120 = vpack.c.b16 %v3896, %v3878
  %v5121 = vpack.c.b16 %v3897, %v3879
  %v5122 = vpack.c.b16 %v3898, %v3880
  %v5123 = vpack.c.b16 %v3899, %v3881
  %v5124 = vpack.c.b16 %v3900, %v3882
  %v5125 = vpack.c.b16 %v3919, %v3901
  %v5126 = vpack.c.b16 %v3920, %v3902
  %v5127 = vpack.c.b16 %v3921, %v3903
  %v5128 = vpack.c.b16 %v3922, %v3904
  %v5129 = vpack.c.b16 %v3923, %v3905
  %v5130 = vpack.c.b16 %v3924, %v3906
  %v5131 = vpack.c.b16 %v3925, %v3907
  %v5132 = vpack.c.b16 %v3926, %v3908
  %v5133 = vpack.c.b16 %v3927, %v3909
  %v5134 = vpack.c.b16 %v3928, %v3910
  %v5135 = vpack.c.b16 %v3929, %v3911
  %v5136 = vpack.c.b16 %v3930, %v3912
  %v5137 = vpack.c.b16 %v3931, %v3913
  %v5138 = vpack.c.b16 %v3932, %v3914
  %v5139 = vpack.c.b16 %v3933, %v3915
  %v5140 = vpack.c.b16 %v3934, %v3916
  %v5141 = vpack.c.b16 %v3935, %v3917
  %v5142 = vpack.c.b16 %v3936, %v3918
  %v5143 = vpack.c.b16 %v3955, %v3937
  %v5144 = vpack.c.b16 %v3956, %v3938
  %v5145 = vpack.c.b16 %v3957, %v3939
  %v5146 = vpack.c.b16 %v3958, %v3940
  %v5147 = vpack.c.b16 %v3959, %v3941
  %v5148 = vpack.c.b16 %v3960, %v3942
  %v5149 = vpack.c.b16 %v3961, %v3943
  %v5150 = vpack.c.b16 %v3962, %v3944
  %v5151 = vpack.c.b16 %v3963, %v3945
  %v5152 = vpack.c.b16 %v3964, %v3946
  %v5153 = vpack.c.b16 %v3965, %v3947
  %v5154 = vpack.c.b16 %v3966, %v3948
  %v5155 = vpack.c.b16 %v3967, %v3949
  %v5156 = vpack.c.b16 %v3968, %v3950
  %v5157 = vpack.c.b16 %v3969, %v3951
  %v5158 = vpack.c.b16 %v3970, %v3952
  %v5159 = vpack.c.b16 %v3971, %v3953
  %v5160 = vpack.c.b16 %v3972, %v3954
  %v5161 = vpack.c.b16 %v3991, %v3973
  %v5162 = vpack.c.b16 %v3992, %v3974
  %v5163 = vpack.c.b16 %v3993, %v3975
  %v5164 = vpack.c.b16 %v3994, %v3976
  %v5165 = vpack.c.b16 %v3995, %v3977
  %v5166 = vpack.c.b16 %v3996, %v3978
  %v5167 = vpack.c.b16 %v3997, %v3979
  %v5168 = vpack.c.b16 %v3998, %v3980
  %v5169 = vpack.c.b16 %v3999, %v3981
  %v5170 = vpack.c.b16 %v4000, %v3982
  %v5171 = vpack.c.b16 %v4001, %v3983
  %v5172 = vpack.c.b16 %v4002, %v3984
  %v5173 = vpack.c.b16 %v4003, %v3985
  %v5174 = vpack.c.b16 %v4004, %v3986
  %v5175 = vpack.c.b16 %v4005, %v3987
  %v5176 = vpack.c.b16 %v4006, %v3988
  %v5177 = vpack.c.b16 %v4007, %v3989
  %v5178 = vpack.c.b16 %v4008, %v3990
  %v5179 = vpack.c.b16 %v4027, %v4009
  %v5180 = vpack.c.b16 %v4028, %v4010
  %v5181 = vpack.c.b16 %v4029, %v4011
  %v5182 = vpack.c.b16 %v4030, %v4012
  %v5183 = vpack.c.b16 %v4031, %v4013
  %v5184 = vpack.c.b16 %v4032, %v4014
  %v5185 = vpack.c.b16 %v4033, %v4015
  %v5186 = vpack.c.b16 %v4034, %v4016
  %v5187 = vpack.c.b16 %v4035, %v4017
  %v5188 = vpack.c.b16 %v4036, %v4018
  %v5189 = vpack.c.b16 %v4037, %v4019
  %v5190 = vpack.c.b16 %v4038, %v4020
  %v5191 = vpack.c.b16 %v4039, %v4021
  %v5192 = vpack.c.b16 %v4040, %v4022
  %v5193 = vpack.c.b16 %v4041, %v4023
  %v5194 = vpack.c.b16 %v4042, %v4024
  %v5195 = vpack.c.b16 %v4043, %v4025
  %v5196 = vpack.c.b16 %v4044, %v4026
  %v5197 = vpack.c.b16 %v4063, %v4045
  %v5198 = vpack.c.b16 %v4064, %v4046
  %v5199 = vpack.c.b16 %v4065, %v4047
  %v5200 = vpack.c.b16 %v4066, %v4048
  %v5201 = vpack.c.b16 %v4067, %v4049
  %v5202 = vpack.c.b16 %v4068, %v4050
  %v5203 = vpack.c.b16 %v4069, %v4051
  %v5204 = vpack.c.b16 %v4070, %v4052
  %v5205 = vpack.c.b16 %v4071, %v4053
  %v5206 = vpack.c.b16 %v4072, %v4054
  %v5207 = vpack.c.b16 %v4073, %v4055
  %v5208 = vpack.c.b16 %v4074, %v4056
  %v5209 = vpack.c.b16 %v4075, %v4057
  %v5210 = vpack.c.b16 %v4076, %v4058
  %v5211 = vpack.c.b16 %v4077, %v4059
  %v5212 = vpack.c.b16 %v4078, %v4060
  %v5213 = vpack.c.b16 %v4079, %v4061
  %v5214 = vpack.c.b16 %v4080, %v4062
  %v5215 = vpack.c.b16 %v4099, %v4081
  %v5216 = vpack.c.b16 %v4100, %v4082
  %v5217 = vpack.c.b16 %v4101, %v4083
  %v5218 = vpack.c.b16 %v4102, %v4084
  %v5219 = vpack.c.b16 %v4103, %v4085
  %v5220 = vpack.c.b16 %v4104, %v4086
  %v5221 = vpack.c.b16 %v4105, %v4087
  %v5222 = vpack.c.b16 %v4106, %v4088
  %v5223 = vpack.c.b16 %v4107, %v4089
  %v5224 = vpack.c.b16 %v4108, %v4090
  %v5225 = vpack.c.b16 %v4109, %v4091
  %v5226 = vpack.c.b16 %v4110, %v4092
  %v5227 = vpack.c.b16 %v4111, %v4093
  %v5228 = vpack.c.b16 %v4112, %v4094
  %v5229 = vpack.c.b16 %v4113, %v4095
  %v5230 = vpack.c.b16 %v4114, %v4096
  %v5231 = vpack.c.b16 %v4115, %v4097
  %v5232 = vpack.c.b16 %v4116, %v4098
  %v5233 = vpack.c.b16 %v4135, %v4117
  %v5234 = vpack.c.b16 %v4136, %v4118
  %v5235 = vpack.c.b16 %v4137, %v4119
  %v5236 = vpack.c.b16 %v4138, %v4120
  %v5237 = vpack.c.b16 %v4139, %v4121
  %v5238 = vpack.c.b16 %v4140, %v4122
  %v5239 = vpack.c.b16 %v4141, %v4123
  %v5240 = vpack.c.b16 %v4142, %v4124
  %v5241 = vpack.c.b16 %v4143, %v4125
  %v5242 = vpack.c.b16 %v4144, %v4126
  %v5243 = vpack.c.b16 %v4145, %v4127
  %v5244 = vpack.c.b16 %v4146, %v4128
  %v5245 = vpack.c.b16 %v4147, %v4129
  %v5246 = vpack.c.b16 %v4148, %v4130
  %v5247 = vpack.c.b16 %v4149, %v4131
  %v5248 = vpack.c.b16 %v4150, %v4132
  %v5249 = vpack.c.b16 %v4151, %v4133
  %v5250 = vpack.c.b16 %v4152, %v4134
  %v5251 = vpack.c.b16 %v4171, %v4153
  %v5252 = vpack.c.b16 %v4172, %v4154
  %v5253 = vpack.c.b16 %v4173, %v4155
  %v5254 = vpack.c.b16 %v4174, %v4156
  %v5255 = vpack.c.b16 %v4175, %v4157
  %v5256 = vpack.c.b16 %v4176, %v4158
  %v5257 = vpack.c.b16 %v4177, %v4159
  %v5258 = vpack.c.b16 %v4178, %v4160
  %v5259 = vpack.c.b16 %v4179, %v4161
  %v5260 = vpack.c.b16 %v4180, %v4162
  %v5261 = vpack.c.b16 %v4181, %v4163
  %v5262 = vpack.c.b16 %v4182, %v4164
  %v5263 = vpack.c.b16 %v4183, %v4165
  %v5264 = vpack.c.b16 %v4184, %v4166
  %v5265 = vpack.c.b16 %v4185, %v4167
  %v5266 = vpack.c.b16 %v4186, %v4168
  %v5267 = vpack.c.b16 %v4187, %v4169
  %v5268 = vpack.c.b16 %v4188, %v4170
  %v5269 = vpack.c.b16 %v4207, %v4189
  %v5270 = vpack.c.b16 %v4208, %v4190
  %v5271 = vpack.c.b16 %v4209, %v4191
  %v5272 = vpack.c.b16 %v4210, %v4192
  %v5273 = vpack.c.b16 %v4211, %v4193
  %v5274 = vpack.c.b16 %v4212, %v4194
  %v5275 = vpack.c.b16 %v4213, %v4195
  %v5276 = vpack.c.b16 %v4214, %v4196
  %v5277 = vpack.c.b16 %v4215, %v4197
  %v5278 = vpack.c.b16 %v4216, %v4198
  %v5279 = vpack.c.b16 %v4217, %v4199
  %v5280 = vpack.c.b16 %v4218, %v4200
  %v5281 = vpack.c.b16 %v4219, %v4201
  %v5282 = vpack.c.b16 %v4220, %v4202
  %v5283 = vpack.c.b16 %v4221, %v4203
  %v5284 = vpack.c.b16 %v4222, %v4204
  %v5285 = vpack.c.b16 %v4223, %v4205
  %v5286 = vpack.c.b16 %v4224, %v4206
  %v5287 = vpack.c.b16 %v4243, %v4225
  %v5288 = vpack.c.b16 %v4244, %v4226
  %v5289 = vpack.c.b16 %v4245, %v4227
  %v5290 = vpack.c.b16 %v4246, %v4228
  %v5291 = vpack.c.b16 %v4247, %v4229
  %v5292 = vpack.c.b16 %v4248, %v4230
  %v5293 = vpack.c.b16 %v4249, %v4231
  %v5294 = vpack.c.b16 %v4250, %v4232
  %v5295 = vpack.c.b16 %v4251, %v4233
  %v5296 = vpack.c.b16 %v4252, %v4234
  %v5297 = vpack.c.b16 %v4253, %v4235
  %v5298 = vpack.c.b16 %v4254, %v4236
  %v5299 = vpack.c.b16 %v4255, %v4237
  %v5300 = vpack.c.b16 %v4256, %v4238
  %v5301 = vpack.c.b16 %v4257, %v4239
  %v5302 = vpack.c.b16 %v4258, %v4240
  %v5303 = vpack.c.b16 %v4259, %v4241
  %v5304 = vpack.c.b16 %v4260, %v4242
  %v5305 = vpack.c.b16 %v4279, %v4261
  %v5306 = vpack.c.b16 %v4280, %v4262
  %v5307 = vpack.c.b16 %v4281, %v4263
  %v5308 = vpack.c.b16 %v4282, %v4264
  %v5309 = vpack.c.b16 %v4283, %v4265
  %v5310 = vpack.c.b16 %v4284, %v4266
  %v5311 = vpack.c.b16 %v4285, %v4267
  %v5312 = vpack.c.b16 %v4286, %v4268
  %v5313 = vpack.c.b16 %v4287, %v4269
  %v5314 = vpack.c.b16 %v4288, %v4270
  %v5315 = vpack.c.b16 %v4289, %v4271
  %v5316 = vpack.c.b16 %v4290, %v4272
  %v5317 = vpack.c.b16 %v4291, %v4273
  %v5318 = vpack.c.b16 %v4292, %v4274
  %v5319 = vpack.c.b16 %v4293, %v4275
  %v5320 = vpack.c.b16 %v4294, %v4276
  %v5321 = vpack.c.b16 %v4295, %v4277
  %v5322 = vpack.c.b16 %v4296, %v4278
  %v5323 = vpack.c.b16 %v4315, %v4297
  %v5324 = vpack.c.b16 %v4316, %v4298
  %v5325 = vpack.c.b16 %v4317, %v4299
  %v5326 = vpack.c.b16 %v4318, %v4300
  %v5327 = vpack.c.b16 %v4319, %v4301
  %v5328 = vpack.c.b16 %v4320, %v4302
  %v5329 = vpack.c.b16 %v4321, %v4303
  %v5330 = vpack.c.b16 %v4322, %v4304
  %v5331 = vpack.c.b16 %v4323, %v4305
  %v5332 = vpack.c.b16 %v4324, %v4306
  %v5333 = vpack.c.b16 %v4325, %v4307
  %v5334 = vpack.c.b16 %v4326, %v4308
  %v5335 = vpack.c.b16 %v4327, %v4309
  %v5336 = vpack.c.b16 %v4328, %v4310
  %v5337 = vpack.c.b16 %v4329, %v4311
  %v5338 = vpack.c.b16 %v4330, %v4312
  %v5339 = vpack.c.b16 %v4331, %v4313
  %v5340 = vpack.c.b16 %v4332, %v4314
  %v5341 = vpack.c.b16 %v4351, %v4333
  %v5342 = vpack.c.b16 %v4352, %v4334
  %v5343 = vpack.c.b16 %v4353, %v4335
  %v5344 = vpack.c.b16 %v4354, %v4336
  %v5345 = vpack.c.b16 %v4355, %v4337
  %v5346 = vpack.c.b16 %v4356, %v4338
  %v5347 = vpack.c.b16 %v4357, %v4339
  %v5348 = vpack.c.b16 %v4358, %v4340
  %v5349 = vpack.c.b16 %v4359, %v4341
  %v5350 = vpack.c.b16 %v4360, %v4342
  %v5351 = vpack.c.b16 %v4361, %v4343
  %v5352 = vpack.c.b16 %v4362, %v4344
  %v5353 = vpack.c.b16 %v4363, %v4345
  %v5354 = vpack.c.b16 %v4364, %v4346
  %v5355 = vpack.c.b16 %v4365, %v4347
  %v5356 = vpack.c.b16 %v4366, %v4348
  %v5357 = vpack.c.b16 %v4367, %v4349
  %v5358 = vpack.c.b16 %v4368, %v4350
  %v5359 = vpack.c.b16 %v4387, %v4369
  %v5360 = vpack.c.b16 %v4388, %v4370
  %v5361 = vpack.c.b16 %v4389, %v4371
  %v5362 = vpack.c.b16 %v4390, %v4372
  %v5363 = vpack.c.b16 %v4391, %v4373
  %v5364 = vpack.c.b16 %v4392, %v4374
  %v5365 = vpack.c.b16 %v4393, %v4375
  %v5366 = vpack.c.b16 %v4394, %v4376
  %v5367 = vpack.c.b16 %v4395, %v4377
  %v5368 = vpack.c.b16 %v4396, %v4378
  %v5369 = vpack.c.b16 %v4397, %v4379
  %v5370 = vpack.c.b16 %v4398, %v4380
  %v5371 = vpack.c.b16 %v4399, %v4381
  %v5372 = vpack.c.b16 %v4400, %v4382
  %v5373 = vpack.c.b16 %v4401, %v4383
  %v5374 = vpack.c.b16 %v4402, %v4384
  %v5375 = vpack.c.b16 %v4403, %v4385
  %v5376 = vpack.c.b16 %v4404, %v4386
  %v5377 = vpack.c.b16 %v4423, %v4405
  %v5378 = vpack.c.b16 %v4424, %v4406
  %v5379 = vpack.c.b16 %v4425, %v4407
  %v5380 = vpack.c.b16 %v4426, %v4408
  %v5381 = vpack.c.b16 %v4427, %v4409
  %v5382 = vpack.c.b16 %v4428, %v4410
  %v5383 = vpack.c.b16 %v4429, %v4411
  %v5384 = vpack.c.b16 %v4430, %v4412
  %v5385 = vpack.c.b16 %v4431, %v4413
  %v5386 = vpack.c.b16 %v4432, %v4414
  %v5387 = vpack.c.b16 %v4433, %v4415
  %v5388 = vpack.c.b16 %v4434, %v4416
  %v5389 = vpack.c.b16 %v4435, %v4417
  %v5390 = vpack.c.b16 %v4436, %v4418
  %v5391 = vpack.c.b16 %v4437, %v4419
  %v5392 = vpack.c.b16 %v4438, %v4420
  %v5393 = vpack.c.b16 %v4439, %v4421
  %v5394 = vpack.c.b16 %v4440, %v4422
  %v5395 = vpack.c.b16 %v4459, %v4441
  %v5396 = vpack.c.b16 %v4460, %v4442
  %v5397 = vpack.c.b16 %v4461, %v4443
  %v5398 = vpack.c.b16 %v4462, %v4444
  %v5399 = vpack.c.b16 %v4463, %v4445
  %v5400 = vpack.c.b16 %v4464, %v4446
  %v5401 = vpack.c.b16 %v4465, %v4447
  %v5402 = vpack.c.b16 %v4466, %v4448
  %v5403 = vpack.c.b16 %v4467, %v4449
  %v5404 = vpack.c.b16 %v4468, %v4450
  %v5405 = vpack.c.b16 %v4469, %v4451
  %v5406 = vpack.c.b16 %v4470, %v4452
  %v5407 = vpack.c.b16 %v4471, %v4453
  %v5408 = vpack.c.b16 %v4472, %v4454
  %v5409 = vpack.c.b16 %v4473, %v4455
  %v5410 = vpack.c.b16 %v4474, %v4456
  %v5411 = vpack.c.b16 %v4475, %v4457
  %v5412 = vpack.c.b16 %v4476, %v4458
  %v5413 = vpack.c.b16 %v4495, %v4477
  %v5414 = vpack.c.b16 %v4496, %v4478
  %v5415 = vpack.c.b16 %v4497, %v4479
  %v5416 = vpack.c.b16 %v4498, %v4480
  %v5417 = vpack.c.b16 %v4499, %v4481
  %v5418 = vpack.c.b16 %v4500, %v4482
  %v5419 = vpack.c.b16 %v4501, %v4483
  %v5420 = vpack.c.b16 %v4502, %v4484
  %v5421 = vpack.c.b16 %v4503, %v4485
  %v5422 = vpack.c.b16 %v4504, %v4486
  %v5423 = vpack.c.b16 %v4505, %v4487
  %v5424 = vpack.c.b16 %v4506, %v4488
  %v5425 = vpack.c.b16 %v4507, %v4489
  %v5426 = vpack.c.b16 %v4508, %v4490
  %v5427 = vpack.c.b16 %v4509, %v4491
  %v5428 = vpack.c.b16 %v4510, %v4492
  %v5429 = vpack.c.b16 %v4511, %v4493
  %v5430 = vpack.c.b16 %v4512, %v4494
  %v5431 = vpack.c.b16 %v4531, %v4513
  %v5432 = vpack.c.b16 %v4532, %v4514
  %v5433 = vpack.c.b16 %v4533, %v4515
  %v5434 = vpack.c.b16 %v4534, %v4516
  %v5435 = vpack.c.b16 %v4535, %v4517
  %v5436 = vpack.c.b16 %v4536, %v4518
  %v5437 = vpack.c.b16 %v4537, %v4519
  %v5438 = vpack.c.b16 %v4538, %v4520
  %v5439 = vpack.c.b16 %v4539, %v4521
  %v5440 = vpack.c.b16 %v4540, %v4522
  %v5441 = vpack.c.b16 %v4541, %v4523
  %v5442 = vpack.c.b16 %v4542, %v4524
  %v5443 = vpack.c.b16 %v4543, %v4525
  %v5444 = vpack.c.b16 %v4544, %v4526
  %v5445 = vpack.c.b16 %v4545, %v4527
  %v5446 = vpack.c.b16 %v4546, %v4528
  %v5447 = vpack.c.b16 %v4547, %v4529
  %v5448 = vpack.c.b16 %v4548, %v4530
  %v5449 = vpack.c.b16 %v4567, %v4549
  %v5450 = vpack.c.b16 %v4568, %v4550
  %v5451 = vpack.c.b16 %v4569, %v4551
  %v5452 = vpack.c.b16 %v4570, %v4552
  %v5453 = vpack.c.b16 %v4571, %v4553
  %v5454 = vpack.c.b16 %v4572, %v4554
  %v5455 = vpack.c.b16 %v4573, %v4555
  %v5456 = vpack.c.b16 %v4574, %v4556
  %v5457 = vpack.c.b16 %v4575, %v4557
  %v5458 = vpack.c.b16 %v4576, %v4558
  %v5459 = vpack.c.b16 %v4577, %v4559
  %v5460 = vpack.c.b16 %v4578, %v4560
  %v5461 = vpack.c.b16 %v4579, %v4561
  %v5462 = vpack.c.b16 %v4580, %v4562
  %v5463 = vpack.c.b16 %v4581, %v4563
  %v5464 = vpack.c.b16 %v4582, %v4564
  %v5465 = vpack.c.b16 %v4583, %v4565
  %v5466 = vpack.c.b16 %v4584, %v4566
  %vm6349 = vcmask 130048
  %v6351 = vsel %vm6349, %v960, 0
  %6353 = vmatprep.subr.bf16.mxu0 %v4586
  %6354 = vmatpush1.bf16.msra.mxu0 %v4585
  %6355 = vmatprep.subr.bf16.mxu0 %v4604
  %6356 = vmatpush1.bf16.msra.mxu0 %v4603
  %6357 = vmatprep.subr.bf16.mxu0 %v4622
  %6358 = vmatpush1.bf16.msra.mxu0 %v4621
  %6359 = vmatprep.subr.bf16.mxu0 %v4640
  %6360 = vmatpush1.bf16.msra.mxu0 %v4639
  %6361 = vmatprep.subr.bf16.mxu0 %v4658
  %6362 = vmatpush1.bf16.msra.mxu0 %v4657
  %6363 = vmatprep.subr.bf16.mxu0 %v4676
  %6364 = vmatpush1.bf16.msra.mxu0 %v4675
  %6365 = vmatprep.subr.bf16.mxu0 %v4694
  %6366 = vmatpush1.bf16.msra.mxu0 %v4693
  %6367 = vmatprep.subr.bf16.mxu0 %v4712
  %6368 = vmatpush1.bf16.msra.mxu0 %v4711
  %6369 = vmatprep.subr.bf16.mxu0 %v4730
  %6370 = vmatpush1.bf16.msra.mxu0 %v4729
  %6371 = vmatprep.subr.bf16.mxu0 %v4748
  %6372 = vmatpush1.bf16.msra.mxu0 %v4747
  %6373 = vmatprep.subr.bf16.mxu0 %v4766
  %6374 = vmatpush1.bf16.msra.mxu0 %v4765
  %6375 = vmatprep.subr.bf16.mxu0 %v4784
  %6376 = vmatpush1.bf16.msra.mxu0 %v4783
  %6377 = vmatprep.subr.bf16.mxu0 %v4802
  %6378 = vmatpush1.bf16.msra.mxu0 %v4801
  %6379 = vmatprep.subr.bf16.mxu0 %v4820
  %6380 = vmatpush1.bf16.msra.mxu0 %v4819
  %6381 = vmatprep.subr.bf16.mxu0 %v4838
  %6382 = vmatpush1.bf16.msra.mxu0 %v4837
  %6383 = vmatprep.subr.bf16.mxu0 %v4856
  %6384 = vmatpush1.bf16.msra.mxu0 %v4855
  %6385 = vmatprep.mubr.bf16.mxu0 %v955
  %6386 = vmatmul.mubr.bf16.gmra.mrb[0].mxu0 %v954
  %v6387 = vpop.f32.mrb[0].mxu0
  %v6388 = vadd.f32 %v1852, %v6387
  %v6389 = vpop.f32.mrb[0].mxu0
  %v6390 = vadd.f32 %v1856, %v6389
  %v6391 = vpop.f32.mrb[0].mxu0
  %v6392 = vpop.f32.mrb[0].mxu0
  %6393 = vdwg.mxu0
  %6394 = vmatprep.subr.bf16.mxu0 %v4874
  %6395 = vmatpush1.bf16.msra.mxu0 %v4873
  %6396 = vmatprep.subr.bf16.mxu0 %v4892
  %6397 = vmatpush1.bf16.msra.mxu0 %v4891
  %6398 = vmatprep.subr.bf16.mxu0 %v4910
  %6399 = vmatpush1.bf16.msra.mxu0 %v4909
  %6400 = vmatprep.subr.bf16.mxu0 %v4928
  %6401 = vmatpush1.bf16.msra.mxu0 %v4927
  %6402 = vmatprep.subr.bf16.mxu0 %v4946
  %6403 = vmatpush1.bf16.msra.mxu0 %v4945
  %6404 = vmatprep.subr.bf16.mxu0 %v4964
  %6405 = vmatpush1.bf16.msra.mxu0 %v4963
  %6406 = vmatprep.subr.bf16.mxu0 %v4982
  %6407 = vmatpush1.bf16.msra.mxu0 %v4981
  %6408 = vmatprep.subr.bf16.mxu0 %v5000
  %6409 = vmatpush1.bf16.msra.mxu0 %v4999
  %6410 = vmatprep.subr.bf16.mxu0 %v5018
  %6411 = vmatpush1.bf16.msra.mxu0 %v5017
  %6412 = vmatprep.subr.bf16.mxu0 %v5036
  %6413 = vmatpush1.bf16.msra.mxu0 %v5035
  %6414 = vmatprep.subr.bf16.mxu0 %v5054
  %6415 = vmatpush1.bf16.msra.mxu0 %v5053
  %6416 = vmatprep.subr.bf16.mxu0 %v5072
  %6417 = vmatpush1.bf16.msra.mxu0 %v5071
  %6418 = vmatprep.subr.bf16.mxu0 %v5090
  %6419 = vmatpush1.bf16.msra.mxu0 %v5089
  %6420 = vmatprep.subr.bf16.mxu0 %v5108
  %6421 = vmatpush1.bf16.msra.mxu0 %v5107
  %6422 = vmatprep.subr.bf16.mxu0 %v5126
  %6423 = vmatpush1.bf16.msra.mxu0 %v5125
  %6424 = vmatprep.subr.bf16.mxu0 %v5144
  %6425 = vmatpush1.bf16.msra.mxu0 %v5143
  %6426 = vmatprep.mubr.bf16.mxu0 %v957
  %6427 = vmatmul.mubr.bf16.gmra.mrb[0].mxu0 %v956
  %v6428 = vpop.f32.mrb[0].mxu0
  %v6429 = vadd.f32 %v6388, %v6428
  %v6430 = vpop.f32.mrb[0].mxu0
  %v6431 = vadd.f32 %v6390, %v6430
  %v6432 = vpop.f32.mrb[0].mxu0
  %v6433 = vpop.f32.mrb[0].mxu0
  %6434 = vdwg.mxu0
  %6435 = vmatprep.subr.bf16.mxu0 %v5162
  %6436 = vmatpush1.bf16.msra.mxu0 %v5161
  %6437 = vmatprep.subr.bf16.mxu0 %v5180
  %6438 = vmatpush1.bf16.msra.mxu0 %v5179
  %6439 = vmatprep.subr.bf16.mxu0 %v5198
  %6440 = vmatpush1.bf16.msra.mxu0 %v5197
  %6441 = vmatprep.subr.bf16.mxu0 %v5216
  %6442 = vmatpush1.bf16.msra.mxu0 %v5215
  %6443 = vmatprep.subr.bf16.mxu0 %v5234
  %6444 = vmatpush1.bf16.msra.mxu0 %v5233
  %6445 = vmatprep.subr.bf16.mxu0 %v5252
  %6446 = vmatpush1.bf16.msra.mxu0 %v5251
  %6447 = vmatprep.subr.bf16.mxu0 %v5270
  %6448 = vmatpush1.bf16.msra.mxu0 %v5269
  %6449 = vmatprep.subr.bf16.mxu0 %v5288
  %6450 = vmatpush1.bf16.msra.mxu0 %v5287
  %6451 = vmatprep.subr.bf16.mxu0 %v5306
  %6452 = vmatpush1.bf16.msra.mxu0 %v5305
  %6453 = vmatprep.subr.bf16.mxu0 %v5324
  %6454 = vmatpush1.bf16.msra.mxu0 %v5323
  %6455 = vmatprep.subr.bf16.mxu0 %v5342
  %6456 = vmatpush1.bf16.msra.mxu0 %v5341
  %6457 = vmatprep.subr.bf16.mxu0 %v5360
  %6458 = vmatpush1.bf16.msra.mxu0 %v5359
  %6459 = vmatprep.subr.bf16.mxu0 %v5378
  %6460 = vmatpush1.bf16.msra.mxu0 %v5377
  %6461 = vmatprep.subr.bf16.mxu0 %v5396
  %6462 = vmatpush1.bf16.msra.mxu0 %v5395
  %6463 = vmatprep.subr.bf16.mxu0 %v5414
  %6464 = vmatpush1.bf16.msra.mxu0 %v5413
  %6465 = vmatprep.subr.bf16.mxu0 %v5432
  %6466 = vmatpush1.bf16.msra.mxu0 %v5431
  %6467 = vmatprep.mubr.bf16.mxu0 %v959
  %6468 = vmatmul.mubr.bf16.gmra.mrb[0].mxu0 %v958
  %v6469 = vpop.f32.mrb[0].mxu0
  %v6470 = vadd.f32 %v6429, %v6469
  %v6471 = vpop.f32.mrb[0].mxu0
  %v6472 = vadd.f32 %v6431, %v6471
  %v6473 = vpop.f32.mrb[0].mxu0
  %v6474 = vpop.f32.mrb[0].mxu0
  %6475 = vdwg.mxu0
  %6476 = vmatprep.subr.bf16.mxu0 %v5450
  %6477 = vmatpush1.bf16.msra.mxu0 %v5449
  %6478 = vmatprep.subr.bf16.mxu0 0
  %6479 = vmatpush1.bf16.msra.mxu0 0
  %6480 = vmatprep.subr.bf16.mxu0 0
  %6481 = vmatpush1.bf16.msra.mxu0 0
  %6482 = vmatprep.subr.bf16.mxu0 0
  %6483 = vmatpush1.bf16.msra.mxu0 0
  %6484 = vmatprep.subr.bf16.mxu0 0
  %6485 = vmatpush1.bf16.msra.mxu0 0
  %6486 = vmatprep.subr.bf16.mxu0 0
  %6487 = vmatpush1.bf16.msra.mxu0 0
  %6488 = vmatprep.subr.bf16.mxu0 0
  %6489 = vmatpush1.bf16.msra.mxu0 0
  %6490 = vmatprep.subr.bf16.mxu0 0
  %6491 = vmatpush1.bf16.msra.mxu0 0
  %6492 = vmatprep.subr.bf16.mxu0 0
  %6493 = vmatpush1.bf16.msra.mxu0 0
  %6494 = vmatprep.subr.bf16.mxu0 0
  %6495 = vmatpush1.bf16.msra.mxu0 0
  %6496 = vmatprep.subr.bf16.mxu0 0
  %6497 = vmatpush1.bf16.msra.mxu0 0
  %6498 = vmatprep.subr.bf16.mxu0 0
  %6499 = vmatpush1.bf16.msra.mxu0 0
  %6500 = vmatprep.subr.bf16.mxu0 0
  %6501 = vmatpush1.bf16.msra.mxu0 0
  %6502 = vmatprep.subr.bf16.mxu0 0
  %6503 = vmatpush1.bf16.msra.mxu0 0
  %6504 = vmatprep.subr.bf16.mxu0 0
  %6505 = vmatpush1.bf16.msra.mxu0 0
  %6506 = vmatprep.subr.bf16.mxu0 0
  %6507 = vmatpush1.bf16.msra.mxu0 0
  %6508 = vmatprep.mubr.bf16.mxu0 0
  %6509 = vmatmul.mubr.bf16.gmra.mrb[0].mxu0 %v6351
  %v6510 = vpop.f32.mrb[0].mxu0
  %v6511 = vadd.f32 %v6470, %v6510
  %v6512 = vpop.f32.mrb[0].mxu0
  %v6513 = vadd.f32 %v6472, %v6512
  %v6514 = vpop.f32.mrb[0].mxu0
  %v6515 = vpop.f32.mrb[0].mxu0
  %6516 = vdwg.mxu0
  %6517 = vmatprep.subr.bf16.mxu0 %v4588
  %6518 = vmatpush1.bf16.msra.mxu0 %v4587
  %6519 = vmatprep.subr.bf16.mxu0 %v4606
  %6520 = vmatpush1.bf16.msra.mxu0 %v4605
  %6521 = vmatprep.subr.bf16.mxu0 %v4624
  %6522 = vmatpush1.bf16.msra.mxu0 %v4623
  %6523 = vmatprep.subr.bf16.mxu0 %v4642
  %6524 = vmatpush1.bf16.msra.mxu0 %v4641
  %6525 = vmatprep.subr.bf16.mxu0 %v4660
  %6526 = vmatpush1.bf16.msra.mxu0 %v4659
  %6527 = vmatprep.subr.bf16.mxu0 %v4678
  %6528 = vmatpush1.bf16.msra.mxu0 %v4677
  %6529 = vmatprep.subr.bf16.mxu0 %v4696
  %6530 = vmatpush1.bf16.msra.mxu0 %v4695
  %6531 = vmatprep.subr.bf16.mxu0 %v4714
  %6532 = vmatpush1.bf16.msra.mxu0 %v4713
  %6533 = vmatprep.subr.bf16.mxu0 %v4732
  %6534 = vmatpush1.bf16.msra.mxu0 %v4731
  %6535 = vmatprep.subr.bf16.mxu0 %v4750
  %6536 = vmatpush1.bf16.msra.mxu0 %v4749
  %6537 = vmatprep.subr.bf16.mxu0 %v4768
  %6538 = vmatpush1.bf16.msra.mxu0 %v4767
  %6539 = vmatprep.subr.bf16.mxu0 %v4786
  %6540 = vmatpush1.bf16.msra.mxu0 %v4785
  %6541 = vmatprep.subr.bf16.mxu0 %v4804
  %6542 = vmatpush1.bf16.msra.mxu0 %v4803
  %6543 = vmatprep.subr.bf16.mxu0 %v4822
  %6544 = vmatpush1.bf16.msra.mxu0 %v4821
  %6545 = vmatprep.subr.bf16.mxu0 %v4840
  %6546 = vmatpush1.bf16.msra.mxu0 %v4839
  %6547 = vmatprep.subr.bf16.mxu0 %v4858
  %6548 = vmatpush1.bf16.msra.mxu0 %v4857
  %6549 = vmatprep.mubr.bf16.mxu0 %v955
  %6550 = vmatmul.mubr.bf16.gmra.mrb[0].mxu0 %v954
  %v6551 = vpop.f32.mrb[0].mxu0
  %v6552 = vadd.f32 %v1860, %v6551
  %v6553 = vpop.f32.mrb[0].mxu0
  %v6554 = vadd.f32 %v1864, %v6553
  %v6555 = vpop.f32.mrb[0].mxu0
  %v6556 = vpop.f32.mrb[0].mxu0
  %6557 = vdwg.mxu0
  %6558 = vmatprep.subr.bf16.mxu0 %v4876
  %6559 = vmatpush1.bf16.msra.mxu0 %v4875
  %6560 = vmatprep.subr.bf16.mxu0 %v4894
  %6561 = vmatpush1.bf16.msra.mxu0 %v4893
  %6562 = vmatprep.subr.bf16.mxu0 %v4912
  %6563 = vmatpush1.bf16.msra.mxu0 %v4911
  %6564 = vmatprep.subr.bf16.mxu0 %v4930
  %6565 = vmatpush1.bf16.msra.mxu0 %v4929
  %6566 = vmatprep.subr.bf16.mxu0 %v4948
  %6567 = vmatpush1.bf16.msra.mxu0 %v4947
  %6568 = vmatprep.subr.bf16.mxu0 %v4966
  %6569 = vmatpush1.bf16.msra.mxu0 %v4965
  %6570 = vmatprep.subr.bf16.mxu0 %v4984
  %6571 = vmatpush1.bf16.msra.mxu0 %v4983
  %6572 = vmatprep.subr.bf16.mxu0 %v5002
  %6573 = vmatpush1.bf16.msra.mxu0 %v5001
  %6574 = vmatprep.subr.bf16.mxu0 %v5020
  %6575 = vmatpush1.bf16.msra.mxu0 %v5019
  %6576 = vmatprep.subr.bf16.mxu0 %v5038
  %6577 = vmatpush1.bf16.msra.mxu0 %v5037
  %6578 = vmatprep.subr.bf16.mxu0 %v5056
  %6579 = vmatpush1.bf16.msra.mxu0 %v5055
  %6580 = vmatprep.subr.bf16.mxu0 %v5074
  %6581 = vmatpush1.bf16.msra.mxu0 %v5073
  %6582 = vmatprep.subr.bf16.mxu0 %v5092
  %6583 = vmatpush1.bf16.msra.mxu0 %v5091
  %6584 = vmatprep.subr.bf16.mxu0 %v5110
  %6585 = vmatpush1.bf16.msra.mxu0 %v5109
  %6586 = vmatprep.subr.bf16.mxu0 %v5128
  %6587 = vmatpush1.bf16.msra.mxu0 %v5127
  %6588 = vmatprep.subr.bf16.mxu0 %v5146
  %6589 = vmatpush1.bf16.msra.mxu0 %v5145
  %6590 = vmatprep.mubr.bf16.mxu0 %v957
  %6591 = vmatmul.mubr.bf16.gmra.mrb[0].mxu0 %v956
  %v6592 = vpop.f32.mrb[0].mxu0
  %v6593 = vadd.f32 %v6552, %v6592
  %v6594 = vpop.f32.mrb[0].mxu0
  %v6595 = vadd.f32 %v6554, %v6594
  %v6596 = vpop.f32.mrb[0].mxu0
  %v6597 = vpop.f32.mrb[0].mxu0
  %6598 = vdwg.mxu0
  %6599 = vmatprep.subr.bf16.mxu0 %v5164
  %6600 = vmatpush1.bf16.msra.mxu0 %v5163
  %6601 = vmatprep.subr.bf16.mxu0 %v5182
  %6602 = vmatpush1.bf16.msra.mxu0 %v5181
  %6603 = vmatprep.subr.bf16.mxu0 %v5200
  %6604 = vmatpush1.bf16.msra.mxu0 %v5199
  %6605 = vmatprep.subr.bf16.mxu0 %v5218
  %6606 = vmatpush1.bf16.msra.mxu0 %v5217
  %6607 = vmatprep.subr.bf16.mxu0 %v5236
  %6608 = vmatpush1.bf16.msra.mxu0 %v5235
  %6609 = vmatprep.subr.bf16.mxu0 %v5254
  %6610 = vmatpush1.bf16.msra.mxu0 %v5253
  %6611 = vmatprep.subr.bf16.mxu0 %v5272
  %6612 = vmatpush1.bf16.msra.mxu0 %v5271
  %6613 = vmatprep.subr.bf16.mxu0 %v5290
  %6614 = vmatpush1.bf16.msra.mxu0 %v5289
  %6615 = vmatprep.subr.bf16.mxu0 %v5308
  %6616 = vmatpush1.bf16.msra.mxu0 %v5307
  %6617 = vmatprep.subr.bf16.mxu0 %v5326
  %6618 = vmatpush1.bf16.msra.mxu0 %v5325
  %6619 = vmatprep.subr.bf16.mxu0 %v5344
  %6620 = vmatpush1.bf16.msra.mxu0 %v5343
  %6621 = vmatprep.subr.bf16.mxu0 %v5362
  %6622 = vmatpush1.bf16.msra.mxu0 %v5361
  %6623 = vmatprep.subr.bf16.mxu0 %v5380
  %6624 = vmatpush1.bf16.msra.mxu0 %v5379
  %6625 = vmatprep.subr.bf16.mxu0 %v5398
  %6626 = vmatpush1.bf16.msra.mxu0 %v5397
  %6627 = vmatprep.subr.bf16.mxu0 %v5416
  %6628 = vmatpush1.bf16.msra.mxu0 %v5415
  %6629 = vmatprep.subr.bf16.mxu0 %v5434
  %6630 = vmatpush1.bf16.msra.mxu0 %v5433
  %6631 = vmatprep.mubr.bf16.mxu0 %v959
  %6632 = vmatmul.mubr.bf16.gmra.mrb[0].mxu0 %v958
  %v6633 = vpop.f32.mrb[0].mxu0
  %v6634 = vadd.f32 %v6593, %v6633
  %v6635 = vpop.f32.mrb[0].mxu0
  %v6636 = vadd.f32 %v6595, %v6635
  %v6637 = vpop.f32.mrb[0].mxu0
  %v6638 = vpop.f32.mrb[0].mxu0
  %6639 = vdwg.mxu0
  %6640 = vmatprep.subr.bf16.mxu0 %v5452
  %6641 = vmatpush1.bf16.msra.mxu0 %v5451
  %6642 = vmatprep.subr.bf16.mxu0 0
  %6643 = vmatpush1.bf16.msra.mxu0 0
  %6644 = vmatprep.subr.bf16.mxu0 0
  %6645 = vmatpush1.bf16.msra.mxu0 0
  %6646 = vmatprep.subr.bf16.mxu0 0
  %6647 = vmatpush1.bf16.msra.mxu0 0
  %6648 = vmatprep.subr.bf16.mxu0 0
  %6649 = vmatpush1.bf16.msra.mxu0 0
  %6650 = vmatprep.subr.bf16.mxu0 0
  %6651 = vmatpush1.bf16.msra.mxu0 0
  %6652 = vmatprep.subr.bf16.mxu0 0
  %6653 = vmatpush1.bf16.msra.mxu0 0
  %6654 = vmatprep.subr.bf16.mxu0 0
  %6655 = vmatpush1.bf16.msra.mxu0 0
  %6656 = vmatprep.subr.bf16.mxu0 0
  %6657 = vmatpush1.bf16.msra.mxu0 0
  %6658 = vmatprep.subr.bf16.mxu0 0
  %6659 = vmatpush1.bf16.msra.mxu0 0
  %6660 = vmatprep.subr.bf16.mxu0 0
  %6661 = vmatpush1.bf16.msra.mxu0 0
  %6662 = vmatprep.subr.bf16.mxu0 0
  %6663 = vmatpush1.bf16.msra.mxu0 0
  %6664 = vmatprep.subr.bf16.mxu0 0
  %6665 = vmatpush1.bf16.msra.mxu0 0
  %6666 = vmatprep.subr.bf16.mxu0 0
  %6667 = vmatpush1.bf16.msra.mxu0 0
  %6668 = vmatprep.subr.bf16.mxu0 0
  %6669 = vmatpush1.bf16.msra.mxu0 0
  %6670 = vmatprep.subr.bf16.mxu0 0
  %6671 = vmatpush1.bf16.msra.mxu0 0
  %6672 = vmatprep.mubr.bf16.mxu0 0
  %6673 = vmatmul.mubr.bf16.gmra.mrb[0].mxu0 %v6351
  %v6674 = vpop.f32.mrb[0].mxu0
  %v6675 = vadd.f32 %v6634, %v6674
  %v6676 = vpop.f32.mrb[0].mxu0
  %v6677 = vadd.f32 %v6636, %v6676
  %v6678 = vpop.f32.mrb[0].mxu0
  %v6679 = vpop.f32.mrb[0].mxu0
  %6680 = vdwg.mxu0
  %6681 = vmatprep.subr.bf16.mxu0 %v4590
  %6682 = vmatpush1.bf16.msra.mxu0 %v4589
  %6683 = vmatprep.subr.bf16.mxu0 %v4608
  %6684 = vmatpush1.bf16.msra.mxu0 %v4607
  %6685 = vmatprep.subr.bf16.mxu0 %v4626
  %6686 = vmatpush1.bf16.msra.mxu0 %v4625
  %6687 = vmatprep.subr.bf16.mxu0 %v4644
  %6688 = vmatpush1.bf16.msra.mxu0 %v4643
  %6689 = vmatprep.subr.bf16.mxu0 %v4662
  %6690 = vmatpush1.bf16.msra.mxu0 %v4661
  %6691 = vmatprep.subr.bf16.mxu0 %v4680
  %6692 = vmatpush1.bf16.msra.mxu0 %v4679
  %6693 = vmatprep.subr.bf16.mxu0 %v4698
  %6694 = vmatpush1.bf16.msra.mxu0 %v4697
  %6695 = vmatprep.subr.bf16.mxu0 %v4716
  %6696 = vmatpush1.bf16.msra.mxu0 %v4715
  %6697 = vmatprep.subr.bf16.mxu0 %v4734
  %6698 = vmatpush1.bf16.msra.mxu0 %v4733
  %6699 = vmatprep.subr.bf16.mxu0 %v4752
  %6700 = vmatpush1.bf16.msra.mxu0 %v4751
  %6701 = vmatprep.subr.bf16.mxu0 %v4770
  %6702 = vmatpush1.bf16.msra.mxu0 %v4769
  %6703 = vmatprep.subr.bf16.mxu0 %v4788
  %6704 = vmatpush1.bf16.msra.mxu0 %v4787
  %6705 = vmatprep.subr.bf16.mxu0 %v4806
  %6706 = vmatpush1.bf16.msra.mxu0 %v4805
  %6707 = vmatprep.subr.bf16.mxu0 %v4824
  %6708 = vmatpush1.bf16.msra.mxu0 %v4823
  %6709 = vmatprep.subr.bf16.mxu0 %v4842
  %6710 = vmatpush1.bf16.msra.mxu0 %v4841
  %6711 = vmatprep.subr.bf16.mxu0 %v4860
  %6712 = vmatpush1.bf16.msra.mxu0 %v4859
  %6713 = vmatprep.mubr.bf16.mxu0 %v955
  %6714 = vmatmul.mubr.bf16.gmra.mrb[0].mxu0 %v954
  %v6715 = vpop.f32.mrb[0].mxu0
  %v6716 = vadd.f32 %v1868, %v6715
  %v6717 = vpop.f32.mrb[0].mxu0
  %v6718 = vadd.f32 %v1872, %v6717
  %v6719 = vpop.f32.mrb[0].mxu0
  %v6720 = vpop.f32.mrb[0].mxu0
  %6721 = vdwg.mxu0
  %6722 = vmatprep.subr.bf16.mxu0 %v4878
  %6723 = vmatpush1.bf16.msra.mxu0 %v4877
  %6724 = vmatprep.subr.bf16.mxu0 %v4896
  %6725 = vmatpush1.bf16.msra.mxu0 %v4895
  %6726 = vmatprep.subr.bf16.mxu0 %v4914
  %6727 = vmatpush1.bf16.msra.mxu0 %v4913
  %6728 = vmatprep.subr.bf16.mxu0 %v4932
  %6729 = vmatpush1.bf16.msra.mxu0 %v4931
  %6730 = vmatprep.subr.bf16.mxu0 %v4950
  %6731 = vmatpush1.bf16.msra.mxu0 %v4949
  %6732 = vmatprep.subr.bf16.mxu0 %v4968
  %6733 = vmatpush1.bf16.msra.mxu0 %v4967
  %6734 = vmatprep.subr.bf16.mxu0 %v4986
  %6735 = vmatpush1.bf16.msra.mxu0 %v4985
  %6736 = vmatprep.subr.bf16.mxu0 %v5004
  %6737 = vmatpush1.bf16.msra.mxu0 %v5003
  %6738 = vmatprep.subr.bf16.mxu0 %v5022
  %6739 = vmatpush1.bf16.msra.mxu0 %v5021
  %6740 = vmatprep.subr.bf16.mxu0 %v5040
  %6741 = vmatpush1.bf16.msra.mxu0 %v5039
  %6742 = vmatprep.subr.bf16.mxu0 %v5058
  %6743 = vmatpush1.bf16.msra.mxu0 %v5057
  %6744 = vmatprep.subr.bf16.mxu0 %v5076
  %6745 = vmatpush1.bf16.msra.mxu0 %v5075
  %6746 = vmatprep.subr.bf16.mxu0 %v5094
  %6747 = vmatpush1.bf16.msra.mxu0 %v5093
  %6748 = vmatprep.subr.bf16.mxu0 %v5112
  %6749 = vmatpush1.bf16.msra.mxu0 %v5111
  %6750 = vmatprep.subr.bf16.mxu0 %v5130
  %6751 = vmatpush1.bf16.msra.mxu0 %v5129
  %6752 = vmatprep.subr.bf16.mxu0 %v5148
  %6753 = vmatpush1.bf16.msra.mxu0 %v5147
  %6754 = vmatprep.mubr.bf16.mxu0 %v957
  %6755 = vmatmul.mubr.bf16.gmra.mrb[0].mxu0 %v956
  %v6756 = vpop.f32.mrb[0].mxu0
  %v6757 = vadd.f32 %v6716, %v6756
  %v6758 = vpop.f32.mrb[0].mxu0
  %v6759 = vadd.f32 %v6718, %v6758
  %v6760 = vpop.f32.mrb[0].mxu0
  %v6761 = vpop.f32.mrb[0].mxu0
  %6762 = vdwg.mxu0
  %6763 = vmatprep.subr.bf16.mxu0 %v5166
  %6764 = vmatpush1.bf16.msra.mxu0 %v5165
  %6765 = vmatprep.subr.bf16.mxu0 %v5184
  %6766 = vmatpush1.bf16.msra.mxu0 %v5183
  %6767 = vmatprep.subr.bf16.mxu0 %v5202
  %6768 = vmatpush1.bf16.msra.mxu0 %v5201
  %6769 = vmatprep.subr.bf16.mxu0 %v5220
  %6770 = vmatpush1.bf16.msra.mxu0 %v5219
  %6771 = vmatprep.subr.bf16.mxu0 %v5238
  %6772 = vmatpush1.bf16.msra.mxu0 %v5237
  %6773 = vmatprep.subr.bf16.mxu0 %v5256
  %6774 = vmatpush1.bf16.msra.mxu0 %v5255
  %6775 = vmatprep.subr.bf16.mxu0 %v5274
  %6776 = vmatpush1.bf16.msra.mxu0 %v5273
  %6777 = vmatprep.subr.bf16.mxu0 %v5292
  %6778 = vmatpush1.bf16.msra.mxu0 %v5291
  %6779 = vmatprep.subr.bf16.mxu0 %v5310
  %6780 = vmatpush1.bf16.msra.mxu0 %v5309
  %6781 = vmatprep.subr.bf16.mxu0 %v5328
  %6782 = vmatpush1.bf16.msra.mxu0 %v5327
  %6783 = vmatprep.subr.bf16.mxu0 %v5346
  %6784 = vmatpush1.bf16.msra.mxu0 %v5345
  %6785 = vmatprep.subr.bf16.mxu0 %v5364
  %6786 = vmatpush1.bf16.msra.mxu0 %v5363
  %6787 = vmatprep.subr.bf16.mxu0 %v5382
  %6788 = vmatpush1.bf16.msra.mxu0 %v5381
  %6789 = vmatprep.subr.bf16.mxu0 %v5400
  %6790 = vmatpush1.bf16.msra.mxu0 %v5399
  %6791 = vmatprep.subr.bf16.mxu0 %v5418
  %6792 = vmatpush1.bf16.msra.mxu0 %v5417
  %6793 = vmatprep.subr.bf16.mxu0 %v5436
  %6794 = vmatpush1.bf16.msra.mxu0 %v5435
  %6795 = vmatprep.mubr.bf16.mxu0 %v959
  %6796 = vmatmul.mubr.bf16.gmra.mrb[0].mxu0 %v958
  %v6797 = vpop.f32.mrb[0].mxu0
  %v6798 = vadd.f32 %v6757, %v6797
  %v6799 = vpop.f32.mrb[0].mxu0
  %v6800 = vadd.f32 %v6759, %v6799
  %v6801 = vpop.f32.mrb[0].mxu0
  %v6802 = vpop.f32.mrb[0].mxu0
  %6803 = vdwg.mxu0
  %6804 = vmatprep.subr.bf16.mxu0 %v5454
  %6805 = vmatpush1.bf16.msra.mxu0 %v5453
  %6806 = vmatprep.subr.bf16.mxu0 0
  %6807 = vmatpush1.bf16.msra.mxu0 0
  %6808 = vmatprep.subr.bf16.mxu0 0
  %6809 = vmatpush1.bf16.msra.mxu0 0
  %6810 = vmatprep.subr.bf16.mxu0 0
  %6811 = vmatpush1.bf16.msra.mxu0 0
  %6812 = vmatprep.subr.bf16.mxu0 0
  %6813 = vmatpush1.bf16.msra.mxu0 0
  %6814 = vmatprep.subr.bf16.mxu0 0
  %6815 = vmatpush1.bf16.msra.mxu0 0
  %6816 = vmatprep.subr.bf16.mxu0 0
  %6817 = vmatpush1.bf16.msra.mxu0 0
  %6818 = vmatprep.subr.bf16.mxu0 0
  %6819 = vmatpush1.bf16.msra.mxu0 0
  %6820 = vmatprep.subr.bf16.mxu0 0
  %6821 = vmatpush1.bf16.msra.mxu0 0
  %6822 = vmatprep.subr.bf16.mxu0 0
  %6823 = vmatpush1.bf16.msra.mxu0 0
  %6824 = vmatprep.subr.bf16.mxu0 0
  %6825 = vmatpush1.bf16.msra.mxu0 0
  %6826 = vmatprep.subr.bf16.mxu0 0
  %6827 = vmatpush1.bf16.msra.mxu0 0
  %6828 = vmatprep.subr.bf16.mxu0 0
  %6829 = vmatpush1.bf16.msra.mxu0 0
  %6830 = vmatprep.subr.bf16.mxu0 0
  %6831 = vmatpush1.bf16.msra.mxu0 0
  %6832 = vmatprep.subr.bf16.mxu0 0
  %6833 = vmatpush1.bf16.msra.mxu0 0
  %6834 = vmatprep.subr.bf16.mxu0 0
  %6835 = vmatpush1.bf16.msra.mxu0 0
  %6836 = vmatprep.mubr.bf16.mxu0 0
  %6837 = vmatmul.mubr.bf16.gmra.mrb[0].mxu0 %v6351
  %v6838 = vpop.f32.mrb[0].mxu0
  %v6839 = vadd.f32 %v6798, %v6838
  %v6840 = vpop.f32.mrb[0].mxu0
  %v6841 = vadd.f32 %v6800, %v6840
  %v6842 = vpop.f32.mrb[0].mxu0
  %v6843 = vpop.f32.mrb[0].mxu0
  %6844 = vdwg.mxu0
  %6845 = vmatprep.subr.bf16.mxu0 %v4592
  %6846 = vmatpush1.bf16.msra.mxu0 %v4591
  %6847 = vmatprep.subr.bf16.mxu0 %v4610
  %6848 = vmatpush1.bf16.msra.mxu0 %v4609
  %6849 = vmatprep.subr.bf16.mxu0 %v4628
  %6850 = vmatpush1.bf16.msra.mxu0 %v4627
  %6851 = vmatprep.subr.bf16.mxu0 %v4646
  %6852 = vmatpush1.bf16.msra.mxu0 %v4645
  %6853 = vmatprep.subr.bf16.mxu0 %v4664
  %6854 = vmatpush1.bf16.msra.mxu0 %v4663
  %6855 = vmatprep.subr.bf16.mxu0 %v4682
  %6856 = vmatpush1.bf16.msra.mxu0 %v4681
  %6857 = vmatprep.subr.bf16.mxu0 %v4700
  %6858 = vmatpush1.bf16.msra.mxu0 %v4699
  %6859 = vmatprep.subr.bf16.mxu0 %v4718
  %6860 = vmatpush1.bf16.msra.mxu0 %v4717
  %6861 = vmatprep.subr.bf16.mxu0 %v4736
  %6862 = vmatpush1.bf16.msra.mxu0 %v4735
  %6863 = vmatprep.subr.bf16.mxu0 %v4754
  %6864 = vmatpush1.bf16.msra.mxu0 %v4753
  %6865 = vmatprep.subr.bf16.mxu0 %v4772
  %6866 = vmatpush1.bf16.msra.mxu0 %v4771
  %6867 = vmatprep.subr.bf16.mxu0 %v4790
  %6868 = vmatpush1.bf16.msra.mxu0 %v4789
  %6869 = vmatprep.subr.bf16.mxu0 %v4808
  %6870 = vmatpush1.bf16.msra.mxu0 %v4807
  %6871 = vmatprep.subr.bf16.mxu0 %v4826
  %6872 = vmatpush1.bf16.msra.mxu0 %v4825
  %6873 = vmatprep.subr.bf16.mxu0 %v4844
  %6874 = vmatpush1.bf16.msra.mxu0 %v4843
  %6875 = vmatprep.subr.bf16.mxu0 %v4862
  %6876 = vmatpush1.bf16.msra.mxu0 %v4861
  %6877 = vmatprep.mubr.bf16.mxu0 %v955
  %6878 = vmatmul.mubr.bf16.gmra.mrb[0].mxu0 %v954
  %v6879 = vpop.f32.mrb[0].mxu0
  %v6880 = vadd.f32 %v1876, %v6879
  %v6881 = vpop.f32.mrb[0].mxu0
  %v6882 = vadd.f32 %v1880, %v6881
  %v6883 = vpop.f32.mrb[0].mxu0
  %v6884 = vpop.f32.mrb[0].mxu0
  %6885 = vdwg.mxu0
  %6886 = vmatprep.subr.bf16.mxu0 %v4880
  %6887 = vmatpush1.bf16.msra.mxu0 %v4879
  %6888 = vmatprep.subr.bf16.mxu0 %v4898
  %6889 = vmatpush1.bf16.msra.mxu0 %v4897
  %6890 = vmatprep.subr.bf16.mxu0 %v4916
  %6891 = vmatpush1.bf16.msra.mxu0 %v4915
  %6892 = vmatprep.subr.bf16.mxu0 %v4934
  %6893 = vmatpush1.bf16.msra.mxu0 %v4933
  %6894 = vmatprep.subr.bf16.mxu0 %v4952
  %6895 = vmatpush1.bf16.msra.mxu0 %v4951
  %6896 = vmatprep.subr.bf16.mxu0 %v4970
  %6897 = vmatpush1.bf16.msra.mxu0 %v4969
  %6898 = vmatprep.subr.bf16.mxu0 %v4988
  %6899 = vmatpush1.bf16.msra.mxu0 %v4987
  %6900 = vmatprep.subr.bf16.mxu0 %v5006
  %6901 = vmatpush1.bf16.msra.mxu0 %v5005
  %6902 = vmatprep.subr.bf16.mxu0 %v5024
  %6903 = vmatpush1.bf16.msra.mxu0 %v5023
  %6904 = vmatprep.subr.bf16.mxu0 %v5042
  %6905 = vmatpush1.bf16.msra.mxu0 %v5041
  %6906 = vmatprep.subr.bf16.mxu0 %v5060
  %6907 = vmatpush1.bf16.msra.mxu0 %v5059
  %6908 = vmatprep.subr.bf16.mxu0 %v5078
  %6909 = vmatpush1.bf16.msra.mxu0 %v5077
  %6910 = vmatprep.subr.bf16.mxu0 %v5096
  %6911 = vmatpush1.bf16.msra.mxu0 %v5095
  %6912 = vmatprep.subr.bf16.mxu0 %v5114
  %6913 = vmatpush1.bf16.msra.mxu0 %v5113
  %6914 = vmatprep.subr.bf16.mxu0 %v5132
  %6915 = vmatpush1.bf16.msra.mxu0 %v5131
  %6916 = vmatprep.subr.bf16.mxu0 %v5150
  %6917 = vmatpush1.bf16.msra.mxu0 %v5149
  %6918 = vmatprep.mubr.bf16.mxu0 %v957
  %6919 = vmatmul.mubr.bf16.gmra.mrb[0].mxu0 %v956
  %v6920 = vpop.f32.mrb[0].mxu0
  %v6921 = vadd.f32 %v6880, %v6920
  %v6922 = vpop.f32.mrb[0].mxu0
  %v6923 = vadd.f32 %v6882, %v6922
  %v6924 = vpop.f32.mrb[0].mxu0
  %v6925 = vpop.f32.mrb[0].mxu0
  %6926 = vdwg.mxu0
  %6927 = vmatprep.subr.bf16.mxu0 %v5168
  %6928 = vmatpush1.bf16.msra.mxu0 %v5167
  %6929 = vmatprep.subr.bf16.mxu0 %v5186
  %6930 = vmatpush1.bf16.msra.mxu0 %v5185
  %6931 = vmatprep.subr.bf16.mxu0 %v5204
  %6932 = vmatpush1.bf16.msra.mxu0 %v5203
  %6933 = vmatprep.subr.bf16.mxu0 %v5222
  %6934 = vmatpush1.bf16.msra.mxu0 %v5221
  %6935 = vmatprep.subr.bf16.mxu0 %v5240
  %6936 = vmatpush1.bf16.msra.mxu0 %v5239
  %6937 = vmatprep.subr.bf16.mxu0 %v5258
  %6938 = vmatpush1.bf16.msra.mxu0 %v5257
  %6939 = vmatprep.subr.bf16.mxu0 %v5276
  %6940 = vmatpush1.bf16.msra.mxu0 %v5275
  %6941 = vmatprep.subr.bf16.mxu0 %v5294
  %6942 = vmatpush1.bf16.msra.mxu0 %v5293
  %6943 = vmatprep.subr.bf16.mxu0 %v5312
  %6944 = vmatpush1.bf16.msra.mxu0 %v5311
  %6945 = vmatprep.subr.bf16.mxu0 %v5330
  %6946 = vmatpush1.bf16.msra.mxu0 %v5329
  %6947 = vmatprep.subr.bf16.mxu0 %v5348
  %6948 = vmatpush1.bf16.msra.mxu0 %v5347
  %6949 = vmatprep.subr.bf16.mxu0 %v5366
  %6950 = vmatpush1.bf16.msra.mxu0 %v5365
  %6951 = vmatprep.subr.bf16.mxu0 %v5384
  %6952 = vmatpush1.bf16.msra.mxu0 %v5383
  %6953 = vmatprep.subr.bf16.mxu0 %v5402
  %6954 = vmatpush1.bf16.msra.mxu0 %v5401
  %6955 = vmatprep.subr.bf16.mxu0 %v5420
  %6956 = vmatpush1.bf16.msra.mxu0 %v5419
  %6957 = vmatprep.subr.bf16.mxu0 %v5438
  %6958 = vmatpush1.bf16.msra.mxu0 %v5437
  %6959 = vmatprep.mubr.bf16.mxu0 %v959
  %6960 = vmatmul.mubr.bf16.gmra.mrb[0].mxu0 %v958
  %v6961 = vpop.f32.mrb[0].mxu0
  %v6962 = vadd.f32 %v6921, %v6961
  %v6963 = vpop.f32.mrb[0].mxu0
  %v6964 = vadd.f32 %v6923, %v6963
  %v6965 = vpop.f32.mrb[0].mxu0
  %v6966 = vpop.f32.mrb[0].mxu0
  %6967 = vdwg.mxu0
  %6968 = vmatprep.subr.bf16.mxu0 %v5456
  %6969 = vmatpush1.bf16.msra.mxu0 %v5455
  %6970 = vmatprep.subr.bf16.mxu0 0
  %6971 = vmatpush1.bf16.msra.mxu0 0
  %6972 = vmatprep.subr.bf16.mxu0 0
  %6973 = vmatpush1.bf16.msra.mxu0 0
  %6974 = vmatprep.subr.bf16.mxu0 0
  %6975 = vmatpush1.bf16.msra.mxu0 0
  %6976 = vmatprep.subr.bf16.mxu0 0
  %6977 = vmatpush1.bf16.msra.mxu0 0
  %6978 = vmatprep.subr.bf16.mxu0 0
  %6979 = vmatpush1.bf16.msra.mxu0 0
  %6980 = vmatprep.subr.bf16.mxu0 0
  %6981 = vmatpush1.bf16.msra.mxu0 0
  %6982 = vmatprep.subr.bf16.mxu0 0
  %6983 = vmatpush1.bf16.msra.mxu0 0
  %6984 = vmatprep.subr.bf16.mxu0 0
  %6985 = vmatpush1.bf16.msra.mxu0 0
  %6986 = vmatprep.subr.bf16.mxu0 0
  %6987 = vmatpush1.bf16.msra.mxu0 0
  %6988 = vmatprep.subr.bf16.mxu0 0
  %6989 = vmatpush1.bf16.msra.mxu0 0
  %6990 = vmatprep.subr.bf16.mxu0 0
  %6991 = vmatpush1.bf16.msra.mxu0 0
  %6992 = vmatprep.subr.bf16.mxu0 0
  %6993 = vmatpush1.bf16.msra.mxu0 0
  %6994 = vmatprep.subr.bf16.mxu0 0
  %6995 = vmatpush1.bf16.msra.mxu0 0
  %6996 = vmatprep.subr.bf16.mxu0 0
  %6997 = vmatpush1.bf16.msra.mxu0 0
  %6998 = vmatprep.subr.bf16.mxu0 0
  %6999 = vmatpush1.bf16.msra.mxu0 0
  %7000 = vmatprep.mubr.bf16.mxu0 0
  %7001 = vmatmul.mubr.bf16.gmra.mrb[0].mxu0 %v6351
  %v7002 = vpop.f32.mrb[0].mxu0
  %v7003 = vadd.f32 %v6962, %v7002
  %v7004 = vpop.f32.mrb[0].mxu0
  %v7005 = vadd.f32 %v6964, %v7004
  %v7006 = vpop.f32.mrb[0].mxu0
  %v7007 = vpop.f32.mrb[0].mxu0
  %7008 = vdwg.mxu0
  %7009 = vmatprep.subr.bf16.mxu0 %v4594
  %7010 = vmatpush1.bf16.msra.mxu0 %v4593
  %7011 = vmatprep.subr.bf16.mxu0 %v4612
  %7012 = vmatpush1.bf16.msra.mxu0 %v4611
  %7013 = vmatprep.subr.bf16.mxu0 %v4630
  %7014 = vmatpush1.bf16.msra.mxu0 %v4629
  %7015 = vmatprep.subr.bf16.mxu0 %v4648
  %7016 = vmatpush1.bf16.msra.mxu0 %v4647
  %7017 = vmatprep.subr.bf16.mxu0 %v4666
  %7018 = vmatpush1.bf16.msra.mxu0 %v4665
  %7019 = vmatprep.subr.bf16.mxu0 %v4684
  %7020 = vmatpush1.bf16.msra.mxu0 %v4683
  %7021 = vmatprep.subr.bf16.mxu0 %v4702
  %7022 = vmatpush1.bf16.msra.mxu0 %v4701
  %7023 = vmatprep.subr.bf16.mxu0 %v4720
  %7024 = vmatpush1.bf16.msra.mxu0 %v4719
  %7025 = vmatprep.subr.bf16.mxu0 %v4738
  %7026 = vmatpush1.bf16.msra.mxu0 %v4737
  %7027 = vmatprep.subr.bf16.mxu0 %v4756
  %7028 = vmatpush1.bf16.msra.mxu0 %v4755
  %7029 = vmatprep.subr.bf16.mxu0 %v4774
  %7030 = vmatpush1.bf16.msra.mxu0 %v4773
  %7031 = vmatprep.subr.bf16.mxu0 %v4792
  %7032 = vmatpush1.bf16.msra.mxu0 %v4791
  %7033 = vmatprep.subr.bf16.mxu0 %v4810
  %7034 = vmatpush1.bf16.msra.mxu0 %v4809
  %7035 = vmatprep.subr.bf16.mxu0 %v4828
  %7036 = vmatpush1.bf16.msra.mxu0 %v4827
  %7037 = vmatprep.subr.bf16.mxu0 %v4846
  %7038 = vmatpush1.bf16.msra.mxu0 %v4845
  %7039 = vmatprep.subr.bf16.mxu0 %v4864
  %7040 = vmatpush1.bf16.msra.mxu0 %v4863
  %7041 = vmatprep.mubr.bf16.mxu0 %v955
  %7042 = vmatmul.mubr.bf16.gmra.mrb[0].mxu0 %v954
  %v7043 = vpop.f32.mrb[0].mxu0
  %v7044 = vadd.f32 %v1884, %v7043
  %v7045 = vpop.f32.mrb[0].mxu0
  %v7046 = vadd.f32 %v1888, %v7045
  %v7047 = vpop.f32.mrb[0].mxu0
  %v7048 = vpop.f32.mrb[0].mxu0
  %7049 = vdwg.mxu0
  %7050 = vmatprep.subr.bf16.mxu0 %v4882
  %7051 = vmatpush1.bf16.msra.mxu0 %v4881
  %7052 = vmatprep.subr.bf16.mxu0 %v4900
  %7053 = vmatpush1.bf16.msra.mxu0 %v4899
  %7054 = vmatprep.subr.bf16.mxu0 %v4918
  %7055 = vmatpush1.bf16.msra.mxu0 %v4917
  %7056 = vmatprep.subr.bf16.mxu0 %v4936
  %7057 = vmatpush1.bf16.msra.mxu0 %v4935
  %7058 = vmatprep.subr.bf16.mxu0 %v4954
  %7059 = vmatpush1.bf16.msra.mxu0 %v4953
  %7060 = vmatprep.subr.bf16.mxu0 %v4972
  %7061 = vmatpush1.bf16.msra.mxu0 %v4971
  %7062 = vmatprep.subr.bf16.mxu0 %v4990
  %7063 = vmatpush1.bf16.msra.mxu0 %v4989
  %7064 = vmatprep.subr.bf16.mxu0 %v5008
  %7065 = vmatpush1.bf16.msra.mxu0 %v5007
  %7066 = vmatprep.subr.bf16.mxu0 %v5026
  %7067 = vmatpush1.bf16.msra.mxu0 %v5025
  %7068 = vmatprep.subr.bf16.mxu0 %v5044
  %7069 = vmatpush1.bf16.msra.mxu0 %v5043
  %7070 = vmatprep.subr.bf16.mxu0 %v5062
  %7071 = vmatpush1.bf16.msra.mxu0 %v5061
  %7072 = vmatprep.subr.bf16.mxu0 %v5080
  %7073 = vmatpush1.bf16.msra.mxu0 %v5079
  %7074 = vmatprep.subr.bf16.mxu0 %v5098
  %7075 = vmatpush1.bf16.msra.mxu0 %v5097
  %7076 = vmatprep.subr.bf16.mxu0 %v5116
  %7077 = vmatpush1.bf16.msra.mxu0 %v5115
  %7078 = vmatprep.subr.bf16.mxu0 %v5134
  %7079 = vmatpush1.bf16.msra.mxu0 %v5133
  %7080 = vmatprep.subr.bf16.mxu0 %v5152
  %7081 = vmatpush1.bf16.msra.mxu0 %v5151
  %7082 = vmatprep.mubr.bf16.mxu0 %v957
  %7083 = vmatmul.mubr.bf16.gmra.mrb[0].mxu0 %v956
  %v7084 = vpop.f32.mrb[0].mxu0
  %v7085 = vadd.f32 %v7044, %v7084
  %v7086 = vpop.f32.mrb[0].mxu0
  %v7087 = vadd.f32 %v7046, %v7086
  %v7088 = vpop.f32.mrb[0].mxu0
  %v7089 = vpop.f32.mrb[0].mxu0
  %7090 = vdwg.mxu0
  %7091 = vmatprep.subr.bf16.mxu0 %v5170
  %7092 = vmatpush1.bf16.msra.mxu0 %v5169
  %7093 = vmatprep.subr.bf16.mxu0 %v5188
  %7094 = vmatpush1.bf16.msra.mxu0 %v5187
  %7095 = vmatprep.subr.bf16.mxu0 %v5206
  %7096 = vmatpush1.bf16.msra.mxu0 %v5205
  %7097 = vmatprep.subr.bf16.mxu0 %v5224
  %7098 = vmatpush1.bf16.msra.mxu0 %v5223
  %7099 = vmatprep.subr.bf16.mxu0 %v5242
  %7100 = vmatpush1.bf16.msra.mxu0 %v5241
  %7101 = vmatprep.subr.bf16.mxu0 %v5260
  %7102 = vmatpush1.bf16.msra.mxu0 %v5259
  %7103 = vmatprep.subr.bf16.mxu0 %v5278
  %7104 = vmatpush1.bf16.msra.mxu0 %v5277
  %7105 = vmatprep.subr.bf16.mxu0 %v5296
  %7106 = vmatpush1.bf16.msra.mxu0 %v5295
  %7107 = vmatprep.subr.bf16.mxu0 %v5314
  %7108 = vmatpush1.bf16.msra.mxu0 %v5313
  %7109 = vmatprep.subr.bf16.mxu0 %v5332
  %7110 = vmatpush1.bf16.msra.mxu0 %v5331
  %7111 = vmatprep.subr.bf16.mxu0 %v5350
  %7112 = vmatpush1.bf16.msra.mxu0 %v5349
  %7113 = vmatprep.subr.bf16.mxu0 %v5368
  %7114 = vmatpush1.bf16.msra.mxu0 %v5367
  %7115 = vmatprep.subr.bf16.mxu0 %v5386
  %7116 = vmatpush1.bf16.msra.mxu0 %v5385
  %7117 = vmatprep.subr.bf16.mxu0 %v5404
  %7118 = vmatpush1.bf16.msra.mxu0 %v5403
  %7119 = vmatprep.subr.bf16.mxu0 %v5422
  %7120 = vmatpush1.bf16.msra.mxu0 %v5421
  %7121 = vmatprep.subr.bf16.mxu0 %v5440
  %7122 = vmatpush1.bf16.msra.mxu0 %v5439
  %7123 = vmatprep.mubr.bf16.mxu0 %v959
  %7124 = vmatmul.mubr.bf16.gmra.mrb[0].mxu0 %v958
  %v7125 = vpop.f32.mrb[0].mxu0
  %v7126 = vadd.f32 %v7085, %v7125
  %v7127 = vpop.f32.mrb[0].mxu0
  %v7128 = vadd.f32 %v7087, %v7127
  %v7129 = vpop.f32.mrb[0].mxu0
  %v7130 = vpop.f32.mrb[0].mxu0
  %7131 = vdwg.mxu0
  %7132 = vmatprep.subr.bf16.mxu0 %v5458
  %7133 = vmatpush1.bf16.msra.mxu0 %v5457
  %7134 = vmatprep.subr.bf16.mxu0 0
  %7135 = vmatpush1.bf16.msra.mxu0 0
  %7136 = vmatprep.subr.bf16.mxu0 0
  %7137 = vmatpush1.bf16.msra.mxu0 0
  %7138 = vmatprep.subr.bf16.mxu0 0
  %7139 = vmatpush1.bf16.msra.mxu0 0
  %7140 = vmatprep.subr.bf16.mxu0 0
  %7141 = vmatpush1.bf16.msra.mxu0 0
  %7142 = vmatprep.subr.bf16.mxu0 0
  %7143 = vmatpush1.bf16.msra.mxu0 0
  %7144 = vmatprep.subr.bf16.mxu0 0
  %7145 = vmatpush1.bf16.msra.mxu0 0
  %7146 = vmatprep.subr.bf16.mxu0 0
  %7147 = vmatpush1.bf16.msra.mxu0 0
  %7148 = vmatprep.subr.bf16.mxu0 0
  %7149 = vmatpush1.bf16.msra.mxu0 0
  %7150 = vmatprep.subr.bf16.mxu0 0
  %7151 = vmatpush1.bf16.msra.mxu0 0
  %7152 = vmatprep.subr.bf16.mxu0 0
  %7153 = vmatpush1.bf16.msra.mxu0 0
  %7154 = vmatprep.subr.bf16.mxu0 0
  %7155 = vmatpush1.bf16.msra.mxu0 0
  %7156 = vmatprep.subr.bf16.mxu0 0
  %7157 = vmatpush1.bf16.msra.mxu0 0
  %7158 = vmatprep.subr.bf16.mxu0 0
  %7159 = vmatpush1.bf16.msra.mxu0 0
  %7160 = vmatprep.subr.bf16.mxu0 0
  %7161 = vmatpush1.bf16.msra.mxu0 0
  %7162 = vmatprep.subr.bf16.mxu0 0
  %7163 = vmatpush1.bf16.msra.mxu0 0
  %7164 = vmatprep.mubr.bf16.mxu0 0
  %7165 = vmatmul.mubr.bf16.gmra.mrb[0].mxu0 %v6351
  %v7166 = vpop.f32.mrb[0].mxu0
  %v7167 = vadd.f32 %v7126, %v7166
  %v7168 = vpop.f32.mrb[0].mxu0
  %v7169 = vadd.f32 %v7128, %v7168
  %v7170 = vpop.f32.mrb[0].mxu0
  %v7171 = vpop.f32.mrb[0].mxu0
  %7172 = vdwg.mxu0
  %7173 = vmatprep.subr.bf16.mxu0 %v4596
  %7174 = vmatpush1.bf16.msra.mxu0 %v4595
  %7175 = vmatprep.subr.bf16.mxu0 %v4614
  %7176 = vmatpush1.bf16.msra.mxu0 %v4613
  %7177 = vmatprep.subr.bf16.mxu0 %v4632
  %7178 = vmatpush1.bf16.msra.mxu0 %v4631
  %7179 = vmatprep.subr.bf16.mxu0 %v4650
  %7180 = vmatpush1.bf16.msra.mxu0 %v4649
  %7181 = vmatprep.subr.bf16.mxu0 %v4668
  %7182 = vmatpush1.bf16.msra.mxu0 %v4667
  %7183 = vmatprep.subr.bf16.mxu0 %v4686
  %7184 = vmatpush1.bf16.msra.mxu0 %v4685
  %7185 = vmatprep.subr.bf16.mxu0 %v4704
  %7186 = vmatpush1.bf16.msra.mxu0 %v4703
  %7187 = vmatprep.subr.bf16.mxu0 %v4722
  %7188 = vmatpush1.bf16.msra.mxu0 %v4721
  %7189 = vmatprep.subr.bf16.mxu0 %v4740
  %7190 = vmatpush1.bf16.msra.mxu0 %v4739
  %7191 = vmatprep.subr.bf16.mxu0 %v4758
  %7192 = vmatpush1.bf16.msra.mxu0 %v4757
  %7193 = vmatprep.subr.bf16.mxu0 %v4776
  %7194 = vmatpush1.bf16.msra.mxu0 %v4775
  %7195 = vmatprep.subr.bf16.mxu0 %v4794
  %7196 = vmatpush1.bf16.msra.mxu0 %v4793
  %7197 = vmatprep.subr.bf16.mxu0 %v4812
  %7198 = vmatpush1.bf16.msra.mxu0 %v4811
  %7199 = vmatprep.subr.bf16.mxu0 %v4830
  %7200 = vmatpush1.bf16.msra.mxu0 %v4829
  %7201 = vmatprep.subr.bf16.mxu0 %v4848
  %7202 = vmatpush1.bf16.msra.mxu0 %v4847
  %7203 = vmatprep.subr.bf16.mxu0 %v4866
  %7204 = vmatpush1.bf16.msra.mxu0 %v4865
  %7205 = vmatprep.mubr.bf16.mxu0 %v955
  %7206 = vmatmul.mubr.bf16.gmra.mrb[0].mxu0 %v954
  %v7207 = vpop.f32.mrb[0].mxu0
  %v7208 = vadd.f32 %v1892, %v7207
  %v7209 = vpop.f32.mrb[0].mxu0
  %v7210 = vadd.f32 %v1896, %v7209
  %v7211 = vpop.f32.mrb[0].mxu0
  %v7212 = vpop.f32.mrb[0].mxu0
  %7213 = vdwg.mxu0
  %7214 = vmatprep.subr.bf16.mxu0 %v4884
  %7215 = vmatpush1.bf16.msra.mxu0 %v4883
  %7216 = vmatprep.subr.bf16.mxu0 %v4902
  %7217 = vmatpush1.bf16.msra.mxu0 %v4901
  %7218 = vmatprep.subr.bf16.mxu0 %v4920
  %7219 = vmatpush1.bf16.msra.mxu0 %v4919
  %7220 = vmatprep.subr.bf16.mxu0 %v4938
  %7221 = vmatpush1.bf16.msra.mxu0 %v4937
  %7222 = vmatprep.subr.bf16.mxu0 %v4956
  %7223 = vmatpush1.bf16.msra.mxu0 %v4955
  %7224 = vmatprep.subr.bf16.mxu0 %v4974
  %7225 = vmatpush1.bf16.msra.mxu0 %v4973
  %7226 = vmatprep.subr.bf16.mxu0 %v4992
  %7227 = vmatpush1.bf16.msra.mxu0 %v4991
  %7228 = vmatprep.subr.bf16.mxu0 %v5010
  %7229 = vmatpush1.bf16.msra.mxu0 %v5009
  %7230 = vmatprep.subr.bf16.mxu0 %v5028
  %7231 = vmatpush1.bf16.msra.mxu0 %v5027
  %7232 = vmatprep.subr.bf16.mxu0 %v5046
  %7233 = vmatpush1.bf16.msra.mxu0 %v5045
  %7234 = vmatprep.subr.bf16.mxu0 %v5064
  %7235 = vmatpush1.bf16.msra.mxu0 %v5063
  %7236 = vmatprep.subr.bf16.mxu0 %v5082
  %7237 = vmatpush1.bf16.msra.mxu0 %v5081
  %7238 = vmatprep.subr.bf16.mxu0 %v5100
  %7239 = vmatpush1.bf16.msra.mxu0 %v5099
  %7240 = vmatprep.subr.bf16.mxu0 %v5118
  %7241 = vmatpush1.bf16.msra.mxu0 %v5117
  %7242 = vmatprep.subr.bf16.mxu0 %v5136
  %7243 = vmatpush1.bf16.msra.mxu0 %v5135
  %7244 = vmatprep.subr.bf16.mxu0 %v5154
  %7245 = vmatpush1.bf16.msra.mxu0 %v5153
  %7246 = vmatprep.mubr.bf16.mxu0 %v957
  %7247 = vmatmul.mubr.bf16.gmra.mrb[0].mxu0 %v956
  %v7248 = vpop.f32.mrb[0].mxu0
  %v7249 = vadd.f32 %v7208, %v7248
  %v7250 = vpop.f32.mrb[0].mxu0
  %v7251 = vadd.f32 %v7210, %v7250
  %v7252 = vpop.f32.mrb[0].mxu0
  %v7253 = vpop.f32.mrb[0].mxu0
  %7254 = vdwg.mxu0
  %7255 = vmatprep.subr.bf16.mxu0 %v5172
  %7256 = vmatpush1.bf16.msra.mxu0 %v5171
  %7257 = vmatprep.subr.bf16.mxu0 %v5190
  %7258 = vmatpush1.bf16.msra.mxu0 %v5189
  %7259 = vmatprep.subr.bf16.mxu0 %v5208
  %7260 = vmatpush1.bf16.msra.mxu0 %v5207
  %7261 = vmatprep.subr.bf16.mxu0 %v5226
  %7262 = vmatpush1.bf16.msra.mxu0 %v5225
  %7263 = vmatprep.subr.bf16.mxu0 %v5244
  %7264 = vmatpush1.bf16.msra.mxu0 %v5243
  %7265 = vmatprep.subr.bf16.mxu0 %v5262
  %7266 = vmatpush1.bf16.msra.mxu0 %v5261
  %7267 = vmatprep.subr.bf16.mxu0 %v5280
  %7268 = vmatpush1.bf16.msra.mxu0 %v5279
  %7269 = vmatprep.subr.bf16.mxu0 %v5298
  %7270 = vmatpush1.bf16.msra.mxu0 %v5297
  %7271 = vmatprep.subr.bf16.mxu0 %v5316
  %7272 = vmatpush1.bf16.msra.mxu0 %v5315
  %7273 = vmatprep.subr.bf16.mxu0 %v5334
  %7274 = vmatpush1.bf16.msra.mxu0 %v5333
  %7275 = vmatprep.subr.bf16.mxu0 %v5352
  %7276 = vmatpush1.bf16.msra.mxu0 %v5351
  %7277 = vmatprep.subr.bf16.mxu0 %v5370
  %7278 = vmatpush1.bf16.msra.mxu0 %v5369
  %7279 = vmatprep.subr.bf16.mxu0 %v5388
  %7280 = vmatpush1.bf16.msra.mxu0 %v5387
  %7281 = vmatprep.subr.bf16.mxu0 %v5406
  %7282 = vmatpush1.bf16.msra.mxu0 %v5405
  %7283 = vmatprep.subr.bf16.mxu0 %v5424
  %7284 = vmatpush1.bf16.msra.mxu0 %v5423
  %7285 = vmatprep.subr.bf16.mxu0 %v5442
  %7286 = vmatpush1.bf16.msra.mxu0 %v5441
  %7287 = vmatprep.mubr.bf16.mxu0 %v959
  %7288 = vmatmul.mubr.bf16.gmra.mrb[0].mxu0 %v958
  %v7289 = vpop.f32.mrb[0].mxu0
  %v7290 = vadd.f32 %v7249, %v7289
  %v7291 = vpop.f32.mrb[0].mxu0
  %v7292 = vadd.f32 %v7251, %v7291
  %v7293 = vpop.f32.mrb[0].mxu0
  %v7294 = vpop.f32.mrb[0].mxu0
  %7295 = vdwg.mxu0
  %7296 = vmatprep.subr.bf16.mxu0 %v5460
  %7297 = vmatpush1.bf16.msra.mxu0 %v5459
  %7298 = vmatprep.subr.bf16.mxu0 0
  %7299 = vmatpush1.bf16.msra.mxu0 0
  %7300 = vmatprep.subr.bf16.mxu0 0
  %7301 = vmatpush1.bf16.msra.mxu0 0
  %7302 = vmatprep.subr.bf16.mxu0 0
  %7303 = vmatpush1.bf16.msra.mxu0 0
  %7304 = vmatprep.subr.bf16.mxu0 0
  %7305 = vmatpush1.bf16.msra.mxu0 0
  %7306 = vmatprep.subr.bf16.mxu0 0
  %7307 = vmatpush1.bf16.msra.mxu0 0
  %7308 = vmatprep.subr.bf16.mxu0 0
  %7309 = vmatpush1.bf16.msra.mxu0 0
  %7310 = vmatprep.subr.bf16.mxu0 0
  %7311 = vmatpush1.bf16.msra.mxu0 0
  %7312 = vmatprep.subr.bf16.mxu0 0
  %7313 = vmatpush1.bf16.msra.mxu0 0
  %7314 = vmatprep.subr.bf16.mxu0 0
  %7315 = vmatpush1.bf16.msra.mxu0 0
  %7316 = vmatprep.subr.bf16.mxu0 0
  %7317 = vmatpush1.bf16.msra.mxu0 0
  %7318 = vmatprep.subr.bf16.mxu0 0
  %7319 = vmatpush1.bf16.msra.mxu0 0
  %7320 = vmatprep.subr.bf16.mxu0 0
  %7321 = vmatpush1.bf16.msra.mxu0 0
  %7322 = vmatprep.subr.bf16.mxu0 0
  %7323 = vmatpush1.bf16.msra.mxu0 0
  %7324 = vmatprep.subr.bf16.mxu0 0
  %7325 = vmatpush1.bf16.msra.mxu0 0
  %7326 = vmatprep.subr.bf16.mxu0 0
  %7327 = vmatpush1.bf16.msra.mxu0 0
  %7328 = vmatprep.mubr.bf16.mxu0 0
  %7329 = vmatmul.mubr.bf16.gmra.mrb[0].mxu0 %v6351
  %v7330 = vpop.f32.mrb[0].mxu0
  %v7331 = vadd.f32 %v7290, %v7330
  %v7332 = vpop.f32.mrb[0].mxu0
  %v7333 = vadd.f32 %v7292, %v7332
  %v7334 = vpop.f32.mrb[0].mxu0
  %v7335 = vpop.f32.mrb[0].mxu0
  %7336 = vdwg.mxu0
  %7337 = vmatprep.subr.bf16.mxu0 %v4598
  %7338 = vmatpush1.bf16.msra.mxu0 %v4597
  %7339 = vmatprep.subr.bf16.mxu0 %v4616
  %7340 = vmatpush1.bf16.msra.mxu0 %v4615
  %7341 = vmatprep.subr.bf16.mxu0 %v4634
  %7342 = vmatpush1.bf16.msra.mxu0 %v4633
  %7343 = vmatprep.subr.bf16.mxu0 %v4652
  %7344 = vmatpush1.bf16.msra.mxu0 %v4651
  %7345 = vmatprep.subr.bf16.mxu0 %v4670
  %7346 = vmatpush1.bf16.msra.mxu0 %v4669
  %7347 = vmatprep.subr.bf16.mxu0 %v4688
  %7348 = vmatpush1.bf16.msra.mxu0 %v4687
  %7349 = vmatprep.subr.bf16.mxu0 %v4706
  %7350 = vmatpush1.bf16.msra.mxu0 %v4705
  %7351 = vmatprep.subr.bf16.mxu0 %v4724
  %7352 = vmatpush1.bf16.msra.mxu0 %v4723
  %7353 = vmatprep.subr.bf16.mxu0 %v4742
  %7354 = vmatpush1.bf16.msra.mxu0 %v4741
  %7355 = vmatprep.subr.bf16.mxu0 %v4760
  %7356 = vmatpush1.bf16.msra.mxu0 %v4759
  %7357 = vmatprep.subr.bf16.mxu0 %v4778
  %7358 = vmatpush1.bf16.msra.mxu0 %v4777
  %7359 = vmatprep.subr.bf16.mxu0 %v4796
  %7360 = vmatpush1.bf16.msra.mxu0 %v4795
  %7361 = vmatprep.subr.bf16.mxu0 %v4814
  %7362 = vmatpush1.bf16.msra.mxu0 %v4813
  %7363 = vmatprep.subr.bf16.mxu0 %v4832
  %7364 = vmatpush1.bf16.msra.mxu0 %v4831
  %7365 = vmatprep.subr.bf16.mxu0 %v4850
  %7366 = vmatpush1.bf16.msra.mxu0 %v4849
  %7367 = vmatprep.subr.bf16.mxu0 %v4868
  %7368 = vmatpush1.bf16.msra.mxu0 %v4867
  %7369 = vmatprep.mubr.bf16.mxu0 %v955
  %7370 = vmatmul.mubr.bf16.gmra.mrb[0].mxu0 %v954
  %v7371 = vpop.f32.mrb[0].mxu0
  %v7372 = vadd.f32 %v1900, %v7371
  %v7373 = vpop.f32.mrb[0].mxu0
  %v7374 = vadd.f32 %v1904, %v7373
  %v7375 = vpop.f32.mrb[0].mxu0
  %v7376 = vpop.f32.mrb[0].mxu0
  %7377 = vdwg.mxu0
  %7378 = vmatprep.subr.bf16.mxu0 %v4886
  %7379 = vmatpush1.bf16.msra.mxu0 %v4885
  %7380 = vmatprep.subr.bf16.mxu0 %v4904
  %7381 = vmatpush1.bf16.msra.mxu0 %v4903
  %7382 = vmatprep.subr.bf16.mxu0 %v4922
  %7383 = vmatpush1.bf16.msra.mxu0 %v4921
  %7384 = vmatprep.subr.bf16.mxu0 %v4940
  %7385 = vmatpush1.bf16.msra.mxu0 %v4939
  %7386 = vmatprep.subr.bf16.mxu0 %v4958
  %7387 = vmatpush1.bf16.msra.mxu0 %v4957
  %7388 = vmatprep.subr.bf16.mxu0 %v4976
  %7389 = vmatpush1.bf16.msra.mxu0 %v4975
  %7390 = vmatprep.subr.bf16.mxu0 %v4994
  %7391 = vmatpush1.bf16.msra.mxu0 %v4993
  %7392 = vmatprep.subr.bf16.mxu0 %v5012
  %7393 = vmatpush1.bf16.msra.mxu0 %v5011
  %7394 = vmatprep.subr.bf16.mxu0 %v5030
  %7395 = vmatpush1.bf16.msra.mxu0 %v5029
  %7396 = vmatprep.subr.bf16.mxu0 %v5048
  %7397 = vmatpush1.bf16.msra.mxu0 %v5047
  %7398 = vmatprep.subr.bf16.mxu0 %v5066
  %7399 = vmatpush1.bf16.msra.mxu0 %v5065
  %7400 = vmatprep.subr.bf16.mxu0 %v5084
  %7401 = vmatpush1.bf16.msra.mxu0 %v5083
  %7402 = vmatprep.subr.bf16.mxu0 %v5102
  %7403 = vmatpush1.bf16.msra.mxu0 %v5101
  %7404 = vmatprep.subr.bf16.mxu0 %v5120
  %7405 = vmatpush1.bf16.msra.mxu0 %v5119
  %7406 = vmatprep.subr.bf16.mxu0 %v5138
  %7407 = vmatpush1.bf16.msra.mxu0 %v5137
  %7408 = vmatprep.subr.bf16.mxu0 %v5156
  %7409 = vmatpush1.bf16.msra.mxu0 %v5155
  %7410 = vmatprep.mubr.bf16.mxu0 %v957
  %7411 = vmatmul.mubr.bf16.gmra.mrb[0].mxu0 %v956
  %v7412 = vpop.f32.mrb[0].mxu0
  %v7413 = vadd.f32 %v7372, %v7412
  %v7414 = vpop.f32.mrb[0].mxu0
  %v7415 = vadd.f32 %v7374, %v7414
  %v7416 = vpop.f32.mrb[0].mxu0
  %v7417 = vpop.f32.mrb[0].mxu0
  %7418 = vdwg.mxu0
  %7419 = vmatprep.subr.bf16.mxu0 %v5174
  %7420 = vmatpush1.bf16.msra.mxu0 %v5173
  %7421 = vmatprep.subr.bf16.mxu0 %v5192
  %7422 = vmatpush1.bf16.msra.mxu0 %v5191
  %7423 = vmatprep.subr.bf16.mxu0 %v5210
  %7424 = vmatpush1.bf16.msra.mxu0 %v5209
  %7425 = vmatprep.subr.bf16.mxu0 %v5228
  %7426 = vmatpush1.bf16.msra.mxu0 %v5227
  %7427 = vmatprep.subr.bf16.mxu0 %v5246
  %7428 = vmatpush1.bf16.msra.mxu0 %v5245
  %7429 = vmatprep.subr.bf16.mxu0 %v5264
  %7430 = vmatpush1.bf16.msra.mxu0 %v5263
  %7431 = vmatprep.subr.bf16.mxu0 %v5282
  %7432 = vmatpush1.bf16.msra.mxu0 %v5281
  %7433 = vmatprep.subr.bf16.mxu0 %v5300
  %7434 = vmatpush1.bf16.msra.mxu0 %v5299
  %7435 = vmatprep.subr.bf16.mxu0 %v5318
  %7436 = vmatpush1.bf16.msra.mxu0 %v5317
  %7437 = vmatprep.subr.bf16.mxu0 %v5336
  %7438 = vmatpush1.bf16.msra.mxu0 %v5335
  %7439 = vmatprep.subr.bf16.mxu0 %v5354
  %7440 = vmatpush1.bf16.msra.mxu0 %v5353
  %7441 = vmatprep.subr.bf16.mxu0 %v5372
  %7442 = vmatpush1.bf16.msra.mxu0 %v5371
  %7443 = vmatprep.subr.bf16.mxu0 %v5390
  %7444 = vmatpush1.bf16.msra.mxu0 %v5389
  %7445 = vmatprep.subr.bf16.mxu0 %v5408
  %7446 = vmatpush1.bf16.msra.mxu0 %v5407
  %7447 = vmatprep.subr.bf16.mxu0 %v5426
  %7448 = vmatpush1.bf16.msra.mxu0 %v5425
  %7449 = vmatprep.subr.bf16.mxu0 %v5444
  %7450 = vmatpush1.bf16.msra.mxu0 %v5443
  %7451 = vmatprep.mubr.bf16.mxu0 %v959
  %7452 = vmatmul.mubr.bf16.gmra.mrb[0].mxu0 %v958
  %v7453 = vpop.f32.mrb[0].mxu0
  %v7454 = vadd.f32 %v7413, %v7453
  %v7455 = vpop.f32.mrb[0].mxu0
  %v7456 = vadd.f32 %v7415, %v7455
  %v7457 = vpop.f32.mrb[0].mxu0
  %v7458 = vpop.f32.mrb[0].mxu0
  %7459 = vdwg.mxu0
  %7460 = vmatprep.subr.bf16.mxu0 %v5462
  %7461 = vmatpush1.bf16.msra.mxu0 %v5461
  %7462 = vmatprep.subr.bf16.mxu0 0
  %7463 = vmatpush1.bf16.msra.mxu0 0
  %7464 = vmatprep.subr.bf16.mxu0 0
  %7465 = vmatpush1.bf16.msra.mxu0 0
  %7466 = vmatprep.subr.bf16.mxu0 0
  %7467 = vmatpush1.bf16.msra.mxu0 0
  %7468 = vmatprep.subr.bf16.mxu0 0
  %7469 = vmatpush1.bf16.msra.mxu0 0
  %7470 = vmatprep.subr.bf16.mxu0 0
  %7471 = vmatpush1.bf16.msra.mxu0 0
  %7472 = vmatprep.subr.bf16.mxu0 0
  %7473 = vmatpush1.bf16.msra.mxu0 0
  %7474 = vmatprep.subr.bf16.mxu0 0
  %7475 = vmatpush1.bf16.msra.mxu0 0
  %7476 = vmatprep.subr.bf16.mxu0 0
  %7477 = vmatpush1.bf16.msra.mxu0 0
  %7478 = vmatprep.subr.bf16.mxu0 0
  %7479 = vmatpush1.bf16.msra.mxu0 0
  %7480 = vmatprep.subr.bf16.mxu0 0
  %7481 = vmatpush1.bf16.msra.mxu0 0
  %7482 = vmatprep.subr.bf16.mxu0 0
  %7483 = vmatpush1.bf16.msra.mxu0 0
  %7484 = vmatprep.subr.bf16.mxu0 0
  %7485 = vmatpush1.bf16.msra.mxu0 0
  %7486 = vmatprep.subr.bf16.mxu0 0
  %7487 = vmatpush1.bf16.msra.mxu0 0
  %7488 = vmatprep.subr.bf16.mxu0 0
  %7489 = vmatpush1.bf16.msra.mxu0 0
  %7490 = vmatprep.subr.bf16.mxu0 0
  %7491 = vmatpush1.bf16.msra.mxu0 0
  %7492 = vmatprep.mubr.bf16.mxu0 0
  %7493 = vmatmul.mubr.bf16.gmra.mrb[0].mxu0 %v6351
  %v7494 = vpop.f32.mrb[0].mxu0
  %v7495 = vadd.f32 %v7454, %v7494
  %v7496 = vpop.f32.mrb[0].mxu0
  %v7497 = vadd.f32 %v7456, %v7496
  %v7498 = vpop.f32.mrb[0].mxu0
  %v7499 = vpop.f32.mrb[0].mxu0
  %7500 = vdwg.mxu0
  %7501 = vmatprep.subr.bf16.mxu0 %v4600
  %7502 = vmatpush1.bf16.msra.mxu0 %v4599
  %7503 = vmatprep.subr.bf16.mxu0 %v4618
  %7504 = vmatpush1.bf16.msra.mxu0 %v4617
  %7505 = vmatprep.subr.bf16.mxu0 %v4636
  %7506 = vmatpush1.bf16.msra.mxu0 %v4635
  %7507 = vmatprep.subr.bf16.mxu0 %v4654
  %7508 = vmatpush1.bf16.msra.mxu0 %v4653
  %7509 = vmatprep.subr.bf16.mxu0 %v4672
  %7510 = vmatpush1.bf16.msra.mxu0 %v4671
  %7511 = vmatprep.subr.bf16.mxu0 %v4690
  %7512 = vmatpush1.bf16.msra.mxu0 %v4689
  %7513 = vmatprep.subr.bf16.mxu0 %v4708
  %7514 = vmatpush1.bf16.msra.mxu0 %v4707
  %7515 = vmatprep.subr.bf16.mxu0 %v4726
  %7516 = vmatpush1.bf16.msra.mxu0 %v4725
  %7517 = vmatprep.subr.bf16.mxu0 %v4744
  %7518 = vmatpush1.bf16.msra.mxu0 %v4743
  %7519 = vmatprep.subr.bf16.mxu0 %v4762
  %7520 = vmatpush1.bf16.msra.mxu0 %v4761
  %7521 = vmatprep.subr.bf16.mxu0 %v4780
  %7522 = vmatpush1.bf16.msra.mxu0 %v4779
  %7523 = vmatprep.subr.bf16.mxu0 %v4798
  %7524 = vmatpush1.bf16.msra.mxu0 %v4797
  %7525 = vmatprep.subr.bf16.mxu0 %v4816
  %7526 = vmatpush1.bf16.msra.mxu0 %v4815
  %7527 = vmatprep.subr.bf16.mxu0 %v4834
  %7528 = vmatpush1.bf16.msra.mxu0 %v4833
  %7529 = vmatprep.subr.bf16.mxu0 %v4852
  %7530 = vmatpush1.bf16.msra.mxu0 %v4851
  %7531 = vmatprep.subr.bf16.mxu0 %v4870
  %7532 = vmatpush1.bf16.msra.mxu0 %v4869
  %7533 = vmatprep.mubr.bf16.mxu0 %v955
  %7534 = vmatmul.mubr.bf16.gmra.mrb[0].mxu0 %v954
  %v7535 = vpop.f32.mrb[0].mxu0
  %v7536 = vadd.f32 %v1908, %v7535
  %v7537 = vpop.f32.mrb[0].mxu0
  %v7538 = vadd.f32 %v1912, %v7537
  %v7539 = vpop.f32.mrb[0].mxu0
  %v7540 = vpop.f32.mrb[0].mxu0
  %7541 = vdwg.mxu0
  %7542 = vmatprep.subr.bf16.mxu0 %v4888
  %7543 = vmatpush1.bf16.msra.mxu0 %v4887
  %7544 = vmatprep.subr.bf16.mxu0 %v4906
  %7545 = vmatpush1.bf16.msra.mxu0 %v4905
  %7546 = vmatprep.subr.bf16.mxu0 %v4924
  %7547 = vmatpush1.bf16.msra.mxu0 %v4923
  %7548 = vmatprep.subr.bf16.mxu0 %v4942
  %7549 = vmatpush1.bf16.msra.mxu0 %v4941
  %7550 = vmatprep.subr.bf16.mxu0 %v4960
  %7551 = vmatpush1.bf16.msra.mxu0 %v4959
  %7552 = vmatprep.subr.bf16.mxu0 %v4978
  %7553 = vmatpush1.bf16.msra.mxu0 %v4977
  %7554 = vmatprep.subr.bf16.mxu0 %v4996
  %7555 = vmatpush1.bf16.msra.mxu0 %v4995
  %7556 = vmatprep.subr.bf16.mxu0 %v5014
  %7557 = vmatpush1.bf16.msra.mxu0 %v5013
  %7558 = vmatprep.subr.bf16.mxu0 %v5032
  %7559 = vmatpush1.bf16.msra.mxu0 %v5031
  %7560 = vmatprep.subr.bf16.mxu0 %v5050
  %7561 = vmatpush1.bf16.msra.mxu0 %v5049
  %7562 = vmatprep.subr.bf16.mxu0 %v5068
  %7563 = vmatpush1.bf16.msra.mxu0 %v5067
  %7564 = vmatprep.subr.bf16.mxu0 %v5086
  %7565 = vmatpush1.bf16.msra.mxu0 %v5085
  %7566 = vmatprep.subr.bf16.mxu0 %v5104
  %7567 = vmatpush1.bf16.msra.mxu0 %v5103
  %7568 = vmatprep.subr.bf16.mxu0 %v5122
  %7569 = vmatpush1.bf16.msra.mxu0 %v5121
  %7570 = vmatprep.subr.bf16.mxu0 %v5140
  %7571 = vmatpush1.bf16.msra.mxu0 %v5139
  %7572 = vmatprep.subr.bf16.mxu0 %v5158
  %7573 = vmatpush1.bf16.msra.mxu0 %v5157
  %7574 = vmatprep.mubr.bf16.mxu0 %v957
  %7575 = vmatmul.mubr.bf16.gmra.mrb[0].mxu0 %v956
  %v7576 = vpop.f32.mrb[0].mxu0
  %v7577 = vadd.f32 %v7536, %v7576
  %v7578 = vpop.f32.mrb[0].mxu0
  %v7579 = vadd.f32 %v7538, %v7578
  %v7580 = vpop.f32.mrb[0].mxu0
  %v7581 = vpop.f32.mrb[0].mxu0
  %7582 = vdwg.mxu0
  %7583 = vmatprep.subr.bf16.mxu0 %v5176
  %7584 = vmatpush1.bf16.msra.mxu0 %v5175
  %7585 = vmatprep.subr.bf16.mxu0 %v5194
  %7586 = vmatpush1.bf16.msra.mxu0 %v5193
  %7587 = vmatprep.subr.bf16.mxu0 %v5212
  %7588 = vmatpush1.bf16.msra.mxu0 %v5211
  %7589 = vmatprep.subr.bf16.mxu0 %v5230
  %7590 = vmatpush1.bf16.msra.mxu0 %v5229
  %7591 = vmatprep.subr.bf16.mxu0 %v5248
  %7592 = vmatpush1.bf16.msra.mxu0 %v5247
  %7593 = vmatprep.subr.bf16.mxu0 %v5266
  %7594 = vmatpush1.bf16.msra.mxu0 %v5265
  %7595 = vmatprep.subr.bf16.mxu0 %v5284
  %7596 = vmatpush1.bf16.msra.mxu0 %v5283
  %7597 = vmatprep.subr.bf16.mxu0 %v5302
  %7598 = vmatpush1.bf16.msra.mxu0 %v5301
  %7599 = vmatprep.subr.bf16.mxu0 %v5320
  %7600 = vmatpush1.bf16.msra.mxu0 %v5319
  %7601 = vmatprep.subr.bf16.mxu0 %v5338
  %7602 = vmatpush1.bf16.msra.mxu0 %v5337
  %7603 = vmatprep.subr.bf16.mxu0 %v5356
  %7604 = vmatpush1.bf16.msra.mxu0 %v5355
  %7605 = vmatprep.subr.bf16.mxu0 %v5374
  %7606 = vmatpush1.bf16.msra.mxu0 %v5373
  %7607 = vmatprep.subr.bf16.mxu0 %v5392
  %7608 = vmatpush1.bf16.msra.mxu0 %v5391
  %7609 = vmatprep.subr.bf16.mxu0 %v5410
  %7610 = vmatpush1.bf16.msra.mxu0 %v5409
  %7611 = vmatprep.subr.bf16.mxu0 %v5428
  %7612 = vmatpush1.bf16.msra.mxu0 %v5427
  %7613 = vmatprep.subr.bf16.mxu0 %v5446
  %7614 = vmatpush1.bf16.msra.mxu0 %v5445
  %7615 = vmatprep.mubr.bf16.mxu0 %v959
  %7616 = vmatmul.mubr.bf16.gmra.mrb[0].mxu0 %v958
  %v7617 = vpop.f32.mrb[0].mxu0
  %v7618 = vadd.f32 %v7577, %v7617
  %v7619 = vpop.f32.mrb[0].mxu0
  %v7620 = vadd.f32 %v7579, %v7619
  %v7621 = vpop.f32.mrb[0].mxu0
  %v7622 = vpop.f32.mrb[0].mxu0
  %7623 = vdwg.mxu0
  %7624 = vmatprep.subr.bf16.mxu0 %v5464
  %7625 = vmatpush1.bf16.msra.mxu0 %v5463
  %7626 = vmatprep.subr.bf16.mxu0 0
  %7627 = vmatpush1.bf16.msra.mxu0 0
  %7628 = vmatprep.subr.bf16.mxu0 0
  %7629 = vmatpush1.bf16.msra.mxu0 0
  %7630 = vmatprep.subr.bf16.mxu0 0
  %7631 = vmatpush1.bf16.msra.mxu0 0
  %7632 = vmatprep.subr.bf16.mxu0 0
  %7633 = vmatpush1.bf16.msra.mxu0 0
  %7634 = vmatprep.subr.bf16.mxu0 0
  %7635 = vmatpush1.bf16.msra.mxu0 0
  %7636 = vmatprep.subr.bf16.mxu0 0
  %7637 = vmatpush1.bf16.msra.mxu0 0
  %7638 = vmatprep.subr.bf16.mxu0 0
  %7639 = vmatpush1.bf16.msra.mxu0 0
  %7640 = vmatprep.subr.bf16.mxu0 0
  %7641 = vmatpush1.bf16.msra.mxu0 0
  %7642 = vmatprep.subr.bf16.mxu0 0
  %7643 = vmatpush1.bf16.msra.mxu0 0
  %7644 = vmatprep.subr.bf16.mxu0 0
  %7645 = vmatpush1.bf16.msra.mxu0 0
  %7646 = vmatprep.subr.bf16.mxu0 0
  %7647 = vmatpush1.bf16.msra.mxu0 0
  %7648 = vmatprep.subr.bf16.mxu0 0
  %7649 = vmatpush1.bf16.msra.mxu0 0
  %7650 = vmatprep.subr.bf16.mxu0 0
  %7651 = vmatpush1.bf16.msra.mxu0 0
  %7652 = vmatprep.subr.bf16.mxu0 0
  %7653 = vmatpush1.bf16.msra.mxu0 0
  %7654 = vmatprep.subr.bf16.mxu0 0
  %7655 = vmatpush1.bf16.msra.mxu0 0
  %7656 = vmatprep.mubr.bf16.mxu0 0
  %7657 = vmatmul.mubr.bf16.gmra.mrb[0].mxu0 %v6351
  %v7658 = vpop.f32.mrb[0].mxu0
  %v7659 = vadd.f32 %v7618, %v7658
  %v7660 = vpop.f32.mrb[0].mxu0
  %v7661 = vadd.f32 %v7620, %v7660
  %v7662 = vpop.f32.mrb[0].mxu0
  %v7663 = vpop.f32.mrb[0].mxu0
  %7664 = vdwg.mxu0
  %7665 = vmatprep.subr.bf16.mxu0 %v4602
  %7666 = vmatpush1.bf16.msra.mxu0 %v4601
  %7667 = vmatprep.subr.bf16.mxu0 %v4620
  %7668 = vmatpush1.bf16.msra.mxu0 %v4619
  %7669 = vmatprep.subr.bf16.mxu0 %v4638
  %7670 = vmatpush1.bf16.msra.mxu0 %v4637
  %7671 = vmatprep.subr.bf16.mxu0 %v4656
  %7672 = vmatpush1.bf16.msra.mxu0 %v4655
  %7673 = vmatprep.subr.bf16.mxu0 %v4674
  %7674 = vmatpush1.bf16.msra.mxu0 %v4673
  %7675 = vmatprep.subr.bf16.mxu0 %v4692
  %7676 = vmatpush1.bf16.msra.mxu0 %v4691
  %7677 = vmatprep.subr.bf16.mxu0 %v4710
  %7678 = vmatpush1.bf16.msra.mxu0 %v4709
  %7679 = vmatprep.subr.bf16.mxu0 %v4728
  %7680 = vmatpush1.bf16.msra.mxu0 %v4727
  %7681 = vmatprep.subr.bf16.mxu0 %v4746
  %7682 = vmatpush1.bf16.msra.mxu0 %v4745
  %7683 = vmatprep.subr.bf16.mxu0 %v4764
  %7684 = vmatpush1.bf16.msra.mxu0 %v4763
  %7685 = vmatprep.subr.bf16.mxu0 %v4782
  %7686 = vmatpush1.bf16.msra.mxu0 %v4781
  %7687 = vmatprep.subr.bf16.mxu0 %v4800
  %7688 = vmatpush1.bf16.msra.mxu0 %v4799
  %7689 = vmatprep.subr.bf16.mxu0 %v4818
  %7690 = vmatpush1.bf16.msra.mxu0 %v4817
  %7691 = vmatprep.subr.bf16.mxu0 %v4836
  %7692 = vmatpush1.bf16.msra.mxu0 %v4835
  %7693 = vmatprep.subr.bf16.mxu0 %v4854
  %7694 = vmatpush1.bf16.msra.mxu0 %v4853
  %7695 = vmatprep.subr.bf16.mxu0 %v4872
  %7696 = vmatpush1.bf16.msra.mxu0 %v4871
  %7697 = vmatprep.mubr.bf16.mxu0 %v955
  %7698 = vmatmul.mubr.bf16.gmra.mrb[0].mxu0 %v954
  %v7699 = vpop.f32.mrb[0].mxu0
  %v7700 = vadd.f32 %v1916, %v7699
  %v7701 = vpop.f32.mrb[0].mxu0
  %v7702 = vadd.f32 %v1920, %v7701
  %v7703 = vpop.f32.mrb[0].mxu0
  %v7704 = vpop.f32.mrb[0].mxu0
  %7705 = vdwg.mxu0
  %7706 = vmatprep.subr.bf16.mxu0 %v4890
  %7707 = vmatpush1.bf16.msra.mxu0 %v4889
  %7708 = vmatprep.subr.bf16.mxu0 %v4908
  %7709 = vmatpush1.bf16.msra.mxu0 %v4907
  %7710 = vmatprep.subr.bf16.mxu0 %v4926
  %7711 = vmatpush1.bf16.msra.mxu0 %v4925
  %7712 = vmatprep.subr.bf16.mxu0 %v4944
  %7713 = vmatpush1.bf16.msra.mxu0 %v4943
  %7714 = vmatprep.subr.bf16.mxu0 %v4962
  %7715 = vmatpush1.bf16.msra.mxu0 %v4961
  %7716 = vmatprep.subr.bf16.mxu0 %v4980
  %7717 = vmatpush1.bf16.msra.mxu0 %v4979
  %7718 = vmatprep.subr.bf16.mxu0 %v4998
  %7719 = vmatpush1.bf16.msra.mxu0 %v4997
  %7720 = vmatprep.subr.bf16.mxu0 %v5016
  %7721 = vmatpush1.bf16.msra.mxu0 %v5015
  %7722 = vmatprep.subr.bf16.mxu0 %v5034
  %7723 = vmatpush1.bf16.msra.mxu0 %v5033
  %7724 = vmatprep.subr.bf16.mxu0 %v5052
  %7725 = vmatpush1.bf16.msra.mxu0 %v5051
  %7726 = vmatprep.subr.bf16.mxu0 %v5070
  %7727 = vmatpush1.bf16.msra.mxu0 %v5069
  %7728 = vmatprep.subr.bf16.mxu0 %v5088
  %7729 = vmatpush1.bf16.msra.mxu0 %v5087
  %7730 = vmatprep.subr.bf16.mxu0 %v5106
  %7731 = vmatpush1.bf16.msra.mxu0 %v5105
  %7732 = vmatprep.subr.bf16.mxu0 %v5124
  %7733 = vmatpush1.bf16.msra.mxu0 %v5123
  %7734 = vmatprep.subr.bf16.mxu0 %v5142
  %7735 = vmatpush1.bf16.msra.mxu0 %v5141
  %7736 = vmatprep.subr.bf16.mxu0 %v5160
  %7737 = vmatpush1.bf16.msra.mxu0 %v5159
  %7738 = vmatprep.mubr.bf16.mxu0 %v957
  %7739 = vmatmul.mubr.bf16.gmra.mrb[0].mxu0 %v956
  %v7740 = vpop.f32.mrb[0].mxu0
  %v7741 = vadd.f32 %v7700, %v7740
  %v7742 = vpop.f32.mrb[0].mxu0
  %v7743 = vadd.f32 %v7702, %v7742
  %v7744 = vpop.f32.mrb[0].mxu0
  %v7745 = vpop.f32.mrb[0].mxu0
  %7746 = vdwg.mxu0
  %7747 = vmatprep.subr.bf16.mxu0 %v5178
  %7748 = vmatpush1.bf16.msra.mxu0 %v5177
  %7749 = vmatprep.subr.bf16.mxu0 %v5196
  %7750 = vmatpush1.bf16.msra.mxu0 %v5195
  %7751 = vmatprep.subr.bf16.mxu0 %v5214
  %7752 = vmatpush1.bf16.msra.mxu0 %v5213
  %7753 = vmatprep.subr.bf16.mxu0 %v5232
  %7754 = vmatpush1.bf16.msra.mxu0 %v5231
  %7755 = vmatprep.subr.bf16.mxu0 %v5250
  %7756 = vmatpush1.bf16.msra.mxu0 %v5249
  %7757 = vmatprep.subr.bf16.mxu0 %v5268
  %7758 = vmatpush1.bf16.msra.mxu0 %v5267
  %7759 = vmatprep.subr.bf16.mxu0 %v5286
  %7760 = vmatpush1.bf16.msra.mxu0 %v5285
  %7761 = vmatprep.subr.bf16.mxu0 %v5304
  %7762 = vmatpush1.bf16.msra.mxu0 %v5303
  %7763 = vmatprep.subr.bf16.mxu0 %v5322
  %7764 = vmatpush1.bf16.msra.mxu0 %v5321
  %7765 = vmatprep.subr.bf16.mxu0 %v5340
  %7766 = vmatpush1.bf16.msra.mxu0 %v5339
  %7767 = vmatprep.subr.bf16.mxu0 %v5358
  %7768 = vmatpush1.bf16.msra.mxu0 %v5357
  %7769 = vmatprep.subr.bf16.mxu0 %v5376
  %7770 = vmatpush1.bf16.msra.mxu0 %v5375
  %7771 = vmatprep.subr.bf16.mxu0 %v5394
  %7772 = vmatpush1.bf16.msra.mxu0 %v5393
  %7773 = vmatprep.subr.bf16.mxu0 %v5412
  %7774 = vmatpush1.bf16.msra.mxu0 %v5411
  %7775 = vmatprep.subr.bf16.mxu0 %v5430
  %7776 = vmatpush1.bf16.msra.mxu0 %v5429
  %7777 = vmatprep.subr.bf16.mxu0 %v5448
  %7778 = vmatpush1.bf16.msra.mxu0 %v5447
  %7779 = vmatprep.mubr.bf16.mxu0 %v959
  %7780 = vmatmul.mubr.bf16.gmra.mrb[0].mxu0 %v958
  %v7781 = vpop.f32.mrb[0].mxu0
  %v7782 = vadd.f32 %v7741, %v7781
  %v7783 = vpop.f32.mrb[0].mxu0
  %v7784 = vadd.f32 %v7743, %v7783
  %v7785 = vpop.f32.mrb[0].mxu0
  %v7786 = vpop.f32.mrb[0].mxu0
  %7787 = vdwg.mxu0
  %7788 = vmatprep.subr.bf16.mxu0 %v5466
  %7789 = vmatpush1.bf16.msra.mxu0 %v5465
  %7790 = vmatprep.subr.bf16.mxu0 0
  %7791 = vmatpush1.bf16.msra.mxu0 0
  %7792 = vmatprep.subr.bf16.mxu0 0
  %7793 = vmatpush1.bf16.msra.mxu0 0
  %7794 = vmatprep.subr.bf16.mxu0 0
  %7795 = vmatpush1.bf16.msra.mxu0 0
  %7796 = vmatprep.subr.bf16.mxu0 0
  %7797 = vmatpush1.bf16.msra.mxu0 0
  %7798 = vmatprep.subr.bf16.mxu0 0
  %7799 = vmatpush1.bf16.msra.mxu0 0
  %7800 = vmatprep.subr.bf16.mxu0 0
  %7801 = vmatpush1.bf16.msra.mxu0 0
  %7802 = vmatprep.subr.bf16.mxu0 0
  %7803 = vmatpush1.bf16.msra.mxu0 0
  %7804 = vmatprep.subr.bf16.mxu0 0
  %7805 = vmatpush1.bf16.msra.mxu0 0
  %7806 = vmatprep.subr.bf16.mxu0 0
  %7807 = vmatpush1.bf16.msra.mxu0 0
  %7808 = vmatprep.subr.bf16.mxu0 0
  %7809 = vmatpush1.bf16.msra.mxu0 0
  %7810 = vmatprep.subr.bf16.mxu0 0
  %7811 = vmatpush1.bf16.msra.mxu0 0
  %7812 = vmatprep.subr.bf16.mxu0 0
  %7813 = vmatpush1.bf16.msra.mxu0 0
  %7814 = vmatprep.subr.bf16.mxu0 0
  %7815 = vmatpush1.bf16.msra.mxu0 0
  %7816 = vmatprep.subr.bf16.mxu0 0
  %7817 = vmatpush1.bf16.msra.mxu0 0
  %7818 = vmatprep.subr.bf16.mxu0 0
  %7819 = vmatpush1.bf16.msra.mxu0 0
  %7820 = vmatprep.mubr.bf16.mxu0 0
  %7821 = vmatmul.mubr.bf16.gmra.mrb[0].mxu0 %v6351
  %v7822 = vpop.f32.mrb[0].mxu0
  %v7823 = vadd.f32 %v7782, %v7822
  %v7824 = vpop.f32.mrb[0].mxu0
  %v7825 = vadd.f32 %v7784, %v7824
  %v7826 = vpop.f32.mrb[0].mxu0
  %v7827 = vpop.f32.mrb[0].mxu0
  %7828 = vdwg.mxu0
  %v7829 = vmax.f32 %v6511, 0.0
  %v7830 = vmax.f32 %v6513, 0.0
  %v7831 = vmax.f32 %v6675, 0.0
  %v7832 = vmax.f32 %v6677, 0.0
  %v7833 = vmax.f32 %v6839, 0.0
  %v7834 = vmax.f32 %v6841, 0.0
  %v7835 = vmax.f32 %v7003, 0.0
  %v7836 = vmax.f32 %v7005, 0.0
  %v7837 = vmax.f32 %v7167, 0.0
  %v7838 = vmax.f32 %v7169, 0.0
  %v7839 = vmax.f32 %v7331, 0.0
  %v7840 = vmax.f32 %v7333, 0.0
  %v7841 = vmax.f32 %v7495, 0.0
  %v7842 = vmax.f32 %v7497, 0.0
  %v7843 = vmax.f32 %v7659, 0.0
  %v7844 = vmax.f32 %v7661, 0.0
  %v7845 = vmax.f32 %v7823, 0.0
  %v7846 = vmax.f32 %v7825, 0.0
  %7865 = vrot.lane.b32.xlu0 %v7829, 127
  %v7866 = vpop.permute.xlu0 %7865
  %7867 = vrot.lane.b32.xlu0 %v7830, 127
  %v7868 = vpop.permute.xlu0 %7867
  %7869 = vrot.lane.b32.xlu0 %v7831, 127
  %v7870 = vpop.permute.xlu0 %7869
  %7871 = vrot.lane.b32.xlu0 %v7832, 127
  %v7872 = vpop.permute.xlu0 %7871
  %7873 = vrot.lane.b32.xlu0 %v7833, 127
  %v7874 = vpop.permute.xlu0 %7873
  %7875 = vrot.lane.b32.xlu0 %v7834, 127
  %v7876 = vpop.permute.xlu0 %7875
  %7877 = vrot.lane.b32.xlu0 %v7835, 127
  %v7878 = vpop.permute.xlu0 %7877
  %7879 = vrot.lane.b32.xlu0 %v7836, 127
  %v7880 = vpop.permute.xlu0 %7879
  %7881 = vrot.lane.b32.xlu0 %v7837, 127
  %v7882 = vpop.permute.xlu0 %7881
  %7883 = vrot.lane.b32.xlu0 %v7838, 127
  %v7884 = vpop.permute.xlu0 %7883
  %7885 = vrot.lane.b32.xlu0 %v7839, 127
  %v7886 = vpop.permute.xlu0 %7885
  %7887 = vrot.lane.b32.xlu0 %v7840, 127
  %v7888 = vpop.permute.xlu0 %7887
  %7889 = vrot.lane.b32.xlu0 %v7841, 127
  %v7890 = vpop.permute.xlu0 %7889
  %7891 = vrot.lane.b32.xlu0 %v7842, 127
  %v7892 = vpop.permute.xlu0 %7891
  %7893 = vrot.lane.b32.xlu0 %v7843, 127
  %v7894 = vpop.permute.xlu0 %7893
  %7895 = vrot.lane.b32.xlu0 %v7844, 127
  %v7896 = vpop.permute.xlu0 %7895
  %7897 = vrot.lane.b32.xlu0 %v7845, 127
  %v7898 = vpop.permute.xlu0 %7897
  %7899 = vrot.lane.b32.xlu0 %v7846, 127
  %v7900 = vpop.permute.xlu0 %7899
  %vm7901 = vcmask 1039360
  %v7902 = vsel %vm7901, %v7866, %v7868
  %v7903 = vsel %vm7901, %v7868, %v7870
  %v7904 = vsel %vm7901, %v7870, %v7872
  %v7905 = vsel %vm7901, %v7872, %v7874
  %v7906 = vsel %vm7901, %v7874, %v7876
  %v7907 = vsel %vm7901, %v7876, %v7878
  %v7908 = vsel %vm7901, %v7878, %v7880
  %v7909 = vsel %vm7901, %v7880, %v7882
  %v7910 = vsel %vm7901, %v7882, %v7884
  %v7911 = vsel %vm7901, %v7884, %v7886
  %v7912 = vsel %vm7901, %v7886, %v7888
  %v7913 = vsel %vm7901, %v7888, %v7890
  %v7914 = vsel %vm7901, %v7890, %v7892
  %v7915 = vsel %vm7901, %v7892, %v7894
  %v7916 = vsel %vm7901, %v7894, %v7896
  %v7917 = vsel %vm7901, %v7896, %v7898
  %v7918 = vsel %vm7901, %v7898, %v7900
  %v7937 = vmax.f32 %v7829, %v7902
  %v7938 = vmax.f32 %v7830, %v7903
  %v7939 = vmax.f32 %v7831, %v7904
  %v7940 = vmax.f32 %v7832, %v7905
  %v7941 = vmax.f32 %v7833, %v7906
  %v7942 = vmax.f32 %v7834, %v7907
  %v7943 = vmax.f32 %v7835, %v7908
  %v7944 = vmax.f32 %v7836, %v7909
  %v7945 = vmax.f32 %v7837, %v7910
  %v7946 = vmax.f32 %v7838, %v7911
  %v7947 = vmax.f32 %v7839, %v7912
  %v7948 = vmax.f32 %v7840, %v7913
  %v7949 = vmax.f32 %v7841, %v7914
  %v7950 = vmax.f32 %v7842, %v7915
  %v7951 = vmax.f32 %v7843, %v7916
  %v7952 = vmax.f32 %v7844, %v7917
  %v7953 = vmax.f32 %v7845, %v7918
  %v7954 = vmax.f32 %v7846, %v7900
  %7973 = vrot.lane.b32.xlu0 %v7937, 116
  %v7974 = vpop.permute.xlu0 %7973
  %7975 = vrot.lane.b32.xlu0 %v7938, 116
  %v7976 = vpop.permute.xlu0 %7975
  %7977 = vrot.lane.b32.xlu0 %v7939, 116
  %v7978 = vpop.permute.xlu0 %7977
  %7979 = vrot.lane.b32.xlu0 %v7940, 116
  %v7980 = vpop.permute.xlu0 %7979
  %7981 = vrot.lane.b32.xlu0 %v7941, 116
  %v7982 = vpop.permute.xlu0 %7981
  %7983 = vrot.lane.b32.xlu0 %v7942, 116
  %v7984 = vpop.permute.xlu0 %7983
  %7985 = vrot.lane.b32.xlu0 %v7943, 116
  %v7986 = vpop.permute.xlu0 %7985
  %7987 = vrot.lane.b32.xlu0 %v7944, 116
  %v7988 = vpop.permute.xlu0 %7987
  %7989 = vrot.lane.b32.xlu0 %v7945, 116
  %v7990 = vpop.permute.xlu0 %7989
  %7991 = vrot.lane.b32.xlu0 %v7946, 116
  %v7992 = vpop.permute.xlu0 %7991
  %7993 = vrot.lane.b32.xlu0 %v7947, 116
  %v7994 = vpop.permute.xlu0 %7993
  %7995 = vrot.lane.b32.xlu0 %v7948, 116
  %v7996 = vpop.permute.xlu0 %7995
  %7997 = vrot.lane.b32.xlu0 %v7949, 116
  %v7998 = vpop.permute.xlu0 %7997
  %7999 = vrot.lane.b32.xlu0 %v7950, 116
  %v8000 = vpop.permute.xlu0 %7999
  %8001 = vrot.lane.b32.xlu0 %v7951, 116
  %v8002 = vpop.permute.xlu0 %8001
  %8003 = vrot.lane.b32.xlu0 %v7952, 116
  %v8004 = vpop.permute.xlu0 %8003
  %8005 = vrot.lane.b32.xlu0 %v7953, 116
  %v8006 = vpop.permute.xlu0 %8005
  %8007 = vrot.lane.b32.xlu0 %v7954, 116
  %v8008 = vpop.permute.xlu0 %8007
  %vm8009 = vcmask 949248
  %v8010 = vsel %vm8009, %v7974, %v7976
  %v8011 = vsel %vm8009, %v7976, %v7978
  %v8012 = vsel %vm8009, %v7978, %v7980
  %v8013 = vsel %vm8009, %v7980, %v7982
  %v8014 = vsel %vm8009, %v7982, %v7984
  %v8015 = vsel %vm8009, %v7984, %v7986
  %v8016 = vsel %vm8009, %v7986, %v7988
  %v8017 = vsel %vm8009, %v7988, %v7990
  %v8018 = vsel %vm8009, %v7990, %v7992
  %v8019 = vsel %vm8009, %v7992, %v7994
  %v8020 = vsel %vm8009, %v7994, %v7996
  %v8021 = vsel %vm8009, %v7996, %v7998
  %v8022 = vsel %vm8009, %v7998, %v8000
  %v8023 = vsel %vm8009, %v8000, %v8002
  %v8024 = vsel %vm8009, %v8002, %v8004
  %v8025 = vsel %vm8009, %v8004, %v8006
  %v8026 = vsel %vm8009, %v8006, %v8008
  %v8045 = vmax.f32 %v7937, %v8010
  %v8046 = vmax.f32 %v7938, %v8011
  %v8047 = vmax.f32 %v7939, %v8012
  %v8048 = vmax.f32 %v7940, %v8013
  %v8049 = vmax.f32 %v7941, %v8014
  %v8050 = vmax.f32 %v7942, %v8015
  %v8051 = vmax.f32 %v7943, %v8016
  %v8052 = vmax.f32 %v7944, %v8017
  %v8053 = vmax.f32 %v7945, %v8018
  %v8054 = vmax.f32 %v7946, %v8019
  %v8055 = vmax.f32 %v7947, %v8020
  %v8056 = vmax.f32 %v7948, %v8021
  %v8057 = vmax.f32 %v7949, %v8022
  %v8058 = vmax.f32 %v7950, %v8023
  %v8059 = vmax.f32 %v7951, %v8024
  %v8060 = vmax.f32 %v7952, %v8025
  %v8061 = vmax.f32 %v7953, %v8026
  %v8062 = vmax.f32 %v7954, %v8008
  %v8063 = vld [vmem:[%s5] sm:$0xff]
  %v8064 = vld [vmem:[%s5 + $0x8] sm:$0xff]
  %v8065 = vld [vmem:[%s5 + $0x10] sm:$0xff]
  %v8066 = vld [vmem:[%s5 + $0x18] sm:$0xff]
  %v8067 = vld [vmem:[%s5 + $0x20] sm:$0xff]
  %v8068 = vld [vmem:[%s5 + $0x28] sm:$0xff]
  %v8069 = vld [vmem:[%s5 + $0x30] sm:$0xff]
  %v8070 = vld [vmem:[%s5 + $0x38] sm:$0xff]
  %v8071 = vld [vmem:[%s5 + $0x40] sm:$0xff]
  %v8072 = vld [vmem:[%s5 + $0x48] sm:$0xff]
  %v8073 = vld [vmem:[%s5 + $0x50] sm:$0xff]
  %v8074 = vld [vmem:[%s5 + $0x58] sm:$0xff]
  %v8075 = vld [vmem:[%s5 + $0x60] sm:$0xff]
  %v8076 = vld [vmem:[%s5 + $0x68] sm:$0xff]
  %v8077 = vld [vmem:[%s5 + $0x70] sm:$0xff]
  %v8078 = vld [vmem:[%s5 + $0x78] sm:$0xff]
  %v8079 = vld [vmem:[%s5 + $0x80] sm:$0xff]
  %v8080 = vld [vmem:[%s5 + $0x88] sm:$0xff]
  %v8081 = vld [vmem:[%s5 + $0x90] sm:$0xff]
  %v8082 = vld [vmem:[%s5 + $0x98] sm:$0xff]
  %v8083 = vld [vmem:[%s5 + $0xa0] sm:$0xff]
  %v8084 = vld [vmem:[%s5 + $0xa8] sm:$0xff]
  %v8085 = vld [vmem:[%s5 + $0xb0] sm:$0xff]
  %v8086 = vld [vmem:[%s5 + $0xb8] sm:$0xff]
  %v8087 = vld [vmem:[%s5 + $0xc0] sm:$0xff]
  %v8088 = vld [vmem:[%s5 + $0xc8] sm:$0xff]
  %v8089 = vld [vmem:[%s5 + $0xd0] sm:$0xff]
  %v8090 = vld [vmem:[%s5 + $0xd8] sm:$0xff]
  %v8091 = vld [vmem:[%s5 + $0xe0] sm:$0xff]
  %v8092 = vld [vmem:[%s5 + $0xe8] sm:$0xff]
  %v8093 = vld [vmem:[%s5 + $0xf0] sm:$0xff]
  %v8094 = vld [vmem:[%s5 + $0xf8] sm:$0xff]
  %v8095 = vld [vmem:[%s5 + $0x100] sm:$0xff]
  %v8096 = vld [vmem:[%s5 + $0x108] sm:$0xff]
  %v8097 = vld [vmem:[%s5 + $0x110] sm:$0xff]
  %v8098 = vld [vmem:[%s5 + $0x118] sm:$0xff]
  %v8099 = vld [vmem:[%s5 + $0x120] sm:$0xff]
  %v8100 = vld [vmem:[%s5 + $0x128] sm:$0xff]
  %v8101 = vld [vmem:[%s5 + $0x130] sm:$0xff]
  %v8102 = vld [vmem:[%s5 + $0x138] sm:$0xff]
  %v8103 = vld [vmem:[%s5 + $0x140] sm:$0xff]
  %v8104 = vld [vmem:[%s5 + $0x148] sm:$0xff]
  %v8105 = vld [vmem:[%s5 + $0x150] sm:$0xff]
  %v8106 = vld [vmem:[%s5 + $0x158] sm:$0xff]
  %v8107 = vld [vmem:[%s5 + $0x160] sm:$0xff]
  %v8108 = vld [vmem:[%s5 + $0x168] sm:$0xff]
  %v8109 = vld [vmem:[%s5 + $0x170] sm:$0xff]
  %v8110 = vld [vmem:[%s5 + $0x178] sm:$0xff]
  %v8111 = vld [vmem:[%s5 + $0x180] sm:$0xff]
  %v8112 = vld [vmem:[%s5 + $0x188] sm:$0xff]
  %v8113 = vld [vmem:[%s5 + $0x190] sm:$0xff]
  %v8114 = vld [vmem:[%s5 + $0x198] sm:$0xff]
  %v8115 = vld [vmem:[%s5 + $0x1a0] sm:$0xff]
  %v8116 = vld [vmem:[%s5 + $0x1a8] sm:$0xff]
  %v8117 = vld [vmem:[%s5 + $0x1b0] sm:$0xff]
  %v8118 = vld [vmem:[%s5 + $0x1b8] sm:$0xff]
  %v8119 = vld [vmem:[%s5 + $0x1c0] sm:$0xff]
  %v8120 = vld [vmem:[%s5 + $0x1c8] sm:$0xff]
  %v8121 = vld [vmem:[%s5 + $0x1d0] sm:$0xff]
  %v8122 = vld [vmem:[%s5 + $0x1d8] sm:$0xff]
  %v8123 = vld [vmem:[%s5 + $0x1e0] sm:$0xff]
  %v8124 = vld [vmem:[%s5 + $0x1e8] sm:$0xff]
  %v8125 = vld [vmem:[%s5 + $0x1f0] sm:$0xff]
  %v8126 = vld [vmem:[%s5 + $0x1f8] sm:$0xff]
  %v8127 = vld [vmem:[%s5 + $0x200] sm:$0xff]
  %v8128 = vld [vmem:[%s5 + $0x208] sm:$0xff]
  %v8129 = vld [vmem:[%s5 + $0x210] sm:$0xff]
  %v8130 = vld [vmem:[%s5 + $0x218] sm:$0xff]
  %v8131 = vld [vmem:[%s5 + $0x220] sm:$0xff]
  %v8132 = vld [vmem:[%s5 + $0x228] sm:$0xff]
  %v8133 = vld [vmem:[%s5 + $0x230] sm:$0xff]
  %v8134 = vld [vmem:[%s5 + $0x238] sm:$0xff]
  %v8135 = vld [vmem:[%s5 + $0x240] sm:$0xff]
  %v8136 = vld [vmem:[%s5 + $0x248] sm:$0xff]
  %v8137 = vld [vmem:[%s5 + $0x250] sm:$0xff]
  %v8138 = vld [vmem:[%s5 + $0x258] sm:$0xff]
  %v8139 = vld [vmem:[%s5 + $0x260] sm:$0xff]
  %v8140 = vld [vmem:[%s5 + $0x268] sm:$0xff]
  %v8141 = vld [vmem:[%s5 + $0x270] sm:$0xff]
  %v8142 = vld [vmem:[%s5 + $0x278] sm:$0xff]
  %v8143 = vld [vmem:[%s5 + $0x280] sm:$0xff]
  %v8144 = vld [vmem:[%s5 + $0x288] sm:$0xff]
  %v8145 = vld [vmem:[%s5 + $0x290] sm:$0xff]
  %v8146 = vld [vmem:[%s5 + $0x298] sm:$0xff]
  %v8147 = vld [vmem:[%s5 + $0x2a0] sm:$0xff]
  %v8148 = vld [vmem:[%s5 + $0x2a8] sm:$0xff]
  %v8149 = vld [vmem:[%s5 + $0x2b0] sm:$0xff]
  %v8150 = vld [vmem:[%s5 + $0x2b8] sm:$0xff]
  %v8151 = vld [vmem:[%s5 + $0x2c0] sm:$0xff]
  %v8152 = vld [vmem:[%s5 + $0x2c8] sm:$0xff]
  %v8153 = vld [vmem:[%s5 + $0x2d0] sm:$0xff]
  %v8154 = vld [vmem:[%s5 + $0x2d8] sm:$0xff]
  %v8155 = vld [vmem:[%s5 + $0x2e0] sm:$0xff]
  %v8156 = vld [vmem:[%s5 + $0x2e8] sm:$0xff]
  %v8157 = vld [vmem:[%s5 + $0x2f0] sm:$0xff]
  %v8158 = vld [vmem:[%s5 + $0x2f8] sm:$0xff]
  %v8159 = vld [vmem:[%s5 + $0x300] sm:$0xff]
  %v8160 = vld [vmem:[%s5 + $0x308] sm:$0xff]
  %v8161 = vld [vmem:[%s5 + $0x310] sm:$0xff]
  %v8162 = vld [vmem:[%s5 + $0x318] sm:$0xff]
  %v8163 = vld [vmem:[%s5 + $0x320] sm:$0xff]
  %v8164 = vld [vmem:[%s5 + $0x328] sm:$0xff]
  %v8165 = vld [vmem:[%s5 + $0x330] sm:$0xff]
  %v8166 = vld [vmem:[%s5 + $0x338] sm:$0xff]
  %v8167 = vld [vmem:[%s5 + $0x340] sm:$0xff]
  %v8168 = vld [vmem:[%s5 + $0x348] sm:$0xff]
  %v8169 = vld [vmem:[%s5 + $0x350] sm:$0xff]
  %v8170 = vld [vmem:[%s5 + $0x358] sm:$0xff]
  %v8171 = vld [vmem:[%s5 + $0x360] sm:$0xff]
  %v8172 = vld [vmem:[%s5 + $0x368] sm:$0xff]
  %v8173 = vld [vmem:[%s5 + $0x370] sm:$0xff]
  %v8174 = vld [vmem:[%s5 + $0x378] sm:$0xff]
  %v8175 = vld [vmem:[%s5 + $0x380] sm:$0xff]
  %v8176 = vld [vmem:[%s5 + $0x388] sm:$0xff]
  %v8177 = vld [vmem:[%s5 + $0x390] sm:$0xff]
  %v8178 = vld [vmem:[%s5 + $0x398] sm:$0xff]
  %v8179 = vld [vmem:[%s5 + $0x3a0] sm:$0xff]
  %v8180 = vld [vmem:[%s5 + $0x3a8] sm:$0xff]
  %v8181 = vld [vmem:[%s5 + $0x3b0] sm:$0xff]
  %v8182 = vld [vmem:[%s5 + $0x3b8] sm:$0xff]
  %v8183 = vld [vmem:[%s5 + $0x3c0] sm:$0xff]
  %v8184 = vld [vmem:[%s5 + $0x3c8] sm:$0xff]
  %v8185 = vld [vmem:[%s5 + $0x3d0] sm:$0xff]
  %v8186 = vld [vmem:[%s5 + $0x3d8] sm:$0xff]
  %v8187 = vld [vmem:[%s5 + $0x3e0] sm:$0xff]
  %v8188 = vld [vmem:[%s5 + $0x3e8] sm:$0xff]
  %v8189 = vld [vmem:[%s5 + $0x3f0] sm:$0xff]
  %v8190 = vld [vmem:[%s5 + $0x3f8] sm:$0xff]
  %v8191 = vld [vmem:[%s5 + $0x400] sm:$0xff]
  %v8192 = vld [vmem:[%s5 + $0x408] sm:$0xff]
  %v8193 = vld [vmem:[%s5 + $0x410] sm:$0xff]
  %v8194 = vld [vmem:[%s5 + $0x418] sm:$0xff]
  %v8195 = vld [vmem:[%s5 + $0x420] sm:$0xff]
  %v8196 = vld [vmem:[%s5 + $0x428] sm:$0xff]
  %v8197 = vld [vmem:[%s5 + $0x430] sm:$0xff]
  %v8198 = vld [vmem:[%s5 + $0x438] sm:$0xff]
  %v8199 = vld [vmem:[%s5 + $0x440] sm:$0xff]
  %v8200 = vld [vmem:[%s5 + $0x448] sm:$0xff]
  %v8201 = vld [vmem:[%s5 + $0x450] sm:$0xff]
  %v8202 = vld [vmem:[%s5 + $0x458] sm:$0xff]
  %v8203 = vld [vmem:[%s5 + $0x460] sm:$0xff]
  %v8204 = vld [vmem:[%s5 + $0x468] sm:$0xff]
  %v8205 = vld [vmem:[%s5 + $0x470] sm:$0xff]
  %v8206 = vld [vmem:[%s5 + $0x478] sm:$0xff]
  %v8207 = vld [vmem:[%s5 + $0x480] sm:$0xff]
  %v8208 = vld [vmem:[%s5 + $0x488] sm:$0xff]
  %v8209 = vld [vmem:[%s5 + $0x490] sm:$0xff]
  %v8210 = vld [vmem:[%s5 + $0x498] sm:$0xff]
  %v8211 = vld [vmem:[%s5 + $0x4a0] sm:$0xff]
  %v8212 = vld [vmem:[%s5 + $0x4a8] sm:$0xff]
  %v8213 = vld [vmem:[%s5 + $0x4b0] sm:$0xff]
  %v8214 = vld [vmem:[%s5 + $0x4b8] sm:$0xff]
  %v8215 = vld [vmem:[%s5 + $0x4c0] sm:$0xff]
  %v8216 = vld [vmem:[%s5 + $0x4c8] sm:$0xff]
  %v8217 = vld [vmem:[%s5 + $0x4d0] sm:$0xff]
  %v8218 = vld [vmem:[%s5 + $0x4d8] sm:$0xff]
  %v8219 = vld [vmem:[%s5 + $0x4e0] sm:$0xff]
  %v8220 = vld [vmem:[%s5 + $0x4e8] sm:$0xff]
  %v8221 = vld [vmem:[%s5 + $0x4f0] sm:$0xff]
  %v8222 = vld [vmem:[%s5 + $0x4f8] sm:$0xff]
  %v8223 = vld [vmem:[%s5 + $0x500] sm:$0xff]
  %v8224 = vld [vmem:[%s5 + $0x508] sm:$0xff]
  %v8225 = vld [vmem:[%s5 + $0x510] sm:$0xff]
  %v8226 = vld [vmem:[%s5 + $0x518] sm:$0xff]
  %v8227 = vld [vmem:[%s5 + $0x520] sm:$0xff]
  %v8228 = vld [vmem:[%s5 + $0x528] sm:$0xff]
  %v8229 = vld [vmem:[%s5 + $0x530] sm:$0xff]
  %v8230 = vld [vmem:[%s5 + $0x538] sm:$0xff]
  %v8231 = vld [vmem:[%s5 + $0x540] sm:$0xff]
  %v8232 = vld [vmem:[%s5 + $0x548] sm:$0xff]
  %v8233 = vld [vmem:[%s5 + $0x550] sm:$0xff]
  %v8234 = vld [vmem:[%s5 + $0x558] sm:$0xff]
  %v8235 = vld [vmem:[%s5 + $0x560] sm:$0xff]
  %v8236 = vld [vmem:[%s5 + $0x568] sm:$0xff]
  %v8237 = vld [vmem:[%s5 + $0x570] sm:$0xff]
  %v8238 = vld [vmem:[%s5 + $0x578] sm:$0xff]
  %v8239 = vld [vmem:[%s5 + $0x580] sm:$0xff]
  %v8240 = vld [vmem:[%s5 + $0x588] sm:$0xff]
  %v8241 = vld [vmem:[%s5 + $0x590] sm:$0xff]
  %v8242 = vld [vmem:[%s5 + $0x598] sm:$0xff]
  %v8243 = vld [vmem:[%s5 + $0x5a0] sm:$0xff]
  %v8244 = vld [vmem:[%s5 + $0x5a8] sm:$0xff]
  %v8245 = vld [vmem:[%s5 + $0x5b0] sm:$0xff]
  %v8246 = vld [vmem:[%s5 + $0x5b8] sm:$0xff]
  %v8247 = vld [vmem:[%s5 + $0x5c0] sm:$0xff]
  %v8248 = vld [vmem:[%s5 + $0x5c8] sm:$0xff]
  %v8249 = vld [vmem:[%s5 + $0x5d0] sm:$0xff]
  %v8250 = vld [vmem:[%s5 + $0x5d8] sm:$0xff]
  %v8251 = vld [vmem:[%s5 + $0x5e0] sm:$0xff]
  %v8252 = vld [vmem:[%s5 + $0x5e8] sm:$0xff]
  %v8253 = vld [vmem:[%s5 + $0x5f0] sm:$0xff]
  %v8254 = vld [vmem:[%s5 + $0x5f8] sm:$0xff]
  %v8255 = vld [vmem:[%s5 + $0x600] sm:$0xff]
  %v8256 = vld [vmem:[%s5 + $0x608] sm:$0xff]
  %v8257 = vld [vmem:[%s5 + $0x610] sm:$0xff]
  %v8258 = vld [vmem:[%s5 + $0x618] sm:$0xff]
  %v8259 = vld [vmem:[%s5 + $0x620] sm:$0xff]
  %v8260 = vld [vmem:[%s5 + $0x628] sm:$0xff]
  %v8261 = vld [vmem:[%s5 + $0x630] sm:$0xff]
  %v8262 = vld [vmem:[%s5 + $0x638] sm:$0xff]
  %v8263 = vld [vmem:[%s5 + $0x640] sm:$0xff]
  %v8264 = vld [vmem:[%s5 + $0x648] sm:$0xff]
  %v8265 = vld [vmem:[%s5 + $0x650] sm:$0xff]
  %v8266 = vld [vmem:[%s5 + $0x658] sm:$0xff]
  %v8267 = vld [vmem:[%s5 + $0x660] sm:$0xff]
  %v8268 = vld [vmem:[%s5 + $0x668] sm:$0xff]
  %v8269 = vld [vmem:[%s5 + $0x670] sm:$0xff]
  %v8270 = vld [vmem:[%s5 + $0x678] sm:$0xff]
  %v8271 = vld [vmem:[%s5 + $0x680] sm:$0xff]
  %v8272 = vld [vmem:[%s5 + $0x688] sm:$0xff]
  %v8273 = vld [vmem:[%s5 + $0x690] sm:$0xff]
  %v8274 = vld [vmem:[%s5 + $0x698] sm:$0xff]
  %v8275 = vld [vmem:[%s5 + $0x6a0] sm:$0xff]
  %v8276 = vld [vmem:[%s5 + $0x6a8] sm:$0xff]
  %v8277 = vld [vmem:[%s5 + $0x6b0] sm:$0xff]
  %v8278 = vld [vmem:[%s5 + $0x6b8] sm:$0xff]
  %v8279 = vld [vmem:[%s5 + $0x6c0] sm:$0xff]
  %v8280 = vld [vmem:[%s5 + $0x6c8] sm:$0xff]
  %v8281 = vld [vmem:[%s5 + $0x6d0] sm:$0xff]
  %v8282 = vld [vmem:[%s5 + $0x6d8] sm:$0xff]
  %v8283 = vld [vmem:[%s5 + $0x6e0] sm:$0xff]
  %v8284 = vld [vmem:[%s5 + $0x6e8] sm:$0xff]
  %v8285 = vld [vmem:[%s5 + $0x6f0] sm:$0xff]
  %v8286 = vld [vmem:[%s5 + $0x6f8] sm:$0xff]
  %v8287 = vld [vmem:[%s5 + $0x700] sm:$0xff]
  %v8288 = vld [vmem:[%s5 + $0x708] sm:$0xff]
  %v8289 = vld [vmem:[%s5 + $0x710] sm:$0xff]
  %v8290 = vld [vmem:[%s5 + $0x718] sm:$0xff]
  %v8291 = vld [vmem:[%s5 + $0x720] sm:$0xff]
  %v8292 = vld [vmem:[%s5 + $0x728] sm:$0xff]
  %v8293 = vld [vmem:[%s5 + $0x730] sm:$0xff]
  %v8294 = vld [vmem:[%s5 + $0x738] sm:$0xff]
  %v8295 = vld [vmem:[%s5 + $0x740] sm:$0xff]
  %v8296 = vld [vmem:[%s5 + $0x748] sm:$0xff]
  %v8297 = vld [vmem:[%s5 + $0x750] sm:$0xff]
  %v8298 = vld [vmem:[%s5 + $0x758] sm:$0xff]
  %v8299 = vld [vmem:[%s5 + $0x760] sm:$0xff]
  %v8300 = vld [vmem:[%s5 + $0x768] sm:$0xff]
  %v8301 = vld [vmem:[%s5 + $0x770] sm:$0xff]
  %v8302 = vld [vmem:[%s5 + $0x778] sm:$0xff]
  %v8303 = vld [vmem:[%s5 + $0x780] sm:$0xff]
  %v8304 = vld [vmem:[%s5 + $0x788] sm:$0xff]
  %v8305 = vld [vmem:[%s5 + $0x790] sm:$0xff]
  %v8306 = vld [vmem:[%s5 + $0x798] sm:$0xff]
  %v8307 = vld [vmem:[%s5 + $0x7a0] sm:$0xff]
  %v8308 = vld [vmem:[%s5 + $0x7a8] sm:$0xff]
  %v8309 = vld [vmem:[%s5 + $0x7b0] sm:$0xff]
  %v8310 = vld [vmem:[%s5 + $0x7b8] sm:$0xff]
  %v8311 = vld [vmem:[%s5 + $0x7c0] sm:$0xff]
  %v8312 = vld [vmem:[%s5 + $0x7c8] sm:$0xff]
  %v8313 = vld [vmem:[%s5 + $0x7d0] sm:$0xff]
  %v8314 = vld [vmem:[%s5 + $0x7d8] sm:$0xff]
  %v8315 = vld [vmem:[%s5 + $0x7e0] sm:$0xff]
  %v8316 = vld [vmem:[%s5 + $0x7e8] sm:$0xff]
  %v8317 = vld [vmem:[%s5 + $0x7f0] sm:$0xff]
  %v8318 = vld [vmem:[%s5 + $0x7f8] sm:$0xff]
  %v8319 = vld [vmem:[%s5 + $0x800] sm:$0xff]
  %v8320 = vld [vmem:[%s5 + $0x808] sm:$0xff]
  %v8321 = vld [vmem:[%s5 + $0x810] sm:$0xff]
  %v8322 = vld [vmem:[%s5 + $0x818] sm:$0xff]
  %v8323 = vld [vmem:[%s5 + $0x820] sm:$0xff]
  %v8324 = vld [vmem:[%s5 + $0x828] sm:$0xff]
  %v8325 = vld [vmem:[%s5 + $0x830] sm:$0xff]
  %v8326 = vld [vmem:[%s5 + $0x838] sm:$0xff]
  %v8327 = vld [vmem:[%s5 + $0x840] sm:$0xff]
  %v8328 = vld [vmem:[%s5 + $0x848] sm:$0xff]
  %v8329 = vld [vmem:[%s5 + $0x850] sm:$0xff]
  %v8330 = vld [vmem:[%s5 + $0x858] sm:$0xff]
  %v8331 = vld [vmem:[%s5 + $0x860] sm:$0xff]
  %v8332 = vld [vmem:[%s5 + $0x868] sm:$0xff]
  %v8333 = vld [vmem:[%s5 + $0x870] sm:$0xff]
  %v8334 = vld [vmem:[%s5 + $0x878] sm:$0xff]
  %v8335 = vld [vmem:[%s5 + $0x880] sm:$0xff]
  %v8336 = vld [vmem:[%s5 + $0x888] sm:$0xff]
  %v8337 = vld [vmem:[%s5 + $0x890] sm:$0xff]
  %v8338 = vld [vmem:[%s5 + $0x898] sm:$0xff]
  %v8339 = vld [vmem:[%s5 + $0x8a0] sm:$0xff]
  %v8340 = vld [vmem:[%s5 + $0x8a8] sm:$0xff]
  %v8341 = vld [vmem:[%s5 + $0x8b0] sm:$0xff]
  %v8342 = vld [vmem:[%s5 + $0x8b8] sm:$0xff]
  %v8343 = vld [vmem:[%s5 + $0x8c0] sm:$0xff]
  %v8344 = vld [vmem:[%s5 + $0x8c8] sm:$0xff]
  %v8345 = vld [vmem:[%s5 + $0x8d0] sm:$0xff]
  %v8346 = vld [vmem:[%s5 + $0x8d8] sm:$0xff]
  %v8347 = vld [vmem:[%s5 + $0x8e0] sm:$0xff]
  %v8348 = vld [vmem:[%s5 + $0x8e8] sm:$0xff]
  %v8349 = vld [vmem:[%s5 + $0x8f0] sm:$0x7]
  %v8350 = vld [vmem:[%s6] sm:$0x1]
  %v8352 = vlaneseq
  %v8353 = vshrl.u32 %v8352, 7
  %v8354 = vsub.s32 0, %v8353
  %v8355 = vrot.slane %v8350, %v8354
  %vm8357 = vcmask 941056
  %v8359 = vsel %vm8357, %v8062, 0
  %vm8361 = vcmask 1042432
  %v8363 = vsel %vm8361, %v8349, 0
  %8365 = vmatprep.subr.mxu0 0.0
  %8366 = vmatpush1.msra.mxu0 %v8063
  %8367 = vmatprep.subr.mxu0 0.0
  %8368 = vmatpush1.msra.mxu0 %v8064
  %8369 = vmatprep.subr.mxu0 0.0
  %8370 = vmatpush1.msra.mxu0 %v8065
  %8371 = vmatprep.subr.mxu0 0.0
  %8372 = vmatpush1.msra.mxu0 %v8066
  %8373 = vmatprep.subr.mxu0 0.0
  %8374 = vmatpush1.msra.mxu0 %v8067
  %8375 = vmatprep.subr.mxu0 0.0
  %8376 = vmatpush1.msra.mxu0 %v8068
  %8377 = vmatprep.subr.mxu0 0.0
  %8378 = vmatpush1.msra.mxu0 %v8069
  %8379 = vmatprep.subr.mxu0 0.0
  %8380 = vmatpush1.msra.mxu0 %v8070
  %8381 = vmatprep.subr.mxu0 0.0
  %8382 = vmatpush1.msra.mxu0 %v8071
  %8383 = vmatprep.subr.mxu0 0.0
  %8384 = vmatpush1.msra.mxu0 %v8072
  %8385 = vmatprep.subr.mxu0 0.0
  %8386 = vmatpush1.msra.mxu0 %v8073
  %8387 = vmatprep.subr.mxu0 0.0
  %8388 = vmatpush1.msra.mxu0 %v8074
  %8389 = vmatprep.subr.mxu0 0.0
  %8390 = vmatpush1.msra.mxu0 %v8075
  %8391 = vmatprep.subr.mxu0 0.0
  %8392 = vmatpush1.msra.mxu0 %v8076
  %8393 = vmatprep.subr.mxu0 0.0
  %8394 = vmatpush1.msra.mxu0 %v8077
  %8395 = vmatprep.subr.mxu0 0.0
  %8396 = vmatpush1.msra.mxu0 %v8078
  %8397 = vmatprep.subr.mxu0 0.0
  %8398 = vmatpush1.msra.mxu0 %v8079
  %8399 = vmatprep.subr.mxu0 0.0
  %8400 = vmatpush1.msra.mxu0 %v8080
  %8401 = vmatprep.subr.mxu0 0.0
  %8402 = vmatpush1.msra.mxu0 %v8081
  %8403 = vmatprep.subr.mxu0 0.0
  %8404 = vmatpush1.msra.mxu0 %v8082
  %8405 = vmatprep.subr.mxu0 0.0
  %8406 = vmatpush1.msra.mxu0 %v8083
  %8407 = vmatprep.subr.mxu0 0.0
  %8408 = vmatpush1.msra.mxu0 %v8084
  %8409 = vmatprep.subr.mxu0 0.0
  %8410 = vmatpush1.msra.mxu0 %v8085
  %8411 = vmatprep.subr.mxu0 0.0
  %8412 = vmatpush1.msra.mxu0 %v8086
  %8413 = vmatprep.subr.mxu0 0.0
  %8414 = vmatpush1.msra.mxu0 %v8087
  %8415 = vmatprep.subr.mxu0 0.0
  %8416 = vmatpush1.msra.mxu0 %v8088
  %8417 = vmatprep.subr.mxu0 0.0
  %8418 = vmatpush1.msra.mxu0 %v8089
  %8419 = vmatprep.subr.mxu0 0.0
  %8420 = vmatpush1.msra.mxu0 %v8090
  %8421 = vmatprep.subr.mxu0 0.0
  %8422 = vmatpush1.msra.mxu0 %v8091
  %8423 = vmatprep.subr.mxu0 0.0
  %8424 = vmatpush1.msra.mxu0 %v8092
  %8425 = vmatprep.subr.mxu0 0.0
  %8426 = vmatpush1.msra.mxu0 %v8093
  %8427 = vmatprep.subr.mxu0 0.0
  %8428 = vmatpush1.msra.mxu0 %v8094
  %8429 = vmatprep.mubr.f32.mxu0 %v8046
  %8430 = vmatmul.mubr.f32.gmra.mrb[0].mxu0 %v8045
  %v8431 = vpop.f32.mrb[0].mxu0
  %v8432 = vadd.f32 %v8355, %v8431
  %v8433 = vpop.f32.mrb[0].mxu0
  %8434 = vdwg.mxu0
  %8435 = vmatprep.subr.mxu0 0.0
  %8436 = vmatpush1.msra.mxu0 %v8095
  %8437 = vmatprep.subr.mxu0 0.0
  %8438 = vmatpush1.msra.mxu0 %v8096
  %8439 = vmatprep.subr.mxu0 0.0
  %8440 = vmatpush1.msra.mxu0 %v8097
  %8441 = vmatprep.subr.mxu0 0.0
  %8442 = vmatpush1.msra.mxu0 %v8098
  %8443 = vmatprep.subr.mxu0 0.0
  %8444 = vmatpush1.msra.mxu0 %v8099
  %8445 = vmatprep.subr.mxu0 0.0
  %8446 = vmatpush1.msra.mxu0 %v8100
  %8447 = vmatprep.subr.mxu0 0.0
  %8448 = vmatpush1.msra.mxu0 %v8101
  %8449 = vmatprep.subr.mxu0 0.0
  %8450 = vmatpush1.msra.mxu0 %v8102
  %8451 = vmatprep.subr.mxu0 0.0
  %8452 = vmatpush1.msra.mxu0 %v8103
  %8453 = vmatprep.subr.mxu0 0.0
  %8454 = vmatpush1.msra.mxu0 %v8104
  %8455 = vmatprep.subr.mxu0 0.0
  %8456 = vmatpush1.msra.mxu0 %v8105
  %8457 = vmatprep.subr.mxu0 0.0
  %8458 = vmatpush1.msra.mxu0 %v8106
  %8459 = vmatprep.subr.mxu0 0.0
  %8460 = vmatpush1.msra.mxu0 %v8107
  %8461 = vmatprep.subr.mxu0 0.0
  %8462 = vmatpush1.msra.mxu0 %v8108
  %8463 = vmatprep.subr.mxu0 0.0
  %8464 = vmatpush1.msra.mxu0 %v8109
  %8465 = vmatprep.subr.mxu0 0.0
  %8466 = vmatpush1.msra.mxu0 %v8110
  %8467 = vmatprep.subr.mxu0 0.0
  %8468 = vmatpush1.msra.mxu0 %v8111
  %8469 = vmatprep.subr.mxu0 0.0
  %8470 = vmatpush1.msra.mxu0 %v8112
  %8471 = vmatprep.subr.mxu0 0.0
  %8472 = vmatpush1.msra.mxu0 %v8113
  %8473 = vmatprep.subr.mxu0 0.0
  %8474 = vmatpush1.msra.mxu0 %v8114
  %8475 = vmatprep.subr.mxu0 0.0
  %8476 = vmatpush1.msra.mxu0 %v8115
  %8477 = vmatprep.subr.mxu0 0.0
  %8478 = vmatpush1.msra.mxu0 %v8116
  %8479 = vmatprep.subr.mxu0 0.0
  %8480 = vmatpush1.msra.mxu0 %v8117
  %8481 = vmatprep.subr.mxu0 0.0
  %8482 = vmatpush1.msra.mxu0 %v8118
  %8483 = vmatprep.subr.mxu0 0.0
  %8484 = vmatpush1.msra.mxu0 %v8119
  %8485 = vmatprep.subr.mxu0 0.0
  %8486 = vmatpush1.msra.mxu0 %v8120
  %8487 = vmatprep.subr.mxu0 0.0
  %8488 = vmatpush1.msra.mxu0 %v8121
  %8489 = vmatprep.subr.mxu0 0.0
  %8490 = vmatpush1.msra.mxu0 %v8122
  %8491 = vmatprep.subr.mxu0 0.0
  %8492 = vmatpush1.msra.mxu0 %v8123
  %8493 = vmatprep.subr.mxu0 0.0
  %8494 = vmatpush1.msra.mxu0 %v8124
  %8495 = vmatprep.subr.mxu0 0.0
  %8496 = vmatpush1.msra.mxu0 %v8125
  %8497 = vmatprep.subr.mxu0 0.0
  %8498 = vmatpush1.msra.mxu0 %v8126
  %8499 = vmatprep.mubr.f32.mxu0 %v8048
  %8500 = vmatmul.mubr.f32.gmra.mrb[0].mxu0 %v8047
  %v8501 = vpop.f32.mrb[0].mxu0
  %v8502 = vadd.f32 %v8432, %v8501
  %v8503 = vpop.f32.mrb[0].mxu0
  %8504 = vdwg.mxu0
  %8505 = vmatprep.subr.mxu0 0.0
  %8506 = vmatpush1.msra.mxu0 %v8127
  %8507 = vmatprep.subr.mxu0 0.0
  %8508 = vmatpush1.msra.mxu0 %v8128
  %8509 = vmatprep.subr.mxu0 0.0
  %8510 = vmatpush1.msra.mxu0 %v8129
  %8511 = vmatprep.subr.mxu0 0.0
  %8512 = vmatpush1.msra.mxu0 %v8130
  %8513 = vmatprep.subr.mxu0 0.0
  %8514 = vmatpush1.msra.mxu0 %v8131
  %8515 = vmatprep.subr.mxu0 0.0
  %8516 = vmatpush1.msra.mxu0 %v8132
  %8517 = vmatprep.subr.mxu0 0.0
  %8518 = vmatpush1.msra.mxu0 %v8133
  %8519 = vmatprep.subr.mxu0 0.0
  %8520 = vmatpush1.msra.mxu0 %v8134
  %8521 = vmatprep.subr.mxu0 0.0
  %8522 = vmatpush1.msra.mxu0 %v8135
  %8523 = vmatprep.subr.mxu0 0.0
  %8524 = vmatpush1.msra.mxu0 %v8136
  %8525 = vmatprep.subr.mxu0 0.0
  %8526 = vmatpush1.msra.mxu0 %v8137
  %8527 = vmatprep.subr.mxu0 0.0
  %8528 = vmatpush1.msra.mxu0 %v8138
  %8529 = vmatprep.subr.mxu0 0.0
  %8530 = vmatpush1.msra.mxu0 %v8139
  %8531 = vmatprep.subr.mxu0 0.0
  %8532 = vmatpush1.msra.mxu0 %v8140
  %8533 = vmatprep.subr.mxu0 0.0
  %8534 = vmatpush1.msra.mxu0 %v8141
  %8535 = vmatprep.subr.mxu0 0.0
  %8536 = vmatpush1.msra.mxu0 %v8142
  %8537 = vmatprep.subr.mxu0 0.0
  %8538 = vmatpush1.msra.mxu0 %v8143
  %8539 = vmatprep.subr.mxu0 0.0
  %8540 = vmatpush1.msra.mxu0 %v8144
  %8541 = vmatprep.subr.mxu0 0.0
  %8542 = vmatpush1.msra.mxu0 %v8145
  %8543 = vmatprep.subr.mxu0 0.0
  %8544 = vmatpush1.msra.mxu0 %v8146
  %8545 = vmatprep.subr.mxu0 0.0
  %8546 = vmatpush1.msra.mxu0 %v8147
  %8547 = vmatprep.subr.mxu0 0.0
  %8548 = vmatpush1.msra.mxu0 %v8148
  %8549 = vmatprep.subr.mxu0 0.0
  %8550 = vmatpush1.msra.mxu0 %v8149
  %8551 = vmatprep.subr.mxu0 0.0
  %8552 = vmatpush1.msra.mxu0 %v8150
  %8553 = vmatprep.subr.mxu0 0.0
  %8554 = vmatpush1.msra.mxu0 %v8151
  %8555 = vmatprep.subr.mxu0 0.0
  %8556 = vmatpush1.msra.mxu0 %v8152
  %8557 = vmatprep.subr.mxu0 0.0
  %8558 = vmatpush1.msra.mxu0 %v8153
  %8559 = vmatprep.subr.mxu0 0.0
  %8560 = vmatpush1.msra.mxu0 %v8154
  %8561 = vmatprep.subr.mxu0 0.0
  %8562 = vmatpush1.msra.mxu0 %v8155
  %8563 = vmatprep.subr.mxu0 0.0
  %8564 = vmatpush1.msra.mxu0 %v8156
  %8565 = vmatprep.subr.mxu0 0.0
  %8566 = vmatpush1.msra.mxu0 %v8157
  %8567 = vmatprep.subr.mxu0 0.0
  %8568 = vmatpush1.msra.mxu0 %v8158
  %8569 = vmatprep.mubr.f32.mxu0 %v8050
  %8570 = vmatmul.mubr.f32.gmra.mrb[0].mxu0 %v8049
  %v8571 = vpop.f32.mrb[0].mxu0
  %v8572 = vadd.f32 %v8502, %v8571
  %v8573 = vpop.f32.mrb[0].mxu0
  %8574 = vdwg.mxu0
  %8575 = vmatprep.subr.mxu0 0.0
  %8576 = vmatpush1.msra.mxu0 %v8159
  %8577 = vmatprep.subr.mxu0 0.0
  %8578 = vmatpush1.msra.mxu0 %v8160
  %8579 = vmatprep.subr.mxu0 0.0
  %8580 = vmatpush1.msra.mxu0 %v8161
  %8581 = vmatprep.subr.mxu0 0.0
  %8582 = vmatpush1.msra.mxu0 %v8162
  %8583 = vmatprep.subr.mxu0 0.0
  %8584 = vmatpush1.msra.mxu0 %v8163
  %8585 = vmatprep.subr.mxu0 0.0
  %8586 = vmatpush1.msra.mxu0 %v8164
  %8587 = vmatprep.subr.mxu0 0.0
  %8588 = vmatpush1.msra.mxu0 %v8165
  %8589 = vmatprep.subr.mxu0 0.0
  %8590 = vmatpush1.msra.mxu0 %v8166
  %8591 = vmatprep.subr.mxu0 0.0
  %8592 = vmatpush1.msra.mxu0 %v8167
  %8593 = vmatprep.subr.mxu0 0.0
  %8594 = vmatpush1.msra.mxu0 %v8168
  %8595 = vmatprep.subr.mxu0 0.0
  %8596 = vmatpush1.msra.mxu0 %v8169
  %8597 = vmatprep.subr.mxu0 0.0
  %8598 = vmatpush1.msra.mxu0 %v8170
  %8599 = vmatprep.subr.mxu0 0.0
  %8600 = vmatpush1.msra.mxu0 %v8171
  %8601 = vmatprep.subr.mxu0 0.0
  %8602 = vmatpush1.msra.mxu0 %v8172
  %8603 = vmatprep.subr.mxu0 0.0
  %8604 = vmatpush1.msra.mxu0 %v8173
  %8605 = vmatprep.subr.mxu0 0.0
  %8606 = vmatpush1.msra.mxu0 %v8174
  %8607 = vmatprep.subr.mxu0 0.0
  %8608 = vmatpush1.msra.mxu0 %v8175
  %8609 = vmatprep.subr.mxu0 0.0
  %8610 = vmatpush1.msra.mxu0 %v8176
  %8611 = vmatprep.subr.mxu0 0.0
  %8612 = vmatpush1.msra.mxu0 %v8177
  %8613 = vmatprep.subr.mxu0 0.0
  %8614 = vmatpush1.msra.mxu0 %v8178
  %8615 = vmatprep.subr.mxu0 0.0
  %8616 = vmatpush1.msra.mxu0 %v8179
  %8617 = vmatprep.subr.mxu0 0.0
  %8618 = vmatpush1.msra.mxu0 %v8180
  %8619 = vmatprep.subr.mxu0 0.0
  %8620 = vmatpush1.msra.mxu0 %v8181
  %8621 = vmatprep.subr.mxu0 0.0
  %8622 = vmatpush1.msra.mxu0 %v8182
  %8623 = vmatprep.subr.mxu0 0.0
  %8624 = vmatpush1.msra.mxu0 %v8183
  %8625 = vmatprep.subr.mxu0 0.0
  %8626 = vmatpush1.msra.mxu0 %v8184
  %8627 = vmatprep.subr.mxu0 0.0
  %8628 = vmatpush1.msra.mxu0 %v8185
  %8629 = vmatprep.subr.mxu0 0.0
  %8630 = vmatpush1.msra.mxu0 %v8186
  %8631 = vmatprep.subr.mxu0 0.0
  %8632 = vmatpush1.msra.mxu0 %v8187
  %8633 = vmatprep.subr.mxu0 0.0
  %8634 = vmatpush1.msra.mxu0 %v8188
  %8635 = vmatprep.subr.mxu0 0.0
  %8636 = vmatpush1.msra.mxu0 %v8189
  %8637 = vmatprep.subr.mxu0 0.0
  %8638 = vmatpush1.msra.mxu0 %v8190
  %8639 = vmatprep.mubr.f32.mxu0 %v8052
  %8640 = vmatmul.mubr.f32.gmra.mrb[0].mxu0 %v8051
  %v8641 = vpop.f32.mrb[0].mxu0
  %v8642 = vadd.f32 %v8572, %v8641
  %v8643 = vpop.f32.mrb[0].mxu0
  %8644 = vdwg.mxu0
  %8645 = vmatprep.subr.mxu0 0.0
  %8646 = vmatpush1.msra.mxu0 %v8191
  %8647 = vmatprep.subr.mxu0 0.0
  %8648 = vmatpush1.msra.mxu0 %v8192
  %8649 = vmatprep.subr.mxu0 0.0
  %8650 = vmatpush1.msra.mxu0 %v8193
  %8651 = vmatprep.subr.mxu0 0.0
  %8652 = vmatpush1.msra.mxu0 %v8194
  %8653 = vmatprep.subr.mxu0 0.0
  %8654 = vmatpush1.msra.mxu0 %v8195
  %8655 = vmatprep.subr.mxu0 0.0
  %8656 = vmatpush1.msra.mxu0 %v8196
  %8657 = vmatprep.subr.mxu0 0.0
  %8658 = vmatpush1.msra.mxu0 %v8197
  %8659 = vmatprep.subr.mxu0 0.0
  %8660 = vmatpush1.msra.mxu0 %v8198
  %8661 = vmatprep.subr.mxu0 0.0
  %8662 = vmatpush1.msra.mxu0 %v8199
  %8663 = vmatprep.subr.mxu0 0.0
  %8664 = vmatpush1.msra.mxu0 %v8200
  %8665 = vmatprep.subr.mxu0 0.0
  %8666 = vmatpush1.msra.mxu0 %v8201
  %8667 = vmatprep.subr.mxu0 0.0
  %8668 = vmatpush1.msra.mxu0 %v8202
  %8669 = vmatprep.subr.mxu0 0.0
  %8670 = vmatpush1.msra.mxu0 %v8203
  %8671 = vmatprep.subr.mxu0 0.0
  %8672 = vmatpush1.msra.mxu0 %v8204
  %8673 = vmatprep.subr.mxu0 0.0
  %8674 = vmatpush1.msra.mxu0 %v8205
  %8675 = vmatprep.subr.mxu0 0.0
  %8676 = vmatpush1.msra.mxu0 %v8206
  %8677 = vmatprep.subr.mxu0 0.0
  %8678 = vmatpush1.msra.mxu0 %v8207
  %8679 = vmatprep.subr.mxu0 0.0
  %8680 = vmatpush1.msra.mxu0 %v8208
  %8681 = vmatprep.subr.mxu0 0.0
  %8682 = vmatpush1.msra.mxu0 %v8209
  %8683 = vmatprep.subr.mxu0 0.0
  %8684 = vmatpush1.msra.mxu0 %v8210
  %8685 = vmatprep.subr.mxu0 0.0
  %8686 = vmatpush1.msra.mxu0 %v8211
  %8687 = vmatprep.subr.mxu0 0.0
  %8688 = vmatpush1.msra.mxu0 %v8212
  %8689 = vmatprep.subr.mxu0 0.0
  %8690 = vmatpush1.msra.mxu0 %v8213
  %8691 = vmatprep.subr.mxu0 0.0
  %8692 = vmatpush1.msra.mxu0 %v8214
  %8693 = vmatprep.subr.mxu0 0.0
  %8694 = vmatpush1.msra.mxu0 %v8215
  %8695 = vmatprep.subr.mxu0 0.0
  %8696 = vmatpush1.msra.mxu0 %v8216
  %8697 = vmatprep.subr.mxu0 0.0
  %8698 = vmatpush1.msra.mxu0 %v8217
  %8699 = vmatprep.subr.mxu0 0.0
  %8700 = vmatpush1.msra.mxu0 %v8218
  %8701 = vmatprep.subr.mxu0 0.0
  %8702 = vmatpush1.msra.mxu0 %v8219
  %8703 = vmatprep.subr.mxu0 0.0
  %8704 = vmatpush1.msra.mxu0 %v8220
  %8705 = vmatprep.subr.mxu0 0.0
  %8706 = vmatpush1.msra.mxu0 %v8221
  %8707 = vmatprep.subr.mxu0 0.0
  %8708 = vmatpush1.msra.mxu0 %v8222
  %8709 = vmatprep.mubr.f32.mxu0 %v8054
  %8710 = vmatmul.mubr.f32.gmra.mrb[0].mxu0 %v8053
  %v8711 = vpop.f32.mrb[0].mxu0
  %v8712 = vadd.f32 %v8642, %v8711
  %v8713 = vpop.f32.mrb[0].mxu0
  %8714 = vdwg.mxu0
  %8715 = vmatprep.subr.mxu0 0.0
  %8716 = vmatpush1.msra.mxu0 %v8223
  %8717 = vmatprep.subr.mxu0 0.0
  %8718 = vmatpush1.msra.mxu0 %v8224
  %8719 = vmatprep.subr.mxu0 0.0
  %8720 = vmatpush1.msra.mxu0 %v8225
  %8721 = vmatprep.subr.mxu0 0.0
  %8722 = vmatpush1.msra.mxu0 %v8226
  %8723 = vmatprep.subr.mxu0 0.0
  %8724 = vmatpush1.msra.mxu0 %v8227
  %8725 = vmatprep.subr.mxu0 0.0
  %8726 = vmatpush1.msra.mxu0 %v8228
  %8727 = vmatprep.subr.mxu0 0.0
  %8728 = vmatpush1.msra.mxu0 %v8229
  %8729 = vmatprep.subr.mxu0 0.0
  %8730 = vmatpush1.msra.mxu0 %v8230
  %8731 = vmatprep.subr.mxu0 0.0
  %8732 = vmatpush1.msra.mxu0 %v8231
  %8733 = vmatprep.subr.mxu0 0.0
  %8734 = vmatpush1.msra.mxu0 %v8232
  %8735 = vmatprep.subr.mxu0 0.0
  %8736 = vmatpush1.msra.mxu0 %v8233
  %8737 = vmatprep.subr.mxu0 0.0
  %8738 = vmatpush1.msra.mxu0 %v8234
  %8739 = vmatprep.subr.mxu0 0.0
  %8740 = vmatpush1.msra.mxu0 %v8235
  %8741 = vmatprep.subr.mxu0 0.0
  %8742 = vmatpush1.msra.mxu0 %v8236
  %8743 = vmatprep.subr.mxu0 0.0
  %8744 = vmatpush1.msra.mxu0 %v8237
  %8745 = vmatprep.subr.mxu0 0.0
  %8746 = vmatpush1.msra.mxu0 %v8238
  %8747 = vmatprep.subr.mxu0 0.0
  %8748 = vmatpush1.msra.mxu0 %v8239
  %8749 = vmatprep.subr.mxu0 0.0
  %8750 = vmatpush1.msra.mxu0 %v8240
  %8751 = vmatprep.subr.mxu0 0.0
  %8752 = vmatpush1.msra.mxu0 %v8241
  %8753 = vmatprep.subr.mxu0 0.0
  %8754 = vmatpush1.msra.mxu0 %v8242
  %8755 = vmatprep.subr.mxu0 0.0
  %8756 = vmatpush1.msra.mxu0 %v8243
  %8757 = vmatprep.subr.mxu0 0.0
  %8758 = vmatpush1.msra.mxu0 %v8244
  %8759 = vmatprep.subr.mxu0 0.0
  %8760 = vmatpush1.msra.mxu0 %v8245
  %8761 = vmatprep.subr.mxu0 0.0
  %8762 = vmatpush1.msra.mxu0 %v8246
  %8763 = vmatprep.subr.mxu0 0.0
  %8764 = vmatpush1.msra.mxu0 %v8247
  %8765 = vmatprep.subr.mxu0 0.0
  %8766 = vmatpush1.msra.mxu0 %v8248
  %8767 = vmatprep.subr.mxu0 0.0
  %8768 = vmatpush1.msra.mxu0 %v8249
  %8769 = vmatprep.subr.mxu0 0.0
  %8770 = vmatpush1.msra.mxu0 %v8250
  %8771 = vmatprep.subr.mxu0 0.0
  %8772 = vmatpush1.msra.mxu0 %v8251
  %8773 = vmatprep.subr.mxu0 0.0
  %8774 = vmatpush1.msra.mxu0 %v8252
  %8775 = vmatprep.subr.mxu0 0.0
  %8776 = vmatpush1.msra.mxu0 %v8253
  %8777 = vmatprep.subr.mxu0 0.0
  %8778 = vmatpush1.msra.mxu0 %v8254
  %8779 = vmatprep.mubr.f32.mxu0 %v8056
  %8780 = vmatmul.mubr.f32.gmra.mrb[0].mxu0 %v8055
  %v8781 = vpop.f32.mrb[0].mxu0
  %v8782 = vadd.f32 %v8712, %v8781
  %v8783 = vpop.f32.mrb[0].mxu0
  %8784 = vdwg.mxu0
  %8785 = vmatprep.subr.mxu0 0.0
  %8786 = vmatpush1.msra.mxu0 %v8255
  %8787 = vmatprep.subr.mxu0 0.0
  %8788 = vmatpush1.msra.mxu0 %v8256
  %8789 = vmatprep.subr.mxu0 0.0
  %8790 = vmatpush1.msra.mxu0 %v8257
  %8791 = vmatprep.subr.mxu0 0.0
  %8792 = vmatpush1.msra.mxu0 %v8258
  %8793 = vmatprep.subr.mxu0 0.0
  %8794 = vmatpush1.msra.mxu0 %v8259
  %8795 = vmatprep.subr.mxu0 0.0
  %8796 = vmatpush1.msra.mxu0 %v8260
  %8797 = vmatprep.subr.mxu0 0.0
  %8798 = vmatpush1.msra.mxu0 %v8261
  %8799 = vmatprep.subr.mxu0 0.0
  %8800 = vmatpush1.msra.mxu0 %v8262
  %8801 = vmatprep.subr.mxu0 0.0
  %8802 = vmatpush1.msra.mxu0 %v8263
  %8803 = vmatprep.subr.mxu0 0.0
  %8804 = vmatpush1.msra.mxu0 %v8264
  %8805 = vmatprep.subr.mxu0 0.0
  %8806 = vmatpush1.msra.mxu0 %v8265
  %8807 = vmatprep.subr.mxu0 0.0
  %8808 = vmatpush1.msra.mxu0 %v8266
  %8809 = vmatprep.subr.mxu0 0.0
  %8810 = vmatpush1.msra.mxu0 %v8267
  %8811 = vmatprep.subr.mxu0 0.0
  %8812 = vmatpush1.msra.mxu0 %v8268
  %8813 = vmatprep.subr.mxu0 0.0
  %8814 = vmatpush1.msra.mxu0 %v8269
  %8815 = vmatprep.subr.mxu0 0.0
  %8816 = vmatpush1.msra.mxu0 %v8270
  %8817 = vmatprep.subr.mxu0 0.0
  %8818 = vmatpush1.msra.mxu0 %v8271
  %8819 = vmatprep.subr.mxu0 0.0
  %8820 = vmatpush1.msra.mxu0 %v8272
  %8821 = vmatprep.subr.mxu0 0.0
  %8822 = vmatpush1.msra.mxu0 %v8273
  %8823 = vmatprep.subr.mxu0 0.0
  %8824 = vmatpush1.msra.mxu0 %v8274
  %8825 = vmatprep.subr.mxu0 0.0
  %8826 = vmatpush1.msra.mxu0 %v8275
  %8827 = vmatprep.subr.mxu0 0.0
  %8828 = vmatpush1.msra.mxu0 %v8276
  %8829 = vmatprep.subr.mxu0 0.0
  %8830 = vmatpush1.msra.mxu0 %v8277
  %8831 = vmatprep.subr.mxu0 0.0
  %8832 = vmatpush1.msra.mxu0 %v8278
  %8833 = vmatprep.subr.mxu0 0.0
  %8834 = vmatpush1.msra.mxu0 %v8279
  %8835 = vmatprep.subr.mxu0 0.0
  %8836 = vmatpush1.msra.mxu0 %v8280
  %8837 = vmatprep.subr.mxu0 0.0
  %8838 = vmatpush1.msra.mxu0 %v8281
  %8839 = vmatprep.subr.mxu0 0.0
  %8840 = vmatpush1.msra.mxu0 %v8282
  %8841 = vmatprep.subr.mxu0 0.0
  %8842 = vmatpush1.msra.mxu0 %v8283
  %8843 = vmatprep.subr.mxu0 0.0
  %8844 = vmatpush1.msra.mxu0 %v8284
  %8845 = vmatprep.subr.mxu0 0.0
  %8846 = vmatpush1.msra.mxu0 %v8285
  %8847 = vmatprep.subr.mxu0 0.0
  %8848 = vmatpush1.msra.mxu0 %v8286
  %8849 = vmatprep.mubr.f32.mxu0 %v8058
  %8850 = vmatmul.mubr.f32.gmra.mrb[0].mxu0 %v8057
  %v8851 = vpop.f32.mrb[0].mxu0
  %v8852 = vadd.f32 %v8782, %v8851
  %v8853 = vpop.f32.mrb[0].mxu0
  %8854 = vdwg.mxu0
  %8855 = vmatprep.subr.mxu0 0.0
  %8856 = vmatpush1.msra.mxu0 %v8287
  %8857 = vmatprep.subr.mxu0 0.0
  %8858 = vmatpush1.msra.mxu0 %v8288
  %8859 = vmatprep.subr.mxu0 0.0
  %8860 = vmatpush1.msra.mxu0 %v8289
  %8861 = vmatprep.subr.mxu0 0.0
  %8862 = vmatpush1.msra.mxu0 %v8290
  %8863 = vmatprep.subr.mxu0 0.0
  %8864 = vmatpush1.msra.mxu0 %v8291
  %8865 = vmatprep.subr.mxu0 0.0
  %8866 = vmatpush1.msra.mxu0 %v8292
  %8867 = vmatprep.subr.mxu0 0.0
  %8868 = vmatpush1.msra.mxu0 %v8293
  %8869 = vmatprep.subr.mxu0 0.0
  %8870 = vmatpush1.msra.mxu0 %v8294
  %8871 = vmatprep.subr.mxu0 0.0
  %8872 = vmatpush1.msra.mxu0 %v8295
  %8873 = vmatprep.subr.mxu0 0.0
  %8874 = vmatpush1.msra.mxu0 %v8296
  %8875 = vmatprep.subr.mxu0 0.0
  %8876 = vmatpush1.msra.mxu0 %v8297
  %8877 = vmatprep.subr.mxu0 0.0
  %8878 = vmatpush1.msra.mxu0 %v8298
  %8879 = vmatprep.subr.mxu0 0.0
  %8880 = vmatpush1.msra.mxu0 %v8299
  %8881 = vmatprep.subr.mxu0 0.0
  %8882 = vmatpush1.msra.mxu0 %v8300
  %8883 = vmatprep.subr.mxu0 0.0
  %8884 = vmatpush1.msra.mxu0 %v8301
  %8885 = vmatprep.subr.mxu0 0.0
  %8886 = vmatpush1.msra.mxu0 %v8302
  %8887 = vmatprep.subr.mxu0 0.0
  %8888 = vmatpush1.msra.mxu0 %v8303
  %8889 = vmatprep.subr.mxu0 0.0
  %8890 = vmatpush1.msra.mxu0 %v8304
  %8891 = vmatprep.subr.mxu0 0.0
  %8892 = vmatpush1.msra.mxu0 %v8305
  %8893 = vmatprep.subr.mxu0 0.0
  %8894 = vmatpush1.msra.mxu0 %v8306
  %8895 = vmatprep.subr.mxu0 0.0
  %8896 = vmatpush1.msra.mxu0 %v8307
  %8897 = vmatprep.subr.mxu0 0.0
  %8898 = vmatpush1.msra.mxu0 %v8308
  %8899 = vmatprep.subr.mxu0 0.0
  %8900 = vmatpush1.msra.mxu0 %v8309
  %8901 = vmatprep.subr.mxu0 0.0
  %8902 = vmatpush1.msra.mxu0 %v8310
  %8903 = vmatprep.subr.mxu0 0.0
  %8904 = vmatpush1.msra.mxu0 %v8311
  %8905 = vmatprep.subr.mxu0 0.0
  %8906 = vmatpush1.msra.mxu0 %v8312
  %8907 = vmatprep.subr.mxu0 0.0
  %8908 = vmatpush1.msra.mxu0 %v8313
  %8909 = vmatprep.subr.mxu0 0.0
  %8910 = vmatpush1.msra.mxu0 %v8314
  %8911 = vmatprep.subr.mxu0 0.0
  %8912 = vmatpush1.msra.mxu0 %v8315
  %8913 = vmatprep.subr.mxu0 0.0
  %8914 = vmatpush1.msra.mxu0 %v8316
  %8915 = vmatprep.subr.mxu0 0.0
  %8916 = vmatpush1.msra.mxu0 %v8317
  %8917 = vmatprep.subr.mxu0 0.0
  %8918 = vmatpush1.msra.mxu0 %v8318
  %8919 = vmatprep.mubr.f32.mxu0 %v8060
  %8920 = vmatmul.mubr.f32.gmra.mrb[0].mxu0 %v8059
  %v8921 = vpop.f32.mrb[0].mxu0
  %v8922 = vadd.f32 %v8852, %v8921
  %v8923 = vpop.f32.mrb[0].mxu0
  %8924 = vdwg.mxu0
  %8925 = vmatprep.subr.mxu0 0.0
  %8926 = vmatpush1.msra.mxu0 %v8319
  %8927 = vmatprep.subr.mxu0 0.0
  %8928 = vmatpush1.msra.mxu0 %v8320
  %8929 = vmatprep.subr.mxu0 0.0
  %8930 = vmatpush1.msra.mxu0 %v8321
  %8931 = vmatprep.subr.mxu0 0.0
  %8932 = vmatpush1.msra.mxu0 %v8322
  %8933 = vmatprep.subr.mxu0 0.0
  %8934 = vmatpush1.msra.mxu0 %v8323
  %8935 = vmatprep.subr.mxu0 0.0
  %8936 = vmatpush1.msra.mxu0 %v8324
  %8937 = vmatprep.subr.mxu0 0.0
  %8938 = vmatpush1.msra.mxu0 %v8325
  %8939 = vmatprep.subr.mxu0 0.0
  %8940 = vmatpush1.msra.mxu0 %v8326
  %8941 = vmatprep.subr.mxu0 0.0
  %8942 = vmatpush1.msra.mxu0 %v8327
  %8943 = vmatprep.subr.mxu0 0.0
  %8944 = vmatpush1.msra.mxu0 %v8328
  %8945 = vmatprep.subr.mxu0 0.0
  %8946 = vmatpush1.msra.mxu0 %v8329
  %8947 = vmatprep.subr.mxu0 0.0
  %8948 = vmatpush1.msra.mxu0 %v8330
  %8949 = vmatprep.subr.mxu0 0.0
  %8950 = vmatpush1.msra.mxu0 %v8331
  %8951 = vmatprep.subr.mxu0 0.0
  %8952 = vmatpush1.msra.mxu0 %v8332
  %8953 = vmatprep.subr.mxu0 0.0
  %8954 = vmatpush1.msra.mxu0 %v8333
  %8955 = vmatprep.subr.mxu0 0.0
  %8956 = vmatpush1.msra.mxu0 %v8334
  %8957 = vmatprep.subr.mxu0 0.0
  %8958 = vmatpush1.msra.mxu0 %v8335
  %8959 = vmatprep.subr.mxu0 0.0
  %8960 = vmatpush1.msra.mxu0 %v8336
  %8961 = vmatprep.subr.mxu0 0.0
  %8962 = vmatpush1.msra.mxu0 %v8337
  %8963 = vmatprep.subr.mxu0 0.0
  %8964 = vmatpush1.msra.mxu0 %v8338
  %8965 = vmatprep.subr.mxu0 0.0
  %8966 = vmatpush1.msra.mxu0 %v8339
  %8967 = vmatprep.subr.mxu0 0.0
  %8968 = vmatpush1.msra.mxu0 %v8340
  %8969 = vmatprep.subr.mxu0 0.0
  %8970 = vmatpush1.msra.mxu0 %v8341
  %8971 = vmatprep.subr.mxu0 0.0
  %8972 = vmatpush1.msra.mxu0 %v8342
  %8973 = vmatprep.subr.mxu0 0.0
  %8974 = vmatpush1.msra.mxu0 %v8343
  %8975 = vmatprep.subr.mxu0 0.0
  %8976 = vmatpush1.msra.mxu0 %v8344
  %8977 = vmatprep.subr.mxu0 0.0
  %8978 = vmatpush1.msra.mxu0 %v8345
  %8979 = vmatprep.subr.mxu0 0.0
  %8980 = vmatpush1.msra.mxu0 %v8346
  %8981 = vmatprep.subr.mxu0 0.0
  %8982 = vmatpush1.msra.mxu0 %v8347
  %8983 = vmatprep.subr.mxu0 0.0
  %8984 = vmatpush1.msra.mxu0 %v8348
  %8985 = vmatprep.subr.mxu0 0.0
  %8986 = vmatpush1.msra.mxu0 %v8363
  %8987 = vmatprep.subr.mxu0 0.0
  %8988 = vmatpush1.msra.mxu0 0.0
  %8989 = vmatprep.mubr.f32.mxu0 %v8359
  %8990 = vmatmul.mubr.f32.gmra.mrb[0].mxu0 %v8061
  %v8991 = vpop.f32.mrb[0].mxu0
  %v8992 = vadd.f32 %v8922, %v8991
  %v8993 = vpop.f32.mrb[0].mxu0
  %8994 = vdwg.mxu0
  %v8995 = vmax.f32 %v8992, 0.0
  %v8996 = vld [vmem:[%s7] sm:$0xff]
  %v8997 = vld [vmem:[%s7 + $0x8] sm:$0xff]
  %v8998 = vld [vmem:[%s7 + $0x10] sm:$0xff]
  %v8999 = vld [vmem:[%s7 + $0x18] sm:$0xff]
  %v9000 = vld [vmem:[%s8] sm:$0x1]
  %v9002 = vlaneseq
  %v9003 = vshrl.u32 %v9002, 7
  %v9004 = vsub.s32 0, %v9003
  %v9005 = vrot.slane %v9000, %v9004
  %vm9007 = vcmask 261120
  %v9009 = vsel %vm9007, %v8995, 0
  %9011 = vmatprep.subr.mxu0 0.0
  %9012 = vmatpush1.msra.mxu0 %v8996
  %9013 = vmatprep.subr.mxu0 0.0
  %9014 = vmatpush1.msra.mxu0 %v8997
  %9015 = vmatprep.subr.mxu0 0.0
  %9016 = vmatpush1.msra.mxu0 %v8998
  %9017 = vmatprep.subr.mxu0 0.0
  %9018 = vmatpush1.msra.mxu0 %v8999
  %9019 = vmatprep.subr.mxu0 0.0
  %9020 = vmatpush1.msra.mxu0 0.0
  %9021 = vmatprep.subr.mxu0 0.0
  %9022 = vmatpush1.msra.mxu0 0.0
  %9023 = vmatprep.subr.mxu0 0.0
  %9024 = vmatpush1.msra.mxu0 0.0
  %9025 = vmatprep.subr.mxu0 0.0
  %9026 = vmatpush1.msra.mxu0 0.0
  %9027 = vmatprep.subr.mxu0 0.0
  %9028 = vmatpush1.msra.mxu0 0.0
  %9029 = vmatprep.subr.mxu0 0.0
  %9030 = vmatpush1.msra.mxu0 0.0
  %9031 = vmatprep.subr.mxu0 0.0
  %9032 = vmatpush1.msra.mxu0 0.0
  %9033 = vmatprep.subr.mxu0 0.0
  %9034 = vmatpush1.msra.mxu0 0.0
  %9035 = vmatprep.subr.mxu0 0.0
  %9036 = vmatpush1.msra.mxu0 0.0
  %9037 = vmatprep.subr.mxu0 0.0
  %9038 = vmatpush1.msra.mxu0 0.0
  %9039 = vmatprep.subr.mxu0 0.0
  %9040 = vmatpush1.msra.mxu0 0.0
  %9041 = vmatprep.subr.mxu0 0.0
  %9042 = vmatpush1.msra.mxu0 0.0
  %9043 = vmatprep.subr.mxu0 0.0
  %9044 = vmatpush1.msra.mxu0 0.0
  %9045 = vmatprep.subr.mxu0 0.0
  %9046 = vmatpush1.msra.mxu0 0.0
  %9047 = vmatprep.subr.mxu0 0.0
  %9048 = vmatpush1.msra.mxu0 0.0
  %9049 = vmatprep.subr.mxu0 0.0
  %9050 = vmatpush1.msra.mxu0 0.0
  %9051 = vmatprep.subr.mxu0 0.0
  %9052 = vmatpush1.msra.mxu0 0.0
  %9053 = vmatprep.subr.mxu0 0.0
  %9054 = vmatpush1.msra.mxu0 0.0
  %9055 = vmatprep.subr.mxu0 0.0
  %9056 = vmatpush1.msra.mxu0 0.0
  %9057 = vmatprep.subr.mxu0 0.0
  %9058 = vmatpush1.msra.mxu0 0.0
  %9059 = vmatprep.subr.mxu0 0.0
  %9060 = vmatpush1.msra.mxu0 0.0
  %9061 = vmatprep.subr.mxu0 0.0
  %9062 = vmatpush1.msra.mxu0 0.0
  %9063 = vmatprep.subr.mxu0 0.0
  %9064 = vmatpush1.msra.mxu0 0.0
  %9065 = vmatprep.subr.mxu0 0.0
  %9066 = vmatpush1.msra.mxu0 0.0
  %9067 = vmatprep.subr.mxu0 0.0
  %9068 = vmatpush1.msra.mxu0 0.0
  %9069 = vmatprep.subr.mxu0 0.0
  %9070 = vmatpush1.msra.mxu0 0.0
  %9071 = vmatprep.subr.mxu0 0.0
  %9072 = vmatpush1.msra.mxu0 0.0
  %9073 = vmatprep.subr.mxu0 0.0
  %9074 = vmatpush1.msra.mxu0 0.0
  %9075 = vmatprep.mubr.f32.mxu0 0.0
  %9076 = vmatmul.mubr.f32.gmra.mrb[0].mxu0 %v9009
  %v9077 = vpop.f32.mrb[0].mxu0
  %v9078 = vadd.f32 %v9005, %v9077
  %v9079 = vpop.f32.mrb[0].mxu0
  %9080 = vdwg.mxu0
  %v9081 = vmax.f32 %v9078, 0.0
  %v9082 = vld [vmem:[%s9] sm:$0xff]
  %v9083 = vld [vmem:[%s9 + $0x8] sm:$0xff]
  %v9084 = vld [vmem:[%s9 + $0x10] sm:$0xff]
  %v9085 = vld [vmem:[%s9 + $0x18] sm:$0xff]
  %v9086 = vld [vmem:[%s10] sm:$0x1]
  %v9088 = vlaneseq
  %v9089 = vshrl.u32 %v9088, 7
  %v9090 = vsub.s32 0, %v9089
  %v9091 = vrot.slane %v9086, %v9090
  %v9094 = vsel %vm9007, %v9081, 0
  %9096 = vmatprep.subr.mxu0 0.0
  %9097 = vmatpush1.msra.mxu0 %v9082
  %9098 = vmatprep.subr.mxu0 0.0
  %9099 = vmatpush1.msra.mxu0 %v9083
  %9100 = vmatprep.subr.mxu0 0.0
  %9101 = vmatpush1.msra.mxu0 %v9084
  %9102 = vmatprep.subr.mxu0 0.0
  %9103 = vmatpush1.msra.mxu0 %v9085
  %9104 = vmatprep.subr.mxu0 0.0
  %9105 = vmatpush1.msra.mxu0 0.0
  %9106 = vmatprep.subr.mxu0 0.0
  %9107 = vmatpush1.msra.mxu0 0.0
  %9108 = vmatprep.subr.mxu0 0.0
  %9109 = vmatpush1.msra.mxu0 0.0
  %9110 = vmatprep.subr.mxu0 0.0
  %9111 = vmatpush1.msra.mxu0 0.0
  %9112 = vmatprep.subr.mxu0 0.0
  %9113 = vmatpush1.msra.mxu0 0.0
  %9114 = vmatprep.subr.mxu0 0.0
  %9115 = vmatpush1.msra.mxu0 0.0
  %9116 = vmatprep.subr.mxu0 0.0
  %9117 = vmatpush1.msra.mxu0 0.0
  %9118 = vmatprep.subr.mxu0 0.0
  %9119 = vmatpush1.msra.mxu0 0.0
  %9120 = vmatprep.subr.mxu0 0.0
  %9121 = vmatpush1.msra.mxu0 0.0
  %9122 = vmatprep.subr.mxu0 0.0
  %9123 = vmatpush1.msra.mxu0 0.0
  %9124 = vmatprep.subr.mxu0 0.0
  %9125 = vmatpush1.msra.mxu0 0.0
  %9126 = vmatprep.subr.mxu0 0.0
  %9127 = vmatpush1.msra.mxu0 0.0
  %9128 = vmatprep.subr.mxu0 0.0
  %9129 = vmatpush1.msra.mxu0 0.0
  %9130 = vmatprep.subr.mxu0 0.0
  %9131 = vmatpush1.msra.mxu0 0.0
  %9132 = vmatprep.subr.mxu0 0.0
  %9133 = vmatpush1.msra.mxu0 0.0
  %9134 = vmatprep.subr.mxu0 0.0
  %9135 = vmatpush1.msra.mxu0 0.0
  %9136 = vmatprep.subr.mxu0 0.0
  %9137 = vmatpush1.msra.mxu0 0.0
  %9138 = vmatprep.subr.mxu0 0.0
  %9139 = vmatpush1.msra.mxu0 0.0
  %9140 = vmatprep.subr.mxu0 0.0
  %9141 = vmatpush1.msra.mxu0 0.0
  %9142 = vmatprep.subr.mxu0 0.0
  %9143 = vmatpush1.msra.mxu0 0.0
  %9144 = vmatprep.subr.mxu0 0.0
  %9145 = vmatpush1.msra.mxu0 0.0
  %9146 = vmatprep.subr.mxu0 0.0
  %9147 = vmatpush1.msra.mxu0 0.0
  %9148 = vmatprep.subr.mxu0 0.0
  %9149 = vmatpush1.msra.mxu0 0.0
  %9150 = vmatprep.subr.mxu0 0.0
  %9151 = vmatpush1.msra.mxu0 0.0
  %9152 = vmatprep.subr.mxu0 0.0
  %9153 = vmatpush1.msra.mxu0 0.0
  %9154 = vmatprep.subr.mxu0 0.0
  %9155 = vmatpush1.msra.mxu0 0.0
  %9156 = vmatprep.subr.mxu0 0.0
  %9157 = vmatpush1.msra.mxu0 0.0
  %9158 = vmatprep.subr.mxu0 0.0
  %9159 = vmatpush1.msra.mxu0 0.0
  %9160 = vmatprep.mubr.f32.mxu0 0.0
  %9161 = vmatmul.mubr.f32.gmra.mrb[0].mxu0 %v9094
  %v9162 = vpop.f32.mrb[0].mxu0
  %v9163 = vadd.f32 %v9091, %v9162
  %v9164 = vpop.f32.mrb[0].mxu0
  %9165 = vdwg.mxu0
  %9166 = vst [vmem:[%s11] sm:$0xff] %v9163
  // Predicated region
  $region46: #{cnn_forward.1} parent=0 // pred_check
    _
  $region47: #{cnn_forward.1} parent=0 // pred_check_branch
    %9168 = sbr.rel (0) target = $region49
  $region48: #{cnn_forward.1} parent=0 // pred_region
    _
  $region49: #{cnn_forward.1} parent=0 // pred_fallthru
    _
  // Predicated region
  $region50: #{cnn_forward.1} parent=0 // pred_check
    _
  $region51: #{cnn_forward.1} parent=0 // pred_check_branch
    %9170 = sbr.rel (0) target = $region53
  $region52: #{cnn_forward.1} parent=0 // pred_region
    _
  $region53: #{cnn_forward.1} parent=0 // pred_fallthru
    _

</llo_original>
